<compile_context>
chip_gen: v7x
topology: tpu7x:2x2x1
jax: 0.10.0
libtpu: 0.0.40
codegen_flags: <defaults>
</compile_context>

<pallas_src>
import jax
import jax.numpy as jnp
from jax.experimental import pallas as pl
from jax.experimental.pallas import tpu as pltpu


def _it_ff_kernel(img_ref, tab_ref, hb_ref, wc_ref, w1r_ref, w2_ref, b2_ref,
                  out_ref, conv_ref):
    """One batch block.

    img_ref : (BB, N, D)  image tokens
    tab_ref : (BB, D)     tabular feature (already through its small MLP)
    hb_ref  : (BB, H)     folded hidden bias (tab @ W1tab + ba1 + conv-bias term)
    wc_ref  : (C, N)      1x1 conv weight
    w1r_ref : (C, D, H)   aux layer-1 weight, channel-major (rearrange folded in)
    w2_ref  : (2*Np, H)   fused aux layer-2 weight (scale rows [0,N), shift rows [Np,Np+N))
    b2_ref  : (2*Np, 1)   fused aux layer-2 bias
    conv_ref: (BB*C, D)   f32 scratch; rows [b*C, (b+1)*C) hold conv(img[b])
    """
    BB, N, D = img_ref.shape
    C = wc_ref.shape[0]
    Np = b2_ref.shape[0] // 2

    # ---- 1x1 Conv1d: one (C,N)@(N,D) MXU dot per batch element, written as a
    #      single aligned (C, D) slab (no masked single-sublane scatters).
    wc = wc_ref[...]
    for b in range(BB):                                    # BB is small & static
        conv_ref[b * C:(b + 1) * C, :] = jnp.dot(
            wc, img_ref[b], preferred_element_type=jnp.float32)

    # ---- aux hidden layer.  The 'b n d -> b (d n)' rearrange, the concat with the
    #      tabular feature and both biases are folded into w1r / hb in the wrapper;
    #      channel-o rows are read back as one strided (BB, D) slab.
    h = hb_ref[...]                                        # (BB, H)
    for o in range(C):
        h = h + jnp.dot(conv_ref[pl.ds(o, BB, stride=C), :], w1r_ref[o],
                        preferred_element_type=jnp.float32)
    h = jnp.maximum(h, 0.0)                                # ReLU

    # ---- fused aux output layer: one MXU pass for scale+shift, computed as
    #      W2 @ h^T so N lands on sublanes and broadcasts over img's D lanes
    #      with no relayout.  Both halves start at 8-aligned sublane offsets.
    att = jax.lax.dot_general(w2_ref[...], h, (((1,), (1,)), ((), ())),
                              preferred_element_type=jnp.float32) + b2_ref[...]
    v_scale = 1.0 / (1.0 + jnp.exp(-att[:N]))              # (N, BB), sigmoid
    v_shift = att[Np:Np + N]                               # (N, BB)

    # ---- out = s*img + (1-s)*tab + t  ==  s*(img - tab) + (tab + t)
    tab = tab_ref[...]                                     # (BB, D), hoisted
    for b in range(BB):
        s = v_scale[:, b:b + 1]                            # (N, 1)
        t = v_shift[:, b:b + 1]                            # (N, 1)
        tb = tab[b:b + 1, :]                               # (1, D)
        out_ref[b] = (s * (img_ref[b] - tb) + (tb + t)).astype(out_ref.dtype)


def _tpu_vmem_bytes(default=64 << 20):
    """Physical VMEM per TensorCore; conservative 64 MiB fallback (v7x)."""
    try:
        info = pltpu.get_tpu_info()
    except Exception:
        return default
    for name in ("vmem_capacity_bytes", "vmem_bytes", "vmem_size_bytes"):
        v = getattr(info, name, None)
        if isinstance(v, int) and v > 0:
            return v
    return default


def _single_tensorcore():
    """True for single-TC parts (v5e / v6e); False (keep grid balance) otherwise."""
    try:
        kind = jax.devices()[0].device_kind.lower()
    except Exception:
        return False
    return any(t in kind for t in ("v5e", "v5 lite", "v5litepod", "v6e", "v6 lite"))


def _pick_block_batch(B, N, D, itemsize, vmem_cap, single_tc, max_bb=32):
    """Largest legal batch block.

    Legal:  BB divides B and (BB == B or BB % 8 == 0), so the (BB, D)/(BB, H)
            blocks of the small per-batch operands satisfy the (8, 128) rule.
    Budget: img/out blocks are double-buffered by the pipeline, so keep
            4 * block inside ~45% of physical VMEM.
    Balance: only on multi-TC chips (v7x) prefer a grid of length >= 2.
    """
    tile_budget = max(1 << 20, int(0.11 * vmem_cap))
    per_elem = N * D * itemsize
    cap = max(1, min(max_bb, tile_budget // max(per_elem, 1)))
    cands = [d for d in range(1, B + 1)
             if B % d == 0 and d <= cap and (d == B or d % 8 == 0)]
    if not cands:
        cands = [B]        # always-legal fallback (single grid step)
    if not single_tc:
        balanced = [d for d in cands if B // d >= 2]
        if balanced:
            cands = balanced
    return max(cands)


def it_feedforward_updated(img, context, raw_params):
    """img: (B, N, D) f32, context: (B, T) f32; raw_params from make_raw_params."""
    (Wc, bc, Wt1, bt1, Wt2, bt2, Wa1, ba1, Wa2, ba2) = raw_params
    B, N, D = img.shape
    C = Wc.shape[0]                       # 8 conv channels
    H = Wa1.shape[0]                      # hidden_dim
    assert Wa2.shape[0] == 2 * N, "num_vectors must equal the token dim of img"
    assert Wa1.shape[1] == C * D + D

    # ---- tiny XLA-side prep: tabular MLP, weight-norm already applied, and the
    #      rearrange / concat / biases folded into pre-permuted weights.
    tab = jnp.maximum(context @ Wt1.T + bt1, 0.0) @ Wt2.T + bt2              # (B, D)
    W1 = Wa1.T                                                               # (9D, H)
    W1r = W1[:C * D].reshape(D, C, H).transpose(1, 0, 2)                     # (C, D, H)
    W1tab = W1[C * D:]                                                       # (D, H)
    hb = tab @ W1tab + ba1 + jnp.einsum('o,odh->h', bc, W1r)                 # (B, H)

    # Fused + sublane-padded output-layer weights (scale rows [0,N), shift rows
    # [Np, Np+N), Np = round_up(N, 8)); pad rows are zero and never read.
    Np = ((N + 7) // 8) * 8
    w2 = jnp.zeros((2 * Np, H), jnp.float32)
    w2 = w2.at[:N].set(Wa2[:N]).at[Np:Np + N].set(Wa2[N:])
    b2 = jnp.zeros((2 * Np, 1), jnp.float32)
    b2 = b2.at[:N].set(ba2[:N, None]).at[Np:Np + N].set(ba2[N:, None])

    itemsize = jnp.dtype(img.dtype).itemsize
    vmem_cap = _tpu_vmem_bytes()
    BB = _pick_block_batch(B, N, D, itemsize, vmem_cap, _single_tensorcore())
    grid = (B // BB,)

    # VMEM budget: double-buffered img/out blocks + small operands + weights + scratch.
    f32b = 4
    tile = BB * N * D * itemsize
    small = BB * (D + H) * f32b
    weights = (C * N + C * D * H + 2 * Np * (H + 1)) * f32b
    scratch = BB * C * D * f32b
    est = 4 * tile + 2 * small + 2 * weights + scratch + (4 << 20)
    vmem_limit = int(min(int(0.85 * vmem_cap), max(est, 32 << 20)))

    cost = pl.CostEstimate(
        flops=int(2 * B * C * N * D + 2 * B * C * D * H + 2 * B * 2 * Np * H
                  + 4 * B * N * D),
        transcendentals=int(B * N),
        bytes_accessed=int(itemsize * 2 * B * N * D
                           + f32b * (B * (D + H) + C * N + C * D * H
                                     + 2 * Np * (H + 1))),
    )

    return pl.pallas_call(
        _it_ff_kernel,
        out_shape=jax.ShapeDtypeStruct((B, N, D), img.dtype),
        grid_spec=pltpu.PrefetchScalarGridSpec(
            num_scalar_prefetch=0,
            grid=grid,
            in_specs=[
                pl.BlockSpec((BB, N, D), lambda i: (i, 0, 0)),    # img block
                pl.BlockSpec((BB, D),    lambda i: (i, 0)),       # tabular feature
                pl.BlockSpec((BB, H),    lambda i: (i, 0)),       # folded hidden bias
                pl.BlockSpec((C, N),     lambda i: (0, 0)),       # conv weight
                pl.BlockSpec((C, D, H),  lambda i: (0, 0, 0)),    # aux layer-1 (rearranged)
                pl.BlockSpec((2 * Np, H), lambda i: (0, 0)),      # fused aux layer-2 weight
                pl.BlockSpec((2 * Np, 1), lambda i: (0, 0)),      # fused aux layer-2 bias
            ],
            out_specs=pl.BlockSpec((BB, N, D), lambda i: (i, 0, 0)),
            scratch_shapes=[pltpu.VMEM((BB * C, D), jnp.float32)],
        ),
        compiler_params=pltpu.CompilerParams(
            dimension_semantics=("parallel",),
            vmem_limit_bytes=vmem_limit),
        cost_estimate=cost,
    )(img, tab, hb, Wc, W1r, w2, b2)


def _weight_norm(v, g):
    # torch.nn.utils.weight_norm on Linear (dim=0): w = g * v / ||v||, per output row.
    norm = jnp.sqrt(jnp.sum(v * v, axis=1, keepdims=True))
    return (g[:, None] / norm) * v


def make_raw_params(key, img_dim, tabular_dim, hidden_dim, num_vectors):
    """Deterministic synthetic parameters matching the module's shapes."""
    ks = jax.random.split(key, 14)
    C = 8
    # reducion: Conv1d(num_vectors, 8, kernel_size=1)   (not weight-normed)
    Wc = 0.05 * jax.random.normal(ks[0], (C, num_vectors), jnp.float32)
    bc = 0.01 * jax.random.normal(ks[1], (C,), jnp.float32)
    # aux_tabular: Linear(T->H), ReLU, Linear(H->D)     (both weight-normed)
    Wt1 = _weight_norm(0.1 * jax.random.normal(ks[2], (hidden_dim, tabular_dim), jnp.float32),
                       1.0 + 0.05 * jax.random.normal(ks[3], (hidden_dim,), jnp.float32))
    bt1 = 0.01 * jax.random.normal(ks[4], (hidden_dim,), jnp.float32)
    Wt2 = _weight_norm(0.1 * jax.random.normal(ks[5], (img_dim, hidden_dim), jnp.float32),
                       1.0 + 0.05 * jax.random.normal(ks[6], (img_dim,), jnp.float32))
    bt2 = 0.01 * jax.random.normal(ks[7], (img_dim,), jnp.float32)
    # aux: Linear(9D->H), ReLU, Linear(H->2*num_vectors) (both weight-normed)
    Wa1 = _weight_norm(0.1 * jax.random.normal(ks[8], (hidden_dim, 9 * img_dim), jnp.float32),
                       1.0 + 0.05 * jax.random.normal(ks[9], (hidden_dim,), jnp.float32))
    ba1 = 0.01 * jax.random.normal(ks[10], (hidden_dim,), jnp.float32)
    Wa2 = _weight_norm(0.1 * jax.random.normal(ks[11], (2 * num_vectors, hidden_dim), jnp.float32),
                       1.0 + 0.05 * jax.random.normal(ks[12], (2 * num_vectors,), jnp.float32))
    ba2 = 0.01 * jax.random.normal(ks[13], (2 * num_vectors,), jnp.float32)
    return (Wc, bc, Wt1, bt1, Wt2, bt2, Wa1, ba1, Wa2, ba2)


def reference(img, context, raw_params):
    """Direct JAX transcription of IT_FeedForward_Updated.forward."""
    (Wc, bc, Wt1, bt1, Wt2, bt2, Wa1, ba1, Wa2, ba2) = raw_params
    B, N, D = img.shape
    conv = jnp.einsum('om,bmd->bod', Wc, img) + bc[None, :, None]            # (B, 8, D)
    squeeze = jnp.transpose(conv, (0, 2, 1)).reshape(B, -1)                  # 'b n d -> b (d n)'
    tab = jnp.maximum(context @ Wt1.T + bt1, 0.0) @ Wt2.T + bt2              # (B, D)
    cat = jnp.concatenate([squeeze, tab], axis=1)                            # (B, 9D)
    att = jnp.maximum(cat @ Wa1.T + ba1, 0.0) @ Wa2.T + ba2                  # (B, 2N)
    vs = jax.nn.sigmoid(att[:, :N])[:, :, None]                              # (B, N, 1)
    vsh = att[:, N:][:, :, None]                                             # (B, N, 1)
    return vs * img + (1.0 - vs) * tab[:, None, :] + vsh


if __name__ == "__main__":
    jax.config.update("jax_default_matmul_precision", "highest")

    B = 4
    IMG_DIM = 128          # lane-dense last dim (multiple of 128)
    TAB_DIM = 8
    HID_DIM = 32
    NUM_VECTORS = 150      # fixed by the module: Conv1d(150, 8, 1) + expand_as(img)

    key = jax.random.PRNGKey(0)
    k_img, k_ctx, k_par = jax.random.split(key, 3)
    img = jax.random.normal(k_img, (B, NUM_VECTORS, IMG_DIM), jnp.float32)
    context = jax.random.normal(k_ctx, (B, TAB_DIM), jnp.float32)
    raw = make_raw_params(k_par, IMG_DIM, TAB_DIM, HID_DIM, NUM_VECTORS)

    fwd = jax.jit(it_feedforward_updated)
    out = jax.block_until_ready(fwd(img, context, raw))

    ref = reference(img, context, raw)
    assert out.shape == (B, NUM_VECTORS, IMG_DIM)
    assert jnp.allclose(out, ref, atol=2e-3, rtol=2e-3), (
        "mismatch vs reference, max abs err = "
        f"{float(jnp.max(jnp.abs(out - ref)))}")
    print("KERNEL_OK")
</pallas_src>

<mosaic_0001>
module attributes {stable_mosaic.version = 11 : i64} {
  func.func @_it_ff_kernel(%arg0: i32, %arg1: memref<4x150x128xf32, #tpu.memory_space<vmem>>, %arg2: memref<4x128xf32, #tpu.memory_space<vmem>>, %arg3: memref<4x32xf32, #tpu.memory_space<vmem>>, %arg4: memref<8x150xf32, #tpu.memory_space<vmem>>, %arg5: memref<8x128x32xf32, #tpu.memory_space<vmem>>, %arg6: memref<304x32xf32, #tpu.memory_space<vmem>>, %arg7: memref<304x1xf32, #tpu.memory_space<vmem>>, %arg8: memref<4x150x128xf32, #tpu.memory_space<vmem>>, %arg9: memref<32x128xf32, #tpu.memory_space<vmem>>) attributes {dimension_semantics = [#tpu.dimension_semantics<parallel>], iteration_bounds = array<i64: 1>, scalar_prefetch = 0 : i64, scratch_operands = 1 : i64, tpu.core_type = #tpu.core_type<tc>, window_params = [{transform_indices = @transform_0, window_bounds = array<i64: 4, 150, 128>}, {transform_indices = @transform_1, window_bounds = array<i64: 4, 128>}, {transform_indices = @transform_2, window_bounds = array<i64: 4, 32>}, {pipeline_mode = #tpu.pipeline_mode<synchronous>, transform_indices = @transform_3, window_bounds = array<i64: 8, 150>}, {pipeline_mode = #tpu.pipeline_mode<synchronous>, transform_indices = @transform_4, window_bounds = array<i64: 8, 128, 32>}, {pipeline_mode = #tpu.pipeline_mode<synchronous>, transform_indices = @transform_5, window_bounds = array<i64: 304, 32>}, {pipeline_mode = #tpu.pipeline_mode<synchronous>, transform_indices = @transform_6, window_bounds = array<i64: 304, 1>}, {transform_indices = @transform_7, window_bounds = array<i64: 4, 150, 128>}]} {
    %c0 = arith.constant 0 : index
    %c0_0 = arith.constant 0 : index
    %0 = vector.load %arg4[%c0, %c0_0] : memref<8x150xf32, #tpu.memory_space<vmem>>, vector<8x150xf32>
    %c0_1 = arith.constant 0 : index
    %c0_2 = arith.constant 0 : index
    %c0_3 = arith.constant 0 : index
    %1 = vector.load %arg1[%c0_1, %c0_2, %c0_3] : memref<4x150x128xf32, #tpu.memory_space<vmem>>, vector<1x150x128xf32>
    %2 = vector.shape_cast %1 : vector<1x150x128xf32> to vector<150x128xf32>
    %cst = arith.constant dense<0.000000e+00> : vector<8x128xf32>
    %3 = tpu.matmul %0, %2, %cst {dimension_numbers = #tpu.dot_dimension_numbers<[1], [0], [0], [1], [0, 0, 1, 1], [], []>, precision = #tpu.contract_precision<fp32>} : vector<8x150xf32>, vector<150x128xf32>, vector<8x128xf32> -> vector<8x128xf32>
    %c0_4 = arith.constant 0 : index
    %c0_5 = arith.constant 0 : index
    %4 = vector.load %arg9[%c0_4, %c0_5] : memref<32x128xf32, #tpu.memory_space<vmem>>, vector<8x128xf32>
    tpu.vector_store %arg9[%c0_4, %c0_5], %3 {strides = array<i32>} : memref<32x128xf32, #tpu.memory_space<vmem>>, vector<8x128xf32>,
    %c1 = arith.constant 1 : index
    %c0_6 = arith.constant 0 : index
    %c0_7 = arith.constant 0 : index
    %5 = vector.load %arg1[%c1, %c0_6, %c0_7] : memref<4x150x128xf32, #tpu.memory_space<vmem>>, vector<1x150x128xf32>
    %6 = vector.shape_cast %5 : vector<1x150x128xf32> to vector<150x128xf32>
    %cst_8 = arith.constant dense<0.000000e+00> : vector<8x128xf32>
    %7 = tpu.matmul %0, %6, %cst_8 {dimension_numbers = #tpu.dot_dimension_numbers<[1], [0], [0], [1], [0, 0, 1, 1], [], []>, precision = #tpu.contract_precision<fp32>} : vector<8x150xf32>, vector<150x128xf32>, vector<8x128xf32> -> vector<8x128xf32>
    %c8 = arith.constant 8 : index
    %c0_9 = arith.constant 0 : index
    %8 = vector.load %arg9[%c8, %c0_9] : memref<32x128xf32, #tpu.memory_space<vmem>>, vector<8x128xf32>
    tpu.vector_store %arg9[%c8, %c0_9], %7 {strides = array<i32>} : memref<32x128xf32, #tpu.memory_space<vmem>>, vector<8x128xf32>,
    %c2 = arith.constant 2 : index
    %c0_10 = arith.constant 0 : index
    %c0_11 = arith.constant 0 : index
    %9 = vector.load %arg1[%c2, %c0_10, %c0_11] : memref<4x150x128xf32, #tpu.memory_space<vmem>>, vector<1x150x128xf32>
    %10 = vector.shape_cast %9 : vector<1x150x128xf32> to vector<150x128xf32>
    %cst_12 = arith.constant dense<0.000000e+00> : vector<8x128xf32>
    %11 = tpu.matmul %0, %10, %cst_12 {dimension_numbers = #tpu.dot_dimension_numbers<[1], [0], [0], [1], [0, 0, 1, 1], [], []>, precision = #tpu.contract_precision<fp32>} : vector<8x150xf32>, vector<150x128xf32>, vector<8x128xf32> -> vector<8x128xf32>
    %c16 = arith.constant 16 : index
    %c0_13 = arith.constant 0 : index
    %12 = vector.load %arg9[%c16, %c0_13] : memref<32x128xf32, #tpu.memory_space<vmem>>, vector<8x128xf32>
    tpu.vector_store %arg9[%c16, %c0_13], %11 {strides = array<i32>} : memref<32x128xf32, #tpu.memory_space<vmem>>, vector<8x128xf32>,
    %c3 = arith.constant 3 : index
    %c0_14 = arith.constant 0 : index
    %c0_15 = arith.constant 0 : index
    %13 = vector.load %arg1[%c3, %c0_14, %c0_15] : memref<4x150x128xf32, #tpu.memory_space<vmem>>, vector<1x150x128xf32>
    %14 = vector.shape_cast %13 : vector<1x150x128xf32> to vector<150x128xf32>
    %cst_16 = arith.constant dense<0.000000e+00> : vector<8x128xf32>
    %15 = tpu.matmul %0, %14, %cst_16 {dimension_numbers = #tpu.dot_dimension_numbers<[1], [0], [0], [1], [0, 0, 1, 1], [], []>, precision = #tpu.contract_precision<fp32>} : vector<8x150xf32>, vector<150x128xf32>, vector<8x128xf32> -> vector<8x128xf32>
    %c24 = arith.constant 24 : index
    %c0_17 = arith.constant 0 : index
    %16 = vector.load %arg9[%c24, %c0_17] : memref<32x128xf32, #tpu.memory_space<vmem>>, vector<8x128xf32>
    tpu.vector_store %arg9[%c24, %c0_17], %15 {strides = array<i32>} : memref<32x128xf32, #tpu.memory_space<vmem>>, vector<8x128xf32>,
    %c0_18 = arith.constant 0 : index
    %c0_19 = arith.constant 0 : index
    %17 = vector.load %arg3[%c0_18, %c0_19] : memref<4x32xf32, #tpu.memory_space<vmem>>, vector<4x32xf32>
    %c0_20 = arith.constant 0 : index
    %c0_21 = arith.constant 0 : index
    %18 = tpu.strided_load %arg9[%c0_20, %c0_21] {strides = array<i32: 8, 1>} : memref<32x128xf32, #tpu.memory_space<vmem>>, vector<4x128xf32>
    %c0_22 = arith.constant 0 : index
    %c0_23 = arith.constant 0 : index
    %c0_24 = arith.constant 0 : index
    %19 = vector.load %arg5[%c0_22, %c0_23, %c0_24] : memref<8x128x32xf32, #tpu.memory_space<vmem>>, vector<1x128x32xf32>
    %20 = vector.shape_cast %19 : vector<1x128x32xf32> to vector<128x32xf32>
    %cst_25 = arith.constant dense<0.000000e+00> : vector<4x32xf32>
    %21 = tpu.matmul %18, %20, %cst_25 {dimension_numbers = #tpu.dot_dimension_numbers<[1], [0], [0], [1], [0, 0, 1, 1], [], []>, precision = #tpu.contract_precision<fp32>} : vector<4x128xf32>, vector<128x32xf32>, vector<4x32xf32> -> vector<4x32xf32>
    %22 = arith.addf %17, %21 : vector<4x32xf32>
    %c1_26 = arith.constant 1 : index
    %c0_27 = arith.constant 0 : index
    %23 = tpu.strided_load %arg9[%c1_26, %c0_27] {strides = array<i32: 8, 1>} : memref<32x128xf32, #tpu.memory_space<vmem>>, vector<4x128xf32>
    %c1_28 = arith.constant 1 : index
    %c0_29 = arith.constant 0 : index
    %c0_30 = arith.constant 0 : index
    %24 = vector.load %arg5[%c1_28, %c0_29, %c0_30] : memref<8x128x32xf32, #tpu.memory_space<vmem>>, vector<1x128x32xf32>
    %25 = vector.shape_cast %24 : vector<1x128x32xf32> to vector<128x32xf32>
    %cst_31 = arith.constant dense<0.000000e+00> : vector<4x32xf32>
    %26 = tpu.matmul %23, %25, %cst_31 {dimension_numbers = #tpu.dot_dimension_numbers<[1], [0], [0], [1], [0, 0, 1, 1], [], []>, precision = #tpu.contract_precision<fp32>} : vector<4x128xf32>, vector<128x32xf32>, vector<4x32xf32> -> vector<4x32xf32>
    %27 = arith.addf %22, %26 : vector<4x32xf32>
    %c2_32 = arith.constant 2 : index
    %c0_33 = arith.constant 0 : index
    %28 = tpu.strided_load %arg9[%c2_32, %c0_33] {strides = array<i32: 8, 1>} : memref<32x128xf32, #tpu.memory_space<vmem>>, vector<4x128xf32>
    %c2_34 = arith.constant 2 : index
    %c0_35 = arith.constant 0 : index
    %c0_36 = arith.constant 0 : index
    %29 = vector.load %arg5[%c2_34, %c0_35, %c0_36] : memref<8x128x32xf32, #tpu.memory_space<vmem>>, vector<1x128x32xf32>
    %30 = vector.shape_cast %29 : vector<1x128x32xf32> to vector<128x32xf32>
    %cst_37 = arith.constant dense<0.000000e+00> : vector<4x32xf32>
    %31 = tpu.matmul %28, %30, %cst_37 {dimension_numbers = #tpu.dot_dimension_numbers<[1], [0], [0], [1], [0, 0, 1, 1], [], []>, precision = #tpu.contract_precision<fp32>} : vector<4x128xf32>, vector<128x32xf32>, vector<4x32xf32> -> vector<4x32xf32>
    %32 = arith.addf %27, %31 : vector<4x32xf32>
    %c3_38 = arith.constant 3 : index
    %c0_39 = arith.constant 0 : index
    %33 = tpu.strided_load %arg9[%c3_38, %c0_39] {strides = array<i32: 8, 1>} : memref<32x128xf32, #tpu.memory_space<vmem>>, vector<4x128xf32>
    %c3_40 = arith.constant 3 : index
    %c0_41 = arith.constant 0 : index
    %c0_42 = arith.constant 0 : index
    %34 = vector.load %arg5[%c3_40, %c0_41, %c0_42] : memref<8x128x32xf32, #tpu.memory_space<vmem>>, vector<1x128x32xf32>
    %35 = vector.shape_cast %34 : vector<1x128x32xf32> to vector<128x32xf32>
    %cst_43 = arith.constant dense<0.000000e+00> : vector<4x32xf32>
    %36 = tpu.matmul %33, %35, %cst_43 {dimension_numbers = #tpu.dot_dimension_numbers<[1], [0], [0], [1], [0, 0, 1, 1], [], []>, precision = #tpu.contract_precision<fp32>} : vector<4x128xf32>, vector<128x32xf32>, vector<4x32xf32> -> vector<4x32xf32>
    %37 = arith.addf %32, %36 : vector<4x32xf32>
    %c4 = arith.constant 4 : index
    %c0_44 = arith.constant 0 : index
    %38 = tpu.strided_load %arg9[%c4, %c0_44] {strides = array<i32: 8, 1>} : memref<32x128xf32, #tpu.memory_space<vmem>>, vector<4x128xf32>
    %c4_45 = arith.constant 4 : index
    %c0_46 = arith.constant 0 : index
    %c0_47 = arith.constant 0 : index
    %39 = vector.load %arg5[%c4_45, %c0_46, %c0_47] : memref<8x128x32xf32, #tpu.memory_space<vmem>>, vector<1x128x32xf32>
    %40 = vector.shape_cast %39 : vector<1x128x32xf32> to vector<128x32xf32>
    %cst_48 = arith.constant dense<0.000000e+00> : vector<4x32xf32>
    %41 = tpu.matmul %38, %40, %cst_48 {dimension_numbers = #tpu.dot_dimension_numbers<[1], [0], [0], [1], [0, 0, 1, 1], [], []>, precision = #tpu.contract_precision<fp32>} : vector<4x128xf32>, vector<128x32xf32>, vector<4x32xf32> -> vector<4x32xf32>
    %42 = arith.addf %37, %41 : vector<4x32xf32>
    %c5 = arith.constant 5 : index
    %c0_49 = arith.constant 0 : index
    %43 = tpu.strided_load %arg9[%c5, %c0_49] {strides = array<i32: 8, 1>} : memref<32x128xf32, #tpu.memory_space<vmem>>, vector<4x128xf32>
    %c5_50 = arith.constant 5 : index
    %c0_51 = arith.constant 0 : index
    %c0_52 = arith.constant 0 : index
    %44 = vector.load %arg5[%c5_50, %c0_51, %c0_52] : memref<8x128x32xf32, #tpu.memory_space<vmem>>, vector<1x128x32xf32>
    %45 = vector.shape_cast %44 : vector<1x128x32xf32> to vector<128x32xf32>
    %cst_53 = arith.constant dense<0.000000e+00> : vector<4x32xf32>
    %46 = tpu.matmul %43, %45, %cst_53 {dimension_numbers = #tpu.dot_dimension_numbers<[1], [0], [0], [1], [0, 0, 1, 1], [], []>, precision = #tpu.contract_precision<fp32>} : vector<4x128xf32>, vector<128x32xf32>, vector<4x32xf32> -> vector<4x32xf32>
    %47 = arith.addf %42, %46 : vector<4x32xf32>
    %c6 = arith.constant 6 : index
    %c0_54 = arith.constant 0 : index
    %48 = tpu.strided_load %arg9[%c6, %c0_54] {strides = array<i32: 8, 1>} : memref<32x128xf32, #tpu.memory_space<vmem>>, vector<4x128xf32>
    %c6_55 = arith.constant 6 : index
    %c0_56 = arith.constant 0 : index
    %c0_57 = arith.constant 0 : index
    %49 = vector.load %arg5[%c6_55, %c0_56, %c0_57] : memref<8x128x32xf32, #tpu.memory_space<vmem>>, vector<1x128x32xf32>
    %50 = vector.shape_cast %49 : vector<1x128x32xf32> to vector<128x32xf32>
    %cst_58 = arith.constant dense<0.000000e+00> : vector<4x32xf32>
    %51 = tpu.matmul %48, %50, %cst_58 {dimension_numbers = #tpu.dot_dimension_numbers<[1], [0], [0], [1], [0, 0, 1, 1], [], []>, precision = #tpu.contract_precision<fp32>} : vector<4x128xf32>, vector<128x32xf32>, vector<4x32xf32> -> vector<4x32xf32>
    %52 = arith.addf %47, %51 : vector<4x32xf32>
    %c7 = arith.constant 7 : index
    %c0_59 = arith.constant 0 : index
    %53 = tpu.strided_load %arg9[%c7, %c0_59] {strides = array<i32: 8, 1>} : memref<32x128xf32, #tpu.memory_space<vmem>>, vector<4x128xf32>
    %c7_60 = arith.constant 7 : index
    %c0_61 = arith.constant 0 : index
    %c0_62 = arith.constant 0 : index
    %54 = vector.load %arg5[%c7_60, %c0_61, %c0_62] : memref<8x128x32xf32, #tpu.memory_space<vmem>>, vector<1x128x32xf32>
    %55 = vector.shape_cast %54 : vector<1x128x32xf32> to vector<128x32xf32>
    %cst_63 = arith.constant dense<0.000000e+00> : vector<4x32xf32>
    %56 = tpu.matmul %53, %55, %cst_63 {dimension_numbers = #tpu.dot_dimension_numbers<[1], [0], [0], [1], [0, 0, 1, 1], [], []>, precision = #tpu.contract_precision<fp32>} : vector<4x128xf32>, vector<128x32xf32>, vector<4x32xf32> -> vector<4x32xf32>
    %57 = arith.addf %52, %56 : vector<4x32xf32>
    %cst_64 = arith.constant 0.000000e+00 : f32
    %58 = vector.broadcast %cst_64 : f32 to vector<4x32xf32>
    %59 = arith.maximumf %57, %58 : vector<4x32xf32>
    %c0_65 = arith.constant 0 : index
    %c0_66 = arith.constant 0 : index
    %60 = vector.load %arg6[%c0_65, %c0_66] : memref<304x32xf32, #tpu.memory_space<vmem>>, vector<304x32xf32>
    %cst_67 = arith.constant dense<0.000000e+00> : vector<304x4xf32>
    %61 = tpu.matmul %60, %59, %cst_67 {dimension_numbers = #tpu.dot_dimension_numbers<[1], [1], [0], [0], [0, 0, 1, 0], [], []>, precision = #tpu.contract_precision<fp32>} : vector<304x32xf32>, vector<4x32xf32>, vector<304x4xf32> -> vector<304x4xf32>
    %c0_68 = arith.constant 0 : index
    %c0_69 = arith.constant 0 : index
    %62 = vector.load %arg7[%c0_68, %c0_69] : memref<304x1xf32, #tpu.memory_space<vmem>>, vector<304x1xf32>
    %63 = vector.broadcast %62 : vector<304x1xf32> to vector<304x4xf32>
    %64 = arith.addf %61, %63 : vector<304x4xf32>
    %65 = vector.extract_strided_slice %64 {offsets = [0, 0], sizes = [150, 4], strides = [1, 1]} : vector<304x4xf32> to vector<150x4xf32>
    %cst_70 = arith.constant 0.000000e+00 : f32
    %66 = vector.broadcast %cst_70 : f32 to vector<150x4xf32>
    %67 = arith.subf %66, %65 : vector<150x4xf32>
    %68 = math.exp %67 : vector<150x4xf32>
    %cst_71 = arith.constant 1.000000e+00 : f32
    %69 = vector.broadcast %cst_71 : f32 to vector<150x4xf32>
    %70 = arith.addf %69, %68 : vector<150x4xf32>
    %cst_72 = arith.constant 1.000000e+00 : f32
    %71 = vector.broadcast %cst_72 : f32 to vector<150x4xf32>
    %72 = arith.divf %71, %70 : vector<150x4xf32>
    %73 = vector.extract_strided_slice %64 {offsets = [152, 0], sizes = [150, 4], strides = [1, 1]} : vector<304x4xf32> to vector<150x4xf32>
    %c0_73 = arith.constant 0 : index
    %c0_74 = arith.constant 0 : index
    %74 = vector.load %arg2[%c0_73, %c0_74] : memref<4x128xf32, #tpu.memory_space<vmem>>, vector<4x128xf32>
    %75 = vector.extract_strided_slice %72 {offsets = [0, 0], sizes = [150, 1], strides = [1, 1]} : vector<150x4xf32> to vector<150x1xf32>
    %76 = vector.extract_strided_slice %73 {offsets = [0, 0], sizes = [150, 1], strides = [1, 1]} : vector<150x4xf32> to vector<150x1xf32>
    %77 = vector.extract_strided_slice %74 {offsets = [0, 0], sizes = [1, 128], strides = [1, 1]} : vector<4x128xf32> to vector<1x128xf32>
    %c0_75 = arith.constant 0 : index
    %c0_76 = arith.constant 0 : index
    %c0_77 = arith.constant 0 : index
    %78 = vector.load %arg1[%c0_75, %c0_76, %c0_77] : memref<4x150x128xf32, #tpu.memory_space<vmem>>, vector<1x150x128xf32>
    %79 = vector.shape_cast %78 : vector<1x150x128xf32> to vector<150x128xf32>
    %80 = vector.broadcast %77 : vector<1x128xf32> to vector<150x128xf32>
    %81 = arith.subf %79, %80 : vector<150x128xf32>
    %82 = vector.broadcast %75 : vector<150x1xf32> to vector<150x128xf32>
    %83 = arith.mulf %82, %81 : vector<150x128xf32>
    %84 = vector.broadcast %77 : vector<1x128xf32> to vector<150x128xf32>
    %85 = vector.broadcast %76 : vector<150x1xf32> to vector<150x128xf32>
    %86 = arith.addf %84, %85 : vector<150x128xf32>
    %87 = arith.addf %83, %86 : vector<150x128xf32>
    %c0_78 = arith.constant 0 : index
    %c0_79 = arith.constant 0 : index
    %c0_80 = arith.constant 0 : index
    %88 = vector.load %arg8[%c0_78, %c0_79, %c0_80] : memref<4x150x128xf32, #tpu.memory_space<vmem>>, vector<1x150x128xf32>
    %89 = vector.shape_cast %88 : vector<1x150x128xf32> to vector<150x128xf32>
    %90 = vector.shape_cast %87 : vector<150x128xf32> to vector<1x150x128xf32>
    tpu.vector_store %arg8[%c0_78, %c0_79, %c0_80], %90 {strides = array<i32>} : memref<4x150x128xf32, #tpu.memory_space<vmem>>, vector<1x150x128xf32>,
    %91 = vector.extract_strided_slice %72 {offsets = [0, 1], sizes = [150, 1], strides = [1, 1]} : vector<150x4xf32> to vector<150x1xf32>
    %92 = vector.extract_strided_slice %73 {offsets = [0, 1], sizes = [150, 1], strides = [1, 1]} : vector<150x4xf32> to vector<150x1xf32>
    %93 = vector.extract_strided_slice %74 {offsets = [1, 0], sizes = [1, 128], strides = [1, 1]} : vector<4x128xf32> to vector<1x128xf32>
    %c1_81 = arith.constant 1 : index
    %c0_82 = arith.constant 0 : index
    %c0_83 = arith.constant 0 : index
    %94 = vector.load %arg1[%c1_81, %c0_82, %c0_83] : memref<4x150x128xf32, #tpu.memory_space<vmem>>, vector<1x150x128xf32>
    %95 = vector.shape_cast %94 : vector<1x150x128xf32> to vector<150x128xf32>
    %96 = vector.broadcast %93 : vector<1x128xf32> to vector<150x128xf32>
    %97 = arith.subf %95, %96 : vector<150x128xf32>
    %98 = vector.broadcast %91 : vector<150x1xf32> to vector<150x128xf32>
    %99 = arith.mulf %98, %97 : vector<150x128xf32>
    %100 = vector.broadcast %93 : vector<1x128xf32> to vector<150x128xf32>
    %101 = vector.broadcast %92 : vector<150x1xf32> to vector<150x128xf32>
    %102 = arith.addf %100, %101 : vector<150x128xf32>
    %103 = arith.addf %99, %102 : vector<150x128xf32>
    %c1_84 = arith.constant 1 : index
    %c0_85 = arith.constant 0 : index
    %c0_86 = arith.constant 0 : index
    %104 = vector.load %arg8[%c1_84, %c0_85, %c0_86] : memref<4x150x128xf32, #tpu.memory_space<vmem>>, vector<1x150x128xf32>
    %105 = vector.shape_cast %104 : vector<1x150x128xf32> to vector<150x128xf32>
    %106 = vector.shape_cast %103 : vector<150x128xf32> to vector<1x150x128xf32>
    tpu.vector_store %arg8[%c1_84, %c0_85, %c0_86], %106 {strides = array<i32>} : memref<4x150x128xf32, #tpu.memory_space<vmem>>, vector<1x150x128xf32>,
    %107 = vector.extract_strided_slice %72 {offsets = [0, 2], sizes = [150, 1], strides = [1, 1]} : vector<150x4xf32> to vector<150x1xf32>
    %108 = vector.extract_strided_slice %73 {offsets = [0, 2], sizes = [150, 1], strides = [1, 1]} : vector<150x4xf32> to vector<150x1xf32>
    %109 = vector.extract_strided_slice %74 {offsets = [2, 0], sizes = [1, 128], strides = [1, 1]} : vector<4x128xf32> to vector<1x128xf32>
    %c2_87 = arith.constant 2 : index
    %c0_88 = arith.constant 0 : index
    %c0_89 = arith.constant 0 : index
    %110 = vector.load %arg1[%c2_87, %c0_88, %c0_89] : memref<4x150x128xf32, #tpu.memory_space<vmem>>, vector<1x150x128xf32>
    %111 = vector.shape_cast %110 : vector<1x150x128xf32> to vector<150x128xf32>
    %112 = vector.broadcast %109 : vector<1x128xf32> to vector<150x128xf32>
    %113 = arith.subf %111, %112 : vector<150x128xf32>
    %114 = vector.broadcast %107 : vector<150x1xf32> to vector<150x128xf32>
    %115 = arith.mulf %114, %113 : vector<150x128xf32>
    %116 = vector.broadcast %109 : vector<1x128xf32> to vector<150x128xf32>
    %117 = vector.broadcast %108 : vector<150x1xf32> to vector<150x128xf32>
    %118 = arith.addf %116, %117 : vector<150x128xf32>
    %119 = arith.addf %115, %118 : vector<150x128xf32>
    %c2_90 = arith.constant 2 : index
    %c0_91 = arith.constant 0 : index
    %c0_92 = arith.constant 0 : index
    %120 = vector.load %arg8[%c2_90, %c0_91, %c0_92] : memref<4x150x128xf32, #tpu.memory_space<vmem>>, vector<1x150x128xf32>
    %121 = vector.shape_cast %120 : vector<1x150x128xf32> to vector<150x128xf32>
    %122 = vector.shape_cast %119 : vector<150x128xf32> to vector<1x150x128xf32>
    tpu.vector_store %arg8[%c2_90, %c0_91, %c0_92], %122 {strides = array<i32>} : memref<4x150x128xf32, #tpu.memory_space<vmem>>, vector<1x150x128xf32>,
    %123 = vector.extract_strided_slice %72 {offsets = [0, 3], sizes = [150, 1], strides = [1, 1]} : vector<150x4xf32> to vector<150x1xf32>
    %124 = vector.extract_strided_slice %73 {offsets = [0, 3], sizes = [150, 1], strides = [1, 1]} : vector<150x4xf32> to vector<150x1xf32>
    %125 = vector.extract_strided_slice %74 {offsets = [3, 0], sizes = [1, 128], strides = [1, 1]} : vector<4x128xf32> to vector<1x128xf32>
    %c3_93 = arith.constant 3 : index
    %c0_94 = arith.constant 0 : index
    %c0_95 = arith.constant 0 : index
    %126 = vector.load %arg1[%c3_93, %c0_94, %c0_95] : memref<4x150x128xf32, #tpu.memory_space<vmem>>, vector<1x150x128xf32>
    %127 = vector.shape_cast %126 : vector<1x150x128xf32> to vector<150x128xf32>
    %128 = vector.broadcast %125 : vector<1x128xf32> to vector<150x128xf32>
    %129 = arith.subf %127, %128 : vector<150x128xf32>
    %130 = vector.broadcast %123 : vector<150x1xf32> to vector<150x128xf32>
    %131 = arith.mulf %130, %129 : vector<150x128xf32>
    %132 = vector.broadcast %125 : vector<1x128xf32> to vector<150x128xf32>
    %133 = vector.broadcast %124 : vector<150x1xf32> to vector<150x128xf32>
    %134 = arith.addf %132, %133 : vector<150x128xf32>
    %135 = arith.addf %131, %134 : vector<150x128xf32>
    %c3_96 = arith.constant 3 : index
    %c0_97 = arith.constant 0 : index
    %c0_98 = arith.constant 0 : index
    %136 = vector.load %arg8[%c3_96, %c0_97, %c0_98] : memref<4x150x128xf32, #tpu.memory_space<vmem>>, vector<1x150x128xf32>
    %137 = vector.shape_cast %136 : vector<1x150x128xf32> to vector<150x128xf32>
    %138 = vector.shape_cast %135 : vector<150x128xf32> to vector<1x150x128xf32>
    tpu.vector_store %arg8[%c3_96, %c0_97, %c0_98], %138 {strides = array<i32>} : memref<4x150x128xf32, #tpu.memory_space<vmem>>, vector<1x150x128xf32>,
    return
  }
  func.func @transform_0(%arg0: i32) -> (i32, i32, i32) {
    %c0_i32 = arith.constant 0 : i32
    %c0_i32_0 = arith.constant 0 : i32
    %c0_i32_1 = arith.constant 0 : i32
    return %arg0, %c0_i32, %c0_i32_0 : i32, i32, i32
  }
  func.func @transform_1(%arg0: i32) -> (i32, i32) {
    %c0_i32 = arith.constant 0 : i32
    %c0_i32_0 = arith.constant 0 : i32
    return %arg0, %c0_i32 : i32, i32
  }
  func.func @transform_2(%arg0: i32) -> (i32, i32) {
    %c0_i32 = arith.constant 0 : i32
    %c0_i32_0 = arith.constant 0 : i32
    return %arg0, %c0_i32 : i32, i32
  }
  func.func @transform_3(%arg0: i32) -> (i32, i32) {
    %c0_i32 = arith.constant 0 : i32
    %c0_i32_0 = arith.constant 0 : i32
    %c0_i32_1 = arith.constant 0 : i32
    return %c0_i32, %c0_i32_0 : i32, i32
  }
  func.func @transform_4(%arg0: i32) -> (i32, i32, i32) {
    %c0_i32 = arith.constant 0 : i32
    %c0_i32_0 = arith.constant 0 : i32
    %c0_i32_1 = arith.constant 0 : i32
    %c0_i32_2 = arith.constant 0 : i32
    return %c0_i32, %c0_i32_0, %c0_i32_1 : i32, i32, i32
  }
  func.func @transform_5(%arg0: i32) -> (i32, i32) {
    %c0_i32 = arith.constant 0 : i32
    %c0_i32_0 = arith.constant 0 : i32
    %c0_i32_1 = arith.constant 0 : i32
    return %c0_i32, %c0_i32_0 : i32, i32
  }
  func.func @transform_6(%arg0: i32) -> (i32, i32) {
    %c0_i32 = arith.constant 0 : i32
    %c0_i32_0 = arith.constant 0 : i32
    %c0_i32_1 = arith.constant 0 : i32
    return %c0_i32, %c0_i32_0 : i32, i32
  }
  func.func @transform_7(%arg0: i32) -> (i32, i32, i32) {
    %c0_i32 = arith.constant 0 : i32
    %c0_i32_0 = arith.constant 0 : i32
    %c0_i32_1 = arith.constant 0 : i32
    return %arg0, %c0_i32, %c0_i32_0 : i32, i32, i32
  }
}

</mosaic_0001>

<llo_original>
// kernel: it_feedforward_updated.1
$region0: #{it_feedforward_updated.1}
  #allocation0 [shape = 'u32[]', space=smem, size = 0x4, offset = 0x4, fixed_abs, tag = 'smem constant byte address 0x4 - core index']
  #allocation1 [shape = 'u32[144,128]{1,0:T(1,128)}', space=vmem, size = 0x12000, scoped, tag = 'internal scratch']
  #allocation2 [shape = 'f32[32,128]{1,0:T(8,128)}', space=vmem, size = 0x4000, scoped, tag = 'scratch operand']
  %s0 = inlined_call_operand.vmem [shape: f32[4,150,128], index: 0, kind: input, shape index: {}]
  %s1 = inlined_call_operand.vmem [shape: f32[4,128], index: 1, kind: input, shape index: {}]
  %s2 = inlined_call_operand.vmem [shape: f32[4,32], index: 2, kind: input, shape index: {}]
  %s3 = inlined_call_operand.vmem [shape: f32[8,150], index: 3, kind: input, shape index: {}]
  %s4 = inlined_call_operand.vmem [shape: f32[8,128,32], index: 4, kind: input, shape index: {}]
  %s5 = inlined_call_operand.vmem [shape: f32[304,32], index: 5, kind: input, shape index: {}]
  %s6 = inlined_call_operand.vmem [shape: f32[304,1], index: 6, kind: input, shape index: {}]
  %s7 = inlined_call_operand.vmem [shape: f32[4,150,128], index: 7, kind: output, shape index: {}]
  %s8 = sld [smem:[#allocation0]]
  $region38: #{it_feedforward_updated.1} parent=0
    _
  %s10 = ssub.s32 1, %s8
  %s11 = scalar_select 0, %s10, %s8
  // Predicated region
  $region2: #{it_feedforward_updated.1} parent=0 // pred_check
    _
  $region3: #{it_feedforward_updated.1} parent=0 // pred_check_branch
    %13 = sbr.rel (0) target = $region5
  $region4: #{it_feedforward_updated.1} parent=0 // pred_region
    _
  $region5: #{it_feedforward_updated.1} parent=0 // pred_fallthru
    _
  // Predicated region
  $region6: #{it_feedforward_updated.1} parent=0 // pred_check
    _
  $region7: #{it_feedforward_updated.1} parent=0 // pred_check_branch
    %15 = sbr.rel (0) target = $region9
  $region8: #{it_feedforward_updated.1} parent=0 // pred_region
    _
  $region9: #{it_feedforward_updated.1} parent=0 // pred_fallthru
    _
  // Predicated region
  $region10: #{it_feedforward_updated.1} parent=0 // pred_check
    _
  $region11: #{it_feedforward_updated.1} parent=0 // pred_check_branch
    %17 = sbr.rel (0) target = $region13
  $region12: #{it_feedforward_updated.1} parent=0 // pred_region
    _
  $region13: #{it_feedforward_updated.1} parent=0 // pred_fallthru
    _
  // Predicated region
  $region14: #{it_feedforward_updated.1} parent=0 // pred_check
    _
  $region15: #{it_feedforward_updated.1} parent=0 // pred_check_branch
    %19 = sbr.rel (0) target = $region17
  $region16: #{it_feedforward_updated.1} parent=0 // pred_region
    _
  $region17: #{it_feedforward_updated.1} parent=0 // pred_fallthru
    _
  // Predicated region
  $region18: #{it_feedforward_updated.1} parent=0 // pred_check
    _
  $region19: #{it_feedforward_updated.1} parent=0 // pred_check_branch
    %21 = sbr.rel (0) target = $region21
  $region20: #{it_feedforward_updated.1} parent=0 // pred_region
    _
  $region21: #{it_feedforward_updated.1} parent=0 // pred_fallthru
    _
  // Predicated region
  $region22: #{it_feedforward_updated.1} parent=0 // pred_check
    _
  $region23: #{it_feedforward_updated.1} parent=0 // pred_check_branch
    %23 = sbr.rel (0) target = $region25
  $region24: #{it_feedforward_updated.1} parent=0 // pred_region
    _
  $region25: #{it_feedforward_updated.1} parent=0 // pred_fallthru
    _
  // Predicated region
  $region26: #{it_feedforward_updated.1} parent=0 // pred_check
    _
  $region27: #{it_feedforward_updated.1} parent=0 // pred_check_branch
    %25 = sbr.rel (0) target = $region29
  $region28: #{it_feedforward_updated.1} parent=0 // pred_region
    _
  $region29: #{it_feedforward_updated.1} parent=0 // pred_fallthru
    _
  %v26 = vld [vmem:[%s3] sm:$0xff]
  %v27 = vld [vmem:[%s3 + $0x8] sm:$0xff]
  %v28 = vld [vmem:[%s0] sm:$0xff]
  %v29 = vld [vmem:[%s0 + $0x8] sm:$0xff]
  %v30 = vld [vmem:[%s0 + $0x10] sm:$0xff]
  %v31 = vld [vmem:[%s0 + $0x18] sm:$0xff]
  %v32 = vld [vmem:[%s0 + $0x20] sm:$0xff]
  %v33 = vld [vmem:[%s0 + $0x28] sm:$0xff]
  %v34 = vld [vmem:[%s0 + $0x30] sm:$0xff]
  %v35 = vld [vmem:[%s0 + $0x38] sm:$0xff]
  %v36 = vld [vmem:[%s0 + $0x40] sm:$0xff]
  %v37 = vld [vmem:[%s0 + $0x48] sm:$0xff]
  %v38 = vld [vmem:[%s0 + $0x50] sm:$0xff]
  %v39 = vld [vmem:[%s0 + $0x58] sm:$0xff]
  %v40 = vld [vmem:[%s0 + $0x60] sm:$0xff]
  %v41 = vld [vmem:[%s0 + $0x68] sm:$0xff]
  %v42 = vld [vmem:[%s0 + $0x70] sm:$0xff]
  %v43 = vld [vmem:[%s0 + $0x78] sm:$0xff]
  %v44 = vld [vmem:[%s0 + $0x80] sm:$0xff]
  %v45 = vld [vmem:[%s0 + $0x88] sm:$0xff]
  %v46 = vld [vmem:[%s0 + $0x90] sm:$0x3f]
  %vm47 = vcmask 179200
  %v49 = vsel %vm47, %v27, 0
  %vm51 = vcmask 1045504
  %v53 = vsel %vm51, %v46, 0
  %55 = vmatprep.subr.mxu0 0.0
  %v56 = vand.u32 %v28, 4294901760
  %57 = vmatpush1.msra.mxu0 %v56
  %58 = vmatprep.subr.mxu0 0.0
  %v59 = vand.u32 %v29, 4294901760
  %60 = vmatpush1.msra.mxu0 %v59
  %61 = vmatprep.subr.mxu0 0.0
  %v62 = vand.u32 %v30, 4294901760
  %63 = vmatpush1.msra.mxu0 %v62
  %64 = vmatprep.subr.mxu0 0.0
  %v65 = vand.u32 %v31, 4294901760
  %66 = vmatpush1.msra.mxu0 %v65
  %67 = vmatprep.subr.mxu0 0.0
  %v68 = vand.u32 %v32, 4294901760
  %69 = vmatpush1.msra.mxu0 %v68
  %70 = vmatprep.subr.mxu0 0.0
  %v71 = vand.u32 %v33, 4294901760
  %72 = vmatpush1.msra.mxu0 %v71
  %73 = vmatprep.subr.mxu0 0.0
  %v74 = vand.u32 %v34, 4294901760
  %75 = vmatpush1.msra.mxu0 %v74
  %76 = vmatprep.subr.mxu0 0.0
  %v77 = vand.u32 %v35, 4294901760
  %78 = vmatpush1.msra.mxu0 %v77
  %79 = vmatprep.subr.mxu0 0.0
  %v80 = vand.u32 %v36, 4294901760
  %81 = vmatpush1.msra.mxu0 %v80
  %82 = vmatprep.subr.mxu0 0.0
  %v83 = vand.u32 %v37, 4294901760
  %84 = vmatpush1.msra.mxu0 %v83
  %85 = vmatprep.subr.mxu0 0.0
  %v86 = vand.u32 %v38, 4294901760
  %87 = vmatpush1.msra.mxu0 %v86
  %88 = vmatprep.subr.mxu0 0.0
  %v89 = vand.u32 %v39, 4294901760
  %90 = vmatpush1.msra.mxu0 %v89
  %91 = vmatprep.subr.mxu0 0.0
  %v92 = vand.u32 %v40, 4294901760
  %93 = vmatpush1.msra.mxu0 %v92
  %94 = vmatprep.subr.mxu0 0.0
  %v95 = vand.u32 %v41, 4294901760
  %96 = vmatpush1.msra.mxu0 %v95
  %97 = vmatprep.subr.mxu0 0.0
  %v98 = vand.u32 %v42, 4294901760
  %99 = vmatpush1.msra.mxu0 %v98
  %100 = vmatprep.subr.mxu0 0.0
  %v101 = vand.u32 %v43, 4294901760
  %102 = vmatpush1.msra.mxu0 %v101
  %103 = vmatprep.subr.mxu0 0.0
  %v104 = vand.u32 %v44, 4294901760
  %105 = vmatpush1.msra.mxu0 %v104
  %106 = vmatprep.subr.mxu0 0.0
  %v107 = vand.u32 %v45, 4294901760
  %108 = vmatpush1.msra.mxu0 %v107
  %109 = vmatprep.subr.mxu0 0.0
  %v110 = vand.u32 %v53, 4294901760
  %111 = vmatpush1.msra.mxu0 %v110
  %112 = vmatprep.subr.mxu0 0.0
  %113 = vmatpush1.msra.mxu0 0.0
  %114 = vmatprep.subr.mxu0 0.0
  %115 = vmatpush1.msra.mxu0 0.0
  %116 = vmatprep.subr.mxu0 0.0
  %117 = vmatpush1.msra.mxu0 0.0
  %118 = vmatprep.subr.mxu0 0.0
  %119 = vmatpush1.msra.mxu0 0.0
  %120 = vmatprep.subr.mxu0 0.0
  %121 = vmatpush1.msra.mxu0 0.0
  %122 = vmatprep.subr.mxu0 0.0
  %123 = vmatpush1.msra.mxu0 0.0
  %124 = vmatprep.subr.mxu0 0.0
  %125 = vmatpush1.msra.mxu0 0.0
  %126 = vmatprep.subr.mxu0 0.0
  %127 = vmatpush1.msra.mxu0 0.0
  %128 = vmatprep.subr.mxu0 0.0
  %129 = vmatpush1.msra.mxu0 0.0
  %130 = vmatprep.subr.mxu0 0.0
  %131 = vmatpush1.msra.mxu0 0.0
  %132 = vmatprep.subr.mxu0 0.0
  %133 = vmatpush1.msra.mxu0 0.0
  %134 = vmatprep.subr.mxu0 0.0
  %135 = vmatpush1.msra.mxu0 0.0
  %136 = vmatprep.subr.mxu0 0.0
  %137 = vmatpush1.msra.mxu0 0.0
  %v138 = vand.u32 %v49, 4294901760
  %v139 = vsub.f32 %v49, %v138
  %v140 = vand.u32 %v139, 4294901760
  %v141 = vsub.f32 %v139, %v140
  %v142 = vand.u32 %v141, 4294901760
  %143 = vmatprep.mubr.f32.mxu0 %v142
  %v144 = vand.u32 %v26, 4294901760
  %v145 = vsub.f32 %v26, %v144
  %v146 = vand.u32 %v145, 4294901760
  %v147 = vsub.f32 %v145, %v146
  %v148 = vand.u32 %v147, 4294901760
  %149 = vmatmul.mubr.f32.gmra.mrb[0].mxu0 %v148
  %v150 = vpop.f32.mrb[0].mxu0
  %v151 = vadd.f32 0.0, %v150
  %v152 = vpop.f32.mrb[0].mxu0
  %153 = vdwg.mxu0
  %154 = vmatprep.subr.mxu0 0.0
  %v155 = vand.u32 %v28, 4294901760
  %v156 = vsub.f32 %v28, %v155
  %v157 = vand.u32 %v156, 4294901760
  %v158 = vsub.f32 %v156, %v157
  %v159 = vand.u32 %v158, 4294901760
  %160 = vmatpush1.msra.mxu0 %v159
  %161 = vmatprep.subr.mxu0 0.0
  %v162 = vand.u32 %v29, 4294901760
  %v163 = vsub.f32 %v29, %v162
  %v164 = vand.u32 %v163, 4294901760
  %v165 = vsub.f32 %v163, %v164
  %v166 = vand.u32 %v165, 4294901760
  %167 = vmatpush1.msra.mxu0 %v166
  %168 = vmatprep.subr.mxu0 0.0
  %v169 = vand.u32 %v30, 4294901760
  %v170 = vsub.f32 %v30, %v169
  %v171 = vand.u32 %v170, 4294901760
  %v172 = vsub.f32 %v170, %v171
  %v173 = vand.u32 %v172, 4294901760
  %174 = vmatpush1.msra.mxu0 %v173
  %175 = vmatprep.subr.mxu0 0.0
  %v176 = vand.u32 %v31, 4294901760
  %v177 = vsub.f32 %v31, %v176
  %v178 = vand.u32 %v177, 4294901760
  %v179 = vsub.f32 %v177, %v178
  %v180 = vand.u32 %v179, 4294901760
  %181 = vmatpush1.msra.mxu0 %v180
  %182 = vmatprep.subr.mxu0 0.0
  %v183 = vand.u32 %v32, 4294901760
  %v184 = vsub.f32 %v32, %v183
  %v185 = vand.u32 %v184, 4294901760
  %v186 = vsub.f32 %v184, %v185
  %v187 = vand.u32 %v186, 4294901760
  %188 = vmatpush1.msra.mxu0 %v187
  %189 = vmatprep.subr.mxu0 0.0
  %v190 = vand.u32 %v33, 4294901760
  %v191 = vsub.f32 %v33, %v190
  %v192 = vand.u32 %v191, 4294901760
  %v193 = vsub.f32 %v191, %v192
  %v194 = vand.u32 %v193, 4294901760
  %195 = vmatpush1.msra.mxu0 %v194
  %196 = vmatprep.subr.mxu0 0.0
  %v197 = vand.u32 %v34, 4294901760
  %v198 = vsub.f32 %v34, %v197
  %v199 = vand.u32 %v198, 4294901760
  %v200 = vsub.f32 %v198, %v199
  %v201 = vand.u32 %v200, 4294901760
  %202 = vmatpush1.msra.mxu0 %v201
  %203 = vmatprep.subr.mxu0 0.0
  %v204 = vand.u32 %v35, 4294901760
  %v205 = vsub.f32 %v35, %v204
  %v206 = vand.u32 %v205, 4294901760
  %v207 = vsub.f32 %v205, %v206
  %v208 = vand.u32 %v207, 4294901760
  %209 = vmatpush1.msra.mxu0 %v208
  %210 = vmatprep.subr.mxu0 0.0
  %v211 = vand.u32 %v36, 4294901760
  %v212 = vsub.f32 %v36, %v211
  %v213 = vand.u32 %v212, 4294901760
  %v214 = vsub.f32 %v212, %v213
  %v215 = vand.u32 %v214, 4294901760
  %216 = vmatpush1.msra.mxu0 %v215
  %217 = vmatprep.subr.mxu0 0.0
  %v218 = vand.u32 %v37, 4294901760
  %v219 = vsub.f32 %v37, %v218
  %v220 = vand.u32 %v219, 4294901760
  %v221 = vsub.f32 %v219, %v220
  %v222 = vand.u32 %v221, 4294901760
  %223 = vmatpush1.msra.mxu0 %v222
  %224 = vmatprep.subr.mxu0 0.0
  %v225 = vand.u32 %v38, 4294901760
  %v226 = vsub.f32 %v38, %v225
  %v227 = vand.u32 %v226, 4294901760
  %v228 = vsub.f32 %v226, %v227
  %v229 = vand.u32 %v228, 4294901760
  %230 = vmatpush1.msra.mxu0 %v229
  %231 = vmatprep.subr.mxu0 0.0
  %v232 = vand.u32 %v39, 4294901760
  %v233 = vsub.f32 %v39, %v232
  %v234 = vand.u32 %v233, 4294901760
  %v235 = vsub.f32 %v233, %v234
  %v236 = vand.u32 %v235, 4294901760
  %237 = vmatpush1.msra.mxu0 %v236
  %238 = vmatprep.subr.mxu0 0.0
  %v239 = vand.u32 %v40, 4294901760
  %v240 = vsub.f32 %v40, %v239
  %v241 = vand.u32 %v240, 4294901760
  %v242 = vsub.f32 %v240, %v241
  %v243 = vand.u32 %v242, 4294901760
  %244 = vmatpush1.msra.mxu0 %v243
  %245 = vmatprep.subr.mxu0 0.0
  %v246 = vand.u32 %v41, 4294901760
  %v247 = vsub.f32 %v41, %v246
  %v248 = vand.u32 %v247, 4294901760
  %v249 = vsub.f32 %v247, %v248
  %v250 = vand.u32 %v249, 4294901760
  %251 = vmatpush1.msra.mxu0 %v250
  %252 = vmatprep.subr.mxu0 0.0
  %v253 = vand.u32 %v42, 4294901760
  %v254 = vsub.f32 %v42, %v253
  %v255 = vand.u32 %v254, 4294901760
  %v256 = vsub.f32 %v254, %v255
  %v257 = vand.u32 %v256, 4294901760
  %258 = vmatpush1.msra.mxu0 %v257
  %259 = vmatprep.subr.mxu0 0.0
  %v260 = vand.u32 %v43, 4294901760
  %v261 = vsub.f32 %v43, %v260
  %v262 = vand.u32 %v261, 4294901760
  %v263 = vsub.f32 %v261, %v262
  %v264 = vand.u32 %v263, 4294901760
  %265 = vmatpush1.msra.mxu0 %v264
  %266 = vmatprep.subr.mxu0 0.0
  %v267 = vand.u32 %v44, 4294901760
  %v268 = vsub.f32 %v44, %v267
  %v269 = vand.u32 %v268, 4294901760
  %v270 = vsub.f32 %v268, %v269
  %v271 = vand.u32 %v270, 4294901760
  %272 = vmatpush1.msra.mxu0 %v271
  %273 = vmatprep.subr.mxu0 0.0
  %v274 = vand.u32 %v45, 4294901760
  %v275 = vsub.f32 %v45, %v274
  %v276 = vand.u32 %v275, 4294901760
  %v277 = vsub.f32 %v275, %v276
  %v278 = vand.u32 %v277, 4294901760
  %279 = vmatpush1.msra.mxu0 %v278
  %280 = vmatprep.subr.mxu0 0.0
  %v281 = vand.u32 %v53, 4294901760
  %v282 = vsub.f32 %v53, %v281
  %v283 = vand.u32 %v282, 4294901760
  %v284 = vsub.f32 %v282, %v283
  %v285 = vand.u32 %v284, 4294901760
  %286 = vmatpush1.msra.mxu0 %v285
  %287 = vmatprep.subr.mxu0 0.0
  %288 = vmatpush1.msra.mxu0 0.0
  %289 = vmatprep.subr.mxu0 0.0
  %290 = vmatpush1.msra.mxu0 0.0
  %291 = vmatprep.subr.mxu0 0.0
  %292 = vmatpush1.msra.mxu0 0.0
  %293 = vmatprep.subr.mxu0 0.0
  %294 = vmatpush1.msra.mxu0 0.0
  %295 = vmatprep.subr.mxu0 0.0
  %296 = vmatpush1.msra.mxu0 0.0
  %297 = vmatprep.subr.mxu0 0.0
  %298 = vmatpush1.msra.mxu0 0.0
  %299 = vmatprep.subr.mxu0 0.0
  %300 = vmatpush1.msra.mxu0 0.0
  %301 = vmatprep.subr.mxu0 0.0
  %302 = vmatpush1.msra.mxu0 0.0
  %303 = vmatprep.subr.mxu0 0.0
  %304 = vmatpush1.msra.mxu0 0.0
  %305 = vmatprep.subr.mxu0 0.0
  %306 = vmatpush1.msra.mxu0 0.0
  %307 = vmatprep.subr.mxu0 0.0
  %308 = vmatpush1.msra.mxu0 0.0
  %309 = vmatprep.subr.mxu0 0.0
  %310 = vmatpush1.msra.mxu0 0.0
  %311 = vmatprep.subr.mxu0 0.0
  %312 = vmatpush1.msra.mxu0 0.0
  %v313 = vand.u32 %v49, 4294901760
  %314 = vmatprep.mubr.f32.mxu0 %v313
  %v315 = vand.u32 %v26, 4294901760
  %316 = vmatmul.mubr.f32.gmra.mrb[0].mxu0 %v315
  %v317 = vpop.f32.mrb[0].mxu0
  %v318 = vadd.f32 %v151, %v317
  %v319 = vpop.f32.mrb[0].mxu0
  %320 = vdwg.mxu0
  %321 = vmatprep.subr.mxu0 0.0
  %v322 = vand.u32 %v28, 4294901760
  %v323 = vsub.f32 %v28, %v322
  %324 = vmatpush1.msra.mxu0 %v323
  %325 = vmatprep.subr.mxu0 0.0
  %v326 = vand.u32 %v29, 4294901760
  %v327 = vsub.f32 %v29, %v326
  %328 = vmatpush1.msra.mxu0 %v327
  %329 = vmatprep.subr.mxu0 0.0
  %v330 = vand.u32 %v30, 4294901760
  %v331 = vsub.f32 %v30, %v330
  %332 = vmatpush1.msra.mxu0 %v331
  %333 = vmatprep.subr.mxu0 0.0
  %v334 = vand.u32 %v31, 4294901760
  %v335 = vsub.f32 %v31, %v334
  %336 = vmatpush1.msra.mxu0 %v335
  %337 = vmatprep.subr.mxu0 0.0
  %v338 = vand.u32 %v32, 4294901760
  %v339 = vsub.f32 %v32, %v338
  %340 = vmatpush1.msra.mxu0 %v339
  %341 = vmatprep.subr.mxu0 0.0
  %v342 = vand.u32 %v33, 4294901760
  %v343 = vsub.f32 %v33, %v342
  %344 = vmatpush1.msra.mxu0 %v343
  %345 = vmatprep.subr.mxu0 0.0
  %v346 = vand.u32 %v34, 4294901760
  %v347 = vsub.f32 %v34, %v346
  %348 = vmatpush1.msra.mxu0 %v347
  %349 = vmatprep.subr.mxu0 0.0
  %v350 = vand.u32 %v35, 4294901760
  %v351 = vsub.f32 %v35, %v350
  %352 = vmatpush1.msra.mxu0 %v351
  %353 = vmatprep.subr.mxu0 0.0
  %v354 = vand.u32 %v36, 4294901760
  %v355 = vsub.f32 %v36, %v354
  %356 = vmatpush1.msra.mxu0 %v355
  %357 = vmatprep.subr.mxu0 0.0
  %v358 = vand.u32 %v37, 4294901760
  %v359 = vsub.f32 %v37, %v358
  %360 = vmatpush1.msra.mxu0 %v359
  %361 = vmatprep.subr.mxu0 0.0
  %v362 = vand.u32 %v38, 4294901760
  %v363 = vsub.f32 %v38, %v362
  %364 = vmatpush1.msra.mxu0 %v363
  %365 = vmatprep.subr.mxu0 0.0
  %v366 = vand.u32 %v39, 4294901760
  %v367 = vsub.f32 %v39, %v366
  %368 = vmatpush1.msra.mxu0 %v367
  %369 = vmatprep.subr.mxu0 0.0
  %v370 = vand.u32 %v40, 4294901760
  %v371 = vsub.f32 %v40, %v370
  %372 = vmatpush1.msra.mxu0 %v371
  %373 = vmatprep.subr.mxu0 0.0
  %v374 = vand.u32 %v41, 4294901760
  %v375 = vsub.f32 %v41, %v374
  %376 = vmatpush1.msra.mxu0 %v375
  %377 = vmatprep.subr.mxu0 0.0
  %v378 = vand.u32 %v42, 4294901760
  %v379 = vsub.f32 %v42, %v378
  %380 = vmatpush1.msra.mxu0 %v379
  %381 = vmatprep.subr.mxu0 0.0
  %v382 = vand.u32 %v43, 4294901760
  %v383 = vsub.f32 %v43, %v382
  %384 = vmatpush1.msra.mxu0 %v383
  %385 = vmatprep.subr.mxu0 0.0
  %v386 = vand.u32 %v44, 4294901760
  %v387 = vsub.f32 %v44, %v386
  %388 = vmatpush1.msra.mxu0 %v387
  %389 = vmatprep.subr.mxu0 0.0
  %v390 = vand.u32 %v45, 4294901760
  %v391 = vsub.f32 %v45, %v390
  %392 = vmatpush1.msra.mxu0 %v391
  %393 = vmatprep.subr.mxu0 0.0
  %v394 = vand.u32 %v53, 4294901760
  %v395 = vsub.f32 %v53, %v394
  %396 = vmatpush1.msra.mxu0 %v395
  %397 = vmatprep.subr.mxu0 0.0
  %398 = vmatpush1.msra.mxu0 0.0
  %399 = vmatprep.subr.mxu0 0.0
  %400 = vmatpush1.msra.mxu0 0.0
  %401 = vmatprep.subr.mxu0 0.0
  %402 = vmatpush1.msra.mxu0 0.0
  %403 = vmatprep.subr.mxu0 0.0
  %404 = vmatpush1.msra.mxu0 0.0
  %405 = vmatprep.subr.mxu0 0.0
  %406 = vmatpush1.msra.mxu0 0.0
  %407 = vmatprep.subr.mxu0 0.0
  %408 = vmatpush1.msra.mxu0 0.0
  %409 = vmatprep.subr.mxu0 0.0
  %410 = vmatpush1.msra.mxu0 0.0
  %411 = vmatprep.subr.mxu0 0.0
  %412 = vmatpush1.msra.mxu0 0.0
  %413 = vmatprep.subr.mxu0 0.0
  %414 = vmatpush1.msra.mxu0 0.0
  %415 = vmatprep.subr.mxu0 0.0
  %416 = vmatpush1.msra.mxu0 0.0
  %417 = vmatprep.subr.mxu0 0.0
  %418 = vmatpush1.msra.mxu0 0.0
  %419 = vmatprep.subr.mxu0 0.0
  %420 = vmatpush1.msra.mxu0 0.0
  %421 = vmatprep.subr.mxu0 0.0
  %422 = vmatpush1.msra.mxu0 0.0
  %v423 = vand.u32 %v49, 4294901760
  %v424 = vsub.f32 %v49, %v423
  %425 = vmatprep.mubr.f32.mxu0 %v424
  %v426 = vand.u32 %v26, 4294901760
  %v427 = vsub.f32 %v26, %v426
  %428 = vmatmul.mubr.f32.gmra.mrb[0].mxu0 %v427
  %v429 = vpop.f32.mrb[0].mxu0
  %v430 = vadd.f32 %v318, %v429
  %v431 = vpop.f32.mrb[0].mxu0
  %432 = vdwg.mxu0
  %433 = vmatprep.subr.mxu0 0.0
  %v434 = vand.u32 %v28, 4294901760
  %435 = vmatpush1.msra.mxu0 %v434
  %436 = vmatprep.subr.mxu0 0.0
  %v437 = vand.u32 %v29, 4294901760
  %438 = vmatpush1.msra.mxu0 %v437
  %439 = vmatprep.subr.mxu0 0.0
  %v440 = vand.u32 %v30, 4294901760
  %441 = vmatpush1.msra.mxu0 %v440
  %442 = vmatprep.subr.mxu0 0.0
  %v443 = vand.u32 %v31, 4294901760
  %444 = vmatpush1.msra.mxu0 %v443
  %445 = vmatprep.subr.mxu0 0.0
  %v446 = vand.u32 %v32, 4294901760
  %447 = vmatpush1.msra.mxu0 %v446
  %448 = vmatprep.subr.mxu0 0.0
  %v449 = vand.u32 %v33, 4294901760
  %450 = vmatpush1.msra.mxu0 %v449
  %451 = vmatprep.subr.mxu0 0.0
  %v452 = vand.u32 %v34, 4294901760
  %453 = vmatpush1.msra.mxu0 %v452
  %454 = vmatprep.subr.mxu0 0.0
  %v455 = vand.u32 %v35, 4294901760
  %456 = vmatpush1.msra.mxu0 %v455
  %457 = vmatprep.subr.mxu0 0.0
  %v458 = vand.u32 %v36, 4294901760
  %459 = vmatpush1.msra.mxu0 %v458
  %460 = vmatprep.subr.mxu0 0.0
  %v461 = vand.u32 %v37, 4294901760
  %462 = vmatpush1.msra.mxu0 %v461
  %463 = vmatprep.subr.mxu0 0.0
  %v464 = vand.u32 %v38, 4294901760
  %465 = vmatpush1.msra.mxu0 %v464
  %466 = vmatprep.subr.mxu0 0.0
  %v467 = vand.u32 %v39, 4294901760
  %468 = vmatpush1.msra.mxu0 %v467
  %469 = vmatprep.subr.mxu0 0.0
  %v470 = vand.u32 %v40, 4294901760
  %471 = vmatpush1.msra.mxu0 %v470
  %472 = vmatprep.subr.mxu0 0.0
  %v473 = vand.u32 %v41, 4294901760
  %474 = vmatpush1.msra.mxu0 %v473
  %475 = vmatprep.subr.mxu0 0.0
  %v476 = vand.u32 %v42, 4294901760
  %477 = vmatpush1.msra.mxu0 %v476
  %478 = vmatprep.subr.mxu0 0.0
  %v479 = vand.u32 %v43, 4294901760
  %480 = vmatpush1.msra.mxu0 %v479
  %481 = vmatprep.subr.mxu0 0.0
  %v482 = vand.u32 %v44, 4294901760
  %483 = vmatpush1.msra.mxu0 %v482
  %484 = vmatprep.subr.mxu0 0.0
  %v485 = vand.u32 %v45, 4294901760
  %486 = vmatpush1.msra.mxu0 %v485
  %487 = vmatprep.subr.mxu0 0.0
  %v488 = vand.u32 %v53, 4294901760
  %489 = vmatpush1.msra.mxu0 %v488
  %490 = vmatprep.subr.mxu0 0.0
  %491 = vmatpush1.msra.mxu0 0.0
  %492 = vmatprep.subr.mxu0 0.0
  %493 = vmatpush1.msra.mxu0 0.0
  %494 = vmatprep.subr.mxu0 0.0
  %495 = vmatpush1.msra.mxu0 0.0
  %496 = vmatprep.subr.mxu0 0.0
  %497 = vmatpush1.msra.mxu0 0.0
  %498 = vmatprep.subr.mxu0 0.0
  %499 = vmatpush1.msra.mxu0 0.0
  %500 = vmatprep.subr.mxu0 0.0
  %501 = vmatpush1.msra.mxu0 0.0
  %502 = vmatprep.subr.mxu0 0.0
  %503 = vmatpush1.msra.mxu0 0.0
  %504 = vmatprep.subr.mxu0 0.0
  %505 = vmatpush1.msra.mxu0 0.0
  %506 = vmatprep.subr.mxu0 0.0
  %507 = vmatpush1.msra.mxu0 0.0
  %508 = vmatprep.subr.mxu0 0.0
  %509 = vmatpush1.msra.mxu0 0.0
  %510 = vmatprep.subr.mxu0 0.0
  %511 = vmatpush1.msra.mxu0 0.0
  %512 = vmatprep.subr.mxu0 0.0
  %513 = vmatpush1.msra.mxu0 0.0
  %514 = vmatprep.subr.mxu0 0.0
  %515 = vmatpush1.msra.mxu0 0.0
  %v516 = vand.u32 %v49, 4294901760
  %v517 = vsub.f32 %v49, %v516
  %v518 = vand.u32 %v517, 4294901760
  %519 = vmatprep.mubr.f32.mxu0 %v518
  %v520 = vand.u32 %v26, 4294901760
  %v521 = vsub.f32 %v26, %v520
  %v522 = vand.u32 %v521, 4294901760
  %523 = vmatmul.mubr.f32.gmra.mrb[0].mxu0 %v522
  %v524 = vpop.f32.mrb[0].mxu0
  %v525 = vadd.f32 %v430, %v524
  %v526 = vpop.f32.mrb[0].mxu0
  %527 = vdwg.mxu0
  %528 = vmatprep.subr.mxu0 0.0
  %v529 = vand.u32 %v28, 4294901760
  %v530 = vsub.f32 %v28, %v529
  %v531 = vand.u32 %v530, 4294901760
  %532 = vmatpush1.msra.mxu0 %v531
  %533 = vmatprep.subr.mxu0 0.0
  %v534 = vand.u32 %v29, 4294901760
  %v535 = vsub.f32 %v29, %v534
  %v536 = vand.u32 %v535, 4294901760
  %537 = vmatpush1.msra.mxu0 %v536
  %538 = vmatprep.subr.mxu0 0.0
  %v539 = vand.u32 %v30, 4294901760
  %v540 = vsub.f32 %v30, %v539
  %v541 = vand.u32 %v540, 4294901760
  %542 = vmatpush1.msra.mxu0 %v541
  %543 = vmatprep.subr.mxu0 0.0
  %v544 = vand.u32 %v31, 4294901760
  %v545 = vsub.f32 %v31, %v544
  %v546 = vand.u32 %v545, 4294901760
  %547 = vmatpush1.msra.mxu0 %v546
  %548 = vmatprep.subr.mxu0 0.0
  %v549 = vand.u32 %v32, 4294901760
  %v550 = vsub.f32 %v32, %v549
  %v551 = vand.u32 %v550, 4294901760
  %552 = vmatpush1.msra.mxu0 %v551
  %553 = vmatprep.subr.mxu0 0.0
  %v554 = vand.u32 %v33, 4294901760
  %v555 = vsub.f32 %v33, %v554
  %v556 = vand.u32 %v555, 4294901760
  %557 = vmatpush1.msra.mxu0 %v556
  %558 = vmatprep.subr.mxu0 0.0
  %v559 = vand.u32 %v34, 4294901760
  %v560 = vsub.f32 %v34, %v559
  %v561 = vand.u32 %v560, 4294901760
  %562 = vmatpush1.msra.mxu0 %v561
  %563 = vmatprep.subr.mxu0 0.0
  %v564 = vand.u32 %v35, 4294901760
  %v565 = vsub.f32 %v35, %v564
  %v566 = vand.u32 %v565, 4294901760
  %567 = vmatpush1.msra.mxu0 %v566
  %568 = vmatprep.subr.mxu0 0.0
  %v569 = vand.u32 %v36, 4294901760
  %v570 = vsub.f32 %v36, %v569
  %v571 = vand.u32 %v570, 4294901760
  %572 = vmatpush1.msra.mxu0 %v571
  %573 = vmatprep.subr.mxu0 0.0
  %v574 = vand.u32 %v37, 4294901760
  %v575 = vsub.f32 %v37, %v574
  %v576 = vand.u32 %v575, 4294901760
  %577 = vmatpush1.msra.mxu0 %v576
  %578 = vmatprep.subr.mxu0 0.0
  %v579 = vand.u32 %v38, 4294901760
  %v580 = vsub.f32 %v38, %v579
  %v581 = vand.u32 %v580, 4294901760
  %582 = vmatpush1.msra.mxu0 %v581
  %583 = vmatprep.subr.mxu0 0.0
  %v584 = vand.u32 %v39, 4294901760
  %v585 = vsub.f32 %v39, %v584
  %v586 = vand.u32 %v585, 4294901760
  %587 = vmatpush1.msra.mxu0 %v586
  %588 = vmatprep.subr.mxu0 0.0
  %v589 = vand.u32 %v40, 4294901760
  %v590 = vsub.f32 %v40, %v589
  %v591 = vand.u32 %v590, 4294901760
  %592 = vmatpush1.msra.mxu0 %v591
  %593 = vmatprep.subr.mxu0 0.0
  %v594 = vand.u32 %v41, 4294901760
  %v595 = vsub.f32 %v41, %v594
  %v596 = vand.u32 %v595, 4294901760
  %597 = vmatpush1.msra.mxu0 %v596
  %598 = vmatprep.subr.mxu0 0.0
  %v599 = vand.u32 %v42, 4294901760
  %v600 = vsub.f32 %v42, %v599
  %v601 = vand.u32 %v600, 4294901760
  %602 = vmatpush1.msra.mxu0 %v601
  %603 = vmatprep.subr.mxu0 0.0
  %v604 = vand.u32 %v43, 4294901760
  %v605 = vsub.f32 %v43, %v604
  %v606 = vand.u32 %v605, 4294901760
  %607 = vmatpush1.msra.mxu0 %v606
  %608 = vmatprep.subr.mxu0 0.0
  %v609 = vand.u32 %v44, 4294901760
  %v610 = vsub.f32 %v44, %v609
  %v611 = vand.u32 %v610, 4294901760
  %612 = vmatpush1.msra.mxu0 %v611
  %613 = vmatprep.subr.mxu0 0.0
  %v614 = vand.u32 %v45, 4294901760
  %v615 = vsub.f32 %v45, %v614
  %v616 = vand.u32 %v615, 4294901760
  %617 = vmatpush1.msra.mxu0 %v616
  %618 = vmatprep.subr.mxu0 0.0
  %v619 = vand.u32 %v53, 4294901760
  %v620 = vsub.f32 %v53, %v619
  %v621 = vand.u32 %v620, 4294901760
  %622 = vmatpush1.msra.mxu0 %v621
  %623 = vmatprep.subr.mxu0 0.0
  %624 = vmatpush1.msra.mxu0 0.0
  %625 = vmatprep.subr.mxu0 0.0
  %626 = vmatpush1.msra.mxu0 0.0
  %627 = vmatprep.subr.mxu0 0.0
  %628 = vmatpush1.msra.mxu0 0.0
  %629 = vmatprep.subr.mxu0 0.0
  %630 = vmatpush1.msra.mxu0 0.0
  %631 = vmatprep.subr.mxu0 0.0
  %632 = vmatpush1.msra.mxu0 0.0
  %633 = vmatprep.subr.mxu0 0.0
  %634 = vmatpush1.msra.mxu0 0.0
  %635 = vmatprep.subr.mxu0 0.0
  %636 = vmatpush1.msra.mxu0 0.0
  %637 = vmatprep.subr.mxu0 0.0
  %638 = vmatpush1.msra.mxu0 0.0
  %639 = vmatprep.subr.mxu0 0.0
  %640 = vmatpush1.msra.mxu0 0.0
  %641 = vmatprep.subr.mxu0 0.0
  %642 = vmatpush1.msra.mxu0 0.0
  %643 = vmatprep.subr.mxu0 0.0
  %644 = vmatpush1.msra.mxu0 0.0
  %645 = vmatprep.subr.mxu0 0.0
  %646 = vmatpush1.msra.mxu0 0.0
  %647 = vmatprep.subr.mxu0 0.0
  %648 = vmatpush1.msra.mxu0 0.0
  %v649 = vand.u32 %v49, 4294901760
  %650 = vmatprep.mubr.f32.mxu0 %v649
  %v651 = vand.u32 %v26, 4294901760
  %652 = vmatmul.mubr.f32.gmra.mrb[0].mxu0 %v651
  %v653 = vpop.f32.mrb[0].mxu0
  %v654 = vadd.f32 %v525, %v653
  %v655 = vpop.f32.mrb[0].mxu0
  %656 = vdwg.mxu0
  %657 = vmatprep.subr.mxu0 0.0
  %v658 = vand.u32 %v28, 4294901760
  %659 = vmatpush1.msra.mxu0 %v658
  %660 = vmatprep.subr.mxu0 0.0
  %v661 = vand.u32 %v29, 4294901760
  %662 = vmatpush1.msra.mxu0 %v661
  %663 = vmatprep.subr.mxu0 0.0
  %v664 = vand.u32 %v30, 4294901760
  %665 = vmatpush1.msra.mxu0 %v664
  %666 = vmatprep.subr.mxu0 0.0
  %v667 = vand.u32 %v31, 4294901760
  %668 = vmatpush1.msra.mxu0 %v667
  %669 = vmatprep.subr.mxu0 0.0
  %v670 = vand.u32 %v32, 4294901760
  %671 = vmatpush1.msra.mxu0 %v670
  %672 = vmatprep.subr.mxu0 0.0
  %v673 = vand.u32 %v33, 4294901760
  %674 = vmatpush1.msra.mxu0 %v673
  %675 = vmatprep.subr.mxu0 0.0
  %v676 = vand.u32 %v34, 4294901760
  %677 = vmatpush1.msra.mxu0 %v676
  %678 = vmatprep.subr.mxu0 0.0
  %v679 = vand.u32 %v35, 4294901760
  %680 = vmatpush1.msra.mxu0 %v679
  %681 = vmatprep.subr.mxu0 0.0
  %v682 = vand.u32 %v36, 4294901760
  %683 = vmatpush1.msra.mxu0 %v682
  %684 = vmatprep.subr.mxu0 0.0
  %v685 = vand.u32 %v37, 4294901760
  %686 = vmatpush1.msra.mxu0 %v685
  %687 = vmatprep.subr.mxu0 0.0
  %v688 = vand.u32 %v38, 4294901760
  %689 = vmatpush1.msra.mxu0 %v688
  %690 = vmatprep.subr.mxu0 0.0
  %v691 = vand.u32 %v39, 4294901760
  %692 = vmatpush1.msra.mxu0 %v691
  %693 = vmatprep.subr.mxu0 0.0
  %v694 = vand.u32 %v40, 4294901760
  %695 = vmatpush1.msra.mxu0 %v694
  %696 = vmatprep.subr.mxu0 0.0
  %v697 = vand.u32 %v41, 4294901760
  %698 = vmatpush1.msra.mxu0 %v697
  %699 = vmatprep.subr.mxu0 0.0
  %v700 = vand.u32 %v42, 4294901760
  %701 = vmatpush1.msra.mxu0 %v700
  %702 = vmatprep.subr.mxu0 0.0
  %v703 = vand.u32 %v43, 4294901760
  %704 = vmatpush1.msra.mxu0 %v703
  %705 = vmatprep.subr.mxu0 0.0
  %v706 = vand.u32 %v44, 4294901760
  %707 = vmatpush1.msra.mxu0 %v706
  %708 = vmatprep.subr.mxu0 0.0
  %v709 = vand.u32 %v45, 4294901760
  %710 = vmatpush1.msra.mxu0 %v709
  %711 = vmatprep.subr.mxu0 0.0
  %v712 = vand.u32 %v53, 4294901760
  %713 = vmatpush1.msra.mxu0 %v712
  %714 = vmatprep.subr.mxu0 0.0
  %715 = vmatpush1.msra.mxu0 0.0
  %716 = vmatprep.subr.mxu0 0.0
  %717 = vmatpush1.msra.mxu0 0.0
  %718 = vmatprep.subr.mxu0 0.0
  %719 = vmatpush1.msra.mxu0 0.0
  %720 = vmatprep.subr.mxu0 0.0
  %721 = vmatpush1.msra.mxu0 0.0
  %722 = vmatprep.subr.mxu0 0.0
  %723 = vmatpush1.msra.mxu0 0.0
  %724 = vmatprep.subr.mxu0 0.0
  %725 = vmatpush1.msra.mxu0 0.0
  %726 = vmatprep.subr.mxu0 0.0
  %727 = vmatpush1.msra.mxu0 0.0
  %728 = vmatprep.subr.mxu0 0.0
  %729 = vmatpush1.msra.mxu0 0.0
  %730 = vmatprep.subr.mxu0 0.0
  %731 = vmatpush1.msra.mxu0 0.0
  %732 = vmatprep.subr.mxu0 0.0
  %733 = vmatpush1.msra.mxu0 0.0
  %734 = vmatprep.subr.mxu0 0.0
  %735 = vmatpush1.msra.mxu0 0.0
  %736 = vmatprep.subr.mxu0 0.0
  %737 = vmatpush1.msra.mxu0 0.0
  %738 = vmatprep.subr.mxu0 0.0
  %739 = vmatpush1.msra.mxu0 0.0
  %v740 = vand.u32 %v49, 4294901760
  %741 = vmatprep.mubr.f32.mxu0 %v740
  %v742 = vand.u32 %v26, 4294901760
  %743 = vmatmul.mubr.f32.gmra.mrb[0].mxu0 %v742
  %v744 = vpop.f32.mrb[0].mxu0
  %v745 = vadd.f32 %v654, %v744
  %v746 = vpop.f32.mrb[0].mxu0
  %747 = vdwg.mxu0
  %748 = vst [vmem:[#allocation2] sm:$0xff] %v745
  %s749 = scalar_lea.vmem %s0, 152
  %v750 = vld [vmem:[%s749] sm:$0xff]
  %v751 = vld [vmem:[%s749 + $0x8] sm:$0xff]
  %v752 = vld [vmem:[%s749 + $0x10] sm:$0xff]
  %v753 = vld [vmem:[%s749 + $0x18] sm:$0xff]
  %v754 = vld [vmem:[%s749 + $0x20] sm:$0xff]
  %v755 = vld [vmem:[%s749 + $0x28] sm:$0xff]
  %v756 = vld [vmem:[%s749 + $0x30] sm:$0xff]
  %v757 = vld [vmem:[%s749 + $0x38] sm:$0xff]
  %v758 = vld [vmem:[%s749 + $0x40] sm:$0xff]
  %v759 = vld [vmem:[%s749 + $0x48] sm:$0xff]
  %v760 = vld [vmem:[%s749 + $0x50] sm:$0xff]
  %v761 = vld [vmem:[%s749 + $0x58] sm:$0xff]
  %v762 = vld [vmem:[%s749 + $0x60] sm:$0xff]
  %v763 = vld [vmem:[%s749 + $0x68] sm:$0xff]
  %v764 = vld [vmem:[%s749 + $0x70] sm:$0xff]
  %v765 = vld [vmem:[%s749 + $0x78] sm:$0xff]
  %v766 = vld [vmem:[%s749 + $0x80] sm:$0xff]
  %v767 = vld [vmem:[%s749 + $0x88] sm:$0xff]
  %v768 = vld [vmem:[%s749 + $0x90] sm:$0x3f]
  %v770 = vsel %vm51, %v768, 0
  %772 = vmatprep.subr.mxu0 0.0
  %v773 = vand.u32 %v750, 4294901760
  %774 = vmatpush1.msra.mxu0 %v773
  %775 = vmatprep.subr.mxu0 0.0
  %v776 = vand.u32 %v751, 4294901760
  %777 = vmatpush1.msra.mxu0 %v776
  %778 = vmatprep.subr.mxu0 0.0
  %v779 = vand.u32 %v752, 4294901760
  %780 = vmatpush1.msra.mxu0 %v779
  %781 = vmatprep.subr.mxu0 0.0
  %v782 = vand.u32 %v753, 4294901760
  %783 = vmatpush1.msra.mxu0 %v782
  %784 = vmatprep.subr.mxu0 0.0
  %v785 = vand.u32 %v754, 4294901760
  %786 = vmatpush1.msra.mxu0 %v785
  %787 = vmatprep.subr.mxu0 0.0
  %v788 = vand.u32 %v755, 4294901760
  %789 = vmatpush1.msra.mxu0 %v788
  %790 = vmatprep.subr.mxu0 0.0
  %v791 = vand.u32 %v756, 4294901760
  %792 = vmatpush1.msra.mxu0 %v791
  %793 = vmatprep.subr.mxu0 0.0
  %v794 = vand.u32 %v757, 4294901760
  %795 = vmatpush1.msra.mxu0 %v794
  %796 = vmatprep.subr.mxu0 0.0
  %v797 = vand.u32 %v758, 4294901760
  %798 = vmatpush1.msra.mxu0 %v797
  %799 = vmatprep.subr.mxu0 0.0
  %v800 = vand.u32 %v759, 4294901760
  %801 = vmatpush1.msra.mxu0 %v800
  %802 = vmatprep.subr.mxu0 0.0
  %v803 = vand.u32 %v760, 4294901760
  %804 = vmatpush1.msra.mxu0 %v803
  %805 = vmatprep.subr.mxu0 0.0
  %v806 = vand.u32 %v761, 4294901760
  %807 = vmatpush1.msra.mxu0 %v806
  %808 = vmatprep.subr.mxu0 0.0
  %v809 = vand.u32 %v762, 4294901760
  %810 = vmatpush1.msra.mxu0 %v809
  %811 = vmatprep.subr.mxu0 0.0
  %v812 = vand.u32 %v763, 4294901760
  %813 = vmatpush1.msra.mxu0 %v812
  %814 = vmatprep.subr.mxu0 0.0
  %v815 = vand.u32 %v764, 4294901760
  %816 = vmatpush1.msra.mxu0 %v815
  %817 = vmatprep.subr.mxu0 0.0
  %v818 = vand.u32 %v765, 4294901760
  %819 = vmatpush1.msra.mxu0 %v818
  %820 = vmatprep.subr.mxu0 0.0
  %v821 = vand.u32 %v766, 4294901760
  %822 = vmatpush1.msra.mxu0 %v821
  %823 = vmatprep.subr.mxu0 0.0
  %v824 = vand.u32 %v767, 4294901760
  %825 = vmatpush1.msra.mxu0 %v824
  %826 = vmatprep.subr.mxu0 0.0
  %v827 = vand.u32 %v770, 4294901760
  %828 = vmatpush1.msra.mxu0 %v827
  %829 = vmatprep.subr.mxu0 0.0
  %830 = vmatpush1.msra.mxu0 0.0
  %831 = vmatprep.subr.mxu0 0.0
  %832 = vmatpush1.msra.mxu0 0.0
  %833 = vmatprep.subr.mxu0 0.0
  %834 = vmatpush1.msra.mxu0 0.0
  %835 = vmatprep.subr.mxu0 0.0
  %836 = vmatpush1.msra.mxu0 0.0
  %837 = vmatprep.subr.mxu0 0.0
  %838 = vmatpush1.msra.mxu0 0.0
  %839 = vmatprep.subr.mxu0 0.0
  %840 = vmatpush1.msra.mxu0 0.0
  %841 = vmatprep.subr.mxu0 0.0
  %842 = vmatpush1.msra.mxu0 0.0
  %843 = vmatprep.subr.mxu0 0.0
  %844 = vmatpush1.msra.mxu0 0.0
  %845 = vmatprep.subr.mxu0 0.0
  %846 = vmatpush1.msra.mxu0 0.0
  %847 = vmatprep.subr.mxu0 0.0
  %848 = vmatpush1.msra.mxu0 0.0
  %849 = vmatprep.subr.mxu0 0.0
  %850 = vmatpush1.msra.mxu0 0.0
  %851 = vmatprep.subr.mxu0 0.0
  %852 = vmatpush1.msra.mxu0 0.0
  %853 = vmatprep.subr.mxu0 0.0
  %854 = vmatpush1.msra.mxu0 0.0
  %v855 = vand.u32 %v49, 4294901760
  %v856 = vsub.f32 %v49, %v855
  %v857 = vand.u32 %v856, 4294901760
  %v858 = vsub.f32 %v856, %v857
  %v859 = vand.u32 %v858, 4294901760
  %860 = vmatprep.mubr.f32.mxu0 %v859
  %v861 = vand.u32 %v26, 4294901760
  %v862 = vsub.f32 %v26, %v861
  %v863 = vand.u32 %v862, 4294901760
  %v864 = vsub.f32 %v862, %v863
  %v865 = vand.u32 %v864, 4294901760
  %866 = vmatmul.mubr.f32.gmra.mrb[0].mxu0 %v865
  %v867 = vpop.f32.mrb[0].mxu0
  %v868 = vadd.f32 0.0, %v867
  %v869 = vpop.f32.mrb[0].mxu0
  %870 = vdwg.mxu0
  %871 = vmatprep.subr.mxu0 0.0
  %v872 = vand.u32 %v750, 4294901760
  %v873 = vsub.f32 %v750, %v872
  %v874 = vand.u32 %v873, 4294901760
  %v875 = vsub.f32 %v873, %v874
  %v876 = vand.u32 %v875, 4294901760
  %877 = vmatpush1.msra.mxu0 %v876
  %878 = vmatprep.subr.mxu0 0.0
  %v879 = vand.u32 %v751, 4294901760
  %v880 = vsub.f32 %v751, %v879
  %v881 = vand.u32 %v880, 4294901760
  %v882 = vsub.f32 %v880, %v881
  %v883 = vand.u32 %v882, 4294901760
  %884 = vmatpush1.msra.mxu0 %v883
  %885 = vmatprep.subr.mxu0 0.0
  %v886 = vand.u32 %v752, 4294901760
  %v887 = vsub.f32 %v752, %v886
  %v888 = vand.u32 %v887, 4294901760
  %v889 = vsub.f32 %v887, %v888
  %v890 = vand.u32 %v889, 4294901760
  %891 = vmatpush1.msra.mxu0 %v890
  %892 = vmatprep.subr.mxu0 0.0
  %v893 = vand.u32 %v753, 4294901760
  %v894 = vsub.f32 %v753, %v893
  %v895 = vand.u32 %v894, 4294901760
  %v896 = vsub.f32 %v894, %v895
  %v897 = vand.u32 %v896, 4294901760
  %898 = vmatpush1.msra.mxu0 %v897
  %899 = vmatprep.subr.mxu0 0.0
  %v900 = vand.u32 %v754, 4294901760
  %v901 = vsub.f32 %v754, %v900
  %v902 = vand.u32 %v901, 4294901760
  %v903 = vsub.f32 %v901, %v902
  %v904 = vand.u32 %v903, 4294901760
  %905 = vmatpush1.msra.mxu0 %v904
  %906 = vmatprep.subr.mxu0 0.0
  %v907 = vand.u32 %v755, 4294901760
  %v908 = vsub.f32 %v755, %v907
  %v909 = vand.u32 %v908, 4294901760
  %v910 = vsub.f32 %v908, %v909
  %v911 = vand.u32 %v910, 4294901760
  %912 = vmatpush1.msra.mxu0 %v911
  %913 = vmatprep.subr.mxu0 0.0
  %v914 = vand.u32 %v756, 4294901760
  %v915 = vsub.f32 %v756, %v914
  %v916 = vand.u32 %v915, 4294901760
  %v917 = vsub.f32 %v915, %v916
  %v918 = vand.u32 %v917, 4294901760
  %919 = vmatpush1.msra.mxu0 %v918
  %920 = vmatprep.subr.mxu0 0.0
  %v921 = vand.u32 %v757, 4294901760
  %v922 = vsub.f32 %v757, %v921
  %v923 = vand.u32 %v922, 4294901760
  %v924 = vsub.f32 %v922, %v923
  %v925 = vand.u32 %v924, 4294901760
  %926 = vmatpush1.msra.mxu0 %v925
  %927 = vmatprep.subr.mxu0 0.0
  %v928 = vand.u32 %v758, 4294901760
  %v929 = vsub.f32 %v758, %v928
  %v930 = vand.u32 %v929, 4294901760
  %v931 = vsub.f32 %v929, %v930
  %v932 = vand.u32 %v931, 4294901760
  %933 = vmatpush1.msra.mxu0 %v932
  %934 = vmatprep.subr.mxu0 0.0
  %v935 = vand.u32 %v759, 4294901760
  %v936 = vsub.f32 %v759, %v935
  %v937 = vand.u32 %v936, 4294901760
  %v938 = vsub.f32 %v936, %v937
  %v939 = vand.u32 %v938, 4294901760
  %940 = vmatpush1.msra.mxu0 %v939
  %941 = vmatprep.subr.mxu0 0.0
  %v942 = vand.u32 %v760, 4294901760
  %v943 = vsub.f32 %v760, %v942
  %v944 = vand.u32 %v943, 4294901760
  %v945 = vsub.f32 %v943, %v944
  %v946 = vand.u32 %v945, 4294901760
  %947 = vmatpush1.msra.mxu0 %v946
  %948 = vmatprep.subr.mxu0 0.0
  %v949 = vand.u32 %v761, 4294901760
  %v950 = vsub.f32 %v761, %v949
  %v951 = vand.u32 %v950, 4294901760
  %v952 = vsub.f32 %v950, %v951
  %v953 = vand.u32 %v952, 4294901760
  %954 = vmatpush1.msra.mxu0 %v953
  %955 = vmatprep.subr.mxu0 0.0
  %v956 = vand.u32 %v762, 4294901760
  %v957 = vsub.f32 %v762, %v956
  %v958 = vand.u32 %v957, 4294901760
  %v959 = vsub.f32 %v957, %v958
  %v960 = vand.u32 %v959, 4294901760
  %961 = vmatpush1.msra.mxu0 %v960
  %962 = vmatprep.subr.mxu0 0.0
  %v963 = vand.u32 %v763, 4294901760
  %v964 = vsub.f32 %v763, %v963
  %v965 = vand.u32 %v964, 4294901760
  %v966 = vsub.f32 %v964, %v965
  %v967 = vand.u32 %v966, 4294901760
  %968 = vmatpush1.msra.mxu0 %v967
  %969 = vmatprep.subr.mxu0 0.0
  %v970 = vand.u32 %v764, 4294901760
  %v971 = vsub.f32 %v764, %v970
  %v972 = vand.u32 %v971, 4294901760
  %v973 = vsub.f32 %v971, %v972
  %v974 = vand.u32 %v973, 4294901760
  %975 = vmatpush1.msra.mxu0 %v974
  %976 = vmatprep.subr.mxu0 0.0
  %v977 = vand.u32 %v765, 4294901760
  %v978 = vsub.f32 %v765, %v977
  %v979 = vand.u32 %v978, 4294901760
  %v980 = vsub.f32 %v978, %v979
  %v981 = vand.u32 %v980, 4294901760
  %982 = vmatpush1.msra.mxu0 %v981
  %983 = vmatprep.subr.mxu0 0.0
  %v984 = vand.u32 %v766, 4294901760
  %v985 = vsub.f32 %v766, %v984
  %v986 = vand.u32 %v985, 4294901760
  %v987 = vsub.f32 %v985, %v986
  %v988 = vand.u32 %v987, 4294901760
  %989 = vmatpush1.msra.mxu0 %v988
  %990 = vmatprep.subr.mxu0 0.0
  %v991 = vand.u32 %v767, 4294901760
  %v992 = vsub.f32 %v767, %v991
  %v993 = vand.u32 %v992, 4294901760
  %v994 = vsub.f32 %v992, %v993
  %v995 = vand.u32 %v994, 4294901760
  %996 = vmatpush1.msra.mxu0 %v995
  %997 = vmatprep.subr.mxu0 0.0
  %v998 = vand.u32 %v770, 4294901760
  %v999 = vsub.f32 %v770, %v998
  %v1000 = vand.u32 %v999, 4294901760
  %v1001 = vsub.f32 %v999, %v1000
  %v1002 = vand.u32 %v1001, 4294901760
  %1003 = vmatpush1.msra.mxu0 %v1002
  %1004 = vmatprep.subr.mxu0 0.0
  %1005 = vmatpush1.msra.mxu0 0.0
  %1006 = vmatprep.subr.mxu0 0.0
  %1007 = vmatpush1.msra.mxu0 0.0
  %1008 = vmatprep.subr.mxu0 0.0
  %1009 = vmatpush1.msra.mxu0 0.0
  %1010 = vmatprep.subr.mxu0 0.0
  %1011 = vmatpush1.msra.mxu0 0.0
  %1012 = vmatprep.subr.mxu0 0.0
  %1013 = vmatpush1.msra.mxu0 0.0
  %1014 = vmatprep.subr.mxu0 0.0
  %1015 = vmatpush1.msra.mxu0 0.0
  %1016 = vmatprep.subr.mxu0 0.0
  %1017 = vmatpush1.msra.mxu0 0.0
  %1018 = vmatprep.subr.mxu0 0.0
  %1019 = vmatpush1.msra.mxu0 0.0
  %1020 = vmatprep.subr.mxu0 0.0
  %1021 = vmatpush1.msra.mxu0 0.0
  %1022 = vmatprep.subr.mxu0 0.0
  %1023 = vmatpush1.msra.mxu0 0.0
  %1024 = vmatprep.subr.mxu0 0.0
  %1025 = vmatpush1.msra.mxu0 0.0
  %1026 = vmatprep.subr.mxu0 0.0
  %1027 = vmatpush1.msra.mxu0 0.0
  %1028 = vmatprep.subr.mxu0 0.0
  %1029 = vmatpush1.msra.mxu0 0.0
  %v1030 = vand.u32 %v49, 4294901760
  %1031 = vmatprep.mubr.f32.mxu0 %v1030
  %v1032 = vand.u32 %v26, 4294901760
  %1033 = vmatmul.mubr.f32.gmra.mrb[0].mxu0 %v1032
  %v1034 = vpop.f32.mrb[0].mxu0
  %v1035 = vadd.f32 %v868, %v1034
  %v1036 = vpop.f32.mrb[0].mxu0
  %1037 = vdwg.mxu0
  %1038 = vmatprep.subr.mxu0 0.0
  %v1039 = vand.u32 %v750, 4294901760
  %v1040 = vsub.f32 %v750, %v1039
  %1041 = vmatpush1.msra.mxu0 %v1040
  %1042 = vmatprep.subr.mxu0 0.0
  %v1043 = vand.u32 %v751, 4294901760
  %v1044 = vsub.f32 %v751, %v1043
  %1045 = vmatpush1.msra.mxu0 %v1044
  %1046 = vmatprep.subr.mxu0 0.0
  %v1047 = vand.u32 %v752, 4294901760
  %v1048 = vsub.f32 %v752, %v1047
  %1049 = vmatpush1.msra.mxu0 %v1048
  %1050 = vmatprep.subr.mxu0 0.0
  %v1051 = vand.u32 %v753, 4294901760
  %v1052 = vsub.f32 %v753, %v1051
  %1053 = vmatpush1.msra.mxu0 %v1052
  %1054 = vmatprep.subr.mxu0 0.0
  %v1055 = vand.u32 %v754, 4294901760
  %v1056 = vsub.f32 %v754, %v1055
  %1057 = vmatpush1.msra.mxu0 %v1056
  %1058 = vmatprep.subr.mxu0 0.0
  %v1059 = vand.u32 %v755, 4294901760
  %v1060 = vsub.f32 %v755, %v1059
  %1061 = vmatpush1.msra.mxu0 %v1060
  %1062 = vmatprep.subr.mxu0 0.0
  %v1063 = vand.u32 %v756, 4294901760
  %v1064 = vsub.f32 %v756, %v1063
  %1065 = vmatpush1.msra.mxu0 %v1064
  %1066 = vmatprep.subr.mxu0 0.0
  %v1067 = vand.u32 %v757, 4294901760
  %v1068 = vsub.f32 %v757, %v1067
  %1069 = vmatpush1.msra.mxu0 %v1068
  %1070 = vmatprep.subr.mxu0 0.0
  %v1071 = vand.u32 %v758, 4294901760
  %v1072 = vsub.f32 %v758, %v1071
  %1073 = vmatpush1.msra.mxu0 %v1072
  %1074 = vmatprep.subr.mxu0 0.0
  %v1075 = vand.u32 %v759, 4294901760
  %v1076 = vsub.f32 %v759, %v1075
  %1077 = vmatpush1.msra.mxu0 %v1076
  %1078 = vmatprep.subr.mxu0 0.0
  %v1079 = vand.u32 %v760, 4294901760
  %v1080 = vsub.f32 %v760, %v1079
  %1081 = vmatpush1.msra.mxu0 %v1080
  %1082 = vmatprep.subr.mxu0 0.0
  %v1083 = vand.u32 %v761, 4294901760
  %v1084 = vsub.f32 %v761, %v1083
  %1085 = vmatpush1.msra.mxu0 %v1084
  %1086 = vmatprep.subr.mxu0 0.0
  %v1087 = vand.u32 %v762, 4294901760
  %v1088 = vsub.f32 %v762, %v1087
  %1089 = vmatpush1.msra.mxu0 %v1088
  %1090 = vmatprep.subr.mxu0 0.0
  %v1091 = vand.u32 %v763, 4294901760
  %v1092 = vsub.f32 %v763, %v1091
  %1093 = vmatpush1.msra.mxu0 %v1092
  %1094 = vmatprep.subr.mxu0 0.0
  %v1095 = vand.u32 %v764, 4294901760
  %v1096 = vsub.f32 %v764, %v1095
  %1097 = vmatpush1.msra.mxu0 %v1096
  %1098 = vmatprep.subr.mxu0 0.0
  %v1099 = vand.u32 %v765, 4294901760
  %v1100 = vsub.f32 %v765, %v1099
  %1101 = vmatpush1.msra.mxu0 %v1100
  %1102 = vmatprep.subr.mxu0 0.0
  %v1103 = vand.u32 %v766, 4294901760
  %v1104 = vsub.f32 %v766, %v1103
  %1105 = vmatpush1.msra.mxu0 %v1104
  %1106 = vmatprep.subr.mxu0 0.0
  %v1107 = vand.u32 %v767, 4294901760
  %v1108 = vsub.f32 %v767, %v1107
  %1109 = vmatpush1.msra.mxu0 %v1108
  %1110 = vmatprep.subr.mxu0 0.0
  %v1111 = vand.u32 %v770, 4294901760
  %v1112 = vsub.f32 %v770, %v1111
  %1113 = vmatpush1.msra.mxu0 %v1112
  %1114 = vmatprep.subr.mxu0 0.0
  %1115 = vmatpush1.msra.mxu0 0.0
  %1116 = vmatprep.subr.mxu0 0.0
  %1117 = vmatpush1.msra.mxu0 0.0
  %1118 = vmatprep.subr.mxu0 0.0
  %1119 = vmatpush1.msra.mxu0 0.0
  %1120 = vmatprep.subr.mxu0 0.0
  %1121 = vmatpush1.msra.mxu0 0.0
  %1122 = vmatprep.subr.mxu0 0.0
  %1123 = vmatpush1.msra.mxu0 0.0
  %1124 = vmatprep.subr.mxu0 0.0
  %1125 = vmatpush1.msra.mxu0 0.0
  %1126 = vmatprep.subr.mxu0 0.0
  %1127 = vmatpush1.msra.mxu0 0.0
  %1128 = vmatprep.subr.mxu0 0.0
  %1129 = vmatpush1.msra.mxu0 0.0
  %1130 = vmatprep.subr.mxu0 0.0
  %1131 = vmatpush1.msra.mxu0 0.0
  %1132 = vmatprep.subr.mxu0 0.0
  %1133 = vmatpush1.msra.mxu0 0.0
  %1134 = vmatprep.subr.mxu0 0.0
  %1135 = vmatpush1.msra.mxu0 0.0
  %1136 = vmatprep.subr.mxu0 0.0
  %1137 = vmatpush1.msra.mxu0 0.0
  %1138 = vmatprep.subr.mxu0 0.0
  %1139 = vmatpush1.msra.mxu0 0.0
  %v1140 = vand.u32 %v49, 4294901760
  %v1141 = vsub.f32 %v49, %v1140
  %1142 = vmatprep.mubr.f32.mxu0 %v1141
  %v1143 = vand.u32 %v26, 4294901760
  %v1144 = vsub.f32 %v26, %v1143
  %1145 = vmatmul.mubr.f32.gmra.mrb[0].mxu0 %v1144
  %v1146 = vpop.f32.mrb[0].mxu0
  %v1147 = vadd.f32 %v1035, %v1146
  %v1148 = vpop.f32.mrb[0].mxu0
  %1149 = vdwg.mxu0
  %1150 = vmatprep.subr.mxu0 0.0
  %v1151 = vand.u32 %v750, 4294901760
  %1152 = vmatpush1.msra.mxu0 %v1151
  %1153 = vmatprep.subr.mxu0 0.0
  %v1154 = vand.u32 %v751, 4294901760
  %1155 = vmatpush1.msra.mxu0 %v1154
  %1156 = vmatprep.subr.mxu0 0.0
  %v1157 = vand.u32 %v752, 4294901760
  %1158 = vmatpush1.msra.mxu0 %v1157
  %1159 = vmatprep.subr.mxu0 0.0
  %v1160 = vand.u32 %v753, 4294901760
  %1161 = vmatpush1.msra.mxu0 %v1160
  %1162 = vmatprep.subr.mxu0 0.0
  %v1163 = vand.u32 %v754, 4294901760
  %1164 = vmatpush1.msra.mxu0 %v1163
  %1165 = vmatprep.subr.mxu0 0.0
  %v1166 = vand.u32 %v755, 4294901760
  %1167 = vmatpush1.msra.mxu0 %v1166
  %1168 = vmatprep.subr.mxu0 0.0
  %v1169 = vand.u32 %v756, 4294901760
  %1170 = vmatpush1.msra.mxu0 %v1169
  %1171 = vmatprep.subr.mxu0 0.0
  %v1172 = vand.u32 %v757, 4294901760
  %1173 = vmatpush1.msra.mxu0 %v1172
  %1174 = vmatprep.subr.mxu0 0.0
  %v1175 = vand.u32 %v758, 4294901760
  %1176 = vmatpush1.msra.mxu0 %v1175
  %1177 = vmatprep.subr.mxu0 0.0
  %v1178 = vand.u32 %v759, 4294901760
  %1179 = vmatpush1.msra.mxu0 %v1178
  %1180 = vmatprep.subr.mxu0 0.0
  %v1181 = vand.u32 %v760, 4294901760
  %1182 = vmatpush1.msra.mxu0 %v1181
  %1183 = vmatprep.subr.mxu0 0.0
  %v1184 = vand.u32 %v761, 4294901760
  %1185 = vmatpush1.msra.mxu0 %v1184
  %1186 = vmatprep.subr.mxu0 0.0
  %v1187 = vand.u32 %v762, 4294901760
  %1188 = vmatpush1.msra.mxu0 %v1187
  %1189 = vmatprep.subr.mxu0 0.0
  %v1190 = vand.u32 %v763, 4294901760
  %1191 = vmatpush1.msra.mxu0 %v1190
  %1192 = vmatprep.subr.mxu0 0.0
  %v1193 = vand.u32 %v764, 4294901760
  %1194 = vmatpush1.msra.mxu0 %v1193
  %1195 = vmatprep.subr.mxu0 0.0
  %v1196 = vand.u32 %v765, 4294901760
  %1197 = vmatpush1.msra.mxu0 %v1196
  %1198 = vmatprep.subr.mxu0 0.0
  %v1199 = vand.u32 %v766, 4294901760
  %1200 = vmatpush1.msra.mxu0 %v1199
  %1201 = vmatprep.subr.mxu0 0.0
  %v1202 = vand.u32 %v767, 4294901760
  %1203 = vmatpush1.msra.mxu0 %v1202
  %1204 = vmatprep.subr.mxu0 0.0
  %v1205 = vand.u32 %v770, 4294901760
  %1206 = vmatpush1.msra.mxu0 %v1205
  %1207 = vmatprep.subr.mxu0 0.0
  %1208 = vmatpush1.msra.mxu0 0.0
  %1209 = vmatprep.subr.mxu0 0.0
  %1210 = vmatpush1.msra.mxu0 0.0
  %1211 = vmatprep.subr.mxu0 0.0
  %1212 = vmatpush1.msra.mxu0 0.0
  %1213 = vmatprep.subr.mxu0 0.0
  %1214 = vmatpush1.msra.mxu0 0.0
  %1215 = vmatprep.subr.mxu0 0.0
  %1216 = vmatpush1.msra.mxu0 0.0
  %1217 = vmatprep.subr.mxu0 0.0
  %1218 = vmatpush1.msra.mxu0 0.0
  %1219 = vmatprep.subr.mxu0 0.0
  %1220 = vmatpush1.msra.mxu0 0.0
  %1221 = vmatprep.subr.mxu0 0.0
  %1222 = vmatpush1.msra.mxu0 0.0
  %1223 = vmatprep.subr.mxu0 0.0
  %1224 = vmatpush1.msra.mxu0 0.0
  %1225 = vmatprep.subr.mxu0 0.0
  %1226 = vmatpush1.msra.mxu0 0.0
  %1227 = vmatprep.subr.mxu0 0.0
  %1228 = vmatpush1.msra.mxu0 0.0
  %1229 = vmatprep.subr.mxu0 0.0
  %1230 = vmatpush1.msra.mxu0 0.0
  %1231 = vmatprep.subr.mxu0 0.0
  %1232 = vmatpush1.msra.mxu0 0.0
  %v1233 = vand.u32 %v49, 4294901760
  %v1234 = vsub.f32 %v49, %v1233
  %v1235 = vand.u32 %v1234, 4294901760
  %1236 = vmatprep.mubr.f32.mxu0 %v1235
  %v1237 = vand.u32 %v26, 4294901760
  %v1238 = vsub.f32 %v26, %v1237
  %v1239 = vand.u32 %v1238, 4294901760
  %1240 = vmatmul.mubr.f32.gmra.mrb[0].mxu0 %v1239
  %v1241 = vpop.f32.mrb[0].mxu0
  %v1242 = vadd.f32 %v1147, %v1241
  %v1243 = vpop.f32.mrb[0].mxu0
  %1244 = vdwg.mxu0
  %1245 = vmatprep.subr.mxu0 0.0
  %v1246 = vand.u32 %v750, 4294901760
  %v1247 = vsub.f32 %v750, %v1246
  %v1248 = vand.u32 %v1247, 4294901760
  %1249 = vmatpush1.msra.mxu0 %v1248
  %1250 = vmatprep.subr.mxu0 0.0
  %v1251 = vand.u32 %v751, 4294901760
  %v1252 = vsub.f32 %v751, %v1251
  %v1253 = vand.u32 %v1252, 4294901760
  %1254 = vmatpush1.msra.mxu0 %v1253
  %1255 = vmatprep.subr.mxu0 0.0
  %v1256 = vand.u32 %v752, 4294901760
  %v1257 = vsub.f32 %v752, %v1256
  %v1258 = vand.u32 %v1257, 4294901760
  %1259 = vmatpush1.msra.mxu0 %v1258
  %1260 = vmatprep.subr.mxu0 0.0
  %v1261 = vand.u32 %v753, 4294901760
  %v1262 = vsub.f32 %v753, %v1261
  %v1263 = vand.u32 %v1262, 4294901760
  %1264 = vmatpush1.msra.mxu0 %v1263
  %1265 = vmatprep.subr.mxu0 0.0
  %v1266 = vand.u32 %v754, 4294901760
  %v1267 = vsub.f32 %v754, %v1266
  %v1268 = vand.u32 %v1267, 4294901760
  %1269 = vmatpush1.msra.mxu0 %v1268
  %1270 = vmatprep.subr.mxu0 0.0
  %v1271 = vand.u32 %v755, 4294901760
  %v1272 = vsub.f32 %v755, %v1271
  %v1273 = vand.u32 %v1272, 4294901760
  %1274 = vmatpush1.msra.mxu0 %v1273
  %1275 = vmatprep.subr.mxu0 0.0
  %v1276 = vand.u32 %v756, 4294901760
  %v1277 = vsub.f32 %v756, %v1276
  %v1278 = vand.u32 %v1277, 4294901760
  %1279 = vmatpush1.msra.mxu0 %v1278
  %1280 = vmatprep.subr.mxu0 0.0
  %v1281 = vand.u32 %v757, 4294901760
  %v1282 = vsub.f32 %v757, %v1281
  %v1283 = vand.u32 %v1282, 4294901760
  %1284 = vmatpush1.msra.mxu0 %v1283
  %1285 = vmatprep.subr.mxu0 0.0
  %v1286 = vand.u32 %v758, 4294901760
  %v1287 = vsub.f32 %v758, %v1286
  %v1288 = vand.u32 %v1287, 4294901760
  %1289 = vmatpush1.msra.mxu0 %v1288
  %1290 = vmatprep.subr.mxu0 0.0
  %v1291 = vand.u32 %v759, 4294901760
  %v1292 = vsub.f32 %v759, %v1291
  %v1293 = vand.u32 %v1292, 4294901760
  %1294 = vmatpush1.msra.mxu0 %v1293
  %1295 = vmatprep.subr.mxu0 0.0
  %v1296 = vand.u32 %v760, 4294901760
  %v1297 = vsub.f32 %v760, %v1296
  %v1298 = vand.u32 %v1297, 4294901760
  %1299 = vmatpush1.msra.mxu0 %v1298
  %1300 = vmatprep.subr.mxu0 0.0
  %v1301 = vand.u32 %v761, 4294901760
  %v1302 = vsub.f32 %v761, %v1301
  %v1303 = vand.u32 %v1302, 4294901760
  %1304 = vmatpush1.msra.mxu0 %v1303
  %1305 = vmatprep.subr.mxu0 0.0
  %v1306 = vand.u32 %v762, 4294901760
  %v1307 = vsub.f32 %v762, %v1306
  %v1308 = vand.u32 %v1307, 4294901760
  %1309 = vmatpush1.msra.mxu0 %v1308
  %1310 = vmatprep.subr.mxu0 0.0
  %v1311 = vand.u32 %v763, 4294901760
  %v1312 = vsub.f32 %v763, %v1311
  %v1313 = vand.u32 %v1312, 4294901760
  %1314 = vmatpush1.msra.mxu0 %v1313
  %1315 = vmatprep.subr.mxu0 0.0
  %v1316 = vand.u32 %v764, 4294901760
  %v1317 = vsub.f32 %v764, %v1316
  %v1318 = vand.u32 %v1317, 4294901760
  %1319 = vmatpush1.msra.mxu0 %v1318
  %1320 = vmatprep.subr.mxu0 0.0
  %v1321 = vand.u32 %v765, 4294901760
  %v1322 = vsub.f32 %v765, %v1321
  %v1323 = vand.u32 %v1322, 4294901760
  %1324 = vmatpush1.msra.mxu0 %v1323
  %1325 = vmatprep.subr.mxu0 0.0
  %v1326 = vand.u32 %v766, 4294901760
  %v1327 = vsub.f32 %v766, %v1326
  %v1328 = vand.u32 %v1327, 4294901760
  %1329 = vmatpush1.msra.mxu0 %v1328
  %1330 = vmatprep.subr.mxu0 0.0
  %v1331 = vand.u32 %v767, 4294901760
  %v1332 = vsub.f32 %v767, %v1331
  %v1333 = vand.u32 %v1332, 4294901760
  %1334 = vmatpush1.msra.mxu0 %v1333
  %1335 = vmatprep.subr.mxu0 0.0
  %v1336 = vand.u32 %v770, 4294901760
  %v1337 = vsub.f32 %v770, %v1336
  %v1338 = vand.u32 %v1337, 4294901760
  %1339 = vmatpush1.msra.mxu0 %v1338
  %1340 = vmatprep.subr.mxu0 0.0
  %1341 = vmatpush1.msra.mxu0 0.0
  %1342 = vmatprep.subr.mxu0 0.0
  %1343 = vmatpush1.msra.mxu0 0.0
  %1344 = vmatprep.subr.mxu0 0.0
  %1345 = vmatpush1.msra.mxu0 0.0
  %1346 = vmatprep.subr.mxu0 0.0
  %1347 = vmatpush1.msra.mxu0 0.0
  %1348 = vmatprep.subr.mxu0 0.0
  %1349 = vmatpush1.msra.mxu0 0.0
  %1350 = vmatprep.subr.mxu0 0.0
  %1351 = vmatpush1.msra.mxu0 0.0
  %1352 = vmatprep.subr.mxu0 0.0
  %1353 = vmatpush1.msra.mxu0 0.0
  %1354 = vmatprep.subr.mxu0 0.0
  %1355 = vmatpush1.msra.mxu0 0.0
  %1356 = vmatprep.subr.mxu0 0.0
  %1357 = vmatpush1.msra.mxu0 0.0
  %1358 = vmatprep.subr.mxu0 0.0
  %1359 = vmatpush1.msra.mxu0 0.0
  %1360 = vmatprep.subr.mxu0 0.0
  %1361 = vmatpush1.msra.mxu0 0.0
  %1362 = vmatprep.subr.mxu0 0.0
  %1363 = vmatpush1.msra.mxu0 0.0
  %1364 = vmatprep.subr.mxu0 0.0
  %1365 = vmatpush1.msra.mxu0 0.0
  %v1366 = vand.u32 %v49, 4294901760
  %1367 = vmatprep.mubr.f32.mxu0 %v1366
  %v1368 = vand.u32 %v26, 4294901760
  %1369 = vmatmul.mubr.f32.gmra.mrb[0].mxu0 %v1368
  %v1370 = vpop.f32.mrb[0].mxu0
  %v1371 = vadd.f32 %v1242, %v1370
  %v1372 = vpop.f32.mrb[0].mxu0
  %1373 = vdwg.mxu0
  %1374 = vmatprep.subr.mxu0 0.0
  %v1375 = vand.u32 %v750, 4294901760
  %1376 = vmatpush1.msra.mxu0 %v1375
  %1377 = vmatprep.subr.mxu0 0.0
  %v1378 = vand.u32 %v751, 4294901760
  %1379 = vmatpush1.msra.mxu0 %v1378
  %1380 = vmatprep.subr.mxu0 0.0
  %v1381 = vand.u32 %v752, 4294901760
  %1382 = vmatpush1.msra.mxu0 %v1381
  %1383 = vmatprep.subr.mxu0 0.0
  %v1384 = vand.u32 %v753, 4294901760
  %1385 = vmatpush1.msra.mxu0 %v1384
  %1386 = vmatprep.subr.mxu0 0.0
  %v1387 = vand.u32 %v754, 4294901760
  %1388 = vmatpush1.msra.mxu0 %v1387
  %1389 = vmatprep.subr.mxu0 0.0
  %v1390 = vand.u32 %v755, 4294901760
  %1391 = vmatpush1.msra.mxu0 %v1390
  %1392 = vmatprep.subr.mxu0 0.0
  %v1393 = vand.u32 %v756, 4294901760
  %1394 = vmatpush1.msra.mxu0 %v1393
  %1395 = vmatprep.subr.mxu0 0.0
  %v1396 = vand.u32 %v757, 4294901760
  %1397 = vmatpush1.msra.mxu0 %v1396
  %1398 = vmatprep.subr.mxu0 0.0
  %v1399 = vand.u32 %v758, 4294901760
  %1400 = vmatpush1.msra.mxu0 %v1399
  %1401 = vmatprep.subr.mxu0 0.0
  %v1402 = vand.u32 %v759, 4294901760
  %1403 = vmatpush1.msra.mxu0 %v1402
  %1404 = vmatprep.subr.mxu0 0.0
  %v1405 = vand.u32 %v760, 4294901760
  %1406 = vmatpush1.msra.mxu0 %v1405
  %1407 = vmatprep.subr.mxu0 0.0
  %v1408 = vand.u32 %v761, 4294901760
  %1409 = vmatpush1.msra.mxu0 %v1408
  %1410 = vmatprep.subr.mxu0 0.0
  %v1411 = vand.u32 %v762, 4294901760
  %1412 = vmatpush1.msra.mxu0 %v1411
  %1413 = vmatprep.subr.mxu0 0.0
  %v1414 = vand.u32 %v763, 4294901760
  %1415 = vmatpush1.msra.mxu0 %v1414
  %1416 = vmatprep.subr.mxu0 0.0
  %v1417 = vand.u32 %v764, 4294901760
  %1418 = vmatpush1.msra.mxu0 %v1417
  %1419 = vmatprep.subr.mxu0 0.0
  %v1420 = vand.u32 %v765, 4294901760
  %1421 = vmatpush1.msra.mxu0 %v1420
  %1422 = vmatprep.subr.mxu0 0.0
  %v1423 = vand.u32 %v766, 4294901760
  %1424 = vmatpush1.msra.mxu0 %v1423
  %1425 = vmatprep.subr.mxu0 0.0
  %v1426 = vand.u32 %v767, 4294901760
  %1427 = vmatpush1.msra.mxu0 %v1426
  %1428 = vmatprep.subr.mxu0 0.0
  %v1429 = vand.u32 %v770, 4294901760
  %1430 = vmatpush1.msra.mxu0 %v1429
  %1431 = vmatprep.subr.mxu0 0.0
  %1432 = vmatpush1.msra.mxu0 0.0
  %1433 = vmatprep.subr.mxu0 0.0
  %1434 = vmatpush1.msra.mxu0 0.0
  %1435 = vmatprep.subr.mxu0 0.0
  %1436 = vmatpush1.msra.mxu0 0.0
  %1437 = vmatprep.subr.mxu0 0.0
  %1438 = vmatpush1.msra.mxu0 0.0
  %1439 = vmatprep.subr.mxu0 0.0
  %1440 = vmatpush1.msra.mxu0 0.0
  %1441 = vmatprep.subr.mxu0 0.0
  %1442 = vmatpush1.msra.mxu0 0.0
  %1443 = vmatprep.subr.mxu0 0.0
  %1444 = vmatpush1.msra.mxu0 0.0
  %1445 = vmatprep.subr.mxu0 0.0
  %1446 = vmatpush1.msra.mxu0 0.0
  %1447 = vmatprep.subr.mxu0 0.0
  %1448 = vmatpush1.msra.mxu0 0.0
  %1449 = vmatprep.subr.mxu0 0.0
  %1450 = vmatpush1.msra.mxu0 0.0
  %1451 = vmatprep.subr.mxu0 0.0
  %1452 = vmatpush1.msra.mxu0 0.0
  %1453 = vmatprep.subr.mxu0 0.0
  %1454 = vmatpush1.msra.mxu0 0.0
  %1455 = vmatprep.subr.mxu0 0.0
  %1456 = vmatpush1.msra.mxu0 0.0
  %v1457 = vand.u32 %v49, 4294901760
  %1458 = vmatprep.mubr.f32.mxu0 %v1457
  %v1459 = vand.u32 %v26, 4294901760
  %1460 = vmatmul.mubr.f32.gmra.mrb[0].mxu0 %v1459
  %v1461 = vpop.f32.mrb[0].mxu0
  %v1462 = vadd.f32 %v1371, %v1461
  %v1463 = vpop.f32.mrb[0].mxu0
  %1464 = vdwg.mxu0
  %1465 = vst [vmem:[#allocation2 + $0x8] sm:$0xff] %v1462
  %s1466 = scalar_lea.vmem %s0, 304
  %v1467 = vld [vmem:[%s1466] sm:$0xff]
  %v1468 = vld [vmem:[%s1466 + $0x8] sm:$0xff]
  %v1469 = vld [vmem:[%s1466 + $0x10] sm:$0xff]
  %v1470 = vld [vmem:[%s1466 + $0x18] sm:$0xff]
  %v1471 = vld [vmem:[%s1466 + $0x20] sm:$0xff]
  %v1472 = vld [vmem:[%s1466 + $0x28] sm:$0xff]
  %v1473 = vld [vmem:[%s1466 + $0x30] sm:$0xff]
  %v1474 = vld [vmem:[%s1466 + $0x38] sm:$0xff]
  %v1475 = vld [vmem:[%s1466 + $0x40] sm:$0xff]
  %v1476 = vld [vmem:[%s1466 + $0x48] sm:$0xff]
  %v1477 = vld [vmem:[%s1466 + $0x50] sm:$0xff]
  %v1478 = vld [vmem:[%s1466 + $0x58] sm:$0xff]
  %v1479 = vld [vmem:[%s1466 + $0x60] sm:$0xff]
  %v1480 = vld [vmem:[%s1466 + $0x68] sm:$0xff]
  %v1481 = vld [vmem:[%s1466 + $0x70] sm:$0xff]
  %v1482 = vld [vmem:[%s1466 + $0x78] sm:$0xff]
  %v1483 = vld [vmem:[%s1466 + $0x80] sm:$0xff]
  %v1484 = vld [vmem:[%s1466 + $0x88] sm:$0xff]
  %v1485 = vld [vmem:[%s1466 + $0x90] sm:$0x3f]
  %v1487 = vsel %vm51, %v1485, 0
  %1489 = vmatprep.subr.mxu0 0.0
  %v1490 = vand.u32 %v1467, 4294901760
  %1491 = vmatpush1.msra.mxu0 %v1490
  %1492 = vmatprep.subr.mxu0 0.0
  %v1493 = vand.u32 %v1468, 4294901760
  %1494 = vmatpush1.msra.mxu0 %v1493
  %1495 = vmatprep.subr.mxu0 0.0
  %v1496 = vand.u32 %v1469, 4294901760
  %1497 = vmatpush1.msra.mxu0 %v1496
  %1498 = vmatprep.subr.mxu0 0.0
  %v1499 = vand.u32 %v1470, 4294901760
  %1500 = vmatpush1.msra.mxu0 %v1499
  %1501 = vmatprep.subr.mxu0 0.0
  %v1502 = vand.u32 %v1471, 4294901760
  %1503 = vmatpush1.msra.mxu0 %v1502
  %1504 = vmatprep.subr.mxu0 0.0
  %v1505 = vand.u32 %v1472, 4294901760
  %1506 = vmatpush1.msra.mxu0 %v1505
  %1507 = vmatprep.subr.mxu0 0.0
  %v1508 = vand.u32 %v1473, 4294901760
  %1509 = vmatpush1.msra.mxu0 %v1508
  %1510 = vmatprep.subr.mxu0 0.0
  %v1511 = vand.u32 %v1474, 4294901760
  %1512 = vmatpush1.msra.mxu0 %v1511
  %1513 = vmatprep.subr.mxu0 0.0
  %v1514 = vand.u32 %v1475, 4294901760
  %1515 = vmatpush1.msra.mxu0 %v1514
  %1516 = vmatprep.subr.mxu0 0.0
  %v1517 = vand.u32 %v1476, 4294901760
  %1518 = vmatpush1.msra.mxu0 %v1517
  %1519 = vmatprep.subr.mxu0 0.0
  %v1520 = vand.u32 %v1477, 4294901760
  %1521 = vmatpush1.msra.mxu0 %v1520
  %1522 = vmatprep.subr.mxu0 0.0
  %v1523 = vand.u32 %v1478, 4294901760
  %1524 = vmatpush1.msra.mxu0 %v1523
  %1525 = vmatprep.subr.mxu0 0.0
  %v1526 = vand.u32 %v1479, 4294901760
  %1527 = vmatpush1.msra.mxu0 %v1526
  %1528 = vmatprep.subr.mxu0 0.0
  %v1529 = vand.u32 %v1480, 4294901760
  %1530 = vmatpush1.msra.mxu0 %v1529
  %1531 = vmatprep.subr.mxu0 0.0
  %v1532 = vand.u32 %v1481, 4294901760
  %1533 = vmatpush1.msra.mxu0 %v1532
  %1534 = vmatprep.subr.mxu0 0.0
  %v1535 = vand.u32 %v1482, 4294901760
  %1536 = vmatpush1.msra.mxu0 %v1535
  %1537 = vmatprep.subr.mxu0 0.0
  %v1538 = vand.u32 %v1483, 4294901760
  %1539 = vmatpush1.msra.mxu0 %v1538
  %1540 = vmatprep.subr.mxu0 0.0
  %v1541 = vand.u32 %v1484, 4294901760
  %1542 = vmatpush1.msra.mxu0 %v1541
  %1543 = vmatprep.subr.mxu0 0.0
  %v1544 = vand.u32 %v1487, 4294901760
  %1545 = vmatpush1.msra.mxu0 %v1544
  %1546 = vmatprep.subr.mxu0 0.0
  %1547 = vmatpush1.msra.mxu0 0.0
  %1548 = vmatprep.subr.mxu0 0.0
  %1549 = vmatpush1.msra.mxu0 0.0
  %1550 = vmatprep.subr.mxu0 0.0
  %1551 = vmatpush1.msra.mxu0 0.0
  %1552 = vmatprep.subr.mxu0 0.0
  %1553 = vmatpush1.msra.mxu0 0.0
  %1554 = vmatprep.subr.mxu0 0.0
  %1555 = vmatpush1.msra.mxu0 0.0
  %1556 = vmatprep.subr.mxu0 0.0
  %1557 = vmatpush1.msra.mxu0 0.0
  %1558 = vmatprep.subr.mxu0 0.0
  %1559 = vmatpush1.msra.mxu0 0.0
  %1560 = vmatprep.subr.mxu0 0.0
  %1561 = vmatpush1.msra.mxu0 0.0
  %1562 = vmatprep.subr.mxu0 0.0
  %1563 = vmatpush1.msra.mxu0 0.0
  %1564 = vmatprep.subr.mxu0 0.0
  %1565 = vmatpush1.msra.mxu0 0.0
  %1566 = vmatprep.subr.mxu0 0.0
  %1567 = vmatpush1.msra.mxu0 0.0
  %1568 = vmatprep.subr.mxu0 0.0
  %1569 = vmatpush1.msra.mxu0 0.0
  %1570 = vmatprep.subr.mxu0 0.0
  %1571 = vmatpush1.msra.mxu0 0.0
  %v1572 = vand.u32 %v49, 4294901760
  %v1573 = vsub.f32 %v49, %v1572
  %v1574 = vand.u32 %v1573, 4294901760
  %v1575 = vsub.f32 %v1573, %v1574
  %v1576 = vand.u32 %v1575, 4294901760
  %1577 = vmatprep.mubr.f32.mxu0 %v1576
  %v1578 = vand.u32 %v26, 4294901760
  %v1579 = vsub.f32 %v26, %v1578
  %v1580 = vand.u32 %v1579, 4294901760
  %v1581 = vsub.f32 %v1579, %v1580
  %v1582 = vand.u32 %v1581, 4294901760
  %1583 = vmatmul.mubr.f32.gmra.mrb[0].mxu0 %v1582
  %v1584 = vpop.f32.mrb[0].mxu0
  %v1585 = vadd.f32 0.0, %v1584
  %v1586 = vpop.f32.mrb[0].mxu0
  %1587 = vdwg.mxu0
  %1588 = vmatprep.subr.mxu0 0.0
  %v1589 = vand.u32 %v1467, 4294901760
  %v1590 = vsub.f32 %v1467, %v1589
  %v1591 = vand.u32 %v1590, 4294901760
  %v1592 = vsub.f32 %v1590, %v1591
  %v1593 = vand.u32 %v1592, 4294901760
  %1594 = vmatpush1.msra.mxu0 %v1593
  %1595 = vmatprep.subr.mxu0 0.0
  %v1596 = vand.u32 %v1468, 4294901760
  %v1597 = vsub.f32 %v1468, %v1596
  %v1598 = vand.u32 %v1597, 4294901760
  %v1599 = vsub.f32 %v1597, %v1598
  %v1600 = vand.u32 %v1599, 4294901760
  %1601 = vmatpush1.msra.mxu0 %v1600
  %1602 = vmatprep.subr.mxu0 0.0
  %v1603 = vand.u32 %v1469, 4294901760
  %v1604 = vsub.f32 %v1469, %v1603
  %v1605 = vand.u32 %v1604, 4294901760
  %v1606 = vsub.f32 %v1604, %v1605
  %v1607 = vand.u32 %v1606, 4294901760
  %1608 = vmatpush1.msra.mxu0 %v1607
  %1609 = vmatprep.subr.mxu0 0.0
  %v1610 = vand.u32 %v1470, 4294901760
  %v1611 = vsub.f32 %v1470, %v1610
  %v1612 = vand.u32 %v1611, 4294901760
  %v1613 = vsub.f32 %v1611, %v1612
  %v1614 = vand.u32 %v1613, 4294901760
  %1615 = vmatpush1.msra.mxu0 %v1614
  %1616 = vmatprep.subr.mxu0 0.0
  %v1617 = vand.u32 %v1471, 4294901760
  %v1618 = vsub.f32 %v1471, %v1617
  %v1619 = vand.u32 %v1618, 4294901760
  %v1620 = vsub.f32 %v1618, %v1619
  %v1621 = vand.u32 %v1620, 4294901760
  %1622 = vmatpush1.msra.mxu0 %v1621
  %1623 = vmatprep.subr.mxu0 0.0
  %v1624 = vand.u32 %v1472, 4294901760
  %v1625 = vsub.f32 %v1472, %v1624
  %v1626 = vand.u32 %v1625, 4294901760
  %v1627 = vsub.f32 %v1625, %v1626
  %v1628 = vand.u32 %v1627, 4294901760
  %1629 = vmatpush1.msra.mxu0 %v1628
  %1630 = vmatprep.subr.mxu0 0.0
  %v1631 = vand.u32 %v1473, 4294901760
  %v1632 = vsub.f32 %v1473, %v1631
  %v1633 = vand.u32 %v1632, 4294901760
  %v1634 = vsub.f32 %v1632, %v1633
  %v1635 = vand.u32 %v1634, 4294901760
  %1636 = vmatpush1.msra.mxu0 %v1635
  %1637 = vmatprep.subr.mxu0 0.0
  %v1638 = vand.u32 %v1474, 4294901760
  %v1639 = vsub.f32 %v1474, %v1638
  %v1640 = vand.u32 %v1639, 4294901760
  %v1641 = vsub.f32 %v1639, %v1640
  %v1642 = vand.u32 %v1641, 4294901760
  %1643 = vmatpush1.msra.mxu0 %v1642
  %1644 = vmatprep.subr.mxu0 0.0
  %v1645 = vand.u32 %v1475, 4294901760
  %v1646 = vsub.f32 %v1475, %v1645
  %v1647 = vand.u32 %v1646, 4294901760
  %v1648 = vsub.f32 %v1646, %v1647
  %v1649 = vand.u32 %v1648, 4294901760
  %1650 = vmatpush1.msra.mxu0 %v1649
  %1651 = vmatprep.subr.mxu0 0.0
  %v1652 = vand.u32 %v1476, 4294901760
  %v1653 = vsub.f32 %v1476, %v1652
  %v1654 = vand.u32 %v1653, 4294901760
  %v1655 = vsub.f32 %v1653, %v1654
  %v1656 = vand.u32 %v1655, 4294901760
  %1657 = vmatpush1.msra.mxu0 %v1656
  %1658 = vmatprep.subr.mxu0 0.0
  %v1659 = vand.u32 %v1477, 4294901760
  %v1660 = vsub.f32 %v1477, %v1659
  %v1661 = vand.u32 %v1660, 4294901760
  %v1662 = vsub.f32 %v1660, %v1661
  %v1663 = vand.u32 %v1662, 4294901760
  %1664 = vmatpush1.msra.mxu0 %v1663
  %1665 = vmatprep.subr.mxu0 0.0
  %v1666 = vand.u32 %v1478, 4294901760
  %v1667 = vsub.f32 %v1478, %v1666
  %v1668 = vand.u32 %v1667, 4294901760
  %v1669 = vsub.f32 %v1667, %v1668
  %v1670 = vand.u32 %v1669, 4294901760
  %1671 = vmatpush1.msra.mxu0 %v1670
  %1672 = vmatprep.subr.mxu0 0.0
  %v1673 = vand.u32 %v1479, 4294901760
  %v1674 = vsub.f32 %v1479, %v1673
  %v1675 = vand.u32 %v1674, 4294901760
  %v1676 = vsub.f32 %v1674, %v1675
  %v1677 = vand.u32 %v1676, 4294901760
  %1678 = vmatpush1.msra.mxu0 %v1677
  %1679 = vmatprep.subr.mxu0 0.0
  %v1680 = vand.u32 %v1480, 4294901760
  %v1681 = vsub.f32 %v1480, %v1680
  %v1682 = vand.u32 %v1681, 4294901760
  %v1683 = vsub.f32 %v1681, %v1682
  %v1684 = vand.u32 %v1683, 4294901760
  %1685 = vmatpush1.msra.mxu0 %v1684
  %1686 = vmatprep.subr.mxu0 0.0
  %v1687 = vand.u32 %v1481, 4294901760
  %v1688 = vsub.f32 %v1481, %v1687
  %v1689 = vand.u32 %v1688, 4294901760
  %v1690 = vsub.f32 %v1688, %v1689
  %v1691 = vand.u32 %v1690, 4294901760
  %1692 = vmatpush1.msra.mxu0 %v1691
  %1693 = vmatprep.subr.mxu0 0.0
  %v1694 = vand.u32 %v1482, 4294901760
  %v1695 = vsub.f32 %v1482, %v1694
  %v1696 = vand.u32 %v1695, 4294901760
  %v1697 = vsub.f32 %v1695, %v1696
  %v1698 = vand.u32 %v1697, 4294901760
  %1699 = vmatpush1.msra.mxu0 %v1698
  %1700 = vmatprep.subr.mxu0 0.0
  %v1701 = vand.u32 %v1483, 4294901760
  %v1702 = vsub.f32 %v1483, %v1701
  %v1703 = vand.u32 %v1702, 4294901760
  %v1704 = vsub.f32 %v1702, %v1703
  %v1705 = vand.u32 %v1704, 4294901760
  %1706 = vmatpush1.msra.mxu0 %v1705
  %1707 = vmatprep.subr.mxu0 0.0
  %v1708 = vand.u32 %v1484, 4294901760
  %v1709 = vsub.f32 %v1484, %v1708
  %v1710 = vand.u32 %v1709, 4294901760
  %v1711 = vsub.f32 %v1709, %v1710
  %v1712 = vand.u32 %v1711, 4294901760
  %1713 = vmatpush1.msra.mxu0 %v1712
  %1714 = vmatprep.subr.mxu0 0.0
  %v1715 = vand.u32 %v1487, 4294901760
  %v1716 = vsub.f32 %v1487, %v1715
  %v1717 = vand.u32 %v1716, 4294901760
  %v1718 = vsub.f32 %v1716, %v1717
  %v1719 = vand.u32 %v1718, 4294901760
  %1720 = vmatpush1.msra.mxu0 %v1719
  %1721 = vmatprep.subr.mxu0 0.0
  %1722 = vmatpush1.msra.mxu0 0.0
  %1723 = vmatprep.subr.mxu0 0.0
  %1724 = vmatpush1.msra.mxu0 0.0
  %1725 = vmatprep.subr.mxu0 0.0
  %1726 = vmatpush1.msra.mxu0 0.0
  %1727 = vmatprep.subr.mxu0 0.0
  %1728 = vmatpush1.msra.mxu0 0.0
  %1729 = vmatprep.subr.mxu0 0.0
  %1730 = vmatpush1.msra.mxu0 0.0
  %1731 = vmatprep.subr.mxu0 0.0
  %1732 = vmatpush1.msra.mxu0 0.0
  %1733 = vmatprep.subr.mxu0 0.0
  %1734 = vmatpush1.msra.mxu0 0.0
  %1735 = vmatprep.subr.mxu0 0.0
  %1736 = vmatpush1.msra.mxu0 0.0
  %1737 = vmatprep.subr.mxu0 0.0
  %1738 = vmatpush1.msra.mxu0 0.0
  %1739 = vmatprep.subr.mxu0 0.0
  %1740 = vmatpush1.msra.mxu0 0.0
  %1741 = vmatprep.subr.mxu0 0.0
  %1742 = vmatpush1.msra.mxu0 0.0
  %1743 = vmatprep.subr.mxu0 0.0
  %1744 = vmatpush1.msra.mxu0 0.0
  %1745 = vmatprep.subr.mxu0 0.0
  %1746 = vmatpush1.msra.mxu0 0.0
  %v1747 = vand.u32 %v49, 4294901760
  %1748 = vmatprep.mubr.f32.mxu0 %v1747
  %v1749 = vand.u32 %v26, 4294901760
  %1750 = vmatmul.mubr.f32.gmra.mrb[0].mxu0 %v1749
  %v1751 = vpop.f32.mrb[0].mxu0
  %v1752 = vadd.f32 %v1585, %v1751
  %v1753 = vpop.f32.mrb[0].mxu0
  %1754 = vdwg.mxu0
  %1755 = vmatprep.subr.mxu0 0.0
  %v1756 = vand.u32 %v1467, 4294901760
  %v1757 = vsub.f32 %v1467, %v1756
  %1758 = vmatpush1.msra.mxu0 %v1757
  %1759 = vmatprep.subr.mxu0 0.0
  %v1760 = vand.u32 %v1468, 4294901760
  %v1761 = vsub.f32 %v1468, %v1760
  %1762 = vmatpush1.msra.mxu0 %v1761
  %1763 = vmatprep.subr.mxu0 0.0
  %v1764 = vand.u32 %v1469, 4294901760
  %v1765 = vsub.f32 %v1469, %v1764
  %1766 = vmatpush1.msra.mxu0 %v1765
  %1767 = vmatprep.subr.mxu0 0.0
  %v1768 = vand.u32 %v1470, 4294901760
  %v1769 = vsub.f32 %v1470, %v1768
  %1770 = vmatpush1.msra.mxu0 %v1769
  %1771 = vmatprep.subr.mxu0 0.0
  %v1772 = vand.u32 %v1471, 4294901760
  %v1773 = vsub.f32 %v1471, %v1772
  %1774 = vmatpush1.msra.mxu0 %v1773
  %1775 = vmatprep.subr.mxu0 0.0
  %v1776 = vand.u32 %v1472, 4294901760
  %v1777 = vsub.f32 %v1472, %v1776
  %1778 = vmatpush1.msra.mxu0 %v1777
  %1779 = vmatprep.subr.mxu0 0.0
  %v1780 = vand.u32 %v1473, 4294901760
  %v1781 = vsub.f32 %v1473, %v1780
  %1782 = vmatpush1.msra.mxu0 %v1781
  %1783 = vmatprep.subr.mxu0 0.0
  %v1784 = vand.u32 %v1474, 4294901760
  %v1785 = vsub.f32 %v1474, %v1784
  %1786 = vmatpush1.msra.mxu0 %v1785
  %1787 = vmatprep.subr.mxu0 0.0
  %v1788 = vand.u32 %v1475, 4294901760
  %v1789 = vsub.f32 %v1475, %v1788
  %1790 = vmatpush1.msra.mxu0 %v1789
  %1791 = vmatprep.subr.mxu0 0.0
  %v1792 = vand.u32 %v1476, 4294901760
  %v1793 = vsub.f32 %v1476, %v1792
  %1794 = vmatpush1.msra.mxu0 %v1793
  %1795 = vmatprep.subr.mxu0 0.0
  %v1796 = vand.u32 %v1477, 4294901760
  %v1797 = vsub.f32 %v1477, %v1796
  %1798 = vmatpush1.msra.mxu0 %v1797
  %1799 = vmatprep.subr.mxu0 0.0
  %v1800 = vand.u32 %v1478, 4294901760
  %v1801 = vsub.f32 %v1478, %v1800
  %1802 = vmatpush1.msra.mxu0 %v1801
  %1803 = vmatprep.subr.mxu0 0.0
  %v1804 = vand.u32 %v1479, 4294901760
  %v1805 = vsub.f32 %v1479, %v1804
  %1806 = vmatpush1.msra.mxu0 %v1805
  %1807 = vmatprep.subr.mxu0 0.0
  %v1808 = vand.u32 %v1480, 4294901760
  %v1809 = vsub.f32 %v1480, %v1808
  %1810 = vmatpush1.msra.mxu0 %v1809
  %1811 = vmatprep.subr.mxu0 0.0
  %v1812 = vand.u32 %v1481, 4294901760
  %v1813 = vsub.f32 %v1481, %v1812
  %1814 = vmatpush1.msra.mxu0 %v1813
  %1815 = vmatprep.subr.mxu0 0.0
  %v1816 = vand.u32 %v1482, 4294901760
  %v1817 = vsub.f32 %v1482, %v1816
  %1818 = vmatpush1.msra.mxu0 %v1817
  %1819 = vmatprep.subr.mxu0 0.0
  %v1820 = vand.u32 %v1483, 4294901760
  %v1821 = vsub.f32 %v1483, %v1820
  %1822 = vmatpush1.msra.mxu0 %v1821
  %1823 = vmatprep.subr.mxu0 0.0
  %v1824 = vand.u32 %v1484, 4294901760
  %v1825 = vsub.f32 %v1484, %v1824
  %1826 = vmatpush1.msra.mxu0 %v1825
  %1827 = vmatprep.subr.mxu0 0.0
  %v1828 = vand.u32 %v1487, 4294901760
  %v1829 = vsub.f32 %v1487, %v1828
  %1830 = vmatpush1.msra.mxu0 %v1829
  %1831 = vmatprep.subr.mxu0 0.0
  %1832 = vmatpush1.msra.mxu0 0.0
  %1833 = vmatprep.subr.mxu0 0.0
  %1834 = vmatpush1.msra.mxu0 0.0
  %1835 = vmatprep.subr.mxu0 0.0
  %1836 = vmatpush1.msra.mxu0 0.0
  %1837 = vmatprep.subr.mxu0 0.0
  %1838 = vmatpush1.msra.mxu0 0.0
  %1839 = vmatprep.subr.mxu0 0.0
  %1840 = vmatpush1.msra.mxu0 0.0
  %1841 = vmatprep.subr.mxu0 0.0
  %1842 = vmatpush1.msra.mxu0 0.0
  %1843 = vmatprep.subr.mxu0 0.0
  %1844 = vmatpush1.msra.mxu0 0.0
  %1845 = vmatprep.subr.mxu0 0.0
  %1846 = vmatpush1.msra.mxu0 0.0
  %1847 = vmatprep.subr.mxu0 0.0
  %1848 = vmatpush1.msra.mxu0 0.0
  %1849 = vmatprep.subr.mxu0 0.0
  %1850 = vmatpush1.msra.mxu0 0.0
  %1851 = vmatprep.subr.mxu0 0.0
  %1852 = vmatpush1.msra.mxu0 0.0
  %1853 = vmatprep.subr.mxu0 0.0
  %1854 = vmatpush1.msra.mxu0 0.0
  %1855 = vmatprep.subr.mxu0 0.0
  %1856 = vmatpush1.msra.mxu0 0.0
  %v1857 = vand.u32 %v49, 4294901760
  %v1858 = vsub.f32 %v49, %v1857
  %1859 = vmatprep.mubr.f32.mxu0 %v1858
  %v1860 = vand.u32 %v26, 4294901760
  %v1861 = vsub.f32 %v26, %v1860
  %1862 = vmatmul.mubr.f32.gmra.mrb[0].mxu0 %v1861
  %v1863 = vpop.f32.mrb[0].mxu0
  %v1864 = vadd.f32 %v1752, %v1863
  %v1865 = vpop.f32.mrb[0].mxu0
  %1866 = vdwg.mxu0
  %1867 = vmatprep.subr.mxu0 0.0
  %v1868 = vand.u32 %v1467, 4294901760
  %1869 = vmatpush1.msra.mxu0 %v1868
  %1870 = vmatprep.subr.mxu0 0.0
  %v1871 = vand.u32 %v1468, 4294901760
  %1872 = vmatpush1.msra.mxu0 %v1871
  %1873 = vmatprep.subr.mxu0 0.0
  %v1874 = vand.u32 %v1469, 4294901760
  %1875 = vmatpush1.msra.mxu0 %v1874
  %1876 = vmatprep.subr.mxu0 0.0
  %v1877 = vand.u32 %v1470, 4294901760
  %1878 = vmatpush1.msra.mxu0 %v1877
  %1879 = vmatprep.subr.mxu0 0.0
  %v1880 = vand.u32 %v1471, 4294901760
  %1881 = vmatpush1.msra.mxu0 %v1880
  %1882 = vmatprep.subr.mxu0 0.0
  %v1883 = vand.u32 %v1472, 4294901760
  %1884 = vmatpush1.msra.mxu0 %v1883
  %1885 = vmatprep.subr.mxu0 0.0
  %v1886 = vand.u32 %v1473, 4294901760
  %1887 = vmatpush1.msra.mxu0 %v1886
  %1888 = vmatprep.subr.mxu0 0.0
  %v1889 = vand.u32 %v1474, 4294901760
  %1890 = vmatpush1.msra.mxu0 %v1889
  %1891 = vmatprep.subr.mxu0 0.0
  %v1892 = vand.u32 %v1475, 4294901760
  %1893 = vmatpush1.msra.mxu0 %v1892
  %1894 = vmatprep.subr.mxu0 0.0
  %v1895 = vand.u32 %v1476, 4294901760
  %1896 = vmatpush1.msra.mxu0 %v1895
  %1897 = vmatprep.subr.mxu0 0.0
  %v1898 = vand.u32 %v1477, 4294901760
  %1899 = vmatpush1.msra.mxu0 %v1898
  %1900 = vmatprep.subr.mxu0 0.0
  %v1901 = vand.u32 %v1478, 4294901760
  %1902 = vmatpush1.msra.mxu0 %v1901
  %1903 = vmatprep.subr.mxu0 0.0
  %v1904 = vand.u32 %v1479, 4294901760
  %1905 = vmatpush1.msra.mxu0 %v1904
  %1906 = vmatprep.subr.mxu0 0.0
  %v1907 = vand.u32 %v1480, 4294901760
  %1908 = vmatpush1.msra.mxu0 %v1907
  %1909 = vmatprep.subr.mxu0 0.0
  %v1910 = vand.u32 %v1481, 4294901760
  %1911 = vmatpush1.msra.mxu0 %v1910
  %1912 = vmatprep.subr.mxu0 0.0
  %v1913 = vand.u32 %v1482, 4294901760
  %1914 = vmatpush1.msra.mxu0 %v1913
  %1915 = vmatprep.subr.mxu0 0.0
  %v1916 = vand.u32 %v1483, 4294901760
  %1917 = vmatpush1.msra.mxu0 %v1916
  %1918 = vmatprep.subr.mxu0 0.0
  %v1919 = vand.u32 %v1484, 4294901760
  %1920 = vmatpush1.msra.mxu0 %v1919
  %1921 = vmatprep.subr.mxu0 0.0
  %v1922 = vand.u32 %v1487, 4294901760
  %1923 = vmatpush1.msra.mxu0 %v1922
  %1924 = vmatprep.subr.mxu0 0.0
  %1925 = vmatpush1.msra.mxu0 0.0
  %1926 = vmatprep.subr.mxu0 0.0
  %1927 = vmatpush1.msra.mxu0 0.0
  %1928 = vmatprep.subr.mxu0 0.0
  %1929 = vmatpush1.msra.mxu0 0.0
  %1930 = vmatprep.subr.mxu0 0.0
  %1931 = vmatpush1.msra.mxu0 0.0
  %1932 = vmatprep.subr.mxu0 0.0
  %1933 = vmatpush1.msra.mxu0 0.0
  %1934 = vmatprep.subr.mxu0 0.0
  %1935 = vmatpush1.msra.mxu0 0.0
  %1936 = vmatprep.subr.mxu0 0.0
  %1937 = vmatpush1.msra.mxu0 0.0
  %1938 = vmatprep.subr.mxu0 0.0
  %1939 = vmatpush1.msra.mxu0 0.0
  %1940 = vmatprep.subr.mxu0 0.0
  %1941 = vmatpush1.msra.mxu0 0.0
  %1942 = vmatprep.subr.mxu0 0.0
  %1943 = vmatpush1.msra.mxu0 0.0
  %1944 = vmatprep.subr.mxu0 0.0
  %1945 = vmatpush1.msra.mxu0 0.0
  %1946 = vmatprep.subr.mxu0 0.0
  %1947 = vmatpush1.msra.mxu0 0.0
  %1948 = vmatprep.subr.mxu0 0.0
  %1949 = vmatpush1.msra.mxu0 0.0
  %v1950 = vand.u32 %v49, 4294901760
  %v1951 = vsub.f32 %v49, %v1950
  %v1952 = vand.u32 %v1951, 4294901760
  %1953 = vmatprep.mubr.f32.mxu0 %v1952
  %v1954 = vand.u32 %v26, 4294901760
  %v1955 = vsub.f32 %v26, %v1954
  %v1956 = vand.u32 %v1955, 4294901760
  %1957 = vmatmul.mubr.f32.gmra.mrb[0].mxu0 %v1956
  %v1958 = vpop.f32.mrb[0].mxu0
  %v1959 = vadd.f32 %v1864, %v1958
  %v1960 = vpop.f32.mrb[0].mxu0
  %1961 = vdwg.mxu0
  %1962 = vmatprep.subr.mxu0 0.0
  %v1963 = vand.u32 %v1467, 4294901760
  %v1964 = vsub.f32 %v1467, %v1963
  %v1965 = vand.u32 %v1964, 4294901760
  %1966 = vmatpush1.msra.mxu0 %v1965
  %1967 = vmatprep.subr.mxu0 0.0
  %v1968 = vand.u32 %v1468, 4294901760
  %v1969 = vsub.f32 %v1468, %v1968
  %v1970 = vand.u32 %v1969, 4294901760
  %1971 = vmatpush1.msra.mxu0 %v1970
  %1972 = vmatprep.subr.mxu0 0.0
  %v1973 = vand.u32 %v1469, 4294901760
  %v1974 = vsub.f32 %v1469, %v1973
  %v1975 = vand.u32 %v1974, 4294901760
  %1976 = vmatpush1.msra.mxu0 %v1975
  %1977 = vmatprep.subr.mxu0 0.0
  %v1978 = vand.u32 %v1470, 4294901760
  %v1979 = vsub.f32 %v1470, %v1978
  %v1980 = vand.u32 %v1979, 4294901760
  %1981 = vmatpush1.msra.mxu0 %v1980
  %1982 = vmatprep.subr.mxu0 0.0
  %v1983 = vand.u32 %v1471, 4294901760
  %v1984 = vsub.f32 %v1471, %v1983
  %v1985 = vand.u32 %v1984, 4294901760
  %1986 = vmatpush1.msra.mxu0 %v1985
  %1987 = vmatprep.subr.mxu0 0.0
  %v1988 = vand.u32 %v1472, 4294901760
  %v1989 = vsub.f32 %v1472, %v1988
  %v1990 = vand.u32 %v1989, 4294901760
  %1991 = vmatpush1.msra.mxu0 %v1990
  %1992 = vmatprep.subr.mxu0 0.0
  %v1993 = vand.u32 %v1473, 4294901760
  %v1994 = vsub.f32 %v1473, %v1993
  %v1995 = vand.u32 %v1994, 4294901760
  %1996 = vmatpush1.msra.mxu0 %v1995
  %1997 = vmatprep.subr.mxu0 0.0
  %v1998 = vand.u32 %v1474, 4294901760
  %v1999 = vsub.f32 %v1474, %v1998
  %v2000 = vand.u32 %v1999, 4294901760
  %2001 = vmatpush1.msra.mxu0 %v2000
  %2002 = vmatprep.subr.mxu0 0.0
  %v2003 = vand.u32 %v1475, 4294901760
  %v2004 = vsub.f32 %v1475, %v2003
  %v2005 = vand.u32 %v2004, 4294901760
  %2006 = vmatpush1.msra.mxu0 %v2005
  %2007 = vmatprep.subr.mxu0 0.0
  %v2008 = vand.u32 %v1476, 4294901760
  %v2009 = vsub.f32 %v1476, %v2008
  %v2010 = vand.u32 %v2009, 4294901760
  %2011 = vmatpush1.msra.mxu0 %v2010
  %2012 = vmatprep.subr.mxu0 0.0
  %v2013 = vand.u32 %v1477, 4294901760
  %v2014 = vsub.f32 %v1477, %v2013
  %v2015 = vand.u32 %v2014, 4294901760
  %2016 = vmatpush1.msra.mxu0 %v2015
  %2017 = vmatprep.subr.mxu0 0.0
  %v2018 = vand.u32 %v1478, 4294901760
  %v2019 = vsub.f32 %v1478, %v2018
  %v2020 = vand.u32 %v2019, 4294901760
  %2021 = vmatpush1.msra.mxu0 %v2020
  %2022 = vmatprep.subr.mxu0 0.0
  %v2023 = vand.u32 %v1479, 4294901760
  %v2024 = vsub.f32 %v1479, %v2023
  %v2025 = vand.u32 %v2024, 4294901760
  %2026 = vmatpush1.msra.mxu0 %v2025
  %2027 = vmatprep.subr.mxu0 0.0
  %v2028 = vand.u32 %v1480, 4294901760
  %v2029 = vsub.f32 %v1480, %v2028
  %v2030 = vand.u32 %v2029, 4294901760
  %2031 = vmatpush1.msra.mxu0 %v2030
  %2032 = vmatprep.subr.mxu0 0.0
  %v2033 = vand.u32 %v1481, 4294901760
  %v2034 = vsub.f32 %v1481, %v2033
  %v2035 = vand.u32 %v2034, 4294901760
  %2036 = vmatpush1.msra.mxu0 %v2035
  %2037 = vmatprep.subr.mxu0 0.0
  %v2038 = vand.u32 %v1482, 4294901760
  %v2039 = vsub.f32 %v1482, %v2038
  %v2040 = vand.u32 %v2039, 4294901760
  %2041 = vmatpush1.msra.mxu0 %v2040
  %2042 = vmatprep.subr.mxu0 0.0
  %v2043 = vand.u32 %v1483, 4294901760
  %v2044 = vsub.f32 %v1483, %v2043
  %v2045 = vand.u32 %v2044, 4294901760
  %2046 = vmatpush1.msra.mxu0 %v2045
  %2047 = vmatprep.subr.mxu0 0.0
  %v2048 = vand.u32 %v1484, 4294901760
  %v2049 = vsub.f32 %v1484, %v2048
  %v2050 = vand.u32 %v2049, 4294901760
  %2051 = vmatpush1.msra.mxu0 %v2050
  %2052 = vmatprep.subr.mxu0 0.0
  %v2053 = vand.u32 %v1487, 4294901760
  %v2054 = vsub.f32 %v1487, %v2053
  %v2055 = vand.u32 %v2054, 4294901760
  %2056 = vmatpush1.msra.mxu0 %v2055
  %2057 = vmatprep.subr.mxu0 0.0
  %2058 = vmatpush1.msra.mxu0 0.0
  %2059 = vmatprep.subr.mxu0 0.0
  %2060 = vmatpush1.msra.mxu0 0.0
  %2061 = vmatprep.subr.mxu0 0.0
  %2062 = vmatpush1.msra.mxu0 0.0
  %2063 = vmatprep.subr.mxu0 0.0
  %2064 = vmatpush1.msra.mxu0 0.0
  %2065 = vmatprep.subr.mxu0 0.0
  %2066 = vmatpush1.msra.mxu0 0.0
  %2067 = vmatprep.subr.mxu0 0.0
  %2068 = vmatpush1.msra.mxu0 0.0
  %2069 = vmatprep.subr.mxu0 0.0
  %2070 = vmatpush1.msra.mxu0 0.0
  %2071 = vmatprep.subr.mxu0 0.0
  %2072 = vmatpush1.msra.mxu0 0.0
  %2073 = vmatprep.subr.mxu0 0.0
  %2074 = vmatpush1.msra.mxu0 0.0
  %2075 = vmatprep.subr.mxu0 0.0
  %2076 = vmatpush1.msra.mxu0 0.0
  %2077 = vmatprep.subr.mxu0 0.0
  %2078 = vmatpush1.msra.mxu0 0.0
  %2079 = vmatprep.subr.mxu0 0.0
  %2080 = vmatpush1.msra.mxu0 0.0
  %2081 = vmatprep.subr.mxu0 0.0
  %2082 = vmatpush1.msra.mxu0 0.0
  %v2083 = vand.u32 %v49, 4294901760
  %2084 = vmatprep.mubr.f32.mxu0 %v2083
  %v2085 = vand.u32 %v26, 4294901760
  %2086 = vmatmul.mubr.f32.gmra.mrb[0].mxu0 %v2085
  %v2087 = vpop.f32.mrb[0].mxu0
  %v2088 = vadd.f32 %v1959, %v2087
  %v2089 = vpop.f32.mrb[0].mxu0
  %2090 = vdwg.mxu0
  %2091 = vmatprep.subr.mxu0 0.0
  %v2092 = vand.u32 %v1467, 4294901760
  %2093 = vmatpush1.msra.mxu0 %v2092
  %2094 = vmatprep.subr.mxu0 0.0
  %v2095 = vand.u32 %v1468, 4294901760
  %2096 = vmatpush1.msra.mxu0 %v2095
  %2097 = vmatprep.subr.mxu0 0.0
  %v2098 = vand.u32 %v1469, 4294901760
  %2099 = vmatpush1.msra.mxu0 %v2098
  %2100 = vmatprep.subr.mxu0 0.0
  %v2101 = vand.u32 %v1470, 4294901760
  %2102 = vmatpush1.msra.mxu0 %v2101
  %2103 = vmatprep.subr.mxu0 0.0
  %v2104 = vand.u32 %v1471, 4294901760
  %2105 = vmatpush1.msra.mxu0 %v2104
  %2106 = vmatprep.subr.mxu0 0.0
  %v2107 = vand.u32 %v1472, 4294901760
  %2108 = vmatpush1.msra.mxu0 %v2107
  %2109 = vmatprep.subr.mxu0 0.0
  %v2110 = vand.u32 %v1473, 4294901760
  %2111 = vmatpush1.msra.mxu0 %v2110
  %2112 = vmatprep.subr.mxu0 0.0
  %v2113 = vand.u32 %v1474, 4294901760
  %2114 = vmatpush1.msra.mxu0 %v2113
  %2115 = vmatprep.subr.mxu0 0.0
  %v2116 = vand.u32 %v1475, 4294901760
  %2117 = vmatpush1.msra.mxu0 %v2116
  %2118 = vmatprep.subr.mxu0 0.0
  %v2119 = vand.u32 %v1476, 4294901760
  %2120 = vmatpush1.msra.mxu0 %v2119
  %2121 = vmatprep.subr.mxu0 0.0
  %v2122 = vand.u32 %v1477, 4294901760
  %2123 = vmatpush1.msra.mxu0 %v2122
  %2124 = vmatprep.subr.mxu0 0.0
  %v2125 = vand.u32 %v1478, 4294901760
  %2126 = vmatpush1.msra.mxu0 %v2125
  %2127 = vmatprep.subr.mxu0 0.0
  %v2128 = vand.u32 %v1479, 4294901760
  %2129 = vmatpush1.msra.mxu0 %v2128
  %2130 = vmatprep.subr.mxu0 0.0
  %v2131 = vand.u32 %v1480, 4294901760
  %2132 = vmatpush1.msra.mxu0 %v2131
  %2133 = vmatprep.subr.mxu0 0.0
  %v2134 = vand.u32 %v1481, 4294901760
  %2135 = vmatpush1.msra.mxu0 %v2134
  %2136 = vmatprep.subr.mxu0 0.0
  %v2137 = vand.u32 %v1482, 4294901760
  %2138 = vmatpush1.msra.mxu0 %v2137
  %2139 = vmatprep.subr.mxu0 0.0
  %v2140 = vand.u32 %v1483, 4294901760
  %2141 = vmatpush1.msra.mxu0 %v2140
  %2142 = vmatprep.subr.mxu0 0.0
  %v2143 = vand.u32 %v1484, 4294901760
  %2144 = vmatpush1.msra.mxu0 %v2143
  %2145 = vmatprep.subr.mxu0 0.0
  %v2146 = vand.u32 %v1487, 4294901760
  %2147 = vmatpush1.msra.mxu0 %v2146
  %2148 = vmatprep.subr.mxu0 0.0
  %2149 = vmatpush1.msra.mxu0 0.0
  %2150 = vmatprep.subr.mxu0 0.0
  %2151 = vmatpush1.msra.mxu0 0.0
  %2152 = vmatprep.subr.mxu0 0.0
  %2153 = vmatpush1.msra.mxu0 0.0
  %2154 = vmatprep.subr.mxu0 0.0
  %2155 = vmatpush1.msra.mxu0 0.0
  %2156 = vmatprep.subr.mxu0 0.0
  %2157 = vmatpush1.msra.mxu0 0.0
  %2158 = vmatprep.subr.mxu0 0.0
  %2159 = vmatpush1.msra.mxu0 0.0
  %2160 = vmatprep.subr.mxu0 0.0
  %2161 = vmatpush1.msra.mxu0 0.0
  %2162 = vmatprep.subr.mxu0 0.0
  %2163 = vmatpush1.msra.mxu0 0.0
  %2164 = vmatprep.subr.mxu0 0.0
  %2165 = vmatpush1.msra.mxu0 0.0
  %2166 = vmatprep.subr.mxu0 0.0
  %2167 = vmatpush1.msra.mxu0 0.0
  %2168 = vmatprep.subr.mxu0 0.0
  %2169 = vmatpush1.msra.mxu0 0.0
  %2170 = vmatprep.subr.mxu0 0.0
  %2171 = vmatpush1.msra.mxu0 0.0
  %2172 = vmatprep.subr.mxu0 0.0
  %2173 = vmatpush1.msra.mxu0 0.0
  %v2174 = vand.u32 %v49, 4294901760
  %2175 = vmatprep.mubr.f32.mxu0 %v2174
  %v2176 = vand.u32 %v26, 4294901760
  %2177 = vmatmul.mubr.f32.gmra.mrb[0].mxu0 %v2176
  %v2178 = vpop.f32.mrb[0].mxu0
  %v2179 = vadd.f32 %v2088, %v2178
  %v2180 = vpop.f32.mrb[0].mxu0
  %2181 = vdwg.mxu0
  %2182 = vst [vmem:[#allocation2 + $0x10] sm:$0xff] %v2179
  %s2183 = scalar_lea.vmem %s0, 456
  %v2184 = vld [vmem:[%s2183] sm:$0xff]
  %v2185 = vld [vmem:[%s2183 + $0x8] sm:$0xff]
  %v2186 = vld [vmem:[%s2183 + $0x10] sm:$0xff]
  %v2187 = vld [vmem:[%s2183 + $0x18] sm:$0xff]
  %v2188 = vld [vmem:[%s2183 + $0x20] sm:$0xff]
  %v2189 = vld [vmem:[%s2183 + $0x28] sm:$0xff]
  %v2190 = vld [vmem:[%s2183 + $0x30] sm:$0xff]
  %v2191 = vld [vmem:[%s2183 + $0x38] sm:$0xff]
  %v2192 = vld [vmem:[%s2183 + $0x40] sm:$0xff]
  %v2193 = vld [vmem:[%s2183 + $0x48] sm:$0xff]
  %v2194 = vld [vmem:[%s2183 + $0x50] sm:$0xff]
  %v2195 = vld [vmem:[%s2183 + $0x58] sm:$0xff]
  %v2196 = vld [vmem:[%s2183 + $0x60] sm:$0xff]
  %v2197 = vld [vmem:[%s2183 + $0x68] sm:$0xff]
  %v2198 = vld [vmem:[%s2183 + $0x70] sm:$0xff]
  %v2199 = vld [vmem:[%s2183 + $0x78] sm:$0xff]
  %v2200 = vld [vmem:[%s2183 + $0x80] sm:$0xff]
  %v2201 = vld [vmem:[%s2183 + $0x88] sm:$0xff]
  %v2202 = vld [vmem:[%s2183 + $0x90] sm:$0x3f]
  %v2204 = vsel %vm51, %v2202, 0
  %2206 = vmatprep.subr.mxu0 0.0
  %v2207 = vand.u32 %v2184, 4294901760
  %2208 = vmatpush1.msra.mxu0 %v2207
  %2209 = vmatprep.subr.mxu0 0.0
  %v2210 = vand.u32 %v2185, 4294901760
  %2211 = vmatpush1.msra.mxu0 %v2210
  %2212 = vmatprep.subr.mxu0 0.0
  %v2213 = vand.u32 %v2186, 4294901760
  %2214 = vmatpush1.msra.mxu0 %v2213
  %2215 = vmatprep.subr.mxu0 0.0
  %v2216 = vand.u32 %v2187, 4294901760
  %2217 = vmatpush1.msra.mxu0 %v2216
  %2218 = vmatprep.subr.mxu0 0.0
  %v2219 = vand.u32 %v2188, 4294901760
  %2220 = vmatpush1.msra.mxu0 %v2219
  %2221 = vmatprep.subr.mxu0 0.0
  %v2222 = vand.u32 %v2189, 4294901760
  %2223 = vmatpush1.msra.mxu0 %v2222
  %2224 = vmatprep.subr.mxu0 0.0
  %v2225 = vand.u32 %v2190, 4294901760
  %2226 = vmatpush1.msra.mxu0 %v2225
  %2227 = vmatprep.subr.mxu0 0.0
  %v2228 = vand.u32 %v2191, 4294901760
  %2229 = vmatpush1.msra.mxu0 %v2228
  %2230 = vmatprep.subr.mxu0 0.0
  %v2231 = vand.u32 %v2192, 4294901760
  %2232 = vmatpush1.msra.mxu0 %v2231
  %2233 = vmatprep.subr.mxu0 0.0
  %v2234 = vand.u32 %v2193, 4294901760
  %2235 = vmatpush1.msra.mxu0 %v2234
  %2236 = vmatprep.subr.mxu0 0.0
  %v2237 = vand.u32 %v2194, 4294901760
  %2238 = vmatpush1.msra.mxu0 %v2237
  %2239 = vmatprep.subr.mxu0 0.0
  %v2240 = vand.u32 %v2195, 4294901760
  %2241 = vmatpush1.msra.mxu0 %v2240
  %2242 = vmatprep.subr.mxu0 0.0
  %v2243 = vand.u32 %v2196, 4294901760
  %2244 = vmatpush1.msra.mxu0 %v2243
  %2245 = vmatprep.subr.mxu0 0.0
  %v2246 = vand.u32 %v2197, 4294901760
  %2247 = vmatpush1.msra.mxu0 %v2246
  %2248 = vmatprep.subr.mxu0 0.0
  %v2249 = vand.u32 %v2198, 4294901760
  %2250 = vmatpush1.msra.mxu0 %v2249
  %2251 = vmatprep.subr.mxu0 0.0
  %v2252 = vand.u32 %v2199, 4294901760
  %2253 = vmatpush1.msra.mxu0 %v2252
  %2254 = vmatprep.subr.mxu0 0.0
  %v2255 = vand.u32 %v2200, 4294901760
  %2256 = vmatpush1.msra.mxu0 %v2255
  %2257 = vmatprep.subr.mxu0 0.0
  %v2258 = vand.u32 %v2201, 4294901760
  %2259 = vmatpush1.msra.mxu0 %v2258
  %2260 = vmatprep.subr.mxu0 0.0
  %v2261 = vand.u32 %v2204, 4294901760
  %2262 = vmatpush1.msra.mxu0 %v2261
  %2263 = vmatprep.subr.mxu0 0.0
  %2264 = vmatpush1.msra.mxu0 0.0
  %2265 = vmatprep.subr.mxu0 0.0
  %2266 = vmatpush1.msra.mxu0 0.0
  %2267 = vmatprep.subr.mxu0 0.0
  %2268 = vmatpush1.msra.mxu0 0.0
  %2269 = vmatprep.subr.mxu0 0.0
  %2270 = vmatpush1.msra.mxu0 0.0
  %2271 = vmatprep.subr.mxu0 0.0
  %2272 = vmatpush1.msra.mxu0 0.0
  %2273 = vmatprep.subr.mxu0 0.0
  %2274 = vmatpush1.msra.mxu0 0.0
  %2275 = vmatprep.subr.mxu0 0.0
  %2276 = vmatpush1.msra.mxu0 0.0
  %2277 = vmatprep.subr.mxu0 0.0
  %2278 = vmatpush1.msra.mxu0 0.0
  %2279 = vmatprep.subr.mxu0 0.0
  %2280 = vmatpush1.msra.mxu0 0.0
  %2281 = vmatprep.subr.mxu0 0.0
  %2282 = vmatpush1.msra.mxu0 0.0
  %2283 = vmatprep.subr.mxu0 0.0
  %2284 = vmatpush1.msra.mxu0 0.0
  %2285 = vmatprep.subr.mxu0 0.0
  %2286 = vmatpush1.msra.mxu0 0.0
  %2287 = vmatprep.subr.mxu0 0.0
  %2288 = vmatpush1.msra.mxu0 0.0
  %v2289 = vand.u32 %v49, 4294901760
  %v2290 = vsub.f32 %v49, %v2289
  %v2291 = vand.u32 %v2290, 4294901760
  %v2292 = vsub.f32 %v2290, %v2291
  %v2293 = vand.u32 %v2292, 4294901760
  %2294 = vmatprep.mubr.f32.mxu0 %v2293
  %v2295 = vand.u32 %v26, 4294901760
  %v2296 = vsub.f32 %v26, %v2295
  %v2297 = vand.u32 %v2296, 4294901760
  %v2298 = vsub.f32 %v2296, %v2297
  %v2299 = vand.u32 %v2298, 4294901760
  %2300 = vmatmul.mubr.f32.gmra.mrb[0].mxu0 %v2299
  %v2301 = vpop.f32.mrb[0].mxu0
  %v2302 = vadd.f32 0.0, %v2301
  %v2303 = vpop.f32.mrb[0].mxu0
  %2304 = vdwg.mxu0
  %2305 = vmatprep.subr.mxu0 0.0
  %v2306 = vand.u32 %v2184, 4294901760
  %v2307 = vsub.f32 %v2184, %v2306
  %v2308 = vand.u32 %v2307, 4294901760
  %v2309 = vsub.f32 %v2307, %v2308
  %v2310 = vand.u32 %v2309, 4294901760
  %2311 = vmatpush1.msra.mxu0 %v2310
  %2312 = vmatprep.subr.mxu0 0.0
  %v2313 = vand.u32 %v2185, 4294901760
  %v2314 = vsub.f32 %v2185, %v2313
  %v2315 = vand.u32 %v2314, 4294901760
  %v2316 = vsub.f32 %v2314, %v2315
  %v2317 = vand.u32 %v2316, 4294901760
  %2318 = vmatpush1.msra.mxu0 %v2317
  %2319 = vmatprep.subr.mxu0 0.0
  %v2320 = vand.u32 %v2186, 4294901760
  %v2321 = vsub.f32 %v2186, %v2320
  %v2322 = vand.u32 %v2321, 4294901760
  %v2323 = vsub.f32 %v2321, %v2322
  %v2324 = vand.u32 %v2323, 4294901760
  %2325 = vmatpush1.msra.mxu0 %v2324
  %2326 = vmatprep.subr.mxu0 0.0
  %v2327 = vand.u32 %v2187, 4294901760
  %v2328 = vsub.f32 %v2187, %v2327
  %v2329 = vand.u32 %v2328, 4294901760
  %v2330 = vsub.f32 %v2328, %v2329
  %v2331 = vand.u32 %v2330, 4294901760
  %2332 = vmatpush1.msra.mxu0 %v2331
  %2333 = vmatprep.subr.mxu0 0.0
  %v2334 = vand.u32 %v2188, 4294901760
  %v2335 = vsub.f32 %v2188, %v2334
  %v2336 = vand.u32 %v2335, 4294901760
  %v2337 = vsub.f32 %v2335, %v2336
  %v2338 = vand.u32 %v2337, 4294901760
  %2339 = vmatpush1.msra.mxu0 %v2338
  %2340 = vmatprep.subr.mxu0 0.0
  %v2341 = vand.u32 %v2189, 4294901760
  %v2342 = vsub.f32 %v2189, %v2341
  %v2343 = vand.u32 %v2342, 4294901760
  %v2344 = vsub.f32 %v2342, %v2343
  %v2345 = vand.u32 %v2344, 4294901760
  %2346 = vmatpush1.msra.mxu0 %v2345
  %2347 = vmatprep.subr.mxu0 0.0
  %v2348 = vand.u32 %v2190, 4294901760
  %v2349 = vsub.f32 %v2190, %v2348
  %v2350 = vand.u32 %v2349, 4294901760
  %v2351 = vsub.f32 %v2349, %v2350
  %v2352 = vand.u32 %v2351, 4294901760
  %2353 = vmatpush1.msra.mxu0 %v2352
  %2354 = vmatprep.subr.mxu0 0.0
  %v2355 = vand.u32 %v2191, 4294901760
  %v2356 = vsub.f32 %v2191, %v2355
  %v2357 = vand.u32 %v2356, 4294901760
  %v2358 = vsub.f32 %v2356, %v2357
  %v2359 = vand.u32 %v2358, 4294901760
  %2360 = vmatpush1.msra.mxu0 %v2359
  %2361 = vmatprep.subr.mxu0 0.0
  %v2362 = vand.u32 %v2192, 4294901760
  %v2363 = vsub.f32 %v2192, %v2362
  %v2364 = vand.u32 %v2363, 4294901760
  %v2365 = vsub.f32 %v2363, %v2364
  %v2366 = vand.u32 %v2365, 4294901760
  %2367 = vmatpush1.msra.mxu0 %v2366
  %2368 = vmatprep.subr.mxu0 0.0
  %v2369 = vand.u32 %v2193, 4294901760
  %v2370 = vsub.f32 %v2193, %v2369
  %v2371 = vand.u32 %v2370, 4294901760
  %v2372 = vsub.f32 %v2370, %v2371
  %v2373 = vand.u32 %v2372, 4294901760
  %2374 = vmatpush1.msra.mxu0 %v2373
  %2375 = vmatprep.subr.mxu0 0.0
  %v2376 = vand.u32 %v2194, 4294901760
  %v2377 = vsub.f32 %v2194, %v2376
  %v2378 = vand.u32 %v2377, 4294901760
  %v2379 = vsub.f32 %v2377, %v2378
  %v2380 = vand.u32 %v2379, 4294901760
  %2381 = vmatpush1.msra.mxu0 %v2380
  %2382 = vmatprep.subr.mxu0 0.0
  %v2383 = vand.u32 %v2195, 4294901760
  %v2384 = vsub.f32 %v2195, %v2383
  %v2385 = vand.u32 %v2384, 4294901760
  %v2386 = vsub.f32 %v2384, %v2385
  %v2387 = vand.u32 %v2386, 4294901760
  %2388 = vmatpush1.msra.mxu0 %v2387
  %2389 = vmatprep.subr.mxu0 0.0
  %v2390 = vand.u32 %v2196, 4294901760
  %v2391 = vsub.f32 %v2196, %v2390
  %v2392 = vand.u32 %v2391, 4294901760
  %v2393 = vsub.f32 %v2391, %v2392
  %v2394 = vand.u32 %v2393, 4294901760
  %2395 = vmatpush1.msra.mxu0 %v2394
  %2396 = vmatprep.subr.mxu0 0.0
  %v2397 = vand.u32 %v2197, 4294901760
  %v2398 = vsub.f32 %v2197, %v2397
  %v2399 = vand.u32 %v2398, 4294901760
  %v2400 = vsub.f32 %v2398, %v2399
  %v2401 = vand.u32 %v2400, 4294901760
  %2402 = vmatpush1.msra.mxu0 %v2401
  %2403 = vmatprep.subr.mxu0 0.0
  %v2404 = vand.u32 %v2198, 4294901760
  %v2405 = vsub.f32 %v2198, %v2404
  %v2406 = vand.u32 %v2405, 4294901760
  %v2407 = vsub.f32 %v2405, %v2406
  %v2408 = vand.u32 %v2407, 4294901760
  %2409 = vmatpush1.msra.mxu0 %v2408
  %2410 = vmatprep.subr.mxu0 0.0
  %v2411 = vand.u32 %v2199, 4294901760
  %v2412 = vsub.f32 %v2199, %v2411
  %v2413 = vand.u32 %v2412, 4294901760
  %v2414 = vsub.f32 %v2412, %v2413
  %v2415 = vand.u32 %v2414, 4294901760
  %2416 = vmatpush1.msra.mxu0 %v2415
  %2417 = vmatprep.subr.mxu0 0.0
  %v2418 = vand.u32 %v2200, 4294901760
  %v2419 = vsub.f32 %v2200, %v2418
  %v2420 = vand.u32 %v2419, 4294901760
  %v2421 = vsub.f32 %v2419, %v2420
  %v2422 = vand.u32 %v2421, 4294901760
  %2423 = vmatpush1.msra.mxu0 %v2422
  %2424 = vmatprep.subr.mxu0 0.0
  %v2425 = vand.u32 %v2201, 4294901760
  %v2426 = vsub.f32 %v2201, %v2425
  %v2427 = vand.u32 %v2426, 4294901760
  %v2428 = vsub.f32 %v2426, %v2427
  %v2429 = vand.u32 %v2428, 4294901760
  %2430 = vmatpush1.msra.mxu0 %v2429
  %2431 = vmatprep.subr.mxu0 0.0
  %v2432 = vand.u32 %v2204, 4294901760
  %v2433 = vsub.f32 %v2204, %v2432
  %v2434 = vand.u32 %v2433, 4294901760
  %v2435 = vsub.f32 %v2433, %v2434
  %v2436 = vand.u32 %v2435, 4294901760
  %2437 = vmatpush1.msra.mxu0 %v2436
  %2438 = vmatprep.subr.mxu0 0.0
  %2439 = vmatpush1.msra.mxu0 0.0
  %2440 = vmatprep.subr.mxu0 0.0
  %2441 = vmatpush1.msra.mxu0 0.0
  %2442 = vmatprep.subr.mxu0 0.0
  %2443 = vmatpush1.msra.mxu0 0.0
  %2444 = vmatprep.subr.mxu0 0.0
  %2445 = vmatpush1.msra.mxu0 0.0
  %2446 = vmatprep.subr.mxu0 0.0
  %2447 = vmatpush1.msra.mxu0 0.0
  %2448 = vmatprep.subr.mxu0 0.0
  %2449 = vmatpush1.msra.mxu0 0.0
  %2450 = vmatprep.subr.mxu0 0.0
  %2451 = vmatpush1.msra.mxu0 0.0
  %2452 = vmatprep.subr.mxu0 0.0
  %2453 = vmatpush1.msra.mxu0 0.0
  %2454 = vmatprep.subr.mxu0 0.0
  %2455 = vmatpush1.msra.mxu0 0.0
  %2456 = vmatprep.subr.mxu0 0.0
  %2457 = vmatpush1.msra.mxu0 0.0
  %2458 = vmatprep.subr.mxu0 0.0
  %2459 = vmatpush1.msra.mxu0 0.0
  %2460 = vmatprep.subr.mxu0 0.0
  %2461 = vmatpush1.msra.mxu0 0.0
  %2462 = vmatprep.subr.mxu0 0.0
  %2463 = vmatpush1.msra.mxu0 0.0
  %v2464 = vand.u32 %v49, 4294901760
  %2465 = vmatprep.mubr.f32.mxu0 %v2464
  %v2466 = vand.u32 %v26, 4294901760
  %2467 = vmatmul.mubr.f32.gmra.mrb[0].mxu0 %v2466
  %v2468 = vpop.f32.mrb[0].mxu0
  %v2469 = vadd.f32 %v2302, %v2468
  %v2470 = vpop.f32.mrb[0].mxu0
  %2471 = vdwg.mxu0
  %2472 = vmatprep.subr.mxu0 0.0
  %v2473 = vand.u32 %v2184, 4294901760
  %v2474 = vsub.f32 %v2184, %v2473
  %2475 = vmatpush1.msra.mxu0 %v2474
  %2476 = vmatprep.subr.mxu0 0.0
  %v2477 = vand.u32 %v2185, 4294901760
  %v2478 = vsub.f32 %v2185, %v2477
  %2479 = vmatpush1.msra.mxu0 %v2478
  %2480 = vmatprep.subr.mxu0 0.0
  %v2481 = vand.u32 %v2186, 4294901760
  %v2482 = vsub.f32 %v2186, %v2481
  %2483 = vmatpush1.msra.mxu0 %v2482
  %2484 = vmatprep.subr.mxu0 0.0
  %v2485 = vand.u32 %v2187, 4294901760
  %v2486 = vsub.f32 %v2187, %v2485
  %2487 = vmatpush1.msra.mxu0 %v2486
  %2488 = vmatprep.subr.mxu0 0.0
  %v2489 = vand.u32 %v2188, 4294901760
  %v2490 = vsub.f32 %v2188, %v2489
  %2491 = vmatpush1.msra.mxu0 %v2490
  %2492 = vmatprep.subr.mxu0 0.0
  %v2493 = vand.u32 %v2189, 4294901760
  %v2494 = vsub.f32 %v2189, %v2493
  %2495 = vmatpush1.msra.mxu0 %v2494
  %2496 = vmatprep.subr.mxu0 0.0
  %v2497 = vand.u32 %v2190, 4294901760
  %v2498 = vsub.f32 %v2190, %v2497
  %2499 = vmatpush1.msra.mxu0 %v2498
  %2500 = vmatprep.subr.mxu0 0.0
  %v2501 = vand.u32 %v2191, 4294901760
  %v2502 = vsub.f32 %v2191, %v2501
  %2503 = vmatpush1.msra.mxu0 %v2502
  %2504 = vmatprep.subr.mxu0 0.0
  %v2505 = vand.u32 %v2192, 4294901760
  %v2506 = vsub.f32 %v2192, %v2505
  %2507 = vmatpush1.msra.mxu0 %v2506
  %2508 = vmatprep.subr.mxu0 0.0
  %v2509 = vand.u32 %v2193, 4294901760
  %v2510 = vsub.f32 %v2193, %v2509
  %2511 = vmatpush1.msra.mxu0 %v2510
  %2512 = vmatprep.subr.mxu0 0.0
  %v2513 = vand.u32 %v2194, 4294901760
  %v2514 = vsub.f32 %v2194, %v2513
  %2515 = vmatpush1.msra.mxu0 %v2514
  %2516 = vmatprep.subr.mxu0 0.0
  %v2517 = vand.u32 %v2195, 4294901760
  %v2518 = vsub.f32 %v2195, %v2517
  %2519 = vmatpush1.msra.mxu0 %v2518
  %2520 = vmatprep.subr.mxu0 0.0
  %v2521 = vand.u32 %v2196, 4294901760
  %v2522 = vsub.f32 %v2196, %v2521
  %2523 = vmatpush1.msra.mxu0 %v2522
  %2524 = vmatprep.subr.mxu0 0.0
  %v2525 = vand.u32 %v2197, 4294901760
  %v2526 = vsub.f32 %v2197, %v2525
  %2527 = vmatpush1.msra.mxu0 %v2526
  %2528 = vmatprep.subr.mxu0 0.0
  %v2529 = vand.u32 %v2198, 4294901760
  %v2530 = vsub.f32 %v2198, %v2529
  %2531 = vmatpush1.msra.mxu0 %v2530
  %2532 = vmatprep.subr.mxu0 0.0
  %v2533 = vand.u32 %v2199, 4294901760
  %v2534 = vsub.f32 %v2199, %v2533
  %2535 = vmatpush1.msra.mxu0 %v2534
  %2536 = vmatprep.subr.mxu0 0.0
  %v2537 = vand.u32 %v2200, 4294901760
  %v2538 = vsub.f32 %v2200, %v2537
  %2539 = vmatpush1.msra.mxu0 %v2538
  %2540 = vmatprep.subr.mxu0 0.0
  %v2541 = vand.u32 %v2201, 4294901760
  %v2542 = vsub.f32 %v2201, %v2541
  %2543 = vmatpush1.msra.mxu0 %v2542
  %2544 = vmatprep.subr.mxu0 0.0
  %v2545 = vand.u32 %v2204, 4294901760
  %v2546 = vsub.f32 %v2204, %v2545
  %2547 = vmatpush1.msra.mxu0 %v2546
  %2548 = vmatprep.subr.mxu0 0.0
  %2549 = vmatpush1.msra.mxu0 0.0
  %2550 = vmatprep.subr.mxu0 0.0
  %2551 = vmatpush1.msra.mxu0 0.0
  %2552 = vmatprep.subr.mxu0 0.0
  %2553 = vmatpush1.msra.mxu0 0.0
  %2554 = vmatprep.subr.mxu0 0.0
  %2555 = vmatpush1.msra.mxu0 0.0
  %2556 = vmatprep.subr.mxu0 0.0
  %2557 = vmatpush1.msra.mxu0 0.0
  %2558 = vmatprep.subr.mxu0 0.0
  %2559 = vmatpush1.msra.mxu0 0.0
  %2560 = vmatprep.subr.mxu0 0.0
  %2561 = vmatpush1.msra.mxu0 0.0
  %2562 = vmatprep.subr.mxu0 0.0
  %2563 = vmatpush1.msra.mxu0 0.0
  %2564 = vmatprep.subr.mxu0 0.0
  %2565 = vmatpush1.msra.mxu0 0.0
  %2566 = vmatprep.subr.mxu0 0.0
  %2567 = vmatpush1.msra.mxu0 0.0
  %2568 = vmatprep.subr.mxu0 0.0
  %2569 = vmatpush1.msra.mxu0 0.0
  %2570 = vmatprep.subr.mxu0 0.0
  %2571 = vmatpush1.msra.mxu0 0.0
  %2572 = vmatprep.subr.mxu0 0.0
  %2573 = vmatpush1.msra.mxu0 0.0
  %v2574 = vand.u32 %v49, 4294901760
  %v2575 = vsub.f32 %v49, %v2574
  %2576 = vmatprep.mubr.f32.mxu0 %v2575
  %v2577 = vand.u32 %v26, 4294901760
  %v2578 = vsub.f32 %v26, %v2577
  %2579 = vmatmul.mubr.f32.gmra.mrb[0].mxu0 %v2578
  %v2580 = vpop.f32.mrb[0].mxu0
  %v2581 = vadd.f32 %v2469, %v2580
  %v2582 = vpop.f32.mrb[0].mxu0
  %2583 = vdwg.mxu0
  %2584 = vmatprep.subr.mxu0 0.0
  %v2585 = vand.u32 %v2184, 4294901760
  %2586 = vmatpush1.msra.mxu0 %v2585
  %2587 = vmatprep.subr.mxu0 0.0
  %v2588 = vand.u32 %v2185, 4294901760
  %2589 = vmatpush1.msra.mxu0 %v2588
  %2590 = vmatprep.subr.mxu0 0.0
  %v2591 = vand.u32 %v2186, 4294901760
  %2592 = vmatpush1.msra.mxu0 %v2591
  %2593 = vmatprep.subr.mxu0 0.0
  %v2594 = vand.u32 %v2187, 4294901760
  %2595 = vmatpush1.msra.mxu0 %v2594
  %2596 = vmatprep.subr.mxu0 0.0
  %v2597 = vand.u32 %v2188, 4294901760
  %2598 = vmatpush1.msra.mxu0 %v2597
  %2599 = vmatprep.subr.mxu0 0.0
  %v2600 = vand.u32 %v2189, 4294901760
  %2601 = vmatpush1.msra.mxu0 %v2600
  %2602 = vmatprep.subr.mxu0 0.0
  %v2603 = vand.u32 %v2190, 4294901760
  %2604 = vmatpush1.msra.mxu0 %v2603
  %2605 = vmatprep.subr.mxu0 0.0
  %v2606 = vand.u32 %v2191, 4294901760
  %2607 = vmatpush1.msra.mxu0 %v2606
  %2608 = vmatprep.subr.mxu0 0.0
  %v2609 = vand.u32 %v2192, 4294901760
  %2610 = vmatpush1.msra.mxu0 %v2609
  %2611 = vmatprep.subr.mxu0 0.0
  %v2612 = vand.u32 %v2193, 4294901760
  %2613 = vmatpush1.msra.mxu0 %v2612
  %2614 = vmatprep.subr.mxu0 0.0
  %v2615 = vand.u32 %v2194, 4294901760
  %2616 = vmatpush1.msra.mxu0 %v2615
  %2617 = vmatprep.subr.mxu0 0.0
  %v2618 = vand.u32 %v2195, 4294901760
  %2619 = vmatpush1.msra.mxu0 %v2618
  %2620 = vmatprep.subr.mxu0 0.0
  %v2621 = vand.u32 %v2196, 4294901760
  %2622 = vmatpush1.msra.mxu0 %v2621
  %2623 = vmatprep.subr.mxu0 0.0
  %v2624 = vand.u32 %v2197, 4294901760
  %2625 = vmatpush1.msra.mxu0 %v2624
  %2626 = vmatprep.subr.mxu0 0.0
  %v2627 = vand.u32 %v2198, 4294901760
  %2628 = vmatpush1.msra.mxu0 %v2627
  %2629 = vmatprep.subr.mxu0 0.0
  %v2630 = vand.u32 %v2199, 4294901760
  %2631 = vmatpush1.msra.mxu0 %v2630
  %2632 = vmatprep.subr.mxu0 0.0
  %v2633 = vand.u32 %v2200, 4294901760
  %2634 = vmatpush1.msra.mxu0 %v2633
  %2635 = vmatprep.subr.mxu0 0.0
  %v2636 = vand.u32 %v2201, 4294901760
  %2637 = vmatpush1.msra.mxu0 %v2636
  %2638 = vmatprep.subr.mxu0 0.0
  %v2639 = vand.u32 %v2204, 4294901760
  %2640 = vmatpush1.msra.mxu0 %v2639
  %2641 = vmatprep.subr.mxu0 0.0
  %2642 = vmatpush1.msra.mxu0 0.0
  %2643 = vmatprep.subr.mxu0 0.0
  %2644 = vmatpush1.msra.mxu0 0.0
  %2645 = vmatprep.subr.mxu0 0.0
  %2646 = vmatpush1.msra.mxu0 0.0
  %2647 = vmatprep.subr.mxu0 0.0
  %2648 = vmatpush1.msra.mxu0 0.0
  %2649 = vmatprep.subr.mxu0 0.0
  %2650 = vmatpush1.msra.mxu0 0.0
  %2651 = vmatprep.subr.mxu0 0.0
  %2652 = vmatpush1.msra.mxu0 0.0
  %2653 = vmatprep.subr.mxu0 0.0
  %2654 = vmatpush1.msra.mxu0 0.0
  %2655 = vmatprep.subr.mxu0 0.0
  %2656 = vmatpush1.msra.mxu0 0.0
  %2657 = vmatprep.subr.mxu0 0.0
  %2658 = vmatpush1.msra.mxu0 0.0
  %2659 = vmatprep.subr.mxu0 0.0
  %2660 = vmatpush1.msra.mxu0 0.0
  %2661 = vmatprep.subr.mxu0 0.0
  %2662 = vmatpush1.msra.mxu0 0.0
  %2663 = vmatprep.subr.mxu0 0.0
  %2664 = vmatpush1.msra.mxu0 0.0
  %2665 = vmatprep.subr.mxu0 0.0
  %2666 = vmatpush1.msra.mxu0 0.0
  %v2667 = vand.u32 %v49, 4294901760
  %v2668 = vsub.f32 %v49, %v2667
  %v2669 = vand.u32 %v2668, 4294901760
  %2670 = vmatprep.mubr.f32.mxu0 %v2669
  %v2671 = vand.u32 %v26, 4294901760
  %v2672 = vsub.f32 %v26, %v2671
  %v2673 = vand.u32 %v2672, 4294901760
  %2674 = vmatmul.mubr.f32.gmra.mrb[0].mxu0 %v2673
  %v2675 = vpop.f32.mrb[0].mxu0
  %v2676 = vadd.f32 %v2581, %v2675
  %v2677 = vpop.f32.mrb[0].mxu0
  %2678 = vdwg.mxu0
  %2679 = vmatprep.subr.mxu0 0.0
  %v2680 = vand.u32 %v2184, 4294901760
  %v2681 = vsub.f32 %v2184, %v2680
  %v2682 = vand.u32 %v2681, 4294901760
  %2683 = vmatpush1.msra.mxu0 %v2682
  %2684 = vmatprep.subr.mxu0 0.0
  %v2685 = vand.u32 %v2185, 4294901760
  %v2686 = vsub.f32 %v2185, %v2685
  %v2687 = vand.u32 %v2686, 4294901760
  %2688 = vmatpush1.msra.mxu0 %v2687
  %2689 = vmatprep.subr.mxu0 0.0
  %v2690 = vand.u32 %v2186, 4294901760
  %v2691 = vsub.f32 %v2186, %v2690
  %v2692 = vand.u32 %v2691, 4294901760
  %2693 = vmatpush1.msra.mxu0 %v2692
  %2694 = vmatprep.subr.mxu0 0.0
  %v2695 = vand.u32 %v2187, 4294901760
  %v2696 = vsub.f32 %v2187, %v2695
  %v2697 = vand.u32 %v2696, 4294901760
  %2698 = vmatpush1.msra.mxu0 %v2697
  %2699 = vmatprep.subr.mxu0 0.0
  %v2700 = vand.u32 %v2188, 4294901760
  %v2701 = vsub.f32 %v2188, %v2700
  %v2702 = vand.u32 %v2701, 4294901760
  %2703 = vmatpush1.msra.mxu0 %v2702
  %2704 = vmatprep.subr.mxu0 0.0
  %v2705 = vand.u32 %v2189, 4294901760
  %v2706 = vsub.f32 %v2189, %v2705
  %v2707 = vand.u32 %v2706, 4294901760
  %2708 = vmatpush1.msra.mxu0 %v2707
  %2709 = vmatprep.subr.mxu0 0.0
  %v2710 = vand.u32 %v2190, 4294901760
  %v2711 = vsub.f32 %v2190, %v2710
  %v2712 = vand.u32 %v2711, 4294901760
  %2713 = vmatpush1.msra.mxu0 %v2712
  %2714 = vmatprep.subr.mxu0 0.0
  %v2715 = vand.u32 %v2191, 4294901760
  %v2716 = vsub.f32 %v2191, %v2715
  %v2717 = vand.u32 %v2716, 4294901760
  %2718 = vmatpush1.msra.mxu0 %v2717
  %2719 = vmatprep.subr.mxu0 0.0
  %v2720 = vand.u32 %v2192, 4294901760
  %v2721 = vsub.f32 %v2192, %v2720
  %v2722 = vand.u32 %v2721, 4294901760
  %2723 = vmatpush1.msra.mxu0 %v2722
  %2724 = vmatprep.subr.mxu0 0.0
  %v2725 = vand.u32 %v2193, 4294901760
  %v2726 = vsub.f32 %v2193, %v2725
  %v2727 = vand.u32 %v2726, 4294901760
  %2728 = vmatpush1.msra.mxu0 %v2727
  %2729 = vmatprep.subr.mxu0 0.0
  %v2730 = vand.u32 %v2194, 4294901760
  %v2731 = vsub.f32 %v2194, %v2730
  %v2732 = vand.u32 %v2731, 4294901760
  %2733 = vmatpush1.msra.mxu0 %v2732
  %2734 = vmatprep.subr.mxu0 0.0
  %v2735 = vand.u32 %v2195, 4294901760
  %v2736 = vsub.f32 %v2195, %v2735
  %v2737 = vand.u32 %v2736, 4294901760
  %2738 = vmatpush1.msra.mxu0 %v2737
  %2739 = vmatprep.subr.mxu0 0.0
  %v2740 = vand.u32 %v2196, 4294901760
  %v2741 = vsub.f32 %v2196, %v2740
  %v2742 = vand.u32 %v2741, 4294901760
  %2743 = vmatpush1.msra.mxu0 %v2742
  %2744 = vmatprep.subr.mxu0 0.0
  %v2745 = vand.u32 %v2197, 4294901760
  %v2746 = vsub.f32 %v2197, %v2745
  %v2747 = vand.u32 %v2746, 4294901760
  %2748 = vmatpush1.msra.mxu0 %v2747
  %2749 = vmatprep.subr.mxu0 0.0
  %v2750 = vand.u32 %v2198, 4294901760
  %v2751 = vsub.f32 %v2198, %v2750
  %v2752 = vand.u32 %v2751, 4294901760
  %2753 = vmatpush1.msra.mxu0 %v2752
  %2754 = vmatprep.subr.mxu0 0.0
  %v2755 = vand.u32 %v2199, 4294901760
  %v2756 = vsub.f32 %v2199, %v2755
  %v2757 = vand.u32 %v2756, 4294901760
  %2758 = vmatpush1.msra.mxu0 %v2757
  %2759 = vmatprep.subr.mxu0 0.0
  %v2760 = vand.u32 %v2200, 4294901760
  %v2761 = vsub.f32 %v2200, %v2760
  %v2762 = vand.u32 %v2761, 4294901760
  %2763 = vmatpush1.msra.mxu0 %v2762
  %2764 = vmatprep.subr.mxu0 0.0
  %v2765 = vand.u32 %v2201, 4294901760
  %v2766 = vsub.f32 %v2201, %v2765
  %v2767 = vand.u32 %v2766, 4294901760
  %2768 = vmatpush1.msra.mxu0 %v2767
  %2769 = vmatprep.subr.mxu0 0.0
  %v2770 = vand.u32 %v2204, 4294901760
  %v2771 = vsub.f32 %v2204, %v2770
  %v2772 = vand.u32 %v2771, 4294901760
  %2773 = vmatpush1.msra.mxu0 %v2772
  %2774 = vmatprep.subr.mxu0 0.0
  %2775 = vmatpush1.msra.mxu0 0.0
  %2776 = vmatprep.subr.mxu0 0.0
  %2777 = vmatpush1.msra.mxu0 0.0
  %2778 = vmatprep.subr.mxu0 0.0
  %2779 = vmatpush1.msra.mxu0 0.0
  %2780 = vmatprep.subr.mxu0 0.0
  %2781 = vmatpush1.msra.mxu0 0.0
  %2782 = vmatprep.subr.mxu0 0.0
  %2783 = vmatpush1.msra.mxu0 0.0
  %2784 = vmatprep.subr.mxu0 0.0
  %2785 = vmatpush1.msra.mxu0 0.0
  %2786 = vmatprep.subr.mxu0 0.0
  %2787 = vmatpush1.msra.mxu0 0.0
  %2788 = vmatprep.subr.mxu0 0.0
  %2789 = vmatpush1.msra.mxu0 0.0
  %2790 = vmatprep.subr.mxu0 0.0
  %2791 = vmatpush1.msra.mxu0 0.0
  %2792 = vmatprep.subr.mxu0 0.0
  %2793 = vmatpush1.msra.mxu0 0.0
  %2794 = vmatprep.subr.mxu0 0.0
  %2795 = vmatpush1.msra.mxu0 0.0
  %2796 = vmatprep.subr.mxu0 0.0
  %2797 = vmatpush1.msra.mxu0 0.0
  %2798 = vmatprep.subr.mxu0 0.0
  %2799 = vmatpush1.msra.mxu0 0.0
  %v2800 = vand.u32 %v49, 4294901760
  %2801 = vmatprep.mubr.f32.mxu0 %v2800
  %v2802 = vand.u32 %v26, 4294901760
  %2803 = vmatmul.mubr.f32.gmra.mrb[0].mxu0 %v2802
  %v2804 = vpop.f32.mrb[0].mxu0
  %v2805 = vadd.f32 %v2676, %v2804
  %v2806 = vpop.f32.mrb[0].mxu0
  %2807 = vdwg.mxu0
  %2808 = vmatprep.subr.mxu0 0.0
  %v2809 = vand.u32 %v2184, 4294901760
  %2810 = vmatpush1.msra.mxu0 %v2809
  %2811 = vmatprep.subr.mxu0 0.0
  %v2812 = vand.u32 %v2185, 4294901760
  %2813 = vmatpush1.msra.mxu0 %v2812
  %2814 = vmatprep.subr.mxu0 0.0
  %v2815 = vand.u32 %v2186, 4294901760
  %2816 = vmatpush1.msra.mxu0 %v2815
  %2817 = vmatprep.subr.mxu0 0.0
  %v2818 = vand.u32 %v2187, 4294901760
  %2819 = vmatpush1.msra.mxu0 %v2818
  %2820 = vmatprep.subr.mxu0 0.0
  %v2821 = vand.u32 %v2188, 4294901760
  %2822 = vmatpush1.msra.mxu0 %v2821
  %2823 = vmatprep.subr.mxu0 0.0
  %v2824 = vand.u32 %v2189, 4294901760
  %2825 = vmatpush1.msra.mxu0 %v2824
  %2826 = vmatprep.subr.mxu0 0.0
  %v2827 = vand.u32 %v2190, 4294901760
  %2828 = vmatpush1.msra.mxu0 %v2827
  %2829 = vmatprep.subr.mxu0 0.0
  %v2830 = vand.u32 %v2191, 4294901760
  %2831 = vmatpush1.msra.mxu0 %v2830
  %2832 = vmatprep.subr.mxu0 0.0
  %v2833 = vand.u32 %v2192, 4294901760
  %2834 = vmatpush1.msra.mxu0 %v2833
  %2835 = vmatprep.subr.mxu0 0.0
  %v2836 = vand.u32 %v2193, 4294901760
  %2837 = vmatpush1.msra.mxu0 %v2836
  %2838 = vmatprep.subr.mxu0 0.0
  %v2839 = vand.u32 %v2194, 4294901760
  %2840 = vmatpush1.msra.mxu0 %v2839
  %2841 = vmatprep.subr.mxu0 0.0
  %v2842 = vand.u32 %v2195, 4294901760
  %2843 = vmatpush1.msra.mxu0 %v2842
  %2844 = vmatprep.subr.mxu0 0.0
  %v2845 = vand.u32 %v2196, 4294901760
  %2846 = vmatpush1.msra.mxu0 %v2845
  %2847 = vmatprep.subr.mxu0 0.0
  %v2848 = vand.u32 %v2197, 4294901760
  %2849 = vmatpush1.msra.mxu0 %v2848
  %2850 = vmatprep.subr.mxu0 0.0
  %v2851 = vand.u32 %v2198, 4294901760
  %2852 = vmatpush1.msra.mxu0 %v2851
  %2853 = vmatprep.subr.mxu0 0.0
  %v2854 = vand.u32 %v2199, 4294901760
  %2855 = vmatpush1.msra.mxu0 %v2854
  %2856 = vmatprep.subr.mxu0 0.0
  %v2857 = vand.u32 %v2200, 4294901760
  %2858 = vmatpush1.msra.mxu0 %v2857
  %2859 = vmatprep.subr.mxu0 0.0
  %v2860 = vand.u32 %v2201, 4294901760
  %2861 = vmatpush1.msra.mxu0 %v2860
  %2862 = vmatprep.subr.mxu0 0.0
  %v2863 = vand.u32 %v2204, 4294901760
  %2864 = vmatpush1.msra.mxu0 %v2863
  %2865 = vmatprep.subr.mxu0 0.0
  %2866 = vmatpush1.msra.mxu0 0.0
  %2867 = vmatprep.subr.mxu0 0.0
  %2868 = vmatpush1.msra.mxu0 0.0
  %2869 = vmatprep.subr.mxu0 0.0
  %2870 = vmatpush1.msra.mxu0 0.0
  %2871 = vmatprep.subr.mxu0 0.0
  %2872 = vmatpush1.msra.mxu0 0.0
  %2873 = vmatprep.subr.mxu0 0.0
  %2874 = vmatpush1.msra.mxu0 0.0
  %2875 = vmatprep.subr.mxu0 0.0
  %2876 = vmatpush1.msra.mxu0 0.0
  %2877 = vmatprep.subr.mxu0 0.0
  %2878 = vmatpush1.msra.mxu0 0.0
  %2879 = vmatprep.subr.mxu0 0.0
  %2880 = vmatpush1.msra.mxu0 0.0
  %2881 = vmatprep.subr.mxu0 0.0
  %2882 = vmatpush1.msra.mxu0 0.0
  %2883 = vmatprep.subr.mxu0 0.0
  %2884 = vmatpush1.msra.mxu0 0.0
  %2885 = vmatprep.subr.mxu0 0.0
  %2886 = vmatpush1.msra.mxu0 0.0
  %2887 = vmatprep.subr.mxu0 0.0
  %2888 = vmatpush1.msra.mxu0 0.0
  %2889 = vmatprep.subr.mxu0 0.0
  %2890 = vmatpush1.msra.mxu0 0.0
  %v2891 = vand.u32 %v49, 4294901760
  %2892 = vmatprep.mubr.f32.mxu0 %v2891
  %v2893 = vand.u32 %v26, 4294901760
  %2894 = vmatmul.mubr.f32.gmra.mrb[0].mxu0 %v2893
  %v2895 = vpop.f32.mrb[0].mxu0
  %v2896 = vadd.f32 %v2805, %v2895
  %v2897 = vpop.f32.mrb[0].mxu0
  %2898 = vdwg.mxu0
  %2899 = vst [vmem:[#allocation2 + $0x18] sm:$0xff] %v2896
  %v2900 = vld [vmem:[%s2] sm:$0xf]
  %v2901 = vld [vmem:[#allocation2] ss:$8 sm:$0xf]
  %v2902 = vld [vmem:[%s4] sm:$0xff]
  %v2903 = vld [vmem:[%s4 + $0x8] sm:$0xff]
  %v2904 = vld [vmem:[%s4 + $0x10] sm:$0xff]
  %v2905 = vld [vmem:[%s4 + $0x18] sm:$0xff]
  %v2906 = vld [vmem:[%s4 + $0x20] sm:$0xff]
  %v2907 = vld [vmem:[%s4 + $0x28] sm:$0xff]
  %v2908 = vld [vmem:[%s4 + $0x30] sm:$0xff]
  %v2909 = vld [vmem:[%s4 + $0x38] sm:$0xff]
  %v2910 = vld [vmem:[%s4 + $0x40] sm:$0xff]
  %v2911 = vld [vmem:[%s4 + $0x48] sm:$0xff]
  %v2912 = vld [vmem:[%s4 + $0x50] sm:$0xff]
  %v2913 = vld [vmem:[%s4 + $0x58] sm:$0xff]
  %v2914 = vld [vmem:[%s4 + $0x60] sm:$0xff]
  %v2915 = vld [vmem:[%s4 + $0x68] sm:$0xff]
  %v2916 = vld [vmem:[%s4 + $0x70] sm:$0xff]
  %v2917 = vld [vmem:[%s4 + $0x78] sm:$0xff]
  %2918 = vmatprep.subr.mxu0 0.0
  %v2919 = vand.u32 %v2902, 4294901760
  %2920 = vmatpush1.msra.mxu0 %v2919
  %2921 = vmatprep.subr.mxu0 0.0
  %v2922 = vand.u32 %v2903, 4294901760
  %2923 = vmatpush1.msra.mxu0 %v2922
  %2924 = vmatprep.subr.mxu0 0.0
  %v2925 = vand.u32 %v2904, 4294901760
  %2926 = vmatpush1.msra.mxu0 %v2925
  %2927 = vmatprep.subr.mxu0 0.0
  %v2928 = vand.u32 %v2905, 4294901760
  %2929 = vmatpush1.msra.mxu0 %v2928
  %2930 = vmatprep.subr.mxu0 0.0
  %v2931 = vand.u32 %v2906, 4294901760
  %2932 = vmatpush1.msra.mxu0 %v2931
  %2933 = vmatprep.subr.mxu0 0.0
  %v2934 = vand.u32 %v2907, 4294901760
  %2935 = vmatpush1.msra.mxu0 %v2934
  %2936 = vmatprep.subr.mxu0 0.0
  %v2937 = vand.u32 %v2908, 4294901760
  %2938 = vmatpush1.msra.mxu0 %v2937
  %2939 = vmatprep.subr.mxu0 0.0
  %v2940 = vand.u32 %v2909, 4294901760
  %2941 = vmatpush1.msra.mxu0 %v2940
  %2942 = vmatprep.subr.mxu0 0.0
  %v2943 = vand.u32 %v2910, 4294901760
  %2944 = vmatpush1.msra.mxu0 %v2943
  %2945 = vmatprep.subr.mxu0 0.0
  %v2946 = vand.u32 %v2911, 4294901760
  %2947 = vmatpush1.msra.mxu0 %v2946
  %2948 = vmatprep.subr.mxu0 0.0
  %v2949 = vand.u32 %v2912, 4294901760
  %2950 = vmatpush1.msra.mxu0 %v2949
  %2951 = vmatprep.subr.mxu0 0.0
  %v2952 = vand.u32 %v2913, 4294901760
  %2953 = vmatpush1.msra.mxu0 %v2952
  %2954 = vmatprep.subr.mxu0 0.0
  %v2955 = vand.u32 %v2914, 4294901760
  %2956 = vmatpush1.msra.mxu0 %v2955
  %2957 = vmatprep.subr.mxu0 0.0
  %v2958 = vand.u32 %v2915, 4294901760
  %2959 = vmatpush1.msra.mxu0 %v2958
  %2960 = vmatprep.subr.mxu0 0.0
  %v2961 = vand.u32 %v2916, 4294901760
  %2962 = vmatpush1.msra.mxu0 %v2961
  %2963 = vmatprep.subr.mxu0 0.0
  %v2964 = vand.u32 %v2917, 4294901760
  %2965 = vmatpush1.msra.mxu0 %v2964
  %2966 = vmatprep.subr.mxu0 0.0
  %2967 = vmatpush1.msra.mxu0 0.0
  %2968 = vmatprep.subr.mxu0 0.0
  %2969 = vmatpush1.msra.mxu0 0.0
  %2970 = vmatprep.subr.mxu0 0.0
  %2971 = vmatpush1.msra.mxu0 0.0
  %2972 = vmatprep.subr.mxu0 0.0
  %2973 = vmatpush1.msra.mxu0 0.0
  %2974 = vmatprep.subr.mxu0 0.0
  %2975 = vmatpush1.msra.mxu0 0.0
  %2976 = vmatprep.subr.mxu0 0.0
  %2977 = vmatpush1.msra.mxu0 0.0
  %2978 = vmatprep.subr.mxu0 0.0
  %2979 = vmatpush1.msra.mxu0 0.0
  %2980 = vmatprep.subr.mxu0 0.0
  %2981 = vmatpush1.msra.mxu0 0.0
  %2982 = vmatprep.subr.mxu0 0.0
  %2983 = vmatpush1.msra.mxu0 0.0
  %2984 = vmatprep.subr.mxu0 0.0
  %2985 = vmatpush1.msra.mxu0 0.0
  %2986 = vmatprep.subr.mxu0 0.0
  %2987 = vmatpush1.msra.mxu0 0.0
  %2988 = vmatprep.subr.mxu0 0.0
  %2989 = vmatpush1.msra.mxu0 0.0
  %2990 = vmatprep.subr.mxu0 0.0
  %2991 = vmatpush1.msra.mxu0 0.0
  %2992 = vmatprep.subr.mxu0 0.0
  %2993 = vmatpush1.msra.mxu0 0.0
  %2994 = vmatprep.subr.mxu0 0.0
  %2995 = vmatpush1.msra.mxu0 0.0
  %2996 = vmatprep.subr.mxu0 0.0
  %2997 = vmatpush1.msra.mxu0 0.0
  %2998 = vmatprep.mubr.f32.mxu0 0.0
  %v2999 = vand.u32 %v2901, 4294901760
  %v3000 = vsub.f32 %v2901, %v2999
  %v3001 = vand.u32 %v3000, 4294901760
  %v3002 = vsub.f32 %v3000, %v3001
  %v3003 = vand.u32 %v3002, 4294901760
  %3004 = vmatmul.mubr.f32.gmra.mrb[0].mxu0 %v3003
  %v3005 = vpop.f32.mrb[0].mxu0
  %v3006 = vadd.f32 0.0, %v3005
  %v3007 = vpop.f32.mrb[0].mxu0
  %3008 = vdwg.mxu0
  %3009 = vmatprep.subr.mxu0 0.0
  %v3010 = vand.u32 %v2902, 4294901760
  %v3011 = vsub.f32 %v2902, %v3010
  %v3012 = vand.u32 %v3011, 4294901760
  %v3013 = vsub.f32 %v3011, %v3012
  %v3014 = vand.u32 %v3013, 4294901760
  %3015 = vmatpush1.msra.mxu0 %v3014
  %3016 = vmatprep.subr.mxu0 0.0
  %v3017 = vand.u32 %v2903, 4294901760
  %v3018 = vsub.f32 %v2903, %v3017
  %v3019 = vand.u32 %v3018, 4294901760
  %v3020 = vsub.f32 %v3018, %v3019
  %v3021 = vand.u32 %v3020, 4294901760
  %3022 = vmatpush1.msra.mxu0 %v3021
  %3023 = vmatprep.subr.mxu0 0.0
  %v3024 = vand.u32 %v2904, 4294901760
  %v3025 = vsub.f32 %v2904, %v3024
  %v3026 = vand.u32 %v3025, 4294901760
  %v3027 = vsub.f32 %v3025, %v3026
  %v3028 = vand.u32 %v3027, 4294901760
  %3029 = vmatpush1.msra.mxu0 %v3028
  %3030 = vmatprep.subr.mxu0 0.0
  %v3031 = vand.u32 %v2905, 4294901760
  %v3032 = vsub.f32 %v2905, %v3031
  %v3033 = vand.u32 %v3032, 4294901760
  %v3034 = vsub.f32 %v3032, %v3033
  %v3035 = vand.u32 %v3034, 4294901760
  %3036 = vmatpush1.msra.mxu0 %v3035
  %3037 = vmatprep.subr.mxu0 0.0
  %v3038 = vand.u32 %v2906, 4294901760
  %v3039 = vsub.f32 %v2906, %v3038
  %v3040 = vand.u32 %v3039, 4294901760
  %v3041 = vsub.f32 %v3039, %v3040
  %v3042 = vand.u32 %v3041, 4294901760
  %3043 = vmatpush1.msra.mxu0 %v3042
  %3044 = vmatprep.subr.mxu0 0.0
  %v3045 = vand.u32 %v2907, 4294901760
  %v3046 = vsub.f32 %v2907, %v3045
  %v3047 = vand.u32 %v3046, 4294901760
  %v3048 = vsub.f32 %v3046, %v3047
  %v3049 = vand.u32 %v3048, 4294901760
  %3050 = vmatpush1.msra.mxu0 %v3049
  %3051 = vmatprep.subr.mxu0 0.0
  %v3052 = vand.u32 %v2908, 4294901760
  %v3053 = vsub.f32 %v2908, %v3052
  %v3054 = vand.u32 %v3053, 4294901760
  %v3055 = vsub.f32 %v3053, %v3054
  %v3056 = vand.u32 %v3055, 4294901760
  %3057 = vmatpush1.msra.mxu0 %v3056
  %3058 = vmatprep.subr.mxu0 0.0
  %v3059 = vand.u32 %v2909, 4294901760
  %v3060 = vsub.f32 %v2909, %v3059
  %v3061 = vand.u32 %v3060, 4294901760
  %v3062 = vsub.f32 %v3060, %v3061
  %v3063 = vand.u32 %v3062, 4294901760
  %3064 = vmatpush1.msra.mxu0 %v3063
  %3065 = vmatprep.subr.mxu0 0.0
  %v3066 = vand.u32 %v2910, 4294901760
  %v3067 = vsub.f32 %v2910, %v3066
  %v3068 = vand.u32 %v3067, 4294901760
  %v3069 = vsub.f32 %v3067, %v3068
  %v3070 = vand.u32 %v3069, 4294901760
  %3071 = vmatpush1.msra.mxu0 %v3070
  %3072 = vmatprep.subr.mxu0 0.0
  %v3073 = vand.u32 %v2911, 4294901760
  %v3074 = vsub.f32 %v2911, %v3073
  %v3075 = vand.u32 %v3074, 4294901760
  %v3076 = vsub.f32 %v3074, %v3075
  %v3077 = vand.u32 %v3076, 4294901760
  %3078 = vmatpush1.msra.mxu0 %v3077
  %3079 = vmatprep.subr.mxu0 0.0
  %v3080 = vand.u32 %v2912, 4294901760
  %v3081 = vsub.f32 %v2912, %v3080
  %v3082 = vand.u32 %v3081, 4294901760
  %v3083 = vsub.f32 %v3081, %v3082
  %v3084 = vand.u32 %v3083, 4294901760
  %3085 = vmatpush1.msra.mxu0 %v3084
  %3086 = vmatprep.subr.mxu0 0.0
  %v3087 = vand.u32 %v2913, 4294901760
  %v3088 = vsub.f32 %v2913, %v3087
  %v3089 = vand.u32 %v3088, 4294901760
  %v3090 = vsub.f32 %v3088, %v3089
  %v3091 = vand.u32 %v3090, 4294901760
  %3092 = vmatpush1.msra.mxu0 %v3091
  %3093 = vmatprep.subr.mxu0 0.0
  %v3094 = vand.u32 %v2914, 4294901760
  %v3095 = vsub.f32 %v2914, %v3094
  %v3096 = vand.u32 %v3095, 4294901760
  %v3097 = vsub.f32 %v3095, %v3096
  %v3098 = vand.u32 %v3097, 4294901760
  %3099 = vmatpush1.msra.mxu0 %v3098
  %3100 = vmatprep.subr.mxu0 0.0
  %v3101 = vand.u32 %v2915, 4294901760
  %v3102 = vsub.f32 %v2915, %v3101
  %v3103 = vand.u32 %v3102, 4294901760
  %v3104 = vsub.f32 %v3102, %v3103
  %v3105 = vand.u32 %v3104, 4294901760
  %3106 = vmatpush1.msra.mxu0 %v3105
  %3107 = vmatprep.subr.mxu0 0.0
  %v3108 = vand.u32 %v2916, 4294901760
  %v3109 = vsub.f32 %v2916, %v3108
  %v3110 = vand.u32 %v3109, 4294901760
  %v3111 = vsub.f32 %v3109, %v3110
  %v3112 = vand.u32 %v3111, 4294901760
  %3113 = vmatpush1.msra.mxu0 %v3112
  %3114 = vmatprep.subr.mxu0 0.0
  %v3115 = vand.u32 %v2917, 4294901760
  %v3116 = vsub.f32 %v2917, %v3115
  %v3117 = vand.u32 %v3116, 4294901760
  %v3118 = vsub.f32 %v3116, %v3117
  %v3119 = vand.u32 %v3118, 4294901760
  %3120 = vmatpush1.msra.mxu0 %v3119
  %3121 = vmatprep.subr.mxu0 0.0
  %3122 = vmatpush1.msra.mxu0 0.0
  %3123 = vmatprep.subr.mxu0 0.0
  %3124 = vmatpush1.msra.mxu0 0.0
  %3125 = vmatprep.subr.mxu0 0.0
  %3126 = vmatpush1.msra.mxu0 0.0
  %3127 = vmatprep.subr.mxu0 0.0
  %3128 = vmatpush1.msra.mxu0 0.0
  %3129 = vmatprep.subr.mxu0 0.0
  %3130 = vmatpush1.msra.mxu0 0.0
  %3131 = vmatprep.subr.mxu0 0.0
  %3132 = vmatpush1.msra.mxu0 0.0
  %3133 = vmatprep.subr.mxu0 0.0
  %3134 = vmatpush1.msra.mxu0 0.0
  %3135 = vmatprep.subr.mxu0 0.0
  %3136 = vmatpush1.msra.mxu0 0.0
  %3137 = vmatprep.subr.mxu0 0.0
  %3138 = vmatpush1.msra.mxu0 0.0
  %3139 = vmatprep.subr.mxu0 0.0
  %3140 = vmatpush1.msra.mxu0 0.0
  %3141 = vmatprep.subr.mxu0 0.0
  %3142 = vmatpush1.msra.mxu0 0.0
  %3143 = vmatprep.subr.mxu0 0.0
  %3144 = vmatpush1.msra.mxu0 0.0
  %3145 = vmatprep.subr.mxu0 0.0
  %3146 = vmatpush1.msra.mxu0 0.0
  %3147 = vmatprep.subr.mxu0 0.0
  %3148 = vmatpush1.msra.mxu0 0.0
  %3149 = vmatprep.subr.mxu0 0.0
  %3150 = vmatpush1.msra.mxu0 0.0
  %3151 = vmatprep.subr.mxu0 0.0
  %3152 = vmatpush1.msra.mxu0 0.0
  %3153 = vmatprep.mubr.f32.mxu0 0.0
  %v3154 = vand.u32 %v2901, 4294901760
  %3155 = vmatmul.mubr.f32.gmra.mrb[0].mxu0 %v3154
  %v3156 = vpop.f32.mrb[0].mxu0
  %v3157 = vadd.f32 %v3006, %v3156
  %v3158 = vpop.f32.mrb[0].mxu0
  %3159 = vdwg.mxu0
  %3160 = vmatprep.subr.mxu0 0.0
  %v3161 = vand.u32 %v2902, 4294901760
  %v3162 = vsub.f32 %v2902, %v3161
  %3163 = vmatpush1.msra.mxu0 %v3162
  %3164 = vmatprep.subr.mxu0 0.0
  %v3165 = vand.u32 %v2903, 4294901760
  %v3166 = vsub.f32 %v2903, %v3165
  %3167 = vmatpush1.msra.mxu0 %v3166
  %3168 = vmatprep.subr.mxu0 0.0
  %v3169 = vand.u32 %v2904, 4294901760
  %v3170 = vsub.f32 %v2904, %v3169
  %3171 = vmatpush1.msra.mxu0 %v3170
  %3172 = vmatprep.subr.mxu0 0.0
  %v3173 = vand.u32 %v2905, 4294901760
  %v3174 = vsub.f32 %v2905, %v3173
  %3175 = vmatpush1.msra.mxu0 %v3174
  %3176 = vmatprep.subr.mxu0 0.0
  %v3177 = vand.u32 %v2906, 4294901760
  %v3178 = vsub.f32 %v2906, %v3177
  %3179 = vmatpush1.msra.mxu0 %v3178
  %3180 = vmatprep.subr.mxu0 0.0
  %v3181 = vand.u32 %v2907, 4294901760
  %v3182 = vsub.f32 %v2907, %v3181
  %3183 = vmatpush1.msra.mxu0 %v3182
  %3184 = vmatprep.subr.mxu0 0.0
  %v3185 = vand.u32 %v2908, 4294901760
  %v3186 = vsub.f32 %v2908, %v3185
  %3187 = vmatpush1.msra.mxu0 %v3186
  %3188 = vmatprep.subr.mxu0 0.0
  %v3189 = vand.u32 %v2909, 4294901760
  %v3190 = vsub.f32 %v2909, %v3189
  %3191 = vmatpush1.msra.mxu0 %v3190
  %3192 = vmatprep.subr.mxu0 0.0
  %v3193 = vand.u32 %v2910, 4294901760
  %v3194 = vsub.f32 %v2910, %v3193
  %3195 = vmatpush1.msra.mxu0 %v3194
  %3196 = vmatprep.subr.mxu0 0.0
  %v3197 = vand.u32 %v2911, 4294901760
  %v3198 = vsub.f32 %v2911, %v3197
  %3199 = vmatpush1.msra.mxu0 %v3198
  %3200 = vmatprep.subr.mxu0 0.0
  %v3201 = vand.u32 %v2912, 4294901760
  %v3202 = vsub.f32 %v2912, %v3201
  %3203 = vmatpush1.msra.mxu0 %v3202
  %3204 = vmatprep.subr.mxu0 0.0
  %v3205 = vand.u32 %v2913, 4294901760
  %v3206 = vsub.f32 %v2913, %v3205
  %3207 = vmatpush1.msra.mxu0 %v3206
  %3208 = vmatprep.subr.mxu0 0.0
  %v3209 = vand.u32 %v2914, 4294901760
  %v3210 = vsub.f32 %v2914, %v3209
  %3211 = vmatpush1.msra.mxu0 %v3210
  %3212 = vmatprep.subr.mxu0 0.0
  %v3213 = vand.u32 %v2915, 4294901760
  %v3214 = vsub.f32 %v2915, %v3213
  %3215 = vmatpush1.msra.mxu0 %v3214
  %3216 = vmatprep.subr.mxu0 0.0
  %v3217 = vand.u32 %v2916, 4294901760
  %v3218 = vsub.f32 %v2916, %v3217
  %3219 = vmatpush1.msra.mxu0 %v3218
  %3220 = vmatprep.subr.mxu0 0.0
  %v3221 = vand.u32 %v2917, 4294901760
  %v3222 = vsub.f32 %v2917, %v3221
  %3223 = vmatpush1.msra.mxu0 %v3222
  %3224 = vmatprep.subr.mxu0 0.0
  %3225 = vmatpush1.msra.mxu0 0.0
  %3226 = vmatprep.subr.mxu0 0.0
  %3227 = vmatpush1.msra.mxu0 0.0
  %3228 = vmatprep.subr.mxu0 0.0
  %3229 = vmatpush1.msra.mxu0 0.0
  %3230 = vmatprep.subr.mxu0 0.0
  %3231 = vmatpush1.msra.mxu0 0.0
  %3232 = vmatprep.subr.mxu0 0.0
  %3233 = vmatpush1.msra.mxu0 0.0
  %3234 = vmatprep.subr.mxu0 0.0
  %3235 = vmatpush1.msra.mxu0 0.0
  %3236 = vmatprep.subr.mxu0 0.0
  %3237 = vmatpush1.msra.mxu0 0.0
  %3238 = vmatprep.subr.mxu0 0.0
  %3239 = vmatpush1.msra.mxu0 0.0
  %3240 = vmatprep.subr.mxu0 0.0
  %3241 = vmatpush1.msra.mxu0 0.0
  %3242 = vmatprep.subr.mxu0 0.0
  %3243 = vmatpush1.msra.mxu0 0.0
  %3244 = vmatprep.subr.mxu0 0.0
  %3245 = vmatpush1.msra.mxu0 0.0
  %3246 = vmatprep.subr.mxu0 0.0
  %3247 = vmatpush1.msra.mxu0 0.0
  %3248 = vmatprep.subr.mxu0 0.0
  %3249 = vmatpush1.msra.mxu0 0.0
  %3250 = vmatprep.subr.mxu0 0.0
  %3251 = vmatpush1.msra.mxu0 0.0
  %3252 = vmatprep.subr.mxu0 0.0
  %3253 = vmatpush1.msra.mxu0 0.0
  %3254 = vmatprep.subr.mxu0 0.0
  %3255 = vmatpush1.msra.mxu0 0.0
  %3256 = vmatprep.mubr.f32.mxu0 0.0
  %v3257 = vand.u32 %v2901, 4294901760
  %v3258 = vsub.f32 %v2901, %v3257
  %3259 = vmatmul.mubr.f32.gmra.mrb[0].mxu0 %v3258
  %v3260 = vpop.f32.mrb[0].mxu0
  %v3261 = vadd.f32 %v3157, %v3260
  %v3262 = vpop.f32.mrb[0].mxu0
  %3263 = vdwg.mxu0
  %3264 = vmatprep.subr.mxu0 0.0
  %v3265 = vand.u32 %v2902, 4294901760
  %3266 = vmatpush1.msra.mxu0 %v3265
  %3267 = vmatprep.subr.mxu0 0.0
  %v3268 = vand.u32 %v2903, 4294901760
  %3269 = vmatpush1.msra.mxu0 %v3268
  %3270 = vmatprep.subr.mxu0 0.0
  %v3271 = vand.u32 %v2904, 4294901760
  %3272 = vmatpush1.msra.mxu0 %v3271
  %3273 = vmatprep.subr.mxu0 0.0
  %v3274 = vand.u32 %v2905, 4294901760
  %3275 = vmatpush1.msra.mxu0 %v3274
  %3276 = vmatprep.subr.mxu0 0.0
  %v3277 = vand.u32 %v2906, 4294901760
  %3278 = vmatpush1.msra.mxu0 %v3277
  %3279 = vmatprep.subr.mxu0 0.0
  %v3280 = vand.u32 %v2907, 4294901760
  %3281 = vmatpush1.msra.mxu0 %v3280
  %3282 = vmatprep.subr.mxu0 0.0
  %v3283 = vand.u32 %v2908, 4294901760
  %3284 = vmatpush1.msra.mxu0 %v3283
  %3285 = vmatprep.subr.mxu0 0.0
  %v3286 = vand.u32 %v2909, 4294901760
  %3287 = vmatpush1.msra.mxu0 %v3286
  %3288 = vmatprep.subr.mxu0 0.0
  %v3289 = vand.u32 %v2910, 4294901760
  %3290 = vmatpush1.msra.mxu0 %v3289
  %3291 = vmatprep.subr.mxu0 0.0
  %v3292 = vand.u32 %v2911, 4294901760
  %3293 = vmatpush1.msra.mxu0 %v3292
  %3294 = vmatprep.subr.mxu0 0.0
  %v3295 = vand.u32 %v2912, 4294901760
  %3296 = vmatpush1.msra.mxu0 %v3295
  %3297 = vmatprep.subr.mxu0 0.0
  %v3298 = vand.u32 %v2913, 4294901760
  %3299 = vmatpush1.msra.mxu0 %v3298
  %3300 = vmatprep.subr.mxu0 0.0
  %v3301 = vand.u32 %v2914, 4294901760
  %3302 = vmatpush1.msra.mxu0 %v3301
  %3303 = vmatprep.subr.mxu0 0.0
  %v3304 = vand.u32 %v2915, 4294901760
  %3305 = vmatpush1.msra.mxu0 %v3304
  %3306 = vmatprep.subr.mxu0 0.0
  %v3307 = vand.u32 %v2916, 4294901760
  %3308 = vmatpush1.msra.mxu0 %v3307
  %3309 = vmatprep.subr.mxu0 0.0
  %v3310 = vand.u32 %v2917, 4294901760
  %3311 = vmatpush1.msra.mxu0 %v3310
  %3312 = vmatprep.subr.mxu0 0.0
  %3313 = vmatpush1.msra.mxu0 0.0
  %3314 = vmatprep.subr.mxu0 0.0
  %3315 = vmatpush1.msra.mxu0 0.0
  %3316 = vmatprep.subr.mxu0 0.0
  %3317 = vmatpush1.msra.mxu0 0.0
  %3318 = vmatprep.subr.mxu0 0.0
  %3319 = vmatpush1.msra.mxu0 0.0
  %3320 = vmatprep.subr.mxu0 0.0
  %3321 = vmatpush1.msra.mxu0 0.0
  %3322 = vmatprep.subr.mxu0 0.0
  %3323 = vmatpush1.msra.mxu0 0.0
  %3324 = vmatprep.subr.mxu0 0.0
  %3325 = vmatpush1.msra.mxu0 0.0
  %3326 = vmatprep.subr.mxu0 0.0
  %3327 = vmatpush1.msra.mxu0 0.0
  %3328 = vmatprep.subr.mxu0 0.0
  %3329 = vmatpush1.msra.mxu0 0.0
  %3330 = vmatprep.subr.mxu0 0.0
  %3331 = vmatpush1.msra.mxu0 0.0
  %3332 = vmatprep.subr.mxu0 0.0
  %3333 = vmatpush1.msra.mxu0 0.0
  %3334 = vmatprep.subr.mxu0 0.0
  %3335 = vmatpush1.msra.mxu0 0.0
  %3336 = vmatprep.subr.mxu0 0.0
  %3337 = vmatpush1.msra.mxu0 0.0
  %3338 = vmatprep.subr.mxu0 0.0
  %3339 = vmatpush1.msra.mxu0 0.0
  %3340 = vmatprep.subr.mxu0 0.0
  %3341 = vmatpush1.msra.mxu0 0.0
  %3342 = vmatprep.subr.mxu0 0.0
  %3343 = vmatpush1.msra.mxu0 0.0
  %3344 = vmatprep.mubr.f32.mxu0 0.0
  %v3345 = vand.u32 %v2901, 4294901760
  %v3346 = vsub.f32 %v2901, %v3345
  %v3347 = vand.u32 %v3346, 4294901760
  %3348 = vmatmul.mubr.f32.gmra.mrb[0].mxu0 %v3347
  %v3349 = vpop.f32.mrb[0].mxu0
  %v3350 = vadd.f32 %v3261, %v3349
  %v3351 = vpop.f32.mrb[0].mxu0
  %3352 = vdwg.mxu0
  %3353 = vmatprep.subr.mxu0 0.0
  %v3354 = vand.u32 %v2902, 4294901760
  %v3355 = vsub.f32 %v2902, %v3354
  %v3356 = vand.u32 %v3355, 4294901760
  %3357 = vmatpush1.msra.mxu0 %v3356
  %3358 = vmatprep.subr.mxu0 0.0
  %v3359 = vand.u32 %v2903, 4294901760
  %v3360 = vsub.f32 %v2903, %v3359
  %v3361 = vand.u32 %v3360, 4294901760
  %3362 = vmatpush1.msra.mxu0 %v3361
  %3363 = vmatprep.subr.mxu0 0.0
  %v3364 = vand.u32 %v2904, 4294901760
  %v3365 = vsub.f32 %v2904, %v3364
  %v3366 = vand.u32 %v3365, 4294901760
  %3367 = vmatpush1.msra.mxu0 %v3366
  %3368 = vmatprep.subr.mxu0 0.0
  %v3369 = vand.u32 %v2905, 4294901760
  %v3370 = vsub.f32 %v2905, %v3369
  %v3371 = vand.u32 %v3370, 4294901760
  %3372 = vmatpush1.msra.mxu0 %v3371
  %3373 = vmatprep.subr.mxu0 0.0
  %v3374 = vand.u32 %v2906, 4294901760
  %v3375 = vsub.f32 %v2906, %v3374
  %v3376 = vand.u32 %v3375, 4294901760
  %3377 = vmatpush1.msra.mxu0 %v3376
  %3378 = vmatprep.subr.mxu0 0.0
  %v3379 = vand.u32 %v2907, 4294901760
  %v3380 = vsub.f32 %v2907, %v3379
  %v3381 = vand.u32 %v3380, 4294901760
  %3382 = vmatpush1.msra.mxu0 %v3381
  %3383 = vmatprep.subr.mxu0 0.0
  %v3384 = vand.u32 %v2908, 4294901760
  %v3385 = vsub.f32 %v2908, %v3384
  %v3386 = vand.u32 %v3385, 4294901760
  %3387 = vmatpush1.msra.mxu0 %v3386
  %3388 = vmatprep.subr.mxu0 0.0
  %v3389 = vand.u32 %v2909, 4294901760
  %v3390 = vsub.f32 %v2909, %v3389
  %v3391 = vand.u32 %v3390, 4294901760
  %3392 = vmatpush1.msra.mxu0 %v3391
  %3393 = vmatprep.subr.mxu0 0.0
  %v3394 = vand.u32 %v2910, 4294901760
  %v3395 = vsub.f32 %v2910, %v3394
  %v3396 = vand.u32 %v3395, 4294901760
  %3397 = vmatpush1.msra.mxu0 %v3396
  %3398 = vmatprep.subr.mxu0 0.0
  %v3399 = vand.u32 %v2911, 4294901760
  %v3400 = vsub.f32 %v2911, %v3399
  %v3401 = vand.u32 %v3400, 4294901760
  %3402 = vmatpush1.msra.mxu0 %v3401
  %3403 = vmatprep.subr.mxu0 0.0
  %v3404 = vand.u32 %v2912, 4294901760
  %v3405 = vsub.f32 %v2912, %v3404
  %v3406 = vand.u32 %v3405, 4294901760
  %3407 = vmatpush1.msra.mxu0 %v3406
  %3408 = vmatprep.subr.mxu0 0.0
  %v3409 = vand.u32 %v2913, 4294901760
  %v3410 = vsub.f32 %v2913, %v3409
  %v3411 = vand.u32 %v3410, 4294901760
  %3412 = vmatpush1.msra.mxu0 %v3411
  %3413 = vmatprep.subr.mxu0 0.0
  %v3414 = vand.u32 %v2914, 4294901760
  %v3415 = vsub.f32 %v2914, %v3414
  %v3416 = vand.u32 %v3415, 4294901760
  %3417 = vmatpush1.msra.mxu0 %v3416
  %3418 = vmatprep.subr.mxu0 0.0
  %v3419 = vand.u32 %v2915, 4294901760
  %v3420 = vsub.f32 %v2915, %v3419
  %v3421 = vand.u32 %v3420, 4294901760
  %3422 = vmatpush1.msra.mxu0 %v3421
  %3423 = vmatprep.subr.mxu0 0.0
  %v3424 = vand.u32 %v2916, 4294901760
  %v3425 = vsub.f32 %v2916, %v3424
  %v3426 = vand.u32 %v3425, 4294901760
  %3427 = vmatpush1.msra.mxu0 %v3426
  %3428 = vmatprep.subr.mxu0 0.0
  %v3429 = vand.u32 %v2917, 4294901760
  %v3430 = vsub.f32 %v2917, %v3429
  %v3431 = vand.u32 %v3430, 4294901760
  %3432 = vmatpush1.msra.mxu0 %v3431
  %3433 = vmatprep.subr.mxu0 0.0
  %3434 = vmatpush1.msra.mxu0 0.0
  %3435 = vmatprep.subr.mxu0 0.0
  %3436 = vmatpush1.msra.mxu0 0.0
  %3437 = vmatprep.subr.mxu0 0.0
  %3438 = vmatpush1.msra.mxu0 0.0
  %3439 = vmatprep.subr.mxu0 0.0
  %3440 = vmatpush1.msra.mxu0 0.0
  %3441 = vmatprep.subr.mxu0 0.0
  %3442 = vmatpush1.msra.mxu0 0.0
  %3443 = vmatprep.subr.mxu0 0.0
  %3444 = vmatpush1.msra.mxu0 0.0
  %3445 = vmatprep.subr.mxu0 0.0
  %3446 = vmatpush1.msra.mxu0 0.0
  %3447 = vmatprep.subr.mxu0 0.0
  %3448 = vmatpush1.msra.mxu0 0.0
  %3449 = vmatprep.subr.mxu0 0.0
  %3450 = vmatpush1.msra.mxu0 0.0
  %3451 = vmatprep.subr.mxu0 0.0
  %3452 = vmatpush1.msra.mxu0 0.0
  %3453 = vmatprep.subr.mxu0 0.0
  %3454 = vmatpush1.msra.mxu0 0.0
  %3455 = vmatprep.subr.mxu0 0.0
  %3456 = vmatpush1.msra.mxu0 0.0
  %3457 = vmatprep.subr.mxu0 0.0
  %3458 = vmatpush1.msra.mxu0 0.0
  %3459 = vmatprep.subr.mxu0 0.0
  %3460 = vmatpush1.msra.mxu0 0.0
  %3461 = vmatprep.subr.mxu0 0.0
  %3462 = vmatpush1.msra.mxu0 0.0
  %3463 = vmatprep.subr.mxu0 0.0
  %3464 = vmatpush1.msra.mxu0 0.0
  %3465 = vmatprep.mubr.f32.mxu0 0.0
  %v3466 = vand.u32 %v2901, 4294901760
  %3467 = vmatmul.mubr.f32.gmra.mrb[0].mxu0 %v3466
  %v3468 = vpop.f32.mrb[0].mxu0
  %v3469 = vadd.f32 %v3350, %v3468
  %v3470 = vpop.f32.mrb[0].mxu0
  %3471 = vdwg.mxu0
  %3472 = vmatprep.subr.mxu0 0.0
  %v3473 = vand.u32 %v2902, 4294901760
  %3474 = vmatpush1.msra.mxu0 %v3473
  %3475 = vmatprep.subr.mxu0 0.0
  %v3476 = vand.u32 %v2903, 4294901760
  %3477 = vmatpush1.msra.mxu0 %v3476
  %3478 = vmatprep.subr.mxu0 0.0
  %v3479 = vand.u32 %v2904, 4294901760
  %3480 = vmatpush1.msra.mxu0 %v3479
  %3481 = vmatprep.subr.mxu0 0.0
  %v3482 = vand.u32 %v2905, 4294901760
  %3483 = vmatpush1.msra.mxu0 %v3482
  %3484 = vmatprep.subr.mxu0 0.0
  %v3485 = vand.u32 %v2906, 4294901760
  %3486 = vmatpush1.msra.mxu0 %v3485
  %3487 = vmatprep.subr.mxu0 0.0
  %v3488 = vand.u32 %v2907, 4294901760
  %3489 = vmatpush1.msra.mxu0 %v3488
  %3490 = vmatprep.subr.mxu0 0.0
  %v3491 = vand.u32 %v2908, 4294901760
  %3492 = vmatpush1.msra.mxu0 %v3491
  %3493 = vmatprep.subr.mxu0 0.0
  %v3494 = vand.u32 %v2909, 4294901760
  %3495 = vmatpush1.msra.mxu0 %v3494
  %3496 = vmatprep.subr.mxu0 0.0
  %v3497 = vand.u32 %v2910, 4294901760
  %3498 = vmatpush1.msra.mxu0 %v3497
  %3499 = vmatprep.subr.mxu0 0.0
  %v3500 = vand.u32 %v2911, 4294901760
  %3501 = vmatpush1.msra.mxu0 %v3500
  %3502 = vmatprep.subr.mxu0 0.0
  %v3503 = vand.u32 %v2912, 4294901760
  %3504 = vmatpush1.msra.mxu0 %v3503
  %3505 = vmatprep.subr.mxu0 0.0
  %v3506 = vand.u32 %v2913, 4294901760
  %3507 = vmatpush1.msra.mxu0 %v3506
  %3508 = vmatprep.subr.mxu0 0.0
  %v3509 = vand.u32 %v2914, 4294901760
  %3510 = vmatpush1.msra.mxu0 %v3509
  %3511 = vmatprep.subr.mxu0 0.0
  %v3512 = vand.u32 %v2915, 4294901760
  %3513 = vmatpush1.msra.mxu0 %v3512
  %3514 = vmatprep.subr.mxu0 0.0
  %v3515 = vand.u32 %v2916, 4294901760
  %3516 = vmatpush1.msra.mxu0 %v3515
  %3517 = vmatprep.subr.mxu0 0.0
  %v3518 = vand.u32 %v2917, 4294901760
  %3519 = vmatpush1.msra.mxu0 %v3518
  %3520 = vmatprep.subr.mxu0 0.0
  %3521 = vmatpush1.msra.mxu0 0.0
  %3522 = vmatprep.subr.mxu0 0.0
  %3523 = vmatpush1.msra.mxu0 0.0
  %3524 = vmatprep.subr.mxu0 0.0
  %3525 = vmatpush1.msra.mxu0 0.0
  %3526 = vmatprep.subr.mxu0 0.0
  %3527 = vmatpush1.msra.mxu0 0.0
  %3528 = vmatprep.subr.mxu0 0.0
  %3529 = vmatpush1.msra.mxu0 0.0
  %3530 = vmatprep.subr.mxu0 0.0
  %3531 = vmatpush1.msra.mxu0 0.0
  %3532 = vmatprep.subr.mxu0 0.0
  %3533 = vmatpush1.msra.mxu0 0.0
  %3534 = vmatprep.subr.mxu0 0.0
  %3535 = vmatpush1.msra.mxu0 0.0
  %3536 = vmatprep.subr.mxu0 0.0
  %3537 = vmatpush1.msra.mxu0 0.0
  %3538 = vmatprep.subr.mxu0 0.0
  %3539 = vmatpush1.msra.mxu0 0.0
  %3540 = vmatprep.subr.mxu0 0.0
  %3541 = vmatpush1.msra.mxu0 0.0
  %3542 = vmatprep.subr.mxu0 0.0
  %3543 = vmatpush1.msra.mxu0 0.0
  %3544 = vmatprep.subr.mxu0 0.0
  %3545 = vmatpush1.msra.mxu0 0.0
  %3546 = vmatprep.subr.mxu0 0.0
  %3547 = vmatpush1.msra.mxu0 0.0
  %3548 = vmatprep.subr.mxu0 0.0
  %3549 = vmatpush1.msra.mxu0 0.0
  %3550 = vmatprep.subr.mxu0 0.0
  %3551 = vmatpush1.msra.mxu0 0.0
  %3552 = vmatprep.mubr.f32.mxu0 0.0
  %v3553 = vand.u32 %v2901, 4294901760
  %3554 = vmatmul.mubr.f32.gmra.mrb[0].mxu0 %v3553
  %v3555 = vpop.f32.mrb[0].mxu0
  %v3556 = vadd.f32 %v3469, %v3555
  %v3557 = vpop.f32.mrb[0].mxu0
  %3558 = vdwg.mxu0
  %v3559 = vadd.f32 %v2900, %v3556
  %s3560 = scalar_lea.vmem [#allocation2], 1
  %v3561 = vld [vmem:[%s3560] ss:$8 sm:$0xf]
  %s3562 = scalar_lea.vmem %s4, 128
  %v3563 = vld [vmem:[%s3562] sm:$0xff]
  %v3564 = vld [vmem:[%s3562 + $0x8] sm:$0xff]
  %v3565 = vld [vmem:[%s3562 + $0x10] sm:$0xff]
  %v3566 = vld [vmem:[%s3562 + $0x18] sm:$0xff]
  %v3567 = vld [vmem:[%s3562 + $0x20] sm:$0xff]
  %v3568 = vld [vmem:[%s3562 + $0x28] sm:$0xff]
  %v3569 = vld [vmem:[%s3562 + $0x30] sm:$0xff]
  %v3570 = vld [vmem:[%s3562 + $0x38] sm:$0xff]
  %v3571 = vld [vmem:[%s3562 + $0x40] sm:$0xff]
  %v3572 = vld [vmem:[%s3562 + $0x48] sm:$0xff]
  %v3573 = vld [vmem:[%s3562 + $0x50] sm:$0xff]
  %v3574 = vld [vmem:[%s3562 + $0x58] sm:$0xff]
  %v3575 = vld [vmem:[%s3562 + $0x60] sm:$0xff]
  %v3576 = vld [vmem:[%s3562 + $0x68] sm:$0xff]
  %v3577 = vld [vmem:[%s3562 + $0x70] sm:$0xff]
  %v3578 = vld [vmem:[%s3562 + $0x78] sm:$0xff]
  %3579 = vmatprep.subr.mxu0 0.0
  %v3580 = vand.u32 %v3563, 4294901760
  %3581 = vmatpush1.msra.mxu0 %v3580
  %3582 = vmatprep.subr.mxu0 0.0
  %v3583 = vand.u32 %v3564, 4294901760
  %3584 = vmatpush1.msra.mxu0 %v3583
  %3585 = vmatprep.subr.mxu0 0.0
  %v3586 = vand.u32 %v3565, 4294901760
  %3587 = vmatpush1.msra.mxu0 %v3586
  %3588 = vmatprep.subr.mxu0 0.0
  %v3589 = vand.u32 %v3566, 4294901760
  %3590 = vmatpush1.msra.mxu0 %v3589
  %3591 = vmatprep.subr.mxu0 0.0
  %v3592 = vand.u32 %v3567, 4294901760
  %3593 = vmatpush1.msra.mxu0 %v3592
  %3594 = vmatprep.subr.mxu0 0.0
  %v3595 = vand.u32 %v3568, 4294901760
  %3596 = vmatpush1.msra.mxu0 %v3595
  %3597 = vmatprep.subr.mxu0 0.0
  %v3598 = vand.u32 %v3569, 4294901760
  %3599 = vmatpush1.msra.mxu0 %v3598
  %3600 = vmatprep.subr.mxu0 0.0
  %v3601 = vand.u32 %v3570, 4294901760
  %3602 = vmatpush1.msra.mxu0 %v3601
  %3603 = vmatprep.subr.mxu0 0.0
  %v3604 = vand.u32 %v3571, 4294901760
  %3605 = vmatpush1.msra.mxu0 %v3604
  %3606 = vmatprep.subr.mxu0 0.0
  %v3607 = vand.u32 %v3572, 4294901760
  %3608 = vmatpush1.msra.mxu0 %v3607
  %3609 = vmatprep.subr.mxu0 0.0
  %v3610 = vand.u32 %v3573, 4294901760
  %3611 = vmatpush1.msra.mxu0 %v3610
  %3612 = vmatprep.subr.mxu0 0.0
  %v3613 = vand.u32 %v3574, 4294901760
  %3614 = vmatpush1.msra.mxu0 %v3613
  %3615 = vmatprep.subr.mxu0 0.0
  %v3616 = vand.u32 %v3575, 4294901760
  %3617 = vmatpush1.msra.mxu0 %v3616
  %3618 = vmatprep.subr.mxu0 0.0
  %v3619 = vand.u32 %v3576, 4294901760
  %3620 = vmatpush1.msra.mxu0 %v3619
  %3621 = vmatprep.subr.mxu0 0.0
  %v3622 = vand.u32 %v3577, 4294901760
  %3623 = vmatpush1.msra.mxu0 %v3622
  %3624 = vmatprep.subr.mxu0 0.0
  %v3625 = vand.u32 %v3578, 4294901760
  %3626 = vmatpush1.msra.mxu0 %v3625
  %3627 = vmatprep.subr.mxu0 0.0
  %3628 = vmatpush1.msra.mxu0 0.0
  %3629 = vmatprep.subr.mxu0 0.0
  %3630 = vmatpush1.msra.mxu0 0.0
  %3631 = vmatprep.subr.mxu0 0.0
  %3632 = vmatpush1.msra.mxu0 0.0
  %3633 = vmatprep.subr.mxu0 0.0
  %3634 = vmatpush1.msra.mxu0 0.0
  %3635 = vmatprep.subr.mxu0 0.0
  %3636 = vmatpush1.msra.mxu0 0.0
  %3637 = vmatprep.subr.mxu0 0.0
  %3638 = vmatpush1.msra.mxu0 0.0
  %3639 = vmatprep.subr.mxu0 0.0
  %3640 = vmatpush1.msra.mxu0 0.0
  %3641 = vmatprep.subr.mxu0 0.0
  %3642 = vmatpush1.msra.mxu0 0.0
  %3643 = vmatprep.subr.mxu0 0.0
  %3644 = vmatpush1.msra.mxu0 0.0
  %3645 = vmatprep.subr.mxu0 0.0
  %3646 = vmatpush1.msra.mxu0 0.0
  %3647 = vmatprep.subr.mxu0 0.0
  %3648 = vmatpush1.msra.mxu0 0.0
  %3649 = vmatprep.subr.mxu0 0.0
  %3650 = vmatpush1.msra.mxu0 0.0
  %3651 = vmatprep.subr.mxu0 0.0
  %3652 = vmatpush1.msra.mxu0 0.0
  %3653 = vmatprep.subr.mxu0 0.0
  %3654 = vmatpush1.msra.mxu0 0.0
  %3655 = vmatprep.subr.mxu0 0.0
  %3656 = vmatpush1.msra.mxu0 0.0
  %3657 = vmatprep.subr.mxu0 0.0
  %3658 = vmatpush1.msra.mxu0 0.0
  %3659 = vmatprep.mubr.f32.mxu0 0.0
  %v3660 = vand.u32 %v3561, 4294901760
  %v3661 = vsub.f32 %v3561, %v3660
  %v3662 = vand.u32 %v3661, 4294901760
  %v3663 = vsub.f32 %v3661, %v3662
  %v3664 = vand.u32 %v3663, 4294901760
  %3665 = vmatmul.mubr.f32.gmra.mrb[0].mxu0 %v3664
  %v3666 = vpop.f32.mrb[0].mxu0
  %v3667 = vadd.f32 0.0, %v3666
  %v3668 = vpop.f32.mrb[0].mxu0
  %3669 = vdwg.mxu0
  %3670 = vmatprep.subr.mxu0 0.0
  %v3671 = vand.u32 %v3563, 4294901760
  %v3672 = vsub.f32 %v3563, %v3671
  %v3673 = vand.u32 %v3672, 4294901760
  %v3674 = vsub.f32 %v3672, %v3673
  %v3675 = vand.u32 %v3674, 4294901760
  %3676 = vmatpush1.msra.mxu0 %v3675
  %3677 = vmatprep.subr.mxu0 0.0
  %v3678 = vand.u32 %v3564, 4294901760
  %v3679 = vsub.f32 %v3564, %v3678
  %v3680 = vand.u32 %v3679, 4294901760
  %v3681 = vsub.f32 %v3679, %v3680
  %v3682 = vand.u32 %v3681, 4294901760
  %3683 = vmatpush1.msra.mxu0 %v3682
  %3684 = vmatprep.subr.mxu0 0.0
  %v3685 = vand.u32 %v3565, 4294901760
  %v3686 = vsub.f32 %v3565, %v3685
  %v3687 = vand.u32 %v3686, 4294901760
  %v3688 = vsub.f32 %v3686, %v3687
  %v3689 = vand.u32 %v3688, 4294901760
  %3690 = vmatpush1.msra.mxu0 %v3689
  %3691 = vmatprep.subr.mxu0 0.0
  %v3692 = vand.u32 %v3566, 4294901760
  %v3693 = vsub.f32 %v3566, %v3692
  %v3694 = vand.u32 %v3693, 4294901760
  %v3695 = vsub.f32 %v3693, %v3694
  %v3696 = vand.u32 %v3695, 4294901760
  %3697 = vmatpush1.msra.mxu0 %v3696
  %3698 = vmatprep.subr.mxu0 0.0
  %v3699 = vand.u32 %v3567, 4294901760
  %v3700 = vsub.f32 %v3567, %v3699
  %v3701 = vand.u32 %v3700, 4294901760
  %v3702 = vsub.f32 %v3700, %v3701
  %v3703 = vand.u32 %v3702, 4294901760
  %3704 = vmatpush1.msra.mxu0 %v3703
  %3705 = vmatprep.subr.mxu0 0.0
  %v3706 = vand.u32 %v3568, 4294901760
  %v3707 = vsub.f32 %v3568, %v3706
  %v3708 = vand.u32 %v3707, 4294901760
  %v3709 = vsub.f32 %v3707, %v3708
  %v3710 = vand.u32 %v3709, 4294901760
  %3711 = vmatpush1.msra.mxu0 %v3710
  %3712 = vmatprep.subr.mxu0 0.0
  %v3713 = vand.u32 %v3569, 4294901760
  %v3714 = vsub.f32 %v3569, %v3713
  %v3715 = vand.u32 %v3714, 4294901760
  %v3716 = vsub.f32 %v3714, %v3715
  %v3717 = vand.u32 %v3716, 4294901760
  %3718 = vmatpush1.msra.mxu0 %v3717
  %3719 = vmatprep.subr.mxu0 0.0
  %v3720 = vand.u32 %v3570, 4294901760
  %v3721 = vsub.f32 %v3570, %v3720
  %v3722 = vand.u32 %v3721, 4294901760
  %v3723 = vsub.f32 %v3721, %v3722
  %v3724 = vand.u32 %v3723, 4294901760
  %3725 = vmatpush1.msra.mxu0 %v3724
  %3726 = vmatprep.subr.mxu0 0.0
  %v3727 = vand.u32 %v3571, 4294901760
  %v3728 = vsub.f32 %v3571, %v3727
  %v3729 = vand.u32 %v3728, 4294901760
  %v3730 = vsub.f32 %v3728, %v3729
  %v3731 = vand.u32 %v3730, 4294901760
  %3732 = vmatpush1.msra.mxu0 %v3731
  %3733 = vmatprep.subr.mxu0 0.0
  %v3734 = vand.u32 %v3572, 4294901760
  %v3735 = vsub.f32 %v3572, %v3734
  %v3736 = vand.u32 %v3735, 4294901760
  %v3737 = vsub.f32 %v3735, %v3736
  %v3738 = vand.u32 %v3737, 4294901760
  %3739 = vmatpush1.msra.mxu0 %v3738
  %3740 = vmatprep.subr.mxu0 0.0
  %v3741 = vand.u32 %v3573, 4294901760
  %v3742 = vsub.f32 %v3573, %v3741
  %v3743 = vand.u32 %v3742, 4294901760
  %v3744 = vsub.f32 %v3742, %v3743
  %v3745 = vand.u32 %v3744, 4294901760
  %3746 = vmatpush1.msra.mxu0 %v3745
  %3747 = vmatprep.subr.mxu0 0.0
  %v3748 = vand.u32 %v3574, 4294901760
  %v3749 = vsub.f32 %v3574, %v3748
  %v3750 = vand.u32 %v3749, 4294901760
  %v3751 = vsub.f32 %v3749, %v3750
  %v3752 = vand.u32 %v3751, 4294901760
  %3753 = vmatpush1.msra.mxu0 %v3752
  %3754 = vmatprep.subr.mxu0 0.0
  %v3755 = vand.u32 %v3575, 4294901760
  %v3756 = vsub.f32 %v3575, %v3755
  %v3757 = vand.u32 %v3756, 4294901760
  %v3758 = vsub.f32 %v3756, %v3757
  %v3759 = vand.u32 %v3758, 4294901760
  %3760 = vmatpush1.msra.mxu0 %v3759
  %3761 = vmatprep.subr.mxu0 0.0
  %v3762 = vand.u32 %v3576, 4294901760
  %v3763 = vsub.f32 %v3576, %v3762
  %v3764 = vand.u32 %v3763, 4294901760
  %v3765 = vsub.f32 %v3763, %v3764
  %v3766 = vand.u32 %v3765, 4294901760
  %3767 = vmatpush1.msra.mxu0 %v3766
  %3768 = vmatprep.subr.mxu0 0.0
  %v3769 = vand.u32 %v3577, 4294901760
  %v3770 = vsub.f32 %v3577, %v3769
  %v3771 = vand.u32 %v3770, 4294901760
  %v3772 = vsub.f32 %v3770, %v3771
  %v3773 = vand.u32 %v3772, 4294901760
  %3774 = vmatpush1.msra.mxu0 %v3773
  %3775 = vmatprep.subr.mxu0 0.0
  %v3776 = vand.u32 %v3578, 4294901760
  %v3777 = vsub.f32 %v3578, %v3776
  %v3778 = vand.u32 %v3777, 4294901760
  %v3779 = vsub.f32 %v3777, %v3778
  %v3780 = vand.u32 %v3779, 4294901760
  %3781 = vmatpush1.msra.mxu0 %v3780
  %3782 = vmatprep.subr.mxu0 0.0
  %3783 = vmatpush1.msra.mxu0 0.0
  %3784 = vmatprep.subr.mxu0 0.0
  %3785 = vmatpush1.msra.mxu0 0.0
  %3786 = vmatprep.subr.mxu0 0.0
  %3787 = vmatpush1.msra.mxu0 0.0
  %3788 = vmatprep.subr.mxu0 0.0
  %3789 = vmatpush1.msra.mxu0 0.0
  %3790 = vmatprep.subr.mxu0 0.0
  %3791 = vmatpush1.msra.mxu0 0.0
  %3792 = vmatprep.subr.mxu0 0.0
  %3793 = vmatpush1.msra.mxu0 0.0
  %3794 = vmatprep.subr.mxu0 0.0
  %3795 = vmatpush1.msra.mxu0 0.0
  %3796 = vmatprep.subr.mxu0 0.0
  %3797 = vmatpush1.msra.mxu0 0.0
  %3798 = vmatprep.subr.mxu0 0.0
  %3799 = vmatpush1.msra.mxu0 0.0
  %3800 = vmatprep.subr.mxu0 0.0
  %3801 = vmatpush1.msra.mxu0 0.0
  %3802 = vmatprep.subr.mxu0 0.0
  %3803 = vmatpush1.msra.mxu0 0.0
  %3804 = vmatprep.subr.mxu0 0.0
  %3805 = vmatpush1.msra.mxu0 0.0
  %3806 = vmatprep.subr.mxu0 0.0
  %3807 = vmatpush1.msra.mxu0 0.0
  %3808 = vmatprep.subr.mxu0 0.0
  %3809 = vmatpush1.msra.mxu0 0.0
  %3810 = vmatprep.subr.mxu0 0.0
  %3811 = vmatpush1.msra.mxu0 0.0
  %3812 = vmatprep.subr.mxu0 0.0
  %3813 = vmatpush1.msra.mxu0 0.0
  %3814 = vmatprep.mubr.f32.mxu0 0.0
  %v3815 = vand.u32 %v3561, 4294901760
  %3816 = vmatmul.mubr.f32.gmra.mrb[0].mxu0 %v3815
  %v3817 = vpop.f32.mrb[0].mxu0
  %v3818 = vadd.f32 %v3667, %v3817
  %v3819 = vpop.f32.mrb[0].mxu0
  %3820 = vdwg.mxu0
  %3821 = vmatprep.subr.mxu0 0.0
  %v3822 = vand.u32 %v3563, 4294901760
  %v3823 = vsub.f32 %v3563, %v3822
  %3824 = vmatpush1.msra.mxu0 %v3823
  %3825 = vmatprep.subr.mxu0 0.0
  %v3826 = vand.u32 %v3564, 4294901760
  %v3827 = vsub.f32 %v3564, %v3826
  %3828 = vmatpush1.msra.mxu0 %v3827
  %3829 = vmatprep.subr.mxu0 0.0
  %v3830 = vand.u32 %v3565, 4294901760
  %v3831 = vsub.f32 %v3565, %v3830
  %3832 = vmatpush1.msra.mxu0 %v3831
  %3833 = vmatprep.subr.mxu0 0.0
  %v3834 = vand.u32 %v3566, 4294901760
  %v3835 = vsub.f32 %v3566, %v3834
  %3836 = vmatpush1.msra.mxu0 %v3835
  %3837 = vmatprep.subr.mxu0 0.0
  %v3838 = vand.u32 %v3567, 4294901760
  %v3839 = vsub.f32 %v3567, %v3838
  %3840 = vmatpush1.msra.mxu0 %v3839
  %3841 = vmatprep.subr.mxu0 0.0
  %v3842 = vand.u32 %v3568, 4294901760
  %v3843 = vsub.f32 %v3568, %v3842
  %3844 = vmatpush1.msra.mxu0 %v3843
  %3845 = vmatprep.subr.mxu0 0.0
  %v3846 = vand.u32 %v3569, 4294901760
  %v3847 = vsub.f32 %v3569, %v3846
  %3848 = vmatpush1.msra.mxu0 %v3847
  %3849 = vmatprep.subr.mxu0 0.0
  %v3850 = vand.u32 %v3570, 4294901760
  %v3851 = vsub.f32 %v3570, %v3850
  %3852 = vmatpush1.msra.mxu0 %v3851
  %3853 = vmatprep.subr.mxu0 0.0
  %v3854 = vand.u32 %v3571, 4294901760
  %v3855 = vsub.f32 %v3571, %v3854
  %3856 = vmatpush1.msra.mxu0 %v3855
  %3857 = vmatprep.subr.mxu0 0.0
  %v3858 = vand.u32 %v3572, 4294901760
  %v3859 = vsub.f32 %v3572, %v3858
  %3860 = vmatpush1.msra.mxu0 %v3859
  %3861 = vmatprep.subr.mxu0 0.0
  %v3862 = vand.u32 %v3573, 4294901760
  %v3863 = vsub.f32 %v3573, %v3862
  %3864 = vmatpush1.msra.mxu0 %v3863
  %3865 = vmatprep.subr.mxu0 0.0
  %v3866 = vand.u32 %v3574, 4294901760
  %v3867 = vsub.f32 %v3574, %v3866
  %3868 = vmatpush1.msra.mxu0 %v3867
  %3869 = vmatprep.subr.mxu0 0.0
  %v3870 = vand.u32 %v3575, 4294901760
  %v3871 = vsub.f32 %v3575, %v3870
  %3872 = vmatpush1.msra.mxu0 %v3871
  %3873 = vmatprep.subr.mxu0 0.0
  %v3874 = vand.u32 %v3576, 4294901760
  %v3875 = vsub.f32 %v3576, %v3874
  %3876 = vmatpush1.msra.mxu0 %v3875
  %3877 = vmatprep.subr.mxu0 0.0
  %v3878 = vand.u32 %v3577, 4294901760
  %v3879 = vsub.f32 %v3577, %v3878
  %3880 = vmatpush1.msra.mxu0 %v3879
  %3881 = vmatprep.subr.mxu0 0.0
  %v3882 = vand.u32 %v3578, 4294901760
  %v3883 = vsub.f32 %v3578, %v3882
  %3884 = vmatpush1.msra.mxu0 %v3883
  %3885 = vmatprep.subr.mxu0 0.0
  %3886 = vmatpush1.msra.mxu0 0.0
  %3887 = vmatprep.subr.mxu0 0.0
  %3888 = vmatpush1.msra.mxu0 0.0
  %3889 = vmatprep.subr.mxu0 0.0
  %3890 = vmatpush1.msra.mxu0 0.0
  %3891 = vmatprep.subr.mxu0 0.0
  %3892 = vmatpush1.msra.mxu0 0.0
  %3893 = vmatprep.subr.mxu0 0.0
  %3894 = vmatpush1.msra.mxu0 0.0
  %3895 = vmatprep.subr.mxu0 0.0
  %3896 = vmatpush1.msra.mxu0 0.0
  %3897 = vmatprep.subr.mxu0 0.0
  %3898 = vmatpush1.msra.mxu0 0.0
  %3899 = vmatprep.subr.mxu0 0.0
  %3900 = vmatpush1.msra.mxu0 0.0
  %3901 = vmatprep.subr.mxu0 0.0
  %3902 = vmatpush1.msra.mxu0 0.0
  %3903 = vmatprep.subr.mxu0 0.0
  %3904 = vmatpush1.msra.mxu0 0.0
  %3905 = vmatprep.subr.mxu0 0.0
  %3906 = vmatpush1.msra.mxu0 0.0
  %3907 = vmatprep.subr.mxu0 0.0
  %3908 = vmatpush1.msra.mxu0 0.0
  %3909 = vmatprep.subr.mxu0 0.0
  %3910 = vmatpush1.msra.mxu0 0.0
  %3911 = vmatprep.subr.mxu0 0.0
  %3912 = vmatpush1.msra.mxu0 0.0
  %3913 = vmatprep.subr.mxu0 0.0
  %3914 = vmatpush1.msra.mxu0 0.0
  %3915 = vmatprep.subr.mxu0 0.0
  %3916 = vmatpush1.msra.mxu0 0.0
  %3917 = vmatprep.mubr.f32.mxu0 0.0
  %v3918 = vand.u32 %v3561, 4294901760
  %v3919 = vsub.f32 %v3561, %v3918
  %3920 = vmatmul.mubr.f32.gmra.mrb[0].mxu0 %v3919
  %v3921 = vpop.f32.mrb[0].mxu0
  %v3922 = vadd.f32 %v3818, %v3921
  %v3923 = vpop.f32.mrb[0].mxu0
  %3924 = vdwg.mxu0
  %3925 = vmatprep.subr.mxu0 0.0
  %v3926 = vand.u32 %v3563, 4294901760
  %3927 = vmatpush1.msra.mxu0 %v3926
  %3928 = vmatprep.subr.mxu0 0.0
  %v3929 = vand.u32 %v3564, 4294901760
  %3930 = vmatpush1.msra.mxu0 %v3929
  %3931 = vmatprep.subr.mxu0 0.0
  %v3932 = vand.u32 %v3565, 4294901760
  %3933 = vmatpush1.msra.mxu0 %v3932
  %3934 = vmatprep.subr.mxu0 0.0
  %v3935 = vand.u32 %v3566, 4294901760
  %3936 = vmatpush1.msra.mxu0 %v3935
  %3937 = vmatprep.subr.mxu0 0.0
  %v3938 = vand.u32 %v3567, 4294901760
  %3939 = vmatpush1.msra.mxu0 %v3938
  %3940 = vmatprep.subr.mxu0 0.0
  %v3941 = vand.u32 %v3568, 4294901760
  %3942 = vmatpush1.msra.mxu0 %v3941
  %3943 = vmatprep.subr.mxu0 0.0
  %v3944 = vand.u32 %v3569, 4294901760
  %3945 = vmatpush1.msra.mxu0 %v3944
  %3946 = vmatprep.subr.mxu0 0.0
  %v3947 = vand.u32 %v3570, 4294901760
  %3948 = vmatpush1.msra.mxu0 %v3947
  %3949 = vmatprep.subr.mxu0 0.0
  %v3950 = vand.u32 %v3571, 4294901760
  %3951 = vmatpush1.msra.mxu0 %v3950
  %3952 = vmatprep.subr.mxu0 0.0
  %v3953 = vand.u32 %v3572, 4294901760
  %3954 = vmatpush1.msra.mxu0 %v3953
  %3955 = vmatprep.subr.mxu0 0.0
  %v3956 = vand.u32 %v3573, 4294901760
  %3957 = vmatpush1.msra.mxu0 %v3956
  %3958 = vmatprep.subr.mxu0 0.0
  %v3959 = vand.u32 %v3574, 4294901760
  %3960 = vmatpush1.msra.mxu0 %v3959
  %3961 = vmatprep.subr.mxu0 0.0
  %v3962 = vand.u32 %v3575, 4294901760
  %3963 = vmatpush1.msra.mxu0 %v3962
  %3964 = vmatprep.subr.mxu0 0.0
  %v3965 = vand.u32 %v3576, 4294901760
  %3966 = vmatpush1.msra.mxu0 %v3965
  %3967 = vmatprep.subr.mxu0 0.0
  %v3968 = vand.u32 %v3577, 4294901760
  %3969 = vmatpush1.msra.mxu0 %v3968
  %3970 = vmatprep.subr.mxu0 0.0
  %v3971 = vand.u32 %v3578, 4294901760
  %3972 = vmatpush1.msra.mxu0 %v3971
  %3973 = vmatprep.subr.mxu0 0.0
  %3974 = vmatpush1.msra.mxu0 0.0
  %3975 = vmatprep.subr.mxu0 0.0
  %3976 = vmatpush1.msra.mxu0 0.0
  %3977 = vmatprep.subr.mxu0 0.0
  %3978 = vmatpush1.msra.mxu0 0.0
  %3979 = vmatprep.subr.mxu0 0.0
  %3980 = vmatpush1.msra.mxu0 0.0
  %3981 = vmatprep.subr.mxu0 0.0
  %3982 = vmatpush1.msra.mxu0 0.0
  %3983 = vmatprep.subr.mxu0 0.0
  %3984 = vmatpush1.msra.mxu0 0.0
  %3985 = vmatprep.subr.mxu0 0.0
  %3986 = vmatpush1.msra.mxu0 0.0
  %3987 = vmatprep.subr.mxu0 0.0
  %3988 = vmatpush1.msra.mxu0 0.0
  %3989 = vmatprep.subr.mxu0 0.0
  %3990 = vmatpush1.msra.mxu0 0.0
  %3991 = vmatprep.subr.mxu0 0.0
  %3992 = vmatpush1.msra.mxu0 0.0
  %3993 = vmatprep.subr.mxu0 0.0
  %3994 = vmatpush1.msra.mxu0 0.0
  %3995 = vmatprep.subr.mxu0 0.0
  %3996 = vmatpush1.msra.mxu0 0.0
  %3997 = vmatprep.subr.mxu0 0.0
  %3998 = vmatpush1.msra.mxu0 0.0
  %3999 = vmatprep.subr.mxu0 0.0
  %4000 = vmatpush1.msra.mxu0 0.0
  %4001 = vmatprep.subr.mxu0 0.0
  %4002 = vmatpush1.msra.mxu0 0.0
  %4003 = vmatprep.subr.mxu0 0.0
  %4004 = vmatpush1.msra.mxu0 0.0
  %4005 = vmatprep.mubr.f32.mxu0 0.0
  %v4006 = vand.u32 %v3561, 4294901760
  %v4007 = vsub.f32 %v3561, %v4006
  %v4008 = vand.u32 %v4007, 4294901760
  %4009 = vmatmul.mubr.f32.gmra.mrb[0].mxu0 %v4008
  %v4010 = vpop.f32.mrb[0].mxu0
  %v4011 = vadd.f32 %v3922, %v4010
  %v4012 = vpop.f32.mrb[0].mxu0
  %4013 = vdwg.mxu0
  %4014 = vmatprep.subr.mxu0 0.0
  %v4015 = vand.u32 %v3563, 4294901760
  %v4016 = vsub.f32 %v3563, %v4015
  %v4017 = vand.u32 %v4016, 4294901760
  %4018 = vmatpush1.msra.mxu0 %v4017
  %4019 = vmatprep.subr.mxu0 0.0
  %v4020 = vand.u32 %v3564, 4294901760
  %v4021 = vsub.f32 %v3564, %v4020
  %v4022 = vand.u32 %v4021, 4294901760
  %4023 = vmatpush1.msra.mxu0 %v4022
  %4024 = vmatprep.subr.mxu0 0.0
  %v4025 = vand.u32 %v3565, 4294901760
  %v4026 = vsub.f32 %v3565, %v4025
  %v4027 = vand.u32 %v4026, 4294901760
  %4028 = vmatpush1.msra.mxu0 %v4027
  %4029 = vmatprep.subr.mxu0 0.0
  %v4030 = vand.u32 %v3566, 4294901760
  %v4031 = vsub.f32 %v3566, %v4030
  %v4032 = vand.u32 %v4031, 4294901760
  %4033 = vmatpush1.msra.mxu0 %v4032
  %4034 = vmatprep.subr.mxu0 0.0
  %v4035 = vand.u32 %v3567, 4294901760
  %v4036 = vsub.f32 %v3567, %v4035
  %v4037 = vand.u32 %v4036, 4294901760
  %4038 = vmatpush1.msra.mxu0 %v4037
  %4039 = vmatprep.subr.mxu0 0.0
  %v4040 = vand.u32 %v3568, 4294901760
  %v4041 = vsub.f32 %v3568, %v4040
  %v4042 = vand.u32 %v4041, 4294901760
  %4043 = vmatpush1.msra.mxu0 %v4042
  %4044 = vmatprep.subr.mxu0 0.0
  %v4045 = vand.u32 %v3569, 4294901760
  %v4046 = vsub.f32 %v3569, %v4045
  %v4047 = vand.u32 %v4046, 4294901760
  %4048 = vmatpush1.msra.mxu0 %v4047
  %4049 = vmatprep.subr.mxu0 0.0
  %v4050 = vand.u32 %v3570, 4294901760
  %v4051 = vsub.f32 %v3570, %v4050
  %v4052 = vand.u32 %v4051, 4294901760
  %4053 = vmatpush1.msra.mxu0 %v4052
  %4054 = vmatprep.subr.mxu0 0.0
  %v4055 = vand.u32 %v3571, 4294901760
  %v4056 = vsub.f32 %v3571, %v4055
  %v4057 = vand.u32 %v4056, 4294901760
  %4058 = vmatpush1.msra.mxu0 %v4057
  %4059 = vmatprep.subr.mxu0 0.0
  %v4060 = vand.u32 %v3572, 4294901760
  %v4061 = vsub.f32 %v3572, %v4060
  %v4062 = vand.u32 %v4061, 4294901760
  %4063 = vmatpush1.msra.mxu0 %v4062
  %4064 = vmatprep.subr.mxu0 0.0
  %v4065 = vand.u32 %v3573, 4294901760
  %v4066 = vsub.f32 %v3573, %v4065
  %v4067 = vand.u32 %v4066, 4294901760
  %4068 = vmatpush1.msra.mxu0 %v4067
  %4069 = vmatprep.subr.mxu0 0.0
  %v4070 = vand.u32 %v3574, 4294901760
  %v4071 = vsub.f32 %v3574, %v4070
  %v4072 = vand.u32 %v4071, 4294901760
  %4073 = vmatpush1.msra.mxu0 %v4072
  %4074 = vmatprep.subr.mxu0 0.0
  %v4075 = vand.u32 %v3575, 4294901760
  %v4076 = vsub.f32 %v3575, %v4075
  %v4077 = vand.u32 %v4076, 4294901760
  %4078 = vmatpush1.msra.mxu0 %v4077
  %4079 = vmatprep.subr.mxu0 0.0
  %v4080 = vand.u32 %v3576, 4294901760
  %v4081 = vsub.f32 %v3576, %v4080
  %v4082 = vand.u32 %v4081, 4294901760
  %4083 = vmatpush1.msra.mxu0 %v4082
  %4084 = vmatprep.subr.mxu0 0.0
  %v4085 = vand.u32 %v3577, 4294901760
  %v4086 = vsub.f32 %v3577, %v4085
  %v4087 = vand.u32 %v4086, 4294901760
  %4088 = vmatpush1.msra.mxu0 %v4087
  %4089 = vmatprep.subr.mxu0 0.0
  %v4090 = vand.u32 %v3578, 4294901760
  %v4091 = vsub.f32 %v3578, %v4090
  %v4092 = vand.u32 %v4091, 4294901760
  %4093 = vmatpush1.msra.mxu0 %v4092
  %4094 = vmatprep.subr.mxu0 0.0
  %4095 = vmatpush1.msra.mxu0 0.0
  %4096 = vmatprep.subr.mxu0 0.0
  %4097 = vmatpush1.msra.mxu0 0.0
  %4098 = vmatprep.subr.mxu0 0.0
  %4099 = vmatpush1.msra.mxu0 0.0
  %4100 = vmatprep.subr.mxu0 0.0
  %4101 = vmatpush1.msra.mxu0 0.0
  %4102 = vmatprep.subr.mxu0 0.0
  %4103 = vmatpush1.msra.mxu0 0.0
  %4104 = vmatprep.subr.mxu0 0.0
  %4105 = vmatpush1.msra.mxu0 0.0
  %4106 = vmatprep.subr.mxu0 0.0
  %4107 = vmatpush1.msra.mxu0 0.0
  %4108 = vmatprep.subr.mxu0 0.0
  %4109 = vmatpush1.msra.mxu0 0.0
  %4110 = vmatprep.subr.mxu0 0.0
  %4111 = vmatpush1.msra.mxu0 0.0
  %4112 = vmatprep.subr.mxu0 0.0
  %4113 = vmatpush1.msra.mxu0 0.0
  %4114 = vmatprep.subr.mxu0 0.0
  %4115 = vmatpush1.msra.mxu0 0.0
  %4116 = vmatprep.subr.mxu0 0.0
  %4117 = vmatpush1.msra.mxu0 0.0
  %4118 = vmatprep.subr.mxu0 0.0
  %4119 = vmatpush1.msra.mxu0 0.0
  %4120 = vmatprep.subr.mxu0 0.0
  %4121 = vmatpush1.msra.mxu0 0.0
  %4122 = vmatprep.subr.mxu0 0.0
  %4123 = vmatpush1.msra.mxu0 0.0
  %4124 = vmatprep.subr.mxu0 0.0
  %4125 = vmatpush1.msra.mxu0 0.0
  %4126 = vmatprep.mubr.f32.mxu0 0.0
  %v4127 = vand.u32 %v3561, 4294901760
  %4128 = vmatmul.mubr.f32.gmra.mrb[0].mxu0 %v4127
  %v4129 = vpop.f32.mrb[0].mxu0
  %v4130 = vadd.f32 %v4011, %v4129
  %v4131 = vpop.f32.mrb[0].mxu0
  %4132 = vdwg.mxu0
  %4133 = vmatprep.subr.mxu0 0.0
  %v4134 = vand.u32 %v3563, 4294901760
  %4135 = vmatpush1.msra.mxu0 %v4134
  %4136 = vmatprep.subr.mxu0 0.0
  %v4137 = vand.u32 %v3564, 4294901760
  %4138 = vmatpush1.msra.mxu0 %v4137
  %4139 = vmatprep.subr.mxu0 0.0
  %v4140 = vand.u32 %v3565, 4294901760
  %4141 = vmatpush1.msra.mxu0 %v4140
  %4142 = vmatprep.subr.mxu0 0.0
  %v4143 = vand.u32 %v3566, 4294901760
  %4144 = vmatpush1.msra.mxu0 %v4143
  %4145 = vmatprep.subr.mxu0 0.0
  %v4146 = vand.u32 %v3567, 4294901760
  %4147 = vmatpush1.msra.mxu0 %v4146
  %4148 = vmatprep.subr.mxu0 0.0
  %v4149 = vand.u32 %v3568, 4294901760
  %4150 = vmatpush1.msra.mxu0 %v4149
  %4151 = vmatprep.subr.mxu0 0.0
  %v4152 = vand.u32 %v3569, 4294901760
  %4153 = vmatpush1.msra.mxu0 %v4152
  %4154 = vmatprep.subr.mxu0 0.0
  %v4155 = vand.u32 %v3570, 4294901760
  %4156 = vmatpush1.msra.mxu0 %v4155
  %4157 = vmatprep.subr.mxu0 0.0
  %v4158 = vand.u32 %v3571, 4294901760
  %4159 = vmatpush1.msra.mxu0 %v4158
  %4160 = vmatprep.subr.mxu0 0.0
  %v4161 = vand.u32 %v3572, 4294901760
  %4162 = vmatpush1.msra.mxu0 %v4161
  %4163 = vmatprep.subr.mxu0 0.0
  %v4164 = vand.u32 %v3573, 4294901760
  %4165 = vmatpush1.msra.mxu0 %v4164
  %4166 = vmatprep.subr.mxu0 0.0
  %v4167 = vand.u32 %v3574, 4294901760
  %4168 = vmatpush1.msra.mxu0 %v4167
  %4169 = vmatprep.subr.mxu0 0.0
  %v4170 = vand.u32 %v3575, 4294901760
  %4171 = vmatpush1.msra.mxu0 %v4170
  %4172 = vmatprep.subr.mxu0 0.0
  %v4173 = vand.u32 %v3576, 4294901760
  %4174 = vmatpush1.msra.mxu0 %v4173
  %4175 = vmatprep.subr.mxu0 0.0
  %v4176 = vand.u32 %v3577, 4294901760
  %4177 = vmatpush1.msra.mxu0 %v4176
  %4178 = vmatprep.subr.mxu0 0.0
  %v4179 = vand.u32 %v3578, 4294901760
  %4180 = vmatpush1.msra.mxu0 %v4179
  %4181 = vmatprep.subr.mxu0 0.0
  %4182 = vmatpush1.msra.mxu0 0.0
  %4183 = vmatprep.subr.mxu0 0.0
  %4184 = vmatpush1.msra.mxu0 0.0
  %4185 = vmatprep.subr.mxu0 0.0
  %4186 = vmatpush1.msra.mxu0 0.0
  %4187 = vmatprep.subr.mxu0 0.0
  %4188 = vmatpush1.msra.mxu0 0.0
  %4189 = vmatprep.subr.mxu0 0.0
  %4190 = vmatpush1.msra.mxu0 0.0
  %4191 = vmatprep.subr.mxu0 0.0
  %4192 = vmatpush1.msra.mxu0 0.0
  %4193 = vmatprep.subr.mxu0 0.0
  %4194 = vmatpush1.msra.mxu0 0.0
  %4195 = vmatprep.subr.mxu0 0.0
  %4196 = vmatpush1.msra.mxu0 0.0
  %4197 = vmatprep.subr.mxu0 0.0
  %4198 = vmatpush1.msra.mxu0 0.0
  %4199 = vmatprep.subr.mxu0 0.0
  %4200 = vmatpush1.msra.mxu0 0.0
  %4201 = vmatprep.subr.mxu0 0.0
  %4202 = vmatpush1.msra.mxu0 0.0
  %4203 = vmatprep.subr.mxu0 0.0
  %4204 = vmatpush1.msra.mxu0 0.0
  %4205 = vmatprep.subr.mxu0 0.0
  %4206 = vmatpush1.msra.mxu0 0.0
  %4207 = vmatprep.subr.mxu0 0.0
  %4208 = vmatpush1.msra.mxu0 0.0
  %4209 = vmatprep.subr.mxu0 0.0
  %4210 = vmatpush1.msra.mxu0 0.0
  %4211 = vmatprep.subr.mxu0 0.0
  %4212 = vmatpush1.msra.mxu0 0.0
  %4213 = vmatprep.mubr.f32.mxu0 0.0
  %v4214 = vand.u32 %v3561, 4294901760
  %4215 = vmatmul.mubr.f32.gmra.mrb[0].mxu0 %v4214
  %v4216 = vpop.f32.mrb[0].mxu0
  %v4217 = vadd.f32 %v4130, %v4216
  %v4218 = vpop.f32.mrb[0].mxu0
  %4219 = vdwg.mxu0
  %v4220 = vadd.f32 %v3559, %v4217
  %s4221 = scalar_lea.vmem [#allocation2], 2
  %v4222 = vld [vmem:[%s4221] ss:$8 sm:$0xf]
  %s4223 = scalar_lea.vmem %s4, 256
  %v4224 = vld [vmem:[%s4223] sm:$0xff]
  %v4225 = vld [vmem:[%s4223 + $0x8] sm:$0xff]
  %v4226 = vld [vmem:[%s4223 + $0x10] sm:$0xff]
  %v4227 = vld [vmem:[%s4223 + $0x18] sm:$0xff]
  %v4228 = vld [vmem:[%s4223 + $0x20] sm:$0xff]
  %v4229 = vld [vmem:[%s4223 + $0x28] sm:$0xff]
  %v4230 = vld [vmem:[%s4223 + $0x30] sm:$0xff]
  %v4231 = vld [vmem:[%s4223 + $0x38] sm:$0xff]
  %v4232 = vld [vmem:[%s4223 + $0x40] sm:$0xff]
  %v4233 = vld [vmem:[%s4223 + $0x48] sm:$0xff]
  %v4234 = vld [vmem:[%s4223 + $0x50] sm:$0xff]
  %v4235 = vld [vmem:[%s4223 + $0x58] sm:$0xff]
  %v4236 = vld [vmem:[%s4223 + $0x60] sm:$0xff]
  %v4237 = vld [vmem:[%s4223 + $0x68] sm:$0xff]
  %v4238 = vld [vmem:[%s4223 + $0x70] sm:$0xff]
  %v4239 = vld [vmem:[%s4223 + $0x78] sm:$0xff]
  %4240 = vmatprep.subr.mxu0 0.0
  %v4241 = vand.u32 %v4224, 4294901760
  %4242 = vmatpush1.msra.mxu0 %v4241
  %4243 = vmatprep.subr.mxu0 0.0
  %v4244 = vand.u32 %v4225, 4294901760
  %4245 = vmatpush1.msra.mxu0 %v4244
  %4246 = vmatprep.subr.mxu0 0.0
  %v4247 = vand.u32 %v4226, 4294901760
  %4248 = vmatpush1.msra.mxu0 %v4247
  %4249 = vmatprep.subr.mxu0 0.0
  %v4250 = vand.u32 %v4227, 4294901760
  %4251 = vmatpush1.msra.mxu0 %v4250
  %4252 = vmatprep.subr.mxu0 0.0
  %v4253 = vand.u32 %v4228, 4294901760
  %4254 = vmatpush1.msra.mxu0 %v4253
  %4255 = vmatprep.subr.mxu0 0.0
  %v4256 = vand.u32 %v4229, 4294901760
  %4257 = vmatpush1.msra.mxu0 %v4256
  %4258 = vmatprep.subr.mxu0 0.0
  %v4259 = vand.u32 %v4230, 4294901760
  %4260 = vmatpush1.msra.mxu0 %v4259
  %4261 = vmatprep.subr.mxu0 0.0
  %v4262 = vand.u32 %v4231, 4294901760
  %4263 = vmatpush1.msra.mxu0 %v4262
  %4264 = vmatprep.subr.mxu0 0.0
  %v4265 = vand.u32 %v4232, 4294901760
  %4266 = vmatpush1.msra.mxu0 %v4265
  %4267 = vmatprep.subr.mxu0 0.0
  %v4268 = vand.u32 %v4233, 4294901760
  %4269 = vmatpush1.msra.mxu0 %v4268
  %4270 = vmatprep.subr.mxu0 0.0
  %v4271 = vand.u32 %v4234, 4294901760
  %4272 = vmatpush1.msra.mxu0 %v4271
  %4273 = vmatprep.subr.mxu0 0.0
  %v4274 = vand.u32 %v4235, 4294901760
  %4275 = vmatpush1.msra.mxu0 %v4274
  %4276 = vmatprep.subr.mxu0 0.0
  %v4277 = vand.u32 %v4236, 4294901760
  %4278 = vmatpush1.msra.mxu0 %v4277
  %4279 = vmatprep.subr.mxu0 0.0
  %v4280 = vand.u32 %v4237, 4294901760
  %4281 = vmatpush1.msra.mxu0 %v4280
  %4282 = vmatprep.subr.mxu0 0.0
  %v4283 = vand.u32 %v4238, 4294901760
  %4284 = vmatpush1.msra.mxu0 %v4283
  %4285 = vmatprep.subr.mxu0 0.0
  %v4286 = vand.u32 %v4239, 4294901760
  %4287 = vmatpush1.msra.mxu0 %v4286
  %4288 = vmatprep.subr.mxu0 0.0
  %4289 = vmatpush1.msra.mxu0 0.0
  %4290 = vmatprep.subr.mxu0 0.0
  %4291 = vmatpush1.msra.mxu0 0.0
  %4292 = vmatprep.subr.mxu0 0.0
  %4293 = vmatpush1.msra.mxu0 0.0
  %4294 = vmatprep.subr.mxu0 0.0
  %4295 = vmatpush1.msra.mxu0 0.0
  %4296 = vmatprep.subr.mxu0 0.0
  %4297 = vmatpush1.msra.mxu0 0.0
  %4298 = vmatprep.subr.mxu0 0.0
  %4299 = vmatpush1.msra.mxu0 0.0
  %4300 = vmatprep.subr.mxu0 0.0
  %4301 = vmatpush1.msra.mxu0 0.0
  %4302 = vmatprep.subr.mxu0 0.0
  %4303 = vmatpush1.msra.mxu0 0.0
  %4304 = vmatprep.subr.mxu0 0.0
  %4305 = vmatpush1.msra.mxu0 0.0
  %4306 = vmatprep.subr.mxu0 0.0
  %4307 = vmatpush1.msra.mxu0 0.0
  %4308 = vmatprep.subr.mxu0 0.0
  %4309 = vmatpush1.msra.mxu0 0.0
  %4310 = vmatprep.subr.mxu0 0.0
  %4311 = vmatpush1.msra.mxu0 0.0
  %4312 = vmatprep.subr.mxu0 0.0
  %4313 = vmatpush1.msra.mxu0 0.0
  %4314 = vmatprep.subr.mxu0 0.0
  %4315 = vmatpush1.msra.mxu0 0.0
  %4316 = vmatprep.subr.mxu0 0.0
  %4317 = vmatpush1.msra.mxu0 0.0
  %4318 = vmatprep.subr.mxu0 0.0
  %4319 = vmatpush1.msra.mxu0 0.0
  %4320 = vmatprep.mubr.f32.mxu0 0.0
  %v4321 = vand.u32 %v4222, 4294901760
  %v4322 = vsub.f32 %v4222, %v4321
  %v4323 = vand.u32 %v4322, 4294901760
  %v4324 = vsub.f32 %v4322, %v4323
  %v4325 = vand.u32 %v4324, 4294901760
  %4326 = vmatmul.mubr.f32.gmra.mrb[0].mxu0 %v4325
  %v4327 = vpop.f32.mrb[0].mxu0
  %v4328 = vadd.f32 0.0, %v4327
  %v4329 = vpop.f32.mrb[0].mxu0
  %4330 = vdwg.mxu0
  %4331 = vmatprep.subr.mxu0 0.0
  %v4332 = vand.u32 %v4224, 4294901760
  %v4333 = vsub.f32 %v4224, %v4332
  %v4334 = vand.u32 %v4333, 4294901760
  %v4335 = vsub.f32 %v4333, %v4334
  %v4336 = vand.u32 %v4335, 4294901760
  %4337 = vmatpush1.msra.mxu0 %v4336
  %4338 = vmatprep.subr.mxu0 0.0
  %v4339 = vand.u32 %v4225, 4294901760
  %v4340 = vsub.f32 %v4225, %v4339
  %v4341 = vand.u32 %v4340, 4294901760
  %v4342 = vsub.f32 %v4340, %v4341
  %v4343 = vand.u32 %v4342, 4294901760
  %4344 = vmatpush1.msra.mxu0 %v4343
  %4345 = vmatprep.subr.mxu0 0.0
  %v4346 = vand.u32 %v4226, 4294901760
  %v4347 = vsub.f32 %v4226, %v4346
  %v4348 = vand.u32 %v4347, 4294901760
  %v4349 = vsub.f32 %v4347, %v4348
  %v4350 = vand.u32 %v4349, 4294901760
  %4351 = vmatpush1.msra.mxu0 %v4350
  %4352 = vmatprep.subr.mxu0 0.0
  %v4353 = vand.u32 %v4227, 4294901760
  %v4354 = vsub.f32 %v4227, %v4353
  %v4355 = vand.u32 %v4354, 4294901760
  %v4356 = vsub.f32 %v4354, %v4355
  %v4357 = vand.u32 %v4356, 4294901760
  %4358 = vmatpush1.msra.mxu0 %v4357
  %4359 = vmatprep.subr.mxu0 0.0
  %v4360 = vand.u32 %v4228, 4294901760
  %v4361 = vsub.f32 %v4228, %v4360
  %v4362 = vand.u32 %v4361, 4294901760
  %v4363 = vsub.f32 %v4361, %v4362
  %v4364 = vand.u32 %v4363, 4294901760
  %4365 = vmatpush1.msra.mxu0 %v4364
  %4366 = vmatprep.subr.mxu0 0.0
  %v4367 = vand.u32 %v4229, 4294901760
  %v4368 = vsub.f32 %v4229, %v4367
  %v4369 = vand.u32 %v4368, 4294901760
  %v4370 = vsub.f32 %v4368, %v4369
  %v4371 = vand.u32 %v4370, 4294901760
  %4372 = vmatpush1.msra.mxu0 %v4371
  %4373 = vmatprep.subr.mxu0 0.0
  %v4374 = vand.u32 %v4230, 4294901760
  %v4375 = vsub.f32 %v4230, %v4374
  %v4376 = vand.u32 %v4375, 4294901760
  %v4377 = vsub.f32 %v4375, %v4376
  %v4378 = vand.u32 %v4377, 4294901760
  %4379 = vmatpush1.msra.mxu0 %v4378
  %4380 = vmatprep.subr.mxu0 0.0
  %v4381 = vand.u32 %v4231, 4294901760
  %v4382 = vsub.f32 %v4231, %v4381
  %v4383 = vand.u32 %v4382, 4294901760
  %v4384 = vsub.f32 %v4382, %v4383
  %v4385 = vand.u32 %v4384, 4294901760
  %4386 = vmatpush1.msra.mxu0 %v4385
  %4387 = vmatprep.subr.mxu0 0.0
  %v4388 = vand.u32 %v4232, 4294901760
  %v4389 = vsub.f32 %v4232, %v4388
  %v4390 = vand.u32 %v4389, 4294901760
  %v4391 = vsub.f32 %v4389, %v4390
  %v4392 = vand.u32 %v4391, 4294901760
  %4393 = vmatpush1.msra.mxu0 %v4392
  %4394 = vmatprep.subr.mxu0 0.0
  %v4395 = vand.u32 %v4233, 4294901760
  %v4396 = vsub.f32 %v4233, %v4395
  %v4397 = vand.u32 %v4396, 4294901760
  %v4398 = vsub.f32 %v4396, %v4397
  %v4399 = vand.u32 %v4398, 4294901760
  %4400 = vmatpush1.msra.mxu0 %v4399
  %4401 = vmatprep.subr.mxu0 0.0
  %v4402 = vand.u32 %v4234, 4294901760
  %v4403 = vsub.f32 %v4234, %v4402
  %v4404 = vand.u32 %v4403, 4294901760
  %v4405 = vsub.f32 %v4403, %v4404
  %v4406 = vand.u32 %v4405, 4294901760
  %4407 = vmatpush1.msra.mxu0 %v4406
  %4408 = vmatprep.subr.mxu0 0.0
  %v4409 = vand.u32 %v4235, 4294901760
  %v4410 = vsub.f32 %v4235, %v4409
  %v4411 = vand.u32 %v4410, 4294901760
  %v4412 = vsub.f32 %v4410, %v4411
  %v4413 = vand.u32 %v4412, 4294901760
  %4414 = vmatpush1.msra.mxu0 %v4413
  %4415 = vmatprep.subr.mxu0 0.0
  %v4416 = vand.u32 %v4236, 4294901760
  %v4417 = vsub.f32 %v4236, %v4416
  %v4418 = vand.u32 %v4417, 4294901760
  %v4419 = vsub.f32 %v4417, %v4418
  %v4420 = vand.u32 %v4419, 4294901760
  %4421 = vmatpush1.msra.mxu0 %v4420
  %4422 = vmatprep.subr.mxu0 0.0
  %v4423 = vand.u32 %v4237, 4294901760
  %v4424 = vsub.f32 %v4237, %v4423
  %v4425 = vand.u32 %v4424, 4294901760
  %v4426 = vsub.f32 %v4424, %v4425
  %v4427 = vand.u32 %v4426, 4294901760
  %4428 = vmatpush1.msra.mxu0 %v4427
  %4429 = vmatprep.subr.mxu0 0.0
  %v4430 = vand.u32 %v4238, 4294901760
  %v4431 = vsub.f32 %v4238, %v4430
  %v4432 = vand.u32 %v4431, 4294901760
  %v4433 = vsub.f32 %v4431, %v4432
  %v4434 = vand.u32 %v4433, 4294901760
  %4435 = vmatpush1.msra.mxu0 %v4434
  %4436 = vmatprep.subr.mxu0 0.0
  %v4437 = vand.u32 %v4239, 4294901760
  %v4438 = vsub.f32 %v4239, %v4437
  %v4439 = vand.u32 %v4438, 4294901760
  %v4440 = vsub.f32 %v4438, %v4439
  %v4441 = vand.u32 %v4440, 4294901760
  %4442 = vmatpush1.msra.mxu0 %v4441
  %4443 = vmatprep.subr.mxu0 0.0
  %4444 = vmatpush1.msra.mxu0 0.0
  %4445 = vmatprep.subr.mxu0 0.0
  %4446 = vmatpush1.msra.mxu0 0.0
  %4447 = vmatprep.subr.mxu0 0.0
  %4448 = vmatpush1.msra.mxu0 0.0
  %4449 = vmatprep.subr.mxu0 0.0
  %4450 = vmatpush1.msra.mxu0 0.0
  %4451 = vmatprep.subr.mxu0 0.0
  %4452 = vmatpush1.msra.mxu0 0.0
  %4453 = vmatprep.subr.mxu0 0.0
  %4454 = vmatpush1.msra.mxu0 0.0
  %4455 = vmatprep.subr.mxu0 0.0
  %4456 = vmatpush1.msra.mxu0 0.0
  %4457 = vmatprep.subr.mxu0 0.0
  %4458 = vmatpush1.msra.mxu0 0.0
  %4459 = vmatprep.subr.mxu0 0.0
  %4460 = vmatpush1.msra.mxu0 0.0
  %4461 = vmatprep.subr.mxu0 0.0
  %4462 = vmatpush1.msra.mxu0 0.0
  %4463 = vmatprep.subr.mxu0 0.0
  %4464 = vmatpush1.msra.mxu0 0.0
  %4465 = vmatprep.subr.mxu0 0.0
  %4466 = vmatpush1.msra.mxu0 0.0
  %4467 = vmatprep.subr.mxu0 0.0
  %4468 = vmatpush1.msra.mxu0 0.0
  %4469 = vmatprep.subr.mxu0 0.0
  %4470 = vmatpush1.msra.mxu0 0.0
  %4471 = vmatprep.subr.mxu0 0.0
  %4472 = vmatpush1.msra.mxu0 0.0
  %4473 = vmatprep.subr.mxu0 0.0
  %4474 = vmatpush1.msra.mxu0 0.0
  %4475 = vmatprep.mubr.f32.mxu0 0.0
  %v4476 = vand.u32 %v4222, 4294901760
  %4477 = vmatmul.mubr.f32.gmra.mrb[0].mxu0 %v4476
  %v4478 = vpop.f32.mrb[0].mxu0
  %v4479 = vadd.f32 %v4328, %v4478
  %v4480 = vpop.f32.mrb[0].mxu0
  %4481 = vdwg.mxu0
  %4482 = vmatprep.subr.mxu0 0.0
  %v4483 = vand.u32 %v4224, 4294901760
  %v4484 = vsub.f32 %v4224, %v4483
  %4485 = vmatpush1.msra.mxu0 %v4484
  %4486 = vmatprep.subr.mxu0 0.0
  %v4487 = vand.u32 %v4225, 4294901760
  %v4488 = vsub.f32 %v4225, %v4487
  %4489 = vmatpush1.msra.mxu0 %v4488
  %4490 = vmatprep.subr.mxu0 0.0
  %v4491 = vand.u32 %v4226, 4294901760
  %v4492 = vsub.f32 %v4226, %v4491
  %4493 = vmatpush1.msra.mxu0 %v4492
  %4494 = vmatprep.subr.mxu0 0.0
  %v4495 = vand.u32 %v4227, 4294901760
  %v4496 = vsub.f32 %v4227, %v4495
  %4497 = vmatpush1.msra.mxu0 %v4496
  %4498 = vmatprep.subr.mxu0 0.0
  %v4499 = vand.u32 %v4228, 4294901760
  %v4500 = vsub.f32 %v4228, %v4499
  %4501 = vmatpush1.msra.mxu0 %v4500
  %4502 = vmatprep.subr.mxu0 0.0
  %v4503 = vand.u32 %v4229, 4294901760
  %v4504 = vsub.f32 %v4229, %v4503
  %4505 = vmatpush1.msra.mxu0 %v4504
  %4506 = vmatprep.subr.mxu0 0.0
  %v4507 = vand.u32 %v4230, 4294901760
  %v4508 = vsub.f32 %v4230, %v4507
  %4509 = vmatpush1.msra.mxu0 %v4508
  %4510 = vmatprep.subr.mxu0 0.0
  %v4511 = vand.u32 %v4231, 4294901760
  %v4512 = vsub.f32 %v4231, %v4511
  %4513 = vmatpush1.msra.mxu0 %v4512
  %4514 = vmatprep.subr.mxu0 0.0
  %v4515 = vand.u32 %v4232, 4294901760
  %v4516 = vsub.f32 %v4232, %v4515
  %4517 = vmatpush1.msra.mxu0 %v4516
  %4518 = vmatprep.subr.mxu0 0.0
  %v4519 = vand.u32 %v4233, 4294901760
  %v4520 = vsub.f32 %v4233, %v4519
  %4521 = vmatpush1.msra.mxu0 %v4520
  %4522 = vmatprep.subr.mxu0 0.0
  %v4523 = vand.u32 %v4234, 4294901760
  %v4524 = vsub.f32 %v4234, %v4523
  %4525 = vmatpush1.msra.mxu0 %v4524
  %4526 = vmatprep.subr.mxu0 0.0
  %v4527 = vand.u32 %v4235, 4294901760
  %v4528 = vsub.f32 %v4235, %v4527
  %4529 = vmatpush1.msra.mxu0 %v4528
  %4530 = vmatprep.subr.mxu0 0.0
  %v4531 = vand.u32 %v4236, 4294901760
  %v4532 = vsub.f32 %v4236, %v4531
  %4533 = vmatpush1.msra.mxu0 %v4532
  %4534 = vmatprep.subr.mxu0 0.0
  %v4535 = vand.u32 %v4237, 4294901760
  %v4536 = vsub.f32 %v4237, %v4535
  %4537 = vmatpush1.msra.mxu0 %v4536
  %4538 = vmatprep.subr.mxu0 0.0
  %v4539 = vand.u32 %v4238, 4294901760
  %v4540 = vsub.f32 %v4238, %v4539
  %4541 = vmatpush1.msra.mxu0 %v4540
  %4542 = vmatprep.subr.mxu0 0.0
  %v4543 = vand.u32 %v4239, 4294901760
  %v4544 = vsub.f32 %v4239, %v4543
  %4545 = vmatpush1.msra.mxu0 %v4544
  %4546 = vmatprep.subr.mxu0 0.0
  %4547 = vmatpush1.msra.mxu0 0.0
  %4548 = vmatprep.subr.mxu0 0.0
  %4549 = vmatpush1.msra.mxu0 0.0
  %4550 = vmatprep.subr.mxu0 0.0
  %4551 = vmatpush1.msra.mxu0 0.0
  %4552 = vmatprep.subr.mxu0 0.0
  %4553 = vmatpush1.msra.mxu0 0.0
  %4554 = vmatprep.subr.mxu0 0.0
  %4555 = vmatpush1.msra.mxu0 0.0
  %4556 = vmatprep.subr.mxu0 0.0
  %4557 = vmatpush1.msra.mxu0 0.0
  %4558 = vmatprep.subr.mxu0 0.0
  %4559 = vmatpush1.msra.mxu0 0.0
  %4560 = vmatprep.subr.mxu0 0.0
  %4561 = vmatpush1.msra.mxu0 0.0
  %4562 = vmatprep.subr.mxu0 0.0
  %4563 = vmatpush1.msra.mxu0 0.0
  %4564 = vmatprep.subr.mxu0 0.0
  %4565 = vmatpush1.msra.mxu0 0.0
  %4566 = vmatprep.subr.mxu0 0.0
  %4567 = vmatpush1.msra.mxu0 0.0
  %4568 = vmatprep.subr.mxu0 0.0
  %4569 = vmatpush1.msra.mxu0 0.0
  %4570 = vmatprep.subr.mxu0 0.0
  %4571 = vmatpush1.msra.mxu0 0.0
  %4572 = vmatprep.subr.mxu0 0.0
  %4573 = vmatpush1.msra.mxu0 0.0
  %4574 = vmatprep.subr.mxu0 0.0
  %4575 = vmatpush1.msra.mxu0 0.0
  %4576 = vmatprep.subr.mxu0 0.0
  %4577 = vmatpush1.msra.mxu0 0.0
  %4578 = vmatprep.mubr.f32.mxu0 0.0
  %v4579 = vand.u32 %v4222, 4294901760
  %v4580 = vsub.f32 %v4222, %v4579
  %4581 = vmatmul.mubr.f32.gmra.mrb[0].mxu0 %v4580
  %v4582 = vpop.f32.mrb[0].mxu0
  %v4583 = vadd.f32 %v4479, %v4582
  %v4584 = vpop.f32.mrb[0].mxu0
  %4585 = vdwg.mxu0
  %4586 = vmatprep.subr.mxu0 0.0
  %v4587 = vand.u32 %v4224, 4294901760
  %4588 = vmatpush1.msra.mxu0 %v4587
  %4589 = vmatprep.subr.mxu0 0.0
  %v4590 = vand.u32 %v4225, 4294901760
  %4591 = vmatpush1.msra.mxu0 %v4590
  %4592 = vmatprep.subr.mxu0 0.0
  %v4593 = vand.u32 %v4226, 4294901760
  %4594 = vmatpush1.msra.mxu0 %v4593
  %4595 = vmatprep.subr.mxu0 0.0
  %v4596 = vand.u32 %v4227, 4294901760
  %4597 = vmatpush1.msra.mxu0 %v4596
  %4598 = vmatprep.subr.mxu0 0.0
  %v4599 = vand.u32 %v4228, 4294901760
  %4600 = vmatpush1.msra.mxu0 %v4599
  %4601 = vmatprep.subr.mxu0 0.0
  %v4602 = vand.u32 %v4229, 4294901760
  %4603 = vmatpush1.msra.mxu0 %v4602
  %4604 = vmatprep.subr.mxu0 0.0
  %v4605 = vand.u32 %v4230, 4294901760
  %4606 = vmatpush1.msra.mxu0 %v4605
  %4607 = vmatprep.subr.mxu0 0.0
  %v4608 = vand.u32 %v4231, 4294901760
  %4609 = vmatpush1.msra.mxu0 %v4608
  %4610 = vmatprep.subr.mxu0 0.0
  %v4611 = vand.u32 %v4232, 4294901760
  %4612 = vmatpush1.msra.mxu0 %v4611
  %4613 = vmatprep.subr.mxu0 0.0
  %v4614 = vand.u32 %v4233, 4294901760
  %4615 = vmatpush1.msra.mxu0 %v4614
  %4616 = vmatprep.subr.mxu0 0.0
  %v4617 = vand.u32 %v4234, 4294901760
  %4618 = vmatpush1.msra.mxu0 %v4617
  %4619 = vmatprep.subr.mxu0 0.0
  %v4620 = vand.u32 %v4235, 4294901760
  %4621 = vmatpush1.msra.mxu0 %v4620
  %4622 = vmatprep.subr.mxu0 0.0
  %v4623 = vand.u32 %v4236, 4294901760
  %4624 = vmatpush1.msra.mxu0 %v4623
  %4625 = vmatprep.subr.mxu0 0.0
  %v4626 = vand.u32 %v4237, 4294901760
  %4627 = vmatpush1.msra.mxu0 %v4626
  %4628 = vmatprep.subr.mxu0 0.0
  %v4629 = vand.u32 %v4238, 4294901760
  %4630 = vmatpush1.msra.mxu0 %v4629
  %4631 = vmatprep.subr.mxu0 0.0
  %v4632 = vand.u32 %v4239, 4294901760
  %4633 = vmatpush1.msra.mxu0 %v4632
  %4634 = vmatprep.subr.mxu0 0.0
  %4635 = vmatpush1.msra.mxu0 0.0
  %4636 = vmatprep.subr.mxu0 0.0
  %4637 = vmatpush1.msra.mxu0 0.0
  %4638 = vmatprep.subr.mxu0 0.0
  %4639 = vmatpush1.msra.mxu0 0.0
  %4640 = vmatprep.subr.mxu0 0.0
  %4641 = vmatpush1.msra.mxu0 0.0
  %4642 = vmatprep.subr.mxu0 0.0
  %4643 = vmatpush1.msra.mxu0 0.0
  %4644 = vmatprep.subr.mxu0 0.0
  %4645 = vmatpush1.msra.mxu0 0.0
  %4646 = vmatprep.subr.mxu0 0.0
  %4647 = vmatpush1.msra.mxu0 0.0
  %4648 = vmatprep.subr.mxu0 0.0
  %4649 = vmatpush1.msra.mxu0 0.0
  %4650 = vmatprep.subr.mxu0 0.0
  %4651 = vmatpush1.msra.mxu0 0.0
  %4652 = vmatprep.subr.mxu0 0.0
  %4653 = vmatpush1.msra.mxu0 0.0
  %4654 = vmatprep.subr.mxu0 0.0
  %4655 = vmatpush1.msra.mxu0 0.0
  %4656 = vmatprep.subr.mxu0 0.0
  %4657 = vmatpush1.msra.mxu0 0.0
  %4658 = vmatprep.subr.mxu0 0.0
  %4659 = vmatpush1.msra.mxu0 0.0
  %4660 = vmatprep.subr.mxu0 0.0
  %4661 = vmatpush1.msra.mxu0 0.0
  %4662 = vmatprep.subr.mxu0 0.0
  %4663 = vmatpush1.msra.mxu0 0.0
  %4664 = vmatprep.subr.mxu0 0.0
  %4665 = vmatpush1.msra.mxu0 0.0
  %4666 = vmatprep.mubr.f32.mxu0 0.0
  %v4667 = vand.u32 %v4222, 4294901760
  %v4668 = vsub.f32 %v4222, %v4667
  %v4669 = vand.u32 %v4668, 4294901760
  %4670 = vmatmul.mubr.f32.gmra.mrb[0].mxu0 %v4669
  %v4671 = vpop.f32.mrb[0].mxu0
  %v4672 = vadd.f32 %v4583, %v4671
  %v4673 = vpop.f32.mrb[0].mxu0
  %4674 = vdwg.mxu0
  %4675 = vmatprep.subr.mxu0 0.0
  %v4676 = vand.u32 %v4224, 4294901760
  %v4677 = vsub.f32 %v4224, %v4676
  %v4678 = vand.u32 %v4677, 4294901760
  %4679 = vmatpush1.msra.mxu0 %v4678
  %4680 = vmatprep.subr.mxu0 0.0
  %v4681 = vand.u32 %v4225, 4294901760
  %v4682 = vsub.f32 %v4225, %v4681
  %v4683 = vand.u32 %v4682, 4294901760
  %4684 = vmatpush1.msra.mxu0 %v4683
  %4685 = vmatprep.subr.mxu0 0.0
  %v4686 = vand.u32 %v4226, 4294901760
  %v4687 = vsub.f32 %v4226, %v4686
  %v4688 = vand.u32 %v4687, 4294901760
  %4689 = vmatpush1.msra.mxu0 %v4688
  %4690 = vmatprep.subr.mxu0 0.0
  %v4691 = vand.u32 %v4227, 4294901760
  %v4692 = vsub.f32 %v4227, %v4691
  %v4693 = vand.u32 %v4692, 4294901760
  %4694 = vmatpush1.msra.mxu0 %v4693
  %4695 = vmatprep.subr.mxu0 0.0
  %v4696 = vand.u32 %v4228, 4294901760
  %v4697 = vsub.f32 %v4228, %v4696
  %v4698 = vand.u32 %v4697, 4294901760
  %4699 = vmatpush1.msra.mxu0 %v4698
  %4700 = vmatprep.subr.mxu0 0.0
  %v4701 = vand.u32 %v4229, 4294901760
  %v4702 = vsub.f32 %v4229, %v4701
  %v4703 = vand.u32 %v4702, 4294901760
  %4704 = vmatpush1.msra.mxu0 %v4703
  %4705 = vmatprep.subr.mxu0 0.0
  %v4706 = vand.u32 %v4230, 4294901760
  %v4707 = vsub.f32 %v4230, %v4706
  %v4708 = vand.u32 %v4707, 4294901760
  %4709 = vmatpush1.msra.mxu0 %v4708
  %4710 = vmatprep.subr.mxu0 0.0
  %v4711 = vand.u32 %v4231, 4294901760
  %v4712 = vsub.f32 %v4231, %v4711
  %v4713 = vand.u32 %v4712, 4294901760
  %4714 = vmatpush1.msra.mxu0 %v4713
  %4715 = vmatprep.subr.mxu0 0.0
  %v4716 = vand.u32 %v4232, 4294901760
  %v4717 = vsub.f32 %v4232, %v4716
  %v4718 = vand.u32 %v4717, 4294901760
  %4719 = vmatpush1.msra.mxu0 %v4718
  %4720 = vmatprep.subr.mxu0 0.0
  %v4721 = vand.u32 %v4233, 4294901760
  %v4722 = vsub.f32 %v4233, %v4721
  %v4723 = vand.u32 %v4722, 4294901760
  %4724 = vmatpush1.msra.mxu0 %v4723
  %4725 = vmatprep.subr.mxu0 0.0
  %v4726 = vand.u32 %v4234, 4294901760
  %v4727 = vsub.f32 %v4234, %v4726
  %v4728 = vand.u32 %v4727, 4294901760
  %4729 = vmatpush1.msra.mxu0 %v4728
  %4730 = vmatprep.subr.mxu0 0.0
  %v4731 = vand.u32 %v4235, 4294901760
  %v4732 = vsub.f32 %v4235, %v4731
  %v4733 = vand.u32 %v4732, 4294901760
  %4734 = vmatpush1.msra.mxu0 %v4733
  %4735 = vmatprep.subr.mxu0 0.0
  %v4736 = vand.u32 %v4236, 4294901760
  %v4737 = vsub.f32 %v4236, %v4736
  %v4738 = vand.u32 %v4737, 4294901760
  %4739 = vmatpush1.msra.mxu0 %v4738
  %4740 = vmatprep.subr.mxu0 0.0
  %v4741 = vand.u32 %v4237, 4294901760
  %v4742 = vsub.f32 %v4237, %v4741
  %v4743 = vand.u32 %v4742, 4294901760
  %4744 = vmatpush1.msra.mxu0 %v4743
  %4745 = vmatprep.subr.mxu0 0.0
  %v4746 = vand.u32 %v4238, 4294901760
  %v4747 = vsub.f32 %v4238, %v4746
  %v4748 = vand.u32 %v4747, 4294901760
  %4749 = vmatpush1.msra.mxu0 %v4748
  %4750 = vmatprep.subr.mxu0 0.0
  %v4751 = vand.u32 %v4239, 4294901760
  %v4752 = vsub.f32 %v4239, %v4751
  %v4753 = vand.u32 %v4752, 4294901760
  %4754 = vmatpush1.msra.mxu0 %v4753
  %4755 = vmatprep.subr.mxu0 0.0
  %4756 = vmatpush1.msra.mxu0 0.0
  %4757 = vmatprep.subr.mxu0 0.0
  %4758 = vmatpush1.msra.mxu0 0.0
  %4759 = vmatprep.subr.mxu0 0.0
  %4760 = vmatpush1.msra.mxu0 0.0
  %4761 = vmatprep.subr.mxu0 0.0
  %4762 = vmatpush1.msra.mxu0 0.0
  %4763 = vmatprep.subr.mxu0 0.0
  %4764 = vmatpush1.msra.mxu0 0.0
  %4765 = vmatprep.subr.mxu0 0.0
  %4766 = vmatpush1.msra.mxu0 0.0
  %4767 = vmatprep.subr.mxu0 0.0
  %4768 = vmatpush1.msra.mxu0 0.0
  %4769 = vmatprep.subr.mxu0 0.0
  %4770 = vmatpush1.msra.mxu0 0.0
  %4771 = vmatprep.subr.mxu0 0.0
  %4772 = vmatpush1.msra.mxu0 0.0
  %4773 = vmatprep.subr.mxu0 0.0
  %4774 = vmatpush1.msra.mxu0 0.0
  %4775 = vmatprep.subr.mxu0 0.0
  %4776 = vmatpush1.msra.mxu0 0.0
  %4777 = vmatprep.subr.mxu0 0.0
  %4778 = vmatpush1.msra.mxu0 0.0
  %4779 = vmatprep.subr.mxu0 0.0
  %4780 = vmatpush1.msra.mxu0 0.0
  %4781 = vmatprep.subr.mxu0 0.0
  %4782 = vmatpush1.msra.mxu0 0.0
  %4783 = vmatprep.subr.mxu0 0.0
  %4784 = vmatpush1.msra.mxu0 0.0
  %4785 = vmatprep.subr.mxu0 0.0
  %4786 = vmatpush1.msra.mxu0 0.0
  %4787 = vmatprep.mubr.f32.mxu0 0.0
  %v4788 = vand.u32 %v4222, 4294901760
  %4789 = vmatmul.mubr.f32.gmra.mrb[0].mxu0 %v4788
  %v4790 = vpop.f32.mrb[0].mxu0
  %v4791 = vadd.f32 %v4672, %v4790
  %v4792 = vpop.f32.mrb[0].mxu0
  %4793 = vdwg.mxu0
  %4794 = vmatprep.subr.mxu0 0.0
  %v4795 = vand.u32 %v4224, 4294901760
  %4796 = vmatpush1.msra.mxu0 %v4795
  %4797 = vmatprep.subr.mxu0 0.0
  %v4798 = vand.u32 %v4225, 4294901760
  %4799 = vmatpush1.msra.mxu0 %v4798
  %4800 = vmatprep.subr.mxu0 0.0
  %v4801 = vand.u32 %v4226, 4294901760
  %4802 = vmatpush1.msra.mxu0 %v4801
  %4803 = vmatprep.subr.mxu0 0.0
  %v4804 = vand.u32 %v4227, 4294901760
  %4805 = vmatpush1.msra.mxu0 %v4804
  %4806 = vmatprep.subr.mxu0 0.0
  %v4807 = vand.u32 %v4228, 4294901760
  %4808 = vmatpush1.msra.mxu0 %v4807
  %4809 = vmatprep.subr.mxu0 0.0
  %v4810 = vand.u32 %v4229, 4294901760
  %4811 = vmatpush1.msra.mxu0 %v4810
  %4812 = vmatprep.subr.mxu0 0.0
  %v4813 = vand.u32 %v4230, 4294901760
  %4814 = vmatpush1.msra.mxu0 %v4813
  %4815 = vmatprep.subr.mxu0 0.0
  %v4816 = vand.u32 %v4231, 4294901760
  %4817 = vmatpush1.msra.mxu0 %v4816
  %4818 = vmatprep.subr.mxu0 0.0
  %v4819 = vand.u32 %v4232, 4294901760
  %4820 = vmatpush1.msra.mxu0 %v4819
  %4821 = vmatprep.subr.mxu0 0.0
  %v4822 = vand.u32 %v4233, 4294901760
  %4823 = vmatpush1.msra.mxu0 %v4822
  %4824 = vmatprep.subr.mxu0 0.0
  %v4825 = vand.u32 %v4234, 4294901760
  %4826 = vmatpush1.msra.mxu0 %v4825
  %4827 = vmatprep.subr.mxu0 0.0
  %v4828 = vand.u32 %v4235, 4294901760
  %4829 = vmatpush1.msra.mxu0 %v4828
  %4830 = vmatprep.subr.mxu0 0.0
  %v4831 = vand.u32 %v4236, 4294901760
  %4832 = vmatpush1.msra.mxu0 %v4831
  %4833 = vmatprep.subr.mxu0 0.0
  %v4834 = vand.u32 %v4237, 4294901760
  %4835 = vmatpush1.msra.mxu0 %v4834
  %4836 = vmatprep.subr.mxu0 0.0
  %v4837 = vand.u32 %v4238, 4294901760
  %4838 = vmatpush1.msra.mxu0 %v4837
  %4839 = vmatprep.subr.mxu0 0.0
  %v4840 = vand.u32 %v4239, 4294901760
  %4841 = vmatpush1.msra.mxu0 %v4840
  %4842 = vmatprep.subr.mxu0 0.0
  %4843 = vmatpush1.msra.mxu0 0.0
  %4844 = vmatprep.subr.mxu0 0.0
  %4845 = vmatpush1.msra.mxu0 0.0
  %4846 = vmatprep.subr.mxu0 0.0
  %4847 = vmatpush1.msra.mxu0 0.0
  %4848 = vmatprep.subr.mxu0 0.0
  %4849 = vmatpush1.msra.mxu0 0.0
  %4850 = vmatprep.subr.mxu0 0.0
  %4851 = vmatpush1.msra.mxu0 0.0
  %4852 = vmatprep.subr.mxu0 0.0
  %4853 = vmatpush1.msra.mxu0 0.0
  %4854 = vmatprep.subr.mxu0 0.0
  %4855 = vmatpush1.msra.mxu0 0.0
  %4856 = vmatprep.subr.mxu0 0.0
  %4857 = vmatpush1.msra.mxu0 0.0
  %4858 = vmatprep.subr.mxu0 0.0
  %4859 = vmatpush1.msra.mxu0 0.0
  %4860 = vmatprep.subr.mxu0 0.0
  %4861 = vmatpush1.msra.mxu0 0.0
  %4862 = vmatprep.subr.mxu0 0.0
  %4863 = vmatpush1.msra.mxu0 0.0
  %4864 = vmatprep.subr.mxu0 0.0
  %4865 = vmatpush1.msra.mxu0 0.0
  %4866 = vmatprep.subr.mxu0 0.0
  %4867 = vmatpush1.msra.mxu0 0.0
  %4868 = vmatprep.subr.mxu0 0.0
  %4869 = vmatpush1.msra.mxu0 0.0
  %4870 = vmatprep.subr.mxu0 0.0
  %4871 = vmatpush1.msra.mxu0 0.0
  %4872 = vmatprep.subr.mxu0 0.0
  %4873 = vmatpush1.msra.mxu0 0.0
  %4874 = vmatprep.mubr.f32.mxu0 0.0
  %v4875 = vand.u32 %v4222, 4294901760
  %4876 = vmatmul.mubr.f32.gmra.mrb[0].mxu0 %v4875
  %v4877 = vpop.f32.mrb[0].mxu0
  %v4878 = vadd.f32 %v4791, %v4877
  %v4879 = vpop.f32.mrb[0].mxu0
  %4880 = vdwg.mxu0
  %v4881 = vadd.f32 %v4220, %v4878
  %s4882 = scalar_lea.vmem [#allocation2], 3
  %v4883 = vld [vmem:[%s4882] ss:$8 sm:$0xf]
  %s4884 = scalar_lea.vmem %s4, 384
  %v4885 = vld [vmem:[%s4884] sm:$0xff]
  %v4886 = vld [vmem:[%s4884 + $0x8] sm:$0xff]
  %v4887 = vld [vmem:[%s4884 + $0x10] sm:$0xff]
  %v4888 = vld [vmem:[%s4884 + $0x18] sm:$0xff]
  %v4889 = vld [vmem:[%s4884 + $0x20] sm:$0xff]
  %v4890 = vld [vmem:[%s4884 + $0x28] sm:$0xff]
  %v4891 = vld [vmem:[%s4884 + $0x30] sm:$0xff]
  %v4892 = vld [vmem:[%s4884 + $0x38] sm:$0xff]
  %v4893 = vld [vmem:[%s4884 + $0x40] sm:$0xff]
  %v4894 = vld [vmem:[%s4884 + $0x48] sm:$0xff]
  %v4895 = vld [vmem:[%s4884 + $0x50] sm:$0xff]
  %v4896 = vld [vmem:[%s4884 + $0x58] sm:$0xff]
  %v4897 = vld [vmem:[%s4884 + $0x60] sm:$0xff]
  %v4898 = vld [vmem:[%s4884 + $0x68] sm:$0xff]
  %v4899 = vld [vmem:[%s4884 + $0x70] sm:$0xff]
  %v4900 = vld [vmem:[%s4884 + $0x78] sm:$0xff]
  %4901 = vmatprep.subr.mxu0 0.0
  %v4902 = vand.u32 %v4885, 4294901760
  %4903 = vmatpush1.msra.mxu0 %v4902
  %4904 = vmatprep.subr.mxu0 0.0
  %v4905 = vand.u32 %v4886, 4294901760
  %4906 = vmatpush1.msra.mxu0 %v4905
  %4907 = vmatprep.subr.mxu0 0.0
  %v4908 = vand.u32 %v4887, 4294901760
  %4909 = vmatpush1.msra.mxu0 %v4908
  %4910 = vmatprep.subr.mxu0 0.0
  %v4911 = vand.u32 %v4888, 4294901760
  %4912 = vmatpush1.msra.mxu0 %v4911
  %4913 = vmatprep.subr.mxu0 0.0
  %v4914 = vand.u32 %v4889, 4294901760
  %4915 = vmatpush1.msra.mxu0 %v4914
  %4916 = vmatprep.subr.mxu0 0.0
  %v4917 = vand.u32 %v4890, 4294901760
  %4918 = vmatpush1.msra.mxu0 %v4917
  %4919 = vmatprep.subr.mxu0 0.0
  %v4920 = vand.u32 %v4891, 4294901760
  %4921 = vmatpush1.msra.mxu0 %v4920
  %4922 = vmatprep.subr.mxu0 0.0
  %v4923 = vand.u32 %v4892, 4294901760
  %4924 = vmatpush1.msra.mxu0 %v4923
  %4925 = vmatprep.subr.mxu0 0.0
  %v4926 = vand.u32 %v4893, 4294901760
  %4927 = vmatpush1.msra.mxu0 %v4926
  %4928 = vmatprep.subr.mxu0 0.0
  %v4929 = vand.u32 %v4894, 4294901760
  %4930 = vmatpush1.msra.mxu0 %v4929
  %4931 = vmatprep.subr.mxu0 0.0
  %v4932 = vand.u32 %v4895, 4294901760
  %4933 = vmatpush1.msra.mxu0 %v4932
  %4934 = vmatprep.subr.mxu0 0.0
  %v4935 = vand.u32 %v4896, 4294901760
  %4936 = vmatpush1.msra.mxu0 %v4935
  %4937 = vmatprep.subr.mxu0 0.0
  %v4938 = vand.u32 %v4897, 4294901760
  %4939 = vmatpush1.msra.mxu0 %v4938
  %4940 = vmatprep.subr.mxu0 0.0
  %v4941 = vand.u32 %v4898, 4294901760
  %4942 = vmatpush1.msra.mxu0 %v4941
  %4943 = vmatprep.subr.mxu0 0.0
  %v4944 = vand.u32 %v4899, 4294901760
  %4945 = vmatpush1.msra.mxu0 %v4944
  %4946 = vmatprep.subr.mxu0 0.0
  %v4947 = vand.u32 %v4900, 4294901760
  %4948 = vmatpush1.msra.mxu0 %v4947
  %4949 = vmatprep.subr.mxu0 0.0
  %4950 = vmatpush1.msra.mxu0 0.0
  %4951 = vmatprep.subr.mxu0 0.0
  %4952 = vmatpush1.msra.mxu0 0.0
  %4953 = vmatprep.subr.mxu0 0.0
  %4954 = vmatpush1.msra.mxu0 0.0
  %4955 = vmatprep.subr.mxu0 0.0
  %4956 = vmatpush1.msra.mxu0 0.0
  %4957 = vmatprep.subr.mxu0 0.0
  %4958 = vmatpush1.msra.mxu0 0.0
  %4959 = vmatprep.subr.mxu0 0.0
  %4960 = vmatpush1.msra.mxu0 0.0
  %4961 = vmatprep.subr.mxu0 0.0
  %4962 = vmatpush1.msra.mxu0 0.0
  %4963 = vmatprep.subr.mxu0 0.0
  %4964 = vmatpush1.msra.mxu0 0.0
  %4965 = vmatprep.subr.mxu0 0.0
  %4966 = vmatpush1.msra.mxu0 0.0
  %4967 = vmatprep.subr.mxu0 0.0
  %4968 = vmatpush1.msra.mxu0 0.0
  %4969 = vmatprep.subr.mxu0 0.0
  %4970 = vmatpush1.msra.mxu0 0.0
  %4971 = vmatprep.subr.mxu0 0.0
  %4972 = vmatpush1.msra.mxu0 0.0
  %4973 = vmatprep.subr.mxu0 0.0
  %4974 = vmatpush1.msra.mxu0 0.0
  %4975 = vmatprep.subr.mxu0 0.0
  %4976 = vmatpush1.msra.mxu0 0.0
  %4977 = vmatprep.subr.mxu0 0.0
  %4978 = vmatpush1.msra.mxu0 0.0
  %4979 = vmatprep.subr.mxu0 0.0
  %4980 = vmatpush1.msra.mxu0 0.0
  %4981 = vmatprep.mubr.f32.mxu0 0.0
  %v4982 = vand.u32 %v4883, 4294901760
  %v4983 = vsub.f32 %v4883, %v4982
  %v4984 = vand.u32 %v4983, 4294901760
  %v4985 = vsub.f32 %v4983, %v4984
  %v4986 = vand.u32 %v4985, 4294901760
  %4987 = vmatmul.mubr.f32.gmra.mrb[0].mxu0 %v4986
  %v4988 = vpop.f32.mrb[0].mxu0
  %v4989 = vadd.f32 0.0, %v4988
  %v4990 = vpop.f32.mrb[0].mxu0
  %4991 = vdwg.mxu0
  %4992 = vmatprep.subr.mxu0 0.0
  %v4993 = vand.u32 %v4885, 4294901760
  %v4994 = vsub.f32 %v4885, %v4993
  %v4995 = vand.u32 %v4994, 4294901760
  %v4996 = vsub.f32 %v4994, %v4995
  %v4997 = vand.u32 %v4996, 4294901760
  %4998 = vmatpush1.msra.mxu0 %v4997
  %4999 = vmatprep.subr.mxu0 0.0
  %v5000 = vand.u32 %v4886, 4294901760
  %v5001 = vsub.f32 %v4886, %v5000
  %v5002 = vand.u32 %v5001, 4294901760
  %v5003 = vsub.f32 %v5001, %v5002
  %v5004 = vand.u32 %v5003, 4294901760
  %5005 = vmatpush1.msra.mxu0 %v5004
  %5006 = vmatprep.subr.mxu0 0.0
  %v5007 = vand.u32 %v4887, 4294901760
  %v5008 = vsub.f32 %v4887, %v5007
  %v5009 = vand.u32 %v5008, 4294901760
  %v5010 = vsub.f32 %v5008, %v5009
  %v5011 = vand.u32 %v5010, 4294901760
  %5012 = vmatpush1.msra.mxu0 %v5011
  %5013 = vmatprep.subr.mxu0 0.0
  %v5014 = vand.u32 %v4888, 4294901760
  %v5015 = vsub.f32 %v4888, %v5014
  %v5016 = vand.u32 %v5015, 4294901760
  %v5017 = vsub.f32 %v5015, %v5016
  %v5018 = vand.u32 %v5017, 4294901760
  %5019 = vmatpush1.msra.mxu0 %v5018
  %5020 = vmatprep.subr.mxu0 0.0
  %v5021 = vand.u32 %v4889, 4294901760
  %v5022 = vsub.f32 %v4889, %v5021
  %v5023 = vand.u32 %v5022, 4294901760
  %v5024 = vsub.f32 %v5022, %v5023
  %v5025 = vand.u32 %v5024, 4294901760
  %5026 = vmatpush1.msra.mxu0 %v5025
  %5027 = vmatprep.subr.mxu0 0.0
  %v5028 = vand.u32 %v4890, 4294901760
  %v5029 = vsub.f32 %v4890, %v5028
  %v5030 = vand.u32 %v5029, 4294901760
  %v5031 = vsub.f32 %v5029, %v5030
  %v5032 = vand.u32 %v5031, 4294901760
  %5033 = vmatpush1.msra.mxu0 %v5032
  %5034 = vmatprep.subr.mxu0 0.0
  %v5035 = vand.u32 %v4891, 4294901760
  %v5036 = vsub.f32 %v4891, %v5035
  %v5037 = vand.u32 %v5036, 4294901760
  %v5038 = vsub.f32 %v5036, %v5037
  %v5039 = vand.u32 %v5038, 4294901760
  %5040 = vmatpush1.msra.mxu0 %v5039
  %5041 = vmatprep.subr.mxu0 0.0
  %v5042 = vand.u32 %v4892, 4294901760
  %v5043 = vsub.f32 %v4892, %v5042
  %v5044 = vand.u32 %v5043, 4294901760
  %v5045 = vsub.f32 %v5043, %v5044
  %v5046 = vand.u32 %v5045, 4294901760
  %5047 = vmatpush1.msra.mxu0 %v5046
  %5048 = vmatprep.subr.mxu0 0.0
  %v5049 = vand.u32 %v4893, 4294901760
  %v5050 = vsub.f32 %v4893, %v5049
  %v5051 = vand.u32 %v5050, 4294901760
  %v5052 = vsub.f32 %v5050, %v5051
  %v5053 = vand.u32 %v5052, 4294901760
  %5054 = vmatpush1.msra.mxu0 %v5053
  %5055 = vmatprep.subr.mxu0 0.0
  %v5056 = vand.u32 %v4894, 4294901760
  %v5057 = vsub.f32 %v4894, %v5056
  %v5058 = vand.u32 %v5057, 4294901760
  %v5059 = vsub.f32 %v5057, %v5058
  %v5060 = vand.u32 %v5059, 4294901760
  %5061 = vmatpush1.msra.mxu0 %v5060
  %5062 = vmatprep.subr.mxu0 0.0
  %v5063 = vand.u32 %v4895, 4294901760
  %v5064 = vsub.f32 %v4895, %v5063
  %v5065 = vand.u32 %v5064, 4294901760
  %v5066 = vsub.f32 %v5064, %v5065
  %v5067 = vand.u32 %v5066, 4294901760
  %5068 = vmatpush1.msra.mxu0 %v5067
  %5069 = vmatprep.subr.mxu0 0.0
  %v5070 = vand.u32 %v4896, 4294901760
  %v5071 = vsub.f32 %v4896, %v5070
  %v5072 = vand.u32 %v5071, 4294901760
  %v5073 = vsub.f32 %v5071, %v5072
  %v5074 = vand.u32 %v5073, 4294901760
  %5075 = vmatpush1.msra.mxu0 %v5074
  %5076 = vmatprep.subr.mxu0 0.0
  %v5077 = vand.u32 %v4897, 4294901760
  %v5078 = vsub.f32 %v4897, %v5077
  %v5079 = vand.u32 %v5078, 4294901760
  %v5080 = vsub.f32 %v5078, %v5079
  %v5081 = vand.u32 %v5080, 4294901760
  %5082 = vmatpush1.msra.mxu0 %v5081
  %5083 = vmatprep.subr.mxu0 0.0
  %v5084 = vand.u32 %v4898, 4294901760
  %v5085 = vsub.f32 %v4898, %v5084
  %v5086 = vand.u32 %v5085, 4294901760
  %v5087 = vsub.f32 %v5085, %v5086
  %v5088 = vand.u32 %v5087, 4294901760
  %5089 = vmatpush1.msra.mxu0 %v5088
  %5090 = vmatprep.subr.mxu0 0.0
  %v5091 = vand.u32 %v4899, 4294901760
  %v5092 = vsub.f32 %v4899, %v5091
  %v5093 = vand.u32 %v5092, 4294901760
  %v5094 = vsub.f32 %v5092, %v5093
  %v5095 = vand.u32 %v5094, 4294901760
  %5096 = vmatpush1.msra.mxu0 %v5095
  %5097 = vmatprep.subr.mxu0 0.0
  %v5098 = vand.u32 %v4900, 4294901760
  %v5099 = vsub.f32 %v4900, %v5098
  %v5100 = vand.u32 %v5099, 4294901760
  %v5101 = vsub.f32 %v5099, %v5100
  %v5102 = vand.u32 %v5101, 4294901760
  %5103 = vmatpush1.msra.mxu0 %v5102
  %5104 = vmatprep.subr.mxu0 0.0
  %5105 = vmatpush1.msra.mxu0 0.0
  %5106 = vmatprep.subr.mxu0 0.0
  %5107 = vmatpush1.msra.mxu0 0.0
  %5108 = vmatprep.subr.mxu0 0.0
  %5109 = vmatpush1.msra.mxu0 0.0
  %5110 = vmatprep.subr.mxu0 0.0
  %5111 = vmatpush1.msra.mxu0 0.0
  %5112 = vmatprep.subr.mxu0 0.0
  %5113 = vmatpush1.msra.mxu0 0.0
  %5114 = vmatprep.subr.mxu0 0.0
  %5115 = vmatpush1.msra.mxu0 0.0
  %5116 = vmatprep.subr.mxu0 0.0
  %5117 = vmatpush1.msra.mxu0 0.0
  %5118 = vmatprep.subr.mxu0 0.0
  %5119 = vmatpush1.msra.mxu0 0.0
  %5120 = vmatprep.subr.mxu0 0.0
  %5121 = vmatpush1.msra.mxu0 0.0
  %5122 = vmatprep.subr.mxu0 0.0
  %5123 = vmatpush1.msra.mxu0 0.0
  %5124 = vmatprep.subr.mxu0 0.0
  %5125 = vmatpush1.msra.mxu0 0.0
  %5126 = vmatprep.subr.mxu0 0.0
  %5127 = vmatpush1.msra.mxu0 0.0
  %5128 = vmatprep.subr.mxu0 0.0
  %5129 = vmatpush1.msra.mxu0 0.0
  %5130 = vmatprep.subr.mxu0 0.0
  %5131 = vmatpush1.msra.mxu0 0.0
  %5132 = vmatprep.subr.mxu0 0.0
  %5133 = vmatpush1.msra.mxu0 0.0
  %5134 = vmatprep.subr.mxu0 0.0
  %5135 = vmatpush1.msra.mxu0 0.0
  %5136 = vmatprep.mubr.f32.mxu0 0.0
  %v5137 = vand.u32 %v4883, 4294901760
  %5138 = vmatmul.mubr.f32.gmra.mrb[0].mxu0 %v5137
  %v5139 = vpop.f32.mrb[0].mxu0
  %v5140 = vadd.f32 %v4989, %v5139
  %v5141 = vpop.f32.mrb[0].mxu0
  %5142 = vdwg.mxu0
  %5143 = vmatprep.subr.mxu0 0.0
  %v5144 = vand.u32 %v4885, 4294901760
  %v5145 = vsub.f32 %v4885, %v5144
  %5146 = vmatpush1.msra.mxu0 %v5145
  %5147 = vmatprep.subr.mxu0 0.0
  %v5148 = vand.u32 %v4886, 4294901760
  %v5149 = vsub.f32 %v4886, %v5148
  %5150 = vmatpush1.msra.mxu0 %v5149
  %5151 = vmatprep.subr.mxu0 0.0
  %v5152 = vand.u32 %v4887, 4294901760
  %v5153 = vsub.f32 %v4887, %v5152
  %5154 = vmatpush1.msra.mxu0 %v5153
  %5155 = vmatprep.subr.mxu0 0.0
  %v5156 = vand.u32 %v4888, 4294901760
  %v5157 = vsub.f32 %v4888, %v5156
  %5158 = vmatpush1.msra.mxu0 %v5157
  %5159 = vmatprep.subr.mxu0 0.0
  %v5160 = vand.u32 %v4889, 4294901760
  %v5161 = vsub.f32 %v4889, %v5160
  %5162 = vmatpush1.msra.mxu0 %v5161
  %5163 = vmatprep.subr.mxu0 0.0
  %v5164 = vand.u32 %v4890, 4294901760
  %v5165 = vsub.f32 %v4890, %v5164
  %5166 = vmatpush1.msra.mxu0 %v5165
  %5167 = vmatprep.subr.mxu0 0.0
  %v5168 = vand.u32 %v4891, 4294901760
  %v5169 = vsub.f32 %v4891, %v5168
  %5170 = vmatpush1.msra.mxu0 %v5169
  %5171 = vmatprep.subr.mxu0 0.0
  %v5172 = vand.u32 %v4892, 4294901760
  %v5173 = vsub.f32 %v4892, %v5172
  %5174 = vmatpush1.msra.mxu0 %v5173
  %5175 = vmatprep.subr.mxu0 0.0
  %v5176 = vand.u32 %v4893, 4294901760
  %v5177 = vsub.f32 %v4893, %v5176
  %5178 = vmatpush1.msra.mxu0 %v5177
  %5179 = vmatprep.subr.mxu0 0.0
  %v5180 = vand.u32 %v4894, 4294901760
  %v5181 = vsub.f32 %v4894, %v5180
  %5182 = vmatpush1.msra.mxu0 %v5181
  %5183 = vmatprep.subr.mxu0 0.0
  %v5184 = vand.u32 %v4895, 4294901760
  %v5185 = vsub.f32 %v4895, %v5184
  %5186 = vmatpush1.msra.mxu0 %v5185
  %5187 = vmatprep.subr.mxu0 0.0
  %v5188 = vand.u32 %v4896, 4294901760
  %v5189 = vsub.f32 %v4896, %v5188
  %5190 = vmatpush1.msra.mxu0 %v5189
  %5191 = vmatprep.subr.mxu0 0.0
  %v5192 = vand.u32 %v4897, 4294901760
  %v5193 = vsub.f32 %v4897, %v5192
  %5194 = vmatpush1.msra.mxu0 %v5193
  %5195 = vmatprep.subr.mxu0 0.0
  %v5196 = vand.u32 %v4898, 4294901760
  %v5197 = vsub.f32 %v4898, %v5196
  %5198 = vmatpush1.msra.mxu0 %v5197
  %5199 = vmatprep.subr.mxu0 0.0
  %v5200 = vand.u32 %v4899, 4294901760
  %v5201 = vsub.f32 %v4899, %v5200
  %5202 = vmatpush1.msra.mxu0 %v5201
  %5203 = vmatprep.subr.mxu0 0.0
  %v5204 = vand.u32 %v4900, 4294901760
  %v5205 = vsub.f32 %v4900, %v5204
  %5206 = vmatpush1.msra.mxu0 %v5205
  %5207 = vmatprep.subr.mxu0 0.0
  %5208 = vmatpush1.msra.mxu0 0.0
  %5209 = vmatprep.subr.mxu0 0.0
  %5210 = vmatpush1.msra.mxu0 0.0
  %5211 = vmatprep.subr.mxu0 0.0
  %5212 = vmatpush1.msra.mxu0 0.0
  %5213 = vmatprep.subr.mxu0 0.0
  %5214 = vmatpush1.msra.mxu0 0.0
  %5215 = vmatprep.subr.mxu0 0.0
  %5216 = vmatpush1.msra.mxu0 0.0
  %5217 = vmatprep.subr.mxu0 0.0
  %5218 = vmatpush1.msra.mxu0 0.0
  %5219 = vmatprep.subr.mxu0 0.0
  %5220 = vmatpush1.msra.mxu0 0.0
  %5221 = vmatprep.subr.mxu0 0.0
  %5222 = vmatpush1.msra.mxu0 0.0
  %5223 = vmatprep.subr.mxu0 0.0
  %5224 = vmatpush1.msra.mxu0 0.0
  %5225 = vmatprep.subr.mxu0 0.0
  %5226 = vmatpush1.msra.mxu0 0.0
  %5227 = vmatprep.subr.mxu0 0.0
  %5228 = vmatpush1.msra.mxu0 0.0
  %5229 = vmatprep.subr.mxu0 0.0
  %5230 = vmatpush1.msra.mxu0 0.0
  %5231 = vmatprep.subr.mxu0 0.0
  %5232 = vmatpush1.msra.mxu0 0.0
  %5233 = vmatprep.subr.mxu0 0.0
  %5234 = vmatpush1.msra.mxu0 0.0
  %5235 = vmatprep.subr.mxu0 0.0
  %5236 = vmatpush1.msra.mxu0 0.0
  %5237 = vmatprep.subr.mxu0 0.0
  %5238 = vmatpush1.msra.mxu0 0.0
  %5239 = vmatprep.mubr.f32.mxu0 0.0
  %v5240 = vand.u32 %v4883, 4294901760
  %v5241 = vsub.f32 %v4883, %v5240
  %5242 = vmatmul.mubr.f32.gmra.mrb[0].mxu0 %v5241
  %v5243 = vpop.f32.mrb[0].mxu0
  %v5244 = vadd.f32 %v5140, %v5243
  %v5245 = vpop.f32.mrb[0].mxu0
  %5246 = vdwg.mxu0
  %5247 = vmatprep.subr.mxu0 0.0
  %v5248 = vand.u32 %v4885, 4294901760
  %5249 = vmatpush1.msra.mxu0 %v5248
  %5250 = vmatprep.subr.mxu0 0.0
  %v5251 = vand.u32 %v4886, 4294901760
  %5252 = vmatpush1.msra.mxu0 %v5251
  %5253 = vmatprep.subr.mxu0 0.0
  %v5254 = vand.u32 %v4887, 4294901760
  %5255 = vmatpush1.msra.mxu0 %v5254
  %5256 = vmatprep.subr.mxu0 0.0
  %v5257 = vand.u32 %v4888, 4294901760
  %5258 = vmatpush1.msra.mxu0 %v5257
  %5259 = vmatprep.subr.mxu0 0.0
  %v5260 = vand.u32 %v4889, 4294901760
  %5261 = vmatpush1.msra.mxu0 %v5260
  %5262 = vmatprep.subr.mxu0 0.0
  %v5263 = vand.u32 %v4890, 4294901760
  %5264 = vmatpush1.msra.mxu0 %v5263
  %5265 = vmatprep.subr.mxu0 0.0
  %v5266 = vand.u32 %v4891, 4294901760
  %5267 = vmatpush1.msra.mxu0 %v5266
  %5268 = vmatprep.subr.mxu0 0.0
  %v5269 = vand.u32 %v4892, 4294901760
  %5270 = vmatpush1.msra.mxu0 %v5269
  %5271 = vmatprep.subr.mxu0 0.0
  %v5272 = vand.u32 %v4893, 4294901760
  %5273 = vmatpush1.msra.mxu0 %v5272
  %5274 = vmatprep.subr.mxu0 0.0
  %v5275 = vand.u32 %v4894, 4294901760
  %5276 = vmatpush1.msra.mxu0 %v5275
  %5277 = vmatprep.subr.mxu0 0.0
  %v5278 = vand.u32 %v4895, 4294901760
  %5279 = vmatpush1.msra.mxu0 %v5278
  %5280 = vmatprep.subr.mxu0 0.0
  %v5281 = vand.u32 %v4896, 4294901760
  %5282 = vmatpush1.msra.mxu0 %v5281
  %5283 = vmatprep.subr.mxu0 0.0
  %v5284 = vand.u32 %v4897, 4294901760
  %5285 = vmatpush1.msra.mxu0 %v5284
  %5286 = vmatprep.subr.mxu0 0.0
  %v5287 = vand.u32 %v4898, 4294901760
  %5288 = vmatpush1.msra.mxu0 %v5287
  %5289 = vmatprep.subr.mxu0 0.0
  %v5290 = vand.u32 %v4899, 4294901760
  %5291 = vmatpush1.msra.mxu0 %v5290
  %5292 = vmatprep.subr.mxu0 0.0
  %v5293 = vand.u32 %v4900, 4294901760
  %5294 = vmatpush1.msra.mxu0 %v5293
  %5295 = vmatprep.subr.mxu0 0.0
  %5296 = vmatpush1.msra.mxu0 0.0
  %5297 = vmatprep.subr.mxu0 0.0
  %5298 = vmatpush1.msra.mxu0 0.0
  %5299 = vmatprep.subr.mxu0 0.0
  %5300 = vmatpush1.msra.mxu0 0.0
  %5301 = vmatprep.subr.mxu0 0.0
  %5302 = vmatpush1.msra.mxu0 0.0
  %5303 = vmatprep.subr.mxu0 0.0
  %5304 = vmatpush1.msra.mxu0 0.0
  %5305 = vmatprep.subr.mxu0 0.0
  %5306 = vmatpush1.msra.mxu0 0.0
  %5307 = vmatprep.subr.mxu0 0.0
  %5308 = vmatpush1.msra.mxu0 0.0
  %5309 = vmatprep.subr.mxu0 0.0
  %5310 = vmatpush1.msra.mxu0 0.0
  %5311 = vmatprep.subr.mxu0 0.0
  %5312 = vmatpush1.msra.mxu0 0.0
  %5313 = vmatprep.subr.mxu0 0.0
  %5314 = vmatpush1.msra.mxu0 0.0
  %5315 = vmatprep.subr.mxu0 0.0
  %5316 = vmatpush1.msra.mxu0 0.0
  %5317 = vmatprep.subr.mxu0 0.0
  %5318 = vmatpush1.msra.mxu0 0.0
  %5319 = vmatprep.subr.mxu0 0.0
  %5320 = vmatpush1.msra.mxu0 0.0
  %5321 = vmatprep.subr.mxu0 0.0
  %5322 = vmatpush1.msra.mxu0 0.0
  %5323 = vmatprep.subr.mxu0 0.0
  %5324 = vmatpush1.msra.mxu0 0.0
  %5325 = vmatprep.subr.mxu0 0.0
  %5326 = vmatpush1.msra.mxu0 0.0
  %5327 = vmatprep.mubr.f32.mxu0 0.0
  %v5328 = vand.u32 %v4883, 4294901760
  %v5329 = vsub.f32 %v4883, %v5328
  %v5330 = vand.u32 %v5329, 4294901760
  %5331 = vmatmul.mubr.f32.gmra.mrb[0].mxu0 %v5330
  %v5332 = vpop.f32.mrb[0].mxu0
  %v5333 = vadd.f32 %v5244, %v5332
  %v5334 = vpop.f32.mrb[0].mxu0
  %5335 = vdwg.mxu0
  %5336 = vmatprep.subr.mxu0 0.0
  %v5337 = vand.u32 %v4885, 4294901760
  %v5338 = vsub.f32 %v4885, %v5337
  %v5339 = vand.u32 %v5338, 4294901760
  %5340 = vmatpush1.msra.mxu0 %v5339
  %5341 = vmatprep.subr.mxu0 0.0
  %v5342 = vand.u32 %v4886, 4294901760
  %v5343 = vsub.f32 %v4886, %v5342
  %v5344 = vand.u32 %v5343, 4294901760
  %5345 = vmatpush1.msra.mxu0 %v5344
  %5346 = vmatprep.subr.mxu0 0.0
  %v5347 = vand.u32 %v4887, 4294901760
  %v5348 = vsub.f32 %v4887, %v5347
  %v5349 = vand.u32 %v5348, 4294901760
  %5350 = vmatpush1.msra.mxu0 %v5349
  %5351 = vmatprep.subr.mxu0 0.0
  %v5352 = vand.u32 %v4888, 4294901760
  %v5353 = vsub.f32 %v4888, %v5352
  %v5354 = vand.u32 %v5353, 4294901760
  %5355 = vmatpush1.msra.mxu0 %v5354
  %5356 = vmatprep.subr.mxu0 0.0
  %v5357 = vand.u32 %v4889, 4294901760
  %v5358 = vsub.f32 %v4889, %v5357
  %v5359 = vand.u32 %v5358, 4294901760
  %5360 = vmatpush1.msra.mxu0 %v5359
  %5361 = vmatprep.subr.mxu0 0.0
  %v5362 = vand.u32 %v4890, 4294901760
  %v5363 = vsub.f32 %v4890, %v5362
  %v5364 = vand.u32 %v5363, 4294901760
  %5365 = vmatpush1.msra.mxu0 %v5364
  %5366 = vmatprep.subr.mxu0 0.0
  %v5367 = vand.u32 %v4891, 4294901760
  %v5368 = vsub.f32 %v4891, %v5367
  %v5369 = vand.u32 %v5368, 4294901760
  %5370 = vmatpush1.msra.mxu0 %v5369
  %5371 = vmatprep.subr.mxu0 0.0
  %v5372 = vand.u32 %v4892, 4294901760
  %v5373 = vsub.f32 %v4892, %v5372
  %v5374 = vand.u32 %v5373, 4294901760
  %5375 = vmatpush1.msra.mxu0 %v5374
  %5376 = vmatprep.subr.mxu0 0.0
  %v5377 = vand.u32 %v4893, 4294901760
  %v5378 = vsub.f32 %v4893, %v5377
  %v5379 = vand.u32 %v5378, 4294901760
  %5380 = vmatpush1.msra.mxu0 %v5379
  %5381 = vmatprep.subr.mxu0 0.0
  %v5382 = vand.u32 %v4894, 4294901760
  %v5383 = vsub.f32 %v4894, %v5382
  %v5384 = vand.u32 %v5383, 4294901760
  %5385 = vmatpush1.msra.mxu0 %v5384
  %5386 = vmatprep.subr.mxu0 0.0
  %v5387 = vand.u32 %v4895, 4294901760
  %v5388 = vsub.f32 %v4895, %v5387
  %v5389 = vand.u32 %v5388, 4294901760
  %5390 = vmatpush1.msra.mxu0 %v5389
  %5391 = vmatprep.subr.mxu0 0.0
  %v5392 = vand.u32 %v4896, 4294901760
  %v5393 = vsub.f32 %v4896, %v5392
  %v5394 = vand.u32 %v5393, 4294901760
  %5395 = vmatpush1.msra.mxu0 %v5394
  %5396 = vmatprep.subr.mxu0 0.0
  %v5397 = vand.u32 %v4897, 4294901760
  %v5398 = vsub.f32 %v4897, %v5397
  %v5399 = vand.u32 %v5398, 4294901760
  %5400 = vmatpush1.msra.mxu0 %v5399
  %5401 = vmatprep.subr.mxu0 0.0
  %v5402 = vand.u32 %v4898, 4294901760
  %v5403 = vsub.f32 %v4898, %v5402
  %v5404 = vand.u32 %v5403, 4294901760
  %5405 = vmatpush1.msra.mxu0 %v5404
  %5406 = vmatprep.subr.mxu0 0.0
  %v5407 = vand.u32 %v4899, 4294901760
  %v5408 = vsub.f32 %v4899, %v5407
  %v5409 = vand.u32 %v5408, 4294901760
  %5410 = vmatpush1.msra.mxu0 %v5409
  %5411 = vmatprep.subr.mxu0 0.0
  %v5412 = vand.u32 %v4900, 4294901760
  %v5413 = vsub.f32 %v4900, %v5412
  %v5414 = vand.u32 %v5413, 4294901760
  %5415 = vmatpush1.msra.mxu0 %v5414
  %5416 = vmatprep.subr.mxu0 0.0
  %5417 = vmatpush1.msra.mxu0 0.0
  %5418 = vmatprep.subr.mxu0 0.0
  %5419 = vmatpush1.msra.mxu0 0.0
  %5420 = vmatprep.subr.mxu0 0.0
  %5421 = vmatpush1.msra.mxu0 0.0
  %5422 = vmatprep.subr.mxu0 0.0
  %5423 = vmatpush1.msra.mxu0 0.0
  %5424 = vmatprep.subr.mxu0 0.0
  %5425 = vmatpush1.msra.mxu0 0.0
  %5426 = vmatprep.subr.mxu0 0.0
  %5427 = vmatpush1.msra.mxu0 0.0
  %5428 = vmatprep.subr.mxu0 0.0
  %5429 = vmatpush1.msra.mxu0 0.0
  %5430 = vmatprep.subr.mxu0 0.0
  %5431 = vmatpush1.msra.mxu0 0.0
  %5432 = vmatprep.subr.mxu0 0.0
  %5433 = vmatpush1.msra.mxu0 0.0
  %5434 = vmatprep.subr.mxu0 0.0
  %5435 = vmatpush1.msra.mxu0 0.0
  %5436 = vmatprep.subr.mxu0 0.0
  %5437 = vmatpush1.msra.mxu0 0.0
  %5438 = vmatprep.subr.mxu0 0.0
  %5439 = vmatpush1.msra.mxu0 0.0
  %5440 = vmatprep.subr.mxu0 0.0
  %5441 = vmatpush1.msra.mxu0 0.0
  %5442 = vmatprep.subr.mxu0 0.0
  %5443 = vmatpush1.msra.mxu0 0.0
  %5444 = vmatprep.subr.mxu0 0.0
  %5445 = vmatpush1.msra.mxu0 0.0
  %5446 = vmatprep.subr.mxu0 0.0
  %5447 = vmatpush1.msra.mxu0 0.0
  %5448 = vmatprep.mubr.f32.mxu0 0.0
  %v5449 = vand.u32 %v4883, 4294901760
  %5450 = vmatmul.mubr.f32.gmra.mrb[0].mxu0 %v5449
  %v5451 = vpop.f32.mrb[0].mxu0
  %v5452 = vadd.f32 %v5333, %v5451
  %v5453 = vpop.f32.mrb[0].mxu0
  %5454 = vdwg.mxu0
  %5455 = vmatprep.subr.mxu0 0.0
  %v5456 = vand.u32 %v4885, 4294901760
  %5457 = vmatpush1.msra.mxu0 %v5456
  %5458 = vmatprep.subr.mxu0 0.0
  %v5459 = vand.u32 %v4886, 4294901760
  %5460 = vmatpush1.msra.mxu0 %v5459
  %5461 = vmatprep.subr.mxu0 0.0
  %v5462 = vand.u32 %v4887, 4294901760
  %5463 = vmatpush1.msra.mxu0 %v5462
  %5464 = vmatprep.subr.mxu0 0.0
  %v5465 = vand.u32 %v4888, 4294901760
  %5466 = vmatpush1.msra.mxu0 %v5465
  %5467 = vmatprep.subr.mxu0 0.0
  %v5468 = vand.u32 %v4889, 4294901760
  %5469 = vmatpush1.msra.mxu0 %v5468
  %5470 = vmatprep.subr.mxu0 0.0
  %v5471 = vand.u32 %v4890, 4294901760
  %5472 = vmatpush1.msra.mxu0 %v5471
  %5473 = vmatprep.subr.mxu0 0.0
  %v5474 = vand.u32 %v4891, 4294901760
  %5475 = vmatpush1.msra.mxu0 %v5474
  %5476 = vmatprep.subr.mxu0 0.0
  %v5477 = vand.u32 %v4892, 4294901760
  %5478 = vmatpush1.msra.mxu0 %v5477
  %5479 = vmatprep.subr.mxu0 0.0
  %v5480 = vand.u32 %v4893, 4294901760
  %5481 = vmatpush1.msra.mxu0 %v5480
  %5482 = vmatprep.subr.mxu0 0.0
  %v5483 = vand.u32 %v4894, 4294901760
  %5484 = vmatpush1.msra.mxu0 %v5483
  %5485 = vmatprep.subr.mxu0 0.0
  %v5486 = vand.u32 %v4895, 4294901760
  %5487 = vmatpush1.msra.mxu0 %v5486
  %5488 = vmatprep.subr.mxu0 0.0
  %v5489 = vand.u32 %v4896, 4294901760
  %5490 = vmatpush1.msra.mxu0 %v5489
  %5491 = vmatprep.subr.mxu0 0.0
  %v5492 = vand.u32 %v4897, 4294901760
  %5493 = vmatpush1.msra.mxu0 %v5492
  %5494 = vmatprep.subr.mxu0 0.0
  %v5495 = vand.u32 %v4898, 4294901760
  %5496 = vmatpush1.msra.mxu0 %v5495
  %5497 = vmatprep.subr.mxu0 0.0
  %v5498 = vand.u32 %v4899, 4294901760
  %5499 = vmatpush1.msra.mxu0 %v5498
  %5500 = vmatprep.subr.mxu0 0.0
  %v5501 = vand.u32 %v4900, 4294901760
  %5502 = vmatpush1.msra.mxu0 %v5501
  %5503 = vmatprep.subr.mxu0 0.0
  %5504 = vmatpush1.msra.mxu0 0.0
  %5505 = vmatprep.subr.mxu0 0.0
  %5506 = vmatpush1.msra.mxu0 0.0
  %5507 = vmatprep.subr.mxu0 0.0
  %5508 = vmatpush1.msra.mxu0 0.0
  %5509 = vmatprep.subr.mxu0 0.0
  %5510 = vmatpush1.msra.mxu0 0.0
  %5511 = vmatprep.subr.mxu0 0.0
  %5512 = vmatpush1.msra.mxu0 0.0
  %5513 = vmatprep.subr.mxu0 0.0
  %5514 = vmatpush1.msra.mxu0 0.0
  %5515 = vmatprep.subr.mxu0 0.0
  %5516 = vmatpush1.msra.mxu0 0.0
  %5517 = vmatprep.subr.mxu0 0.0
  %5518 = vmatpush1.msra.mxu0 0.0
  %5519 = vmatprep.subr.mxu0 0.0
  %5520 = vmatpush1.msra.mxu0 0.0
  %5521 = vmatprep.subr.mxu0 0.0
  %5522 = vmatpush1.msra.mxu0 0.0
  %5523 = vmatprep.subr.mxu0 0.0
  %5524 = vmatpush1.msra.mxu0 0.0
  %5525 = vmatprep.subr.mxu0 0.0
  %5526 = vmatpush1.msra.mxu0 0.0
  %5527 = vmatprep.subr.mxu0 0.0
  %5528 = vmatpush1.msra.mxu0 0.0
  %5529 = vmatprep.subr.mxu0 0.0
  %5530 = vmatpush1.msra.mxu0 0.0
  %5531 = vmatprep.subr.mxu0 0.0
  %5532 = vmatpush1.msra.mxu0 0.0
  %5533 = vmatprep.subr.mxu0 0.0
  %5534 = vmatpush1.msra.mxu0 0.0
  %5535 = vmatprep.mubr.f32.mxu0 0.0
  %v5536 = vand.u32 %v4883, 4294901760
  %5537 = vmatmul.mubr.f32.gmra.mrb[0].mxu0 %v5536
  %v5538 = vpop.f32.mrb[0].mxu0
  %v5539 = vadd.f32 %v5452, %v5538
  %v5540 = vpop.f32.mrb[0].mxu0
  %5541 = vdwg.mxu0
  %v5542 = vadd.f32 %v4881, %v5539
  %s5543 = scalar_lea.vmem [#allocation2], 4
  %v5544 = vld [vmem:[%s5543] ss:$8 sm:$0xf]
  %s5545 = scalar_lea.vmem %s4, 512
  %v5546 = vld [vmem:[%s5545] sm:$0xff]
  %v5547 = vld [vmem:[%s5545 + $0x8] sm:$0xff]
  %v5548 = vld [vmem:[%s5545 + $0x10] sm:$0xff]
  %v5549 = vld [vmem:[%s5545 + $0x18] sm:$0xff]
  %v5550 = vld [vmem:[%s5545 + $0x20] sm:$0xff]
  %v5551 = vld [vmem:[%s5545 + $0x28] sm:$0xff]
  %v5552 = vld [vmem:[%s5545 + $0x30] sm:$0xff]
  %v5553 = vld [vmem:[%s5545 + $0x38] sm:$0xff]
  %v5554 = vld [vmem:[%s5545 + $0x40] sm:$0xff]
  %v5555 = vld [vmem:[%s5545 + $0x48] sm:$0xff]
  %v5556 = vld [vmem:[%s5545 + $0x50] sm:$0xff]
  %v5557 = vld [vmem:[%s5545 + $0x58] sm:$0xff]
  %v5558 = vld [vmem:[%s5545 + $0x60] sm:$0xff]
  %v5559 = vld [vmem:[%s5545 + $0x68] sm:$0xff]
  %v5560 = vld [vmem:[%s5545 + $0x70] sm:$0xff]
  %v5561 = vld [vmem:[%s5545 + $0x78] sm:$0xff]
  %5562 = vmatprep.subr.mxu0 0.0
  %v5563 = vand.u32 %v5546, 4294901760
  %5564 = vmatpush1.msra.mxu0 %v5563
  %5565 = vmatprep.subr.mxu0 0.0
  %v5566 = vand.u32 %v5547, 4294901760
  %5567 = vmatpush1.msra.mxu0 %v5566
  %5568 = vmatprep.subr.mxu0 0.0
  %v5569 = vand.u32 %v5548, 4294901760
  %5570 = vmatpush1.msra.mxu0 %v5569
  %5571 = vmatprep.subr.mxu0 0.0
  %v5572 = vand.u32 %v5549, 4294901760
  %5573 = vmatpush1.msra.mxu0 %v5572
  %5574 = vmatprep.subr.mxu0 0.0
  %v5575 = vand.u32 %v5550, 4294901760
  %5576 = vmatpush1.msra.mxu0 %v5575
  %5577 = vmatprep.subr.mxu0 0.0
  %v5578 = vand.u32 %v5551, 4294901760
  %5579 = vmatpush1.msra.mxu0 %v5578
  %5580 = vmatprep.subr.mxu0 0.0
  %v5581 = vand.u32 %v5552, 4294901760
  %5582 = vmatpush1.msra.mxu0 %v5581
  %5583 = vmatprep.subr.mxu0 0.0
  %v5584 = vand.u32 %v5553, 4294901760
  %5585 = vmatpush1.msra.mxu0 %v5584
  %5586 = vmatprep.subr.mxu0 0.0
  %v5587 = vand.u32 %v5554, 4294901760
  %5588 = vmatpush1.msra.mxu0 %v5587
  %5589 = vmatprep.subr.mxu0 0.0
  %v5590 = vand.u32 %v5555, 4294901760
  %5591 = vmatpush1.msra.mxu0 %v5590
  %5592 = vmatprep.subr.mxu0 0.0
  %v5593 = vand.u32 %v5556, 4294901760
  %5594 = vmatpush1.msra.mxu0 %v5593
  %5595 = vmatprep.subr.mxu0 0.0
  %v5596 = vand.u32 %v5557, 4294901760
  %5597 = vmatpush1.msra.mxu0 %v5596
  %5598 = vmatprep.subr.mxu0 0.0
  %v5599 = vand.u32 %v5558, 4294901760
  %5600 = vmatpush1.msra.mxu0 %v5599
  %5601 = vmatprep.subr.mxu0 0.0
  %v5602 = vand.u32 %v5559, 4294901760
  %5603 = vmatpush1.msra.mxu0 %v5602
  %5604 = vmatprep.subr.mxu0 0.0
  %v5605 = vand.u32 %v5560, 4294901760
  %5606 = vmatpush1.msra.mxu0 %v5605
  %5607 = vmatprep.subr.mxu0 0.0
  %v5608 = vand.u32 %v5561, 4294901760
  %5609 = vmatpush1.msra.mxu0 %v5608
  %5610 = vmatprep.subr.mxu0 0.0
  %5611 = vmatpush1.msra.mxu0 0.0
  %5612 = vmatprep.subr.mxu0 0.0
  %5613 = vmatpush1.msra.mxu0 0.0
  %5614 = vmatprep.subr.mxu0 0.0
  %5615 = vmatpush1.msra.mxu0 0.0
  %5616 = vmatprep.subr.mxu0 0.0
  %5617 = vmatpush1.msra.mxu0 0.0
  %5618 = vmatprep.subr.mxu0 0.0
  %5619 = vmatpush1.msra.mxu0 0.0
  %5620 = vmatprep.subr.mxu0 0.0
  %5621 = vmatpush1.msra.mxu0 0.0
  %5622 = vmatprep.subr.mxu0 0.0
  %5623 = vmatpush1.msra.mxu0 0.0
  %5624 = vmatprep.subr.mxu0 0.0
  %5625 = vmatpush1.msra.mxu0 0.0
  %5626 = vmatprep.subr.mxu0 0.0
  %5627 = vmatpush1.msra.mxu0 0.0
  %5628 = vmatprep.subr.mxu0 0.0
  %5629 = vmatpush1.msra.mxu0 0.0
  %5630 = vmatprep.subr.mxu0 0.0
  %5631 = vmatpush1.msra.mxu0 0.0
  %5632 = vmatprep.subr.mxu0 0.0
  %5633 = vmatpush1.msra.mxu0 0.0
  %5634 = vmatprep.subr.mxu0 0.0
  %5635 = vmatpush1.msra.mxu0 0.0
  %5636 = vmatprep.subr.mxu0 0.0
  %5637 = vmatpush1.msra.mxu0 0.0
  %5638 = vmatprep.subr.mxu0 0.0
  %5639 = vmatpush1.msra.mxu0 0.0
  %5640 = vmatprep.subr.mxu0 0.0
  %5641 = vmatpush1.msra.mxu0 0.0
  %5642 = vmatprep.mubr.f32.mxu0 0.0
  %v5643 = vand.u32 %v5544, 4294901760
  %v5644 = vsub.f32 %v5544, %v5643
  %v5645 = vand.u32 %v5644, 4294901760
  %v5646 = vsub.f32 %v5644, %v5645
  %v5647 = vand.u32 %v5646, 4294901760
  %5648 = vmatmul.mubr.f32.gmra.mrb[0].mxu0 %v5647
  %v5649 = vpop.f32.mrb[0].mxu0
  %v5650 = vadd.f32 0.0, %v5649
  %v5651 = vpop.f32.mrb[0].mxu0
  %5652 = vdwg.mxu0
  %5653 = vmatprep.subr.mxu0 0.0
  %v5654 = vand.u32 %v5546, 4294901760
  %v5655 = vsub.f32 %v5546, %v5654
  %v5656 = vand.u32 %v5655, 4294901760
  %v5657 = vsub.f32 %v5655, %v5656
  %v5658 = vand.u32 %v5657, 4294901760
  %5659 = vmatpush1.msra.mxu0 %v5658
  %5660 = vmatprep.subr.mxu0 0.0
  %v5661 = vand.u32 %v5547, 4294901760
  %v5662 = vsub.f32 %v5547, %v5661
  %v5663 = vand.u32 %v5662, 4294901760
  %v5664 = vsub.f32 %v5662, %v5663
  %v5665 = vand.u32 %v5664, 4294901760
  %5666 = vmatpush1.msra.mxu0 %v5665
  %5667 = vmatprep.subr.mxu0 0.0
  %v5668 = vand.u32 %v5548, 4294901760
  %v5669 = vsub.f32 %v5548, %v5668
  %v5670 = vand.u32 %v5669, 4294901760
  %v5671 = vsub.f32 %v5669, %v5670
  %v5672 = vand.u32 %v5671, 4294901760
  %5673 = vmatpush1.msra.mxu0 %v5672
  %5674 = vmatprep.subr.mxu0 0.0
  %v5675 = vand.u32 %v5549, 4294901760
  %v5676 = vsub.f32 %v5549, %v5675
  %v5677 = vand.u32 %v5676, 4294901760
  %v5678 = vsub.f32 %v5676, %v5677
  %v5679 = vand.u32 %v5678, 4294901760
  %5680 = vmatpush1.msra.mxu0 %v5679
  %5681 = vmatprep.subr.mxu0 0.0
  %v5682 = vand.u32 %v5550, 4294901760
  %v5683 = vsub.f32 %v5550, %v5682
  %v5684 = vand.u32 %v5683, 4294901760
  %v5685 = vsub.f32 %v5683, %v5684
  %v5686 = vand.u32 %v5685, 4294901760
  %5687 = vmatpush1.msra.mxu0 %v5686
  %5688 = vmatprep.subr.mxu0 0.0
  %v5689 = vand.u32 %v5551, 4294901760
  %v5690 = vsub.f32 %v5551, %v5689
  %v5691 = vand.u32 %v5690, 4294901760
  %v5692 = vsub.f32 %v5690, %v5691
  %v5693 = vand.u32 %v5692, 4294901760
  %5694 = vmatpush1.msra.mxu0 %v5693
  %5695 = vmatprep.subr.mxu0 0.0
  %v5696 = vand.u32 %v5552, 4294901760
  %v5697 = vsub.f32 %v5552, %v5696
  %v5698 = vand.u32 %v5697, 4294901760
  %v5699 = vsub.f32 %v5697, %v5698
  %v5700 = vand.u32 %v5699, 4294901760
  %5701 = vmatpush1.msra.mxu0 %v5700
  %5702 = vmatprep.subr.mxu0 0.0
  %v5703 = vand.u32 %v5553, 4294901760
  %v5704 = vsub.f32 %v5553, %v5703
  %v5705 = vand.u32 %v5704, 4294901760
  %v5706 = vsub.f32 %v5704, %v5705
  %v5707 = vand.u32 %v5706, 4294901760
  %5708 = vmatpush1.msra.mxu0 %v5707
  %5709 = vmatprep.subr.mxu0 0.0
  %v5710 = vand.u32 %v5554, 4294901760
  %v5711 = vsub.f32 %v5554, %v5710
  %v5712 = vand.u32 %v5711, 4294901760
  %v5713 = vsub.f32 %v5711, %v5712
  %v5714 = vand.u32 %v5713, 4294901760
  %5715 = vmatpush1.msra.mxu0 %v5714
  %5716 = vmatprep.subr.mxu0 0.0
  %v5717 = vand.u32 %v5555, 4294901760
  %v5718 = vsub.f32 %v5555, %v5717
  %v5719 = vand.u32 %v5718, 4294901760
  %v5720 = vsub.f32 %v5718, %v5719
  %v5721 = vand.u32 %v5720, 4294901760
  %5722 = vmatpush1.msra.mxu0 %v5721
  %5723 = vmatprep.subr.mxu0 0.0
  %v5724 = vand.u32 %v5556, 4294901760
  %v5725 = vsub.f32 %v5556, %v5724
  %v5726 = vand.u32 %v5725, 4294901760
  %v5727 = vsub.f32 %v5725, %v5726
  %v5728 = vand.u32 %v5727, 4294901760
  %5729 = vmatpush1.msra.mxu0 %v5728
  %5730 = vmatprep.subr.mxu0 0.0
  %v5731 = vand.u32 %v5557, 4294901760
  %v5732 = vsub.f32 %v5557, %v5731
  %v5733 = vand.u32 %v5732, 4294901760
  %v5734 = vsub.f32 %v5732, %v5733
  %v5735 = vand.u32 %v5734, 4294901760
  %5736 = vmatpush1.msra.mxu0 %v5735
  %5737 = vmatprep.subr.mxu0 0.0
  %v5738 = vand.u32 %v5558, 4294901760
  %v5739 = vsub.f32 %v5558, %v5738
  %v5740 = vand.u32 %v5739, 4294901760
  %v5741 = vsub.f32 %v5739, %v5740
  %v5742 = vand.u32 %v5741, 4294901760
  %5743 = vmatpush1.msra.mxu0 %v5742
  %5744 = vmatprep.subr.mxu0 0.0
  %v5745 = vand.u32 %v5559, 4294901760
  %v5746 = vsub.f32 %v5559, %v5745
  %v5747 = vand.u32 %v5746, 4294901760
  %v5748 = vsub.f32 %v5746, %v5747
  %v5749 = vand.u32 %v5748, 4294901760
  %5750 = vmatpush1.msra.mxu0 %v5749
  %5751 = vmatprep.subr.mxu0 0.0
  %v5752 = vand.u32 %v5560, 4294901760
  %v5753 = vsub.f32 %v5560, %v5752
  %v5754 = vand.u32 %v5753, 4294901760
  %v5755 = vsub.f32 %v5753, %v5754
  %v5756 = vand.u32 %v5755, 4294901760
  %5757 = vmatpush1.msra.mxu0 %v5756
  %5758 = vmatprep.subr.mxu0 0.0
  %v5759 = vand.u32 %v5561, 4294901760
  %v5760 = vsub.f32 %v5561, %v5759
  %v5761 = vand.u32 %v5760, 4294901760
  %v5762 = vsub.f32 %v5760, %v5761
  %v5763 = vand.u32 %v5762, 4294901760
  %5764 = vmatpush1.msra.mxu0 %v5763
  %5765 = vmatprep.subr.mxu0 0.0
  %5766 = vmatpush1.msra.mxu0 0.0
  %5767 = vmatprep.subr.mxu0 0.0
  %5768 = vmatpush1.msra.mxu0 0.0
  %5769 = vmatprep.subr.mxu0 0.0
  %5770 = vmatpush1.msra.mxu0 0.0
  %5771 = vmatprep.subr.mxu0 0.0
  %5772 = vmatpush1.msra.mxu0 0.0
  %5773 = vmatprep.subr.mxu0 0.0
  %5774 = vmatpush1.msra.mxu0 0.0
  %5775 = vmatprep.subr.mxu0 0.0
  %5776 = vmatpush1.msra.mxu0 0.0
  %5777 = vmatprep.subr.mxu0 0.0
  %5778 = vmatpush1.msra.mxu0 0.0
  %5779 = vmatprep.subr.mxu0 0.0
  %5780 = vmatpush1.msra.mxu0 0.0
  %5781 = vmatprep.subr.mxu0 0.0
  %5782 = vmatpush1.msra.mxu0 0.0
  %5783 = vmatprep.subr.mxu0 0.0
  %5784 = vmatpush1.msra.mxu0 0.0
  %5785 = vmatprep.subr.mxu0 0.0
  %5786 = vmatpush1.msra.mxu0 0.0
  %5787 = vmatprep.subr.mxu0 0.0
  %5788 = vmatpush1.msra.mxu0 0.0
  %5789 = vmatprep.subr.mxu0 0.0
  %5790 = vmatpush1.msra.mxu0 0.0
  %5791 = vmatprep.subr.mxu0 0.0
  %5792 = vmatpush1.msra.mxu0 0.0
  %5793 = vmatprep.subr.mxu0 0.0
  %5794 = vmatpush1.msra.mxu0 0.0
  %5795 = vmatprep.subr.mxu0 0.0
  %5796 = vmatpush1.msra.mxu0 0.0
  %5797 = vmatprep.mubr.f32.mxu0 0.0
  %v5798 = vand.u32 %v5544, 4294901760
  %5799 = vmatmul.mubr.f32.gmra.mrb[0].mxu0 %v5798
  %v5800 = vpop.f32.mrb[0].mxu0
  %v5801 = vadd.f32 %v5650, %v5800
  %v5802 = vpop.f32.mrb[0].mxu0
  %5803 = vdwg.mxu0
  %5804 = vmatprep.subr.mxu0 0.0
  %v5805 = vand.u32 %v5546, 4294901760
  %v5806 = vsub.f32 %v5546, %v5805
  %5807 = vmatpush1.msra.mxu0 %v5806
  %5808 = vmatprep.subr.mxu0 0.0
  %v5809 = vand.u32 %v5547, 4294901760
  %v5810 = vsub.f32 %v5547, %v5809
  %5811 = vmatpush1.msra.mxu0 %v5810
  %5812 = vmatprep.subr.mxu0 0.0
  %v5813 = vand.u32 %v5548, 4294901760
  %v5814 = vsub.f32 %v5548, %v5813
  %5815 = vmatpush1.msra.mxu0 %v5814
  %5816 = vmatprep.subr.mxu0 0.0
  %v5817 = vand.u32 %v5549, 4294901760
  %v5818 = vsub.f32 %v5549, %v5817
  %5819 = vmatpush1.msra.mxu0 %v5818
  %5820 = vmatprep.subr.mxu0 0.0
  %v5821 = vand.u32 %v5550, 4294901760
  %v5822 = vsub.f32 %v5550, %v5821
  %5823 = vmatpush1.msra.mxu0 %v5822
  %5824 = vmatprep.subr.mxu0 0.0
  %v5825 = vand.u32 %v5551, 4294901760
  %v5826 = vsub.f32 %v5551, %v5825
  %5827 = vmatpush1.msra.mxu0 %v5826
  %5828 = vmatprep.subr.mxu0 0.0
  %v5829 = vand.u32 %v5552, 4294901760
  %v5830 = vsub.f32 %v5552, %v5829
  %5831 = vmatpush1.msra.mxu0 %v5830
  %5832 = vmatprep.subr.mxu0 0.0
  %v5833 = vand.u32 %v5553, 4294901760
  %v5834 = vsub.f32 %v5553, %v5833
  %5835 = vmatpush1.msra.mxu0 %v5834
  %5836 = vmatprep.subr.mxu0 0.0
  %v5837 = vand.u32 %v5554, 4294901760
  %v5838 = vsub.f32 %v5554, %v5837
  %5839 = vmatpush1.msra.mxu0 %v5838
  %5840 = vmatprep.subr.mxu0 0.0
  %v5841 = vand.u32 %v5555, 4294901760
  %v5842 = vsub.f32 %v5555, %v5841
  %5843 = vmatpush1.msra.mxu0 %v5842
  %5844 = vmatprep.subr.mxu0 0.0
  %v5845 = vand.u32 %v5556, 4294901760
  %v5846 = vsub.f32 %v5556, %v5845
  %5847 = vmatpush1.msra.mxu0 %v5846
  %5848 = vmatprep.subr.mxu0 0.0
  %v5849 = vand.u32 %v5557, 4294901760
  %v5850 = vsub.f32 %v5557, %v5849
  %5851 = vmatpush1.msra.mxu0 %v5850
  %5852 = vmatprep.subr.mxu0 0.0
  %v5853 = vand.u32 %v5558, 4294901760
  %v5854 = vsub.f32 %v5558, %v5853
  %5855 = vmatpush1.msra.mxu0 %v5854
  %5856 = vmatprep.subr.mxu0 0.0
  %v5857 = vand.u32 %v5559, 4294901760
  %v5858 = vsub.f32 %v5559, %v5857
  %5859 = vmatpush1.msra.mxu0 %v5858
  %5860 = vmatprep.subr.mxu0 0.0
  %v5861 = vand.u32 %v5560, 4294901760
  %v5862 = vsub.f32 %v5560, %v5861
  %5863 = vmatpush1.msra.mxu0 %v5862
  %5864 = vmatprep.subr.mxu0 0.0
  %v5865 = vand.u32 %v5561, 4294901760
  %v5866 = vsub.f32 %v5561, %v5865
  %5867 = vmatpush1.msra.mxu0 %v5866
  %5868 = vmatprep.subr.mxu0 0.0
  %5869 = vmatpush1.msra.mxu0 0.0
  %5870 = vmatprep.subr.mxu0 0.0
  %5871 = vmatpush1.msra.mxu0 0.0
  %5872 = vmatprep.subr.mxu0 0.0
  %5873 = vmatpush1.msra.mxu0 0.0
  %5874 = vmatprep.subr.mxu0 0.0
  %5875 = vmatpush1.msra.mxu0 0.0
  %5876 = vmatprep.subr.mxu0 0.0
  %5877 = vmatpush1.msra.mxu0 0.0
  %5878 = vmatprep.subr.mxu0 0.0
  %5879 = vmatpush1.msra.mxu0 0.0
  %5880 = vmatprep.subr.mxu0 0.0
  %5881 = vmatpush1.msra.mxu0 0.0
  %5882 = vmatprep.subr.mxu0 0.0
  %5883 = vmatpush1.msra.mxu0 0.0
  %5884 = vmatprep.subr.mxu0 0.0
  %5885 = vmatpush1.msra.mxu0 0.0
  %5886 = vmatprep.subr.mxu0 0.0
  %5887 = vmatpush1.msra.mxu0 0.0
  %5888 = vmatprep.subr.mxu0 0.0
  %5889 = vmatpush1.msra.mxu0 0.0
  %5890 = vmatprep.subr.mxu0 0.0
  %5891 = vmatpush1.msra.mxu0 0.0
  %5892 = vmatprep.subr.mxu0 0.0
  %5893 = vmatpush1.msra.mxu0 0.0
  %5894 = vmatprep.subr.mxu0 0.0
  %5895 = vmatpush1.msra.mxu0 0.0
  %5896 = vmatprep.subr.mxu0 0.0
  %5897 = vmatpush1.msra.mxu0 0.0
  %5898 = vmatprep.subr.mxu0 0.0
  %5899 = vmatpush1.msra.mxu0 0.0
  %5900 = vmatprep.mubr.f32.mxu0 0.0
  %v5901 = vand.u32 %v5544, 4294901760
  %v5902 = vsub.f32 %v5544, %v5901
  %5903 = vmatmul.mubr.f32.gmra.mrb[0].mxu0 %v5902
  %v5904 = vpop.f32.mrb[0].mxu0
  %v5905 = vadd.f32 %v5801, %v5904
  %v5906 = vpop.f32.mrb[0].mxu0
  %5907 = vdwg.mxu0
  %5908 = vmatprep.subr.mxu0 0.0
  %v5909 = vand.u32 %v5546, 4294901760
  %5910 = vmatpush1.msra.mxu0 %v5909
  %5911 = vmatprep.subr.mxu0 0.0
  %v5912 = vand.u32 %v5547, 4294901760
  %5913 = vmatpush1.msra.mxu0 %v5912
  %5914 = vmatprep.subr.mxu0 0.0
  %v5915 = vand.u32 %v5548, 4294901760
  %5916 = vmatpush1.msra.mxu0 %v5915
  %5917 = vmatprep.subr.mxu0 0.0
  %v5918 = vand.u32 %v5549, 4294901760
  %5919 = vmatpush1.msra.mxu0 %v5918
  %5920 = vmatprep.subr.mxu0 0.0
  %v5921 = vand.u32 %v5550, 4294901760
  %5922 = vmatpush1.msra.mxu0 %v5921
  %5923 = vmatprep.subr.mxu0 0.0
  %v5924 = vand.u32 %v5551, 4294901760
  %5925 = vmatpush1.msra.mxu0 %v5924
  %5926 = vmatprep.subr.mxu0 0.0
  %v5927 = vand.u32 %v5552, 4294901760
  %5928 = vmatpush1.msra.mxu0 %v5927
  %5929 = vmatprep.subr.mxu0 0.0
  %v5930 = vand.u32 %v5553, 4294901760
  %5931 = vmatpush1.msra.mxu0 %v5930
  %5932 = vmatprep.subr.mxu0 0.0
  %v5933 = vand.u32 %v5554, 4294901760
  %5934 = vmatpush1.msra.mxu0 %v5933
  %5935 = vmatprep.subr.mxu0 0.0
  %v5936 = vand.u32 %v5555, 4294901760
  %5937 = vmatpush1.msra.mxu0 %v5936
  %5938 = vmatprep.subr.mxu0 0.0
  %v5939 = vand.u32 %v5556, 4294901760
  %5940 = vmatpush1.msra.mxu0 %v5939
  %5941 = vmatprep.subr.mxu0 0.0
  %v5942 = vand.u32 %v5557, 4294901760
  %5943 = vmatpush1.msra.mxu0 %v5942
  %5944 = vmatprep.subr.mxu0 0.0
  %v5945 = vand.u32 %v5558, 4294901760
  %5946 = vmatpush1.msra.mxu0 %v5945
  %5947 = vmatprep.subr.mxu0 0.0
  %v5948 = vand.u32 %v5559, 4294901760
  %5949 = vmatpush1.msra.mxu0 %v5948
  %5950 = vmatprep.subr.mxu0 0.0
  %v5951 = vand.u32 %v5560, 4294901760
  %5952 = vmatpush1.msra.mxu0 %v5951
  %5953 = vmatprep.subr.mxu0 0.0
  %v5954 = vand.u32 %v5561, 4294901760
  %5955 = vmatpush1.msra.mxu0 %v5954
  %5956 = vmatprep.subr.mxu0 0.0
  %5957 = vmatpush1.msra.mxu0 0.0
  %5958 = vmatprep.subr.mxu0 0.0
  %5959 = vmatpush1.msra.mxu0 0.0
  %5960 = vmatprep.subr.mxu0 0.0
  %5961 = vmatpush1.msra.mxu0 0.0
  %5962 = vmatprep.subr.mxu0 0.0
  %5963 = vmatpush1.msra.mxu0 0.0
  %5964 = vmatprep.subr.mxu0 0.0
  %5965 = vmatpush1.msra.mxu0 0.0
  %5966 = vmatprep.subr.mxu0 0.0
  %5967 = vmatpush1.msra.mxu0 0.0
  %5968 = vmatprep.subr.mxu0 0.0
  %5969 = vmatpush1.msra.mxu0 0.0
  %5970 = vmatprep.subr.mxu0 0.0
  %5971 = vmatpush1.msra.mxu0 0.0
  %5972 = vmatprep.subr.mxu0 0.0
  %5973 = vmatpush1.msra.mxu0 0.0
  %5974 = vmatprep.subr.mxu0 0.0
  %5975 = vmatpush1.msra.mxu0 0.0
  %5976 = vmatprep.subr.mxu0 0.0
  %5977 = vmatpush1.msra.mxu0 0.0
  %5978 = vmatprep.subr.mxu0 0.0
  %5979 = vmatpush1.msra.mxu0 0.0
  %5980 = vmatprep.subr.mxu0 0.0
  %5981 = vmatpush1.msra.mxu0 0.0
  %5982 = vmatprep.subr.mxu0 0.0
  %5983 = vmatpush1.msra.mxu0 0.0
  %5984 = vmatprep.subr.mxu0 0.0
  %5985 = vmatpush1.msra.mxu0 0.0
  %5986 = vmatprep.subr.mxu0 0.0
  %5987 = vmatpush1.msra.mxu0 0.0
  %5988 = vmatprep.mubr.f32.mxu0 0.0
  %v5989 = vand.u32 %v5544, 4294901760
  %v5990 = vsub.f32 %v5544, %v5989
  %v5991 = vand.u32 %v5990, 4294901760
  %5992 = vmatmul.mubr.f32.gmra.mrb[0].mxu0 %v5991
  %v5993 = vpop.f32.mrb[0].mxu0
  %v5994 = vadd.f32 %v5905, %v5993
  %v5995 = vpop.f32.mrb[0].mxu0
  %5996 = vdwg.mxu0
  %5997 = vmatprep.subr.mxu0 0.0
  %v5998 = vand.u32 %v5546, 4294901760
  %v5999 = vsub.f32 %v5546, %v5998
  %v6000 = vand.u32 %v5999, 4294901760
  %6001 = vmatpush1.msra.mxu0 %v6000
  %6002 = vmatprep.subr.mxu0 0.0
  %v6003 = vand.u32 %v5547, 4294901760
  %v6004 = vsub.f32 %v5547, %v6003
  %v6005 = vand.u32 %v6004, 4294901760
  %6006 = vmatpush1.msra.mxu0 %v6005
  %6007 = vmatprep.subr.mxu0 0.0
  %v6008 = vand.u32 %v5548, 4294901760
  %v6009 = vsub.f32 %v5548, %v6008
  %v6010 = vand.u32 %v6009, 4294901760
  %6011 = vmatpush1.msra.mxu0 %v6010
  %6012 = vmatprep.subr.mxu0 0.0
  %v6013 = vand.u32 %v5549, 4294901760
  %v6014 = vsub.f32 %v5549, %v6013
  %v6015 = vand.u32 %v6014, 4294901760
  %6016 = vmatpush1.msra.mxu0 %v6015
  %6017 = vmatprep.subr.mxu0 0.0
  %v6018 = vand.u32 %v5550, 4294901760
  %v6019 = vsub.f32 %v5550, %v6018
  %v6020 = vand.u32 %v6019, 4294901760
  %6021 = vmatpush1.msra.mxu0 %v6020
  %6022 = vmatprep.subr.mxu0 0.0
  %v6023 = vand.u32 %v5551, 4294901760
  %v6024 = vsub.f32 %v5551, %v6023
  %v6025 = vand.u32 %v6024, 4294901760
  %6026 = vmatpush1.msra.mxu0 %v6025
  %6027 = vmatprep.subr.mxu0 0.0
  %v6028 = vand.u32 %v5552, 4294901760
  %v6029 = vsub.f32 %v5552, %v6028
  %v6030 = vand.u32 %v6029, 4294901760
  %6031 = vmatpush1.msra.mxu0 %v6030
  %6032 = vmatprep.subr.mxu0 0.0
  %v6033 = vand.u32 %v5553, 4294901760
  %v6034 = vsub.f32 %v5553, %v6033
  %v6035 = vand.u32 %v6034, 4294901760
  %6036 = vmatpush1.msra.mxu0 %v6035
  %6037 = vmatprep.subr.mxu0 0.0
  %v6038 = vand.u32 %v5554, 4294901760
  %v6039 = vsub.f32 %v5554, %v6038
  %v6040 = vand.u32 %v6039, 4294901760
  %6041 = vmatpush1.msra.mxu0 %v6040
  %6042 = vmatprep.subr.mxu0 0.0
  %v6043 = vand.u32 %v5555, 4294901760
  %v6044 = vsub.f32 %v5555, %v6043
  %v6045 = vand.u32 %v6044, 4294901760
  %6046 = vmatpush1.msra.mxu0 %v6045
  %6047 = vmatprep.subr.mxu0 0.0
  %v6048 = vand.u32 %v5556, 4294901760
  %v6049 = vsub.f32 %v5556, %v6048
  %v6050 = vand.u32 %v6049, 4294901760
  %6051 = vmatpush1.msra.mxu0 %v6050
  %6052 = vmatprep.subr.mxu0 0.0
  %v6053 = vand.u32 %v5557, 4294901760
  %v6054 = vsub.f32 %v5557, %v6053
  %v6055 = vand.u32 %v6054, 4294901760
  %6056 = vmatpush1.msra.mxu0 %v6055
  %6057 = vmatprep.subr.mxu0 0.0
  %v6058 = vand.u32 %v5558, 4294901760
  %v6059 = vsub.f32 %v5558, %v6058
  %v6060 = vand.u32 %v6059, 4294901760
  %6061 = vmatpush1.msra.mxu0 %v6060
  %6062 = vmatprep.subr.mxu0 0.0
  %v6063 = vand.u32 %v5559, 4294901760
  %v6064 = vsub.f32 %v5559, %v6063
  %v6065 = vand.u32 %v6064, 4294901760
  %6066 = vmatpush1.msra.mxu0 %v6065
  %6067 = vmatprep.subr.mxu0 0.0
  %v6068 = vand.u32 %v5560, 4294901760
  %v6069 = vsub.f32 %v5560, %v6068
  %v6070 = vand.u32 %v6069, 4294901760
  %6071 = vmatpush1.msra.mxu0 %v6070
  %6072 = vmatprep.subr.mxu0 0.0
  %v6073 = vand.u32 %v5561, 4294901760
  %v6074 = vsub.f32 %v5561, %v6073
  %v6075 = vand.u32 %v6074, 4294901760
  %6076 = vmatpush1.msra.mxu0 %v6075
  %6077 = vmatprep.subr.mxu0 0.0
  %6078 = vmatpush1.msra.mxu0 0.0
  %6079 = vmatprep.subr.mxu0 0.0
  %6080 = vmatpush1.msra.mxu0 0.0
  %6081 = vmatprep.subr.mxu0 0.0
  %6082 = vmatpush1.msra.mxu0 0.0
  %6083 = vmatprep.subr.mxu0 0.0
  %6084 = vmatpush1.msra.mxu0 0.0
  %6085 = vmatprep.subr.mxu0 0.0
  %6086 = vmatpush1.msra.mxu0 0.0
  %6087 = vmatprep.subr.mxu0 0.0
  %6088 = vmatpush1.msra.mxu0 0.0
  %6089 = vmatprep.subr.mxu0 0.0
  %6090 = vmatpush1.msra.mxu0 0.0
  %6091 = vmatprep.subr.mxu0 0.0
  %6092 = vmatpush1.msra.mxu0 0.0
  %6093 = vmatprep.subr.mxu0 0.0
  %6094 = vmatpush1.msra.mxu0 0.0
  %6095 = vmatprep.subr.mxu0 0.0
  %6096 = vmatpush1.msra.mxu0 0.0
  %6097 = vmatprep.subr.mxu0 0.0
  %6098 = vmatpush1.msra.mxu0 0.0
  %6099 = vmatprep.subr.mxu0 0.0
  %6100 = vmatpush1.msra.mxu0 0.0
  %6101 = vmatprep.subr.mxu0 0.0
  %6102 = vmatpush1.msra.mxu0 0.0
  %6103 = vmatprep.subr.mxu0 0.0
  %6104 = vmatpush1.msra.mxu0 0.0
  %6105 = vmatprep.subr.mxu0 0.0
  %6106 = vmatpush1.msra.mxu0 0.0
  %6107 = vmatprep.subr.mxu0 0.0
  %6108 = vmatpush1.msra.mxu0 0.0
  %6109 = vmatprep.mubr.f32.mxu0 0.0
  %v6110 = vand.u32 %v5544, 4294901760
  %6111 = vmatmul.mubr.f32.gmra.mrb[0].mxu0 %v6110
  %v6112 = vpop.f32.mrb[0].mxu0
  %v6113 = vadd.f32 %v5994, %v6112
  %v6114 = vpop.f32.mrb[0].mxu0
  %6115 = vdwg.mxu0
  %6116 = vmatprep.subr.mxu0 0.0
  %v6117 = vand.u32 %v5546, 4294901760
  %6118 = vmatpush1.msra.mxu0 %v6117
  %6119 = vmatprep.subr.mxu0 0.0
  %v6120 = vand.u32 %v5547, 4294901760
  %6121 = vmatpush1.msra.mxu0 %v6120
  %6122 = vmatprep.subr.mxu0 0.0
  %v6123 = vand.u32 %v5548, 4294901760
  %6124 = vmatpush1.msra.mxu0 %v6123
  %6125 = vmatprep.subr.mxu0 0.0
  %v6126 = vand.u32 %v5549, 4294901760
  %6127 = vmatpush1.msra.mxu0 %v6126
  %6128 = vmatprep.subr.mxu0 0.0
  %v6129 = vand.u32 %v5550, 4294901760
  %6130 = vmatpush1.msra.mxu0 %v6129
  %6131 = vmatprep.subr.mxu0 0.0
  %v6132 = vand.u32 %v5551, 4294901760
  %6133 = vmatpush1.msra.mxu0 %v6132
  %6134 = vmatprep.subr.mxu0 0.0
  %v6135 = vand.u32 %v5552, 4294901760
  %6136 = vmatpush1.msra.mxu0 %v6135
  %6137 = vmatprep.subr.mxu0 0.0
  %v6138 = vand.u32 %v5553, 4294901760
  %6139 = vmatpush1.msra.mxu0 %v6138
  %6140 = vmatprep.subr.mxu0 0.0
  %v6141 = vand.u32 %v5554, 4294901760
  %6142 = vmatpush1.msra.mxu0 %v6141
  %6143 = vmatprep.subr.mxu0 0.0
  %v6144 = vand.u32 %v5555, 4294901760
  %6145 = vmatpush1.msra.mxu0 %v6144
  %6146 = vmatprep.subr.mxu0 0.0
  %v6147 = vand.u32 %v5556, 4294901760
  %6148 = vmatpush1.msra.mxu0 %v6147
  %6149 = vmatprep.subr.mxu0 0.0
  %v6150 = vand.u32 %v5557, 4294901760
  %6151 = vmatpush1.msra.mxu0 %v6150
  %6152 = vmatprep.subr.mxu0 0.0
  %v6153 = vand.u32 %v5558, 4294901760
  %6154 = vmatpush1.msra.mxu0 %v6153
  %6155 = vmatprep.subr.mxu0 0.0
  %v6156 = vand.u32 %v5559, 4294901760
  %6157 = vmatpush1.msra.mxu0 %v6156
  %6158 = vmatprep.subr.mxu0 0.0
  %v6159 = vand.u32 %v5560, 4294901760
  %6160 = vmatpush1.msra.mxu0 %v6159
  %6161 = vmatprep.subr.mxu0 0.0
  %v6162 = vand.u32 %v5561, 4294901760
  %6163 = vmatpush1.msra.mxu0 %v6162
  %6164 = vmatprep.subr.mxu0 0.0
  %6165 = vmatpush1.msra.mxu0 0.0
  %6166 = vmatprep.subr.mxu0 0.0
  %6167 = vmatpush1.msra.mxu0 0.0
  %6168 = vmatprep.subr.mxu0 0.0
  %6169 = vmatpush1.msra.mxu0 0.0
  %6170 = vmatprep.subr.mxu0 0.0
  %6171 = vmatpush1.msra.mxu0 0.0
  %6172 = vmatprep.subr.mxu0 0.0
  %6173 = vmatpush1.msra.mxu0 0.0
  %6174 = vmatprep.subr.mxu0 0.0
  %6175 = vmatpush1.msra.mxu0 0.0
  %6176 = vmatprep.subr.mxu0 0.0
  %6177 = vmatpush1.msra.mxu0 0.0
  %6178 = vmatprep.subr.mxu0 0.0
  %6179 = vmatpush1.msra.mxu0 0.0
  %6180 = vmatprep.subr.mxu0 0.0
  %6181 = vmatpush1.msra.mxu0 0.0
  %6182 = vmatprep.subr.mxu0 0.0
  %6183 = vmatpush1.msra.mxu0 0.0
  %6184 = vmatprep.subr.mxu0 0.0
  %6185 = vmatpush1.msra.mxu0 0.0
  %6186 = vmatprep.subr.mxu0 0.0
  %6187 = vmatpush1.msra.mxu0 0.0
  %6188 = vmatprep.subr.mxu0 0.0
  %6189 = vmatpush1.msra.mxu0 0.0
  %6190 = vmatprep.subr.mxu0 0.0
  %6191 = vmatpush1.msra.mxu0 0.0
  %6192 = vmatprep.subr.mxu0 0.0
  %6193 = vmatpush1.msra.mxu0 0.0
  %6194 = vmatprep.subr.mxu0 0.0
  %6195 = vmatpush1.msra.mxu0 0.0
  %6196 = vmatprep.mubr.f32.mxu0 0.0
  %v6197 = vand.u32 %v5544, 4294901760
  %6198 = vmatmul.mubr.f32.gmra.mrb[0].mxu0 %v6197
  %v6199 = vpop.f32.mrb[0].mxu0
  %v6200 = vadd.f32 %v6113, %v6199
  %v6201 = vpop.f32.mrb[0].mxu0
  %6202 = vdwg.mxu0
  %v6203 = vadd.f32 %v5542, %v6200
  %s6204 = scalar_lea.vmem [#allocation2], 5
  %v6205 = vld [vmem:[%s6204] ss:$8 sm:$0xf]
  %s6206 = scalar_lea.vmem %s4, 640
  %v6207 = vld [vmem:[%s6206] sm:$0xff]
  %v6208 = vld [vmem:[%s6206 + $0x8] sm:$0xff]
  %v6209 = vld [vmem:[%s6206 + $0x10] sm:$0xff]
  %v6210 = vld [vmem:[%s6206 + $0x18] sm:$0xff]
  %v6211 = vld [vmem:[%s6206 + $0x20] sm:$0xff]
  %v6212 = vld [vmem:[%s6206 + $0x28] sm:$0xff]
  %v6213 = vld [vmem:[%s6206 + $0x30] sm:$0xff]
  %v6214 = vld [vmem:[%s6206 + $0x38] sm:$0xff]
  %v6215 = vld [vmem:[%s6206 + $0x40] sm:$0xff]
  %v6216 = vld [vmem:[%s6206 + $0x48] sm:$0xff]
  %v6217 = vld [vmem:[%s6206 + $0x50] sm:$0xff]
  %v6218 = vld [vmem:[%s6206 + $0x58] sm:$0xff]
  %v6219 = vld [vmem:[%s6206 + $0x60] sm:$0xff]
  %v6220 = vld [vmem:[%s6206 + $0x68] sm:$0xff]
  %v6221 = vld [vmem:[%s6206 + $0x70] sm:$0xff]
  %v6222 = vld [vmem:[%s6206 + $0x78] sm:$0xff]
  %6223 = vmatprep.subr.mxu0 0.0
  %v6224 = vand.u32 %v6207, 4294901760
  %6225 = vmatpush1.msra.mxu0 %v6224
  %6226 = vmatprep.subr.mxu0 0.0
  %v6227 = vand.u32 %v6208, 4294901760
  %6228 = vmatpush1.msra.mxu0 %v6227
  %6229 = vmatprep.subr.mxu0 0.0
  %v6230 = vand.u32 %v6209, 4294901760
  %6231 = vmatpush1.msra.mxu0 %v6230
  %6232 = vmatprep.subr.mxu0 0.0
  %v6233 = vand.u32 %v6210, 4294901760
  %6234 = vmatpush1.msra.mxu0 %v6233
  %6235 = vmatprep.subr.mxu0 0.0
  %v6236 = vand.u32 %v6211, 4294901760
  %6237 = vmatpush1.msra.mxu0 %v6236
  %6238 = vmatprep.subr.mxu0 0.0
  %v6239 = vand.u32 %v6212, 4294901760
  %6240 = vmatpush1.msra.mxu0 %v6239
  %6241 = vmatprep.subr.mxu0 0.0
  %v6242 = vand.u32 %v6213, 4294901760
  %6243 = vmatpush1.msra.mxu0 %v6242
  %6244 = vmatprep.subr.mxu0 0.0
  %v6245 = vand.u32 %v6214, 4294901760
  %6246 = vmatpush1.msra.mxu0 %v6245
  %6247 = vmatprep.subr.mxu0 0.0
  %v6248 = vand.u32 %v6215, 4294901760
  %6249 = vmatpush1.msra.mxu0 %v6248
  %6250 = vmatprep.subr.mxu0 0.0
  %v6251 = vand.u32 %v6216, 4294901760
  %6252 = vmatpush1.msra.mxu0 %v6251
  %6253 = vmatprep.subr.mxu0 0.0
  %v6254 = vand.u32 %v6217, 4294901760
  %6255 = vmatpush1.msra.mxu0 %v6254
  %6256 = vmatprep.subr.mxu0 0.0
  %v6257 = vand.u32 %v6218, 4294901760
  %6258 = vmatpush1.msra.mxu0 %v6257
  %6259 = vmatprep.subr.mxu0 0.0
  %v6260 = vand.u32 %v6219, 4294901760
  %6261 = vmatpush1.msra.mxu0 %v6260
  %6262 = vmatprep.subr.mxu0 0.0
  %v6263 = vand.u32 %v6220, 4294901760
  %6264 = vmatpush1.msra.mxu0 %v6263
  %6265 = vmatprep.subr.mxu0 0.0
  %v6266 = vand.u32 %v6221, 4294901760
  %6267 = vmatpush1.msra.mxu0 %v6266
  %6268 = vmatprep.subr.mxu0 0.0
  %v6269 = vand.u32 %v6222, 4294901760
  %6270 = vmatpush1.msra.mxu0 %v6269
  %6271 = vmatprep.subr.mxu0 0.0
  %6272 = vmatpush1.msra.mxu0 0.0
  %6273 = vmatprep.subr.mxu0 0.0
  %6274 = vmatpush1.msra.mxu0 0.0
  %6275 = vmatprep.subr.mxu0 0.0
  %6276 = vmatpush1.msra.mxu0 0.0
  %6277 = vmatprep.subr.mxu0 0.0
  %6278 = vmatpush1.msra.mxu0 0.0
  %6279 = vmatprep.subr.mxu0 0.0
  %6280 = vmatpush1.msra.mxu0 0.0
  %6281 = vmatprep.subr.mxu0 0.0
  %6282 = vmatpush1.msra.mxu0 0.0
  %6283 = vmatprep.subr.mxu0 0.0
  %6284 = vmatpush1.msra.mxu0 0.0
  %6285 = vmatprep.subr.mxu0 0.0
  %6286 = vmatpush1.msra.mxu0 0.0
  %6287 = vmatprep.subr.mxu0 0.0
  %6288 = vmatpush1.msra.mxu0 0.0
  %6289 = vmatprep.subr.mxu0 0.0
  %6290 = vmatpush1.msra.mxu0 0.0
  %6291 = vmatprep.subr.mxu0 0.0
  %6292 = vmatpush1.msra.mxu0 0.0
  %6293 = vmatprep.subr.mxu0 0.0
  %6294 = vmatpush1.msra.mxu0 0.0
  %6295 = vmatprep.subr.mxu0 0.0
  %6296 = vmatpush1.msra.mxu0 0.0
  %6297 = vmatprep.subr.mxu0 0.0
  %6298 = vmatpush1.msra.mxu0 0.0
  %6299 = vmatprep.subr.mxu0 0.0
  %6300 = vmatpush1.msra.mxu0 0.0
  %6301 = vmatprep.subr.mxu0 0.0
  %6302 = vmatpush1.msra.mxu0 0.0
  %6303 = vmatprep.mubr.f32.mxu0 0.0
  %v6304 = vand.u32 %v6205, 4294901760
  %v6305 = vsub.f32 %v6205, %v6304
  %v6306 = vand.u32 %v6305, 4294901760
  %v6307 = vsub.f32 %v6305, %v6306
  %v6308 = vand.u32 %v6307, 4294901760
  %6309 = vmatmul.mubr.f32.gmra.mrb[0].mxu0 %v6308
  %v6310 = vpop.f32.mrb[0].mxu0
  %v6311 = vadd.f32 0.0, %v6310
  %v6312 = vpop.f32.mrb[0].mxu0
  %6313 = vdwg.mxu0
  %6314 = vmatprep.subr.mxu0 0.0
  %v6315 = vand.u32 %v6207, 4294901760
  %v6316 = vsub.f32 %v6207, %v6315
  %v6317 = vand.u32 %v6316, 4294901760
  %v6318 = vsub.f32 %v6316, %v6317
  %v6319 = vand.u32 %v6318, 4294901760
  %6320 = vmatpush1.msra.mxu0 %v6319
  %6321 = vmatprep.subr.mxu0 0.0
  %v6322 = vand.u32 %v6208, 4294901760
  %v6323 = vsub.f32 %v6208, %v6322
  %v6324 = vand.u32 %v6323, 4294901760
  %v6325 = vsub.f32 %v6323, %v6324
  %v6326 = vand.u32 %v6325, 4294901760
  %6327 = vmatpush1.msra.mxu0 %v6326
  %6328 = vmatprep.subr.mxu0 0.0
  %v6329 = vand.u32 %v6209, 4294901760
  %v6330 = vsub.f32 %v6209, %v6329
  %v6331 = vand.u32 %v6330, 4294901760
  %v6332 = vsub.f32 %v6330, %v6331
  %v6333 = vand.u32 %v6332, 4294901760
  %6334 = vmatpush1.msra.mxu0 %v6333
  %6335 = vmatprep.subr.mxu0 0.0
  %v6336 = vand.u32 %v6210, 4294901760
  %v6337 = vsub.f32 %v6210, %v6336
  %v6338 = vand.u32 %v6337, 4294901760
  %v6339 = vsub.f32 %v6337, %v6338
  %v6340 = vand.u32 %v6339, 4294901760
  %6341 = vmatpush1.msra.mxu0 %v6340
  %6342 = vmatprep.subr.mxu0 0.0
  %v6343 = vand.u32 %v6211, 4294901760
  %v6344 = vsub.f32 %v6211, %v6343
  %v6345 = vand.u32 %v6344, 4294901760
  %v6346 = vsub.f32 %v6344, %v6345
  %v6347 = vand.u32 %v6346, 4294901760
  %6348 = vmatpush1.msra.mxu0 %v6347
  %6349 = vmatprep.subr.mxu0 0.0
  %v6350 = vand.u32 %v6212, 4294901760
  %v6351 = vsub.f32 %v6212, %v6350
  %v6352 = vand.u32 %v6351, 4294901760
  %v6353 = vsub.f32 %v6351, %v6352
  %v6354 = vand.u32 %v6353, 4294901760
  %6355 = vmatpush1.msra.mxu0 %v6354
  %6356 = vmatprep.subr.mxu0 0.0
  %v6357 = vand.u32 %v6213, 4294901760
  %v6358 = vsub.f32 %v6213, %v6357
  %v6359 = vand.u32 %v6358, 4294901760
  %v6360 = vsub.f32 %v6358, %v6359
  %v6361 = vand.u32 %v6360, 4294901760
  %6362 = vmatpush1.msra.mxu0 %v6361
  %6363 = vmatprep.subr.mxu0 0.0
  %v6364 = vand.u32 %v6214, 4294901760
  %v6365 = vsub.f32 %v6214, %v6364
  %v6366 = vand.u32 %v6365, 4294901760
  %v6367 = vsub.f32 %v6365, %v6366
  %v6368 = vand.u32 %v6367, 4294901760
  %6369 = vmatpush1.msra.mxu0 %v6368
  %6370 = vmatprep.subr.mxu0 0.0
  %v6371 = vand.u32 %v6215, 4294901760
  %v6372 = vsub.f32 %v6215, %v6371
  %v6373 = vand.u32 %v6372, 4294901760
  %v6374 = vsub.f32 %v6372, %v6373
  %v6375 = vand.u32 %v6374, 4294901760
  %6376 = vmatpush1.msra.mxu0 %v6375
  %6377 = vmatprep.subr.mxu0 0.0
  %v6378 = vand.u32 %v6216, 4294901760
  %v6379 = vsub.f32 %v6216, %v6378
  %v6380 = vand.u32 %v6379, 4294901760
  %v6381 = vsub.f32 %v6379, %v6380
  %v6382 = vand.u32 %v6381, 4294901760
  %6383 = vmatpush1.msra.mxu0 %v6382
  %6384 = vmatprep.subr.mxu0 0.0
  %v6385 = vand.u32 %v6217, 4294901760
  %v6386 = vsub.f32 %v6217, %v6385
  %v6387 = vand.u32 %v6386, 4294901760
  %v6388 = vsub.f32 %v6386, %v6387
  %v6389 = vand.u32 %v6388, 4294901760
  %6390 = vmatpush1.msra.mxu0 %v6389
  %6391 = vmatprep.subr.mxu0 0.0
  %v6392 = vand.u32 %v6218, 4294901760
  %v6393 = vsub.f32 %v6218, %v6392
  %v6394 = vand.u32 %v6393, 4294901760
  %v6395 = vsub.f32 %v6393, %v6394
  %v6396 = vand.u32 %v6395, 4294901760
  %6397 = vmatpush1.msra.mxu0 %v6396
  %6398 = vmatprep.subr.mxu0 0.0
  %v6399 = vand.u32 %v6219, 4294901760
  %v6400 = vsub.f32 %v6219, %v6399
  %v6401 = vand.u32 %v6400, 4294901760
  %v6402 = vsub.f32 %v6400, %v6401
  %v6403 = vand.u32 %v6402, 4294901760
  %6404 = vmatpush1.msra.mxu0 %v6403
  %6405 = vmatprep.subr.mxu0 0.0
  %v6406 = vand.u32 %v6220, 4294901760
  %v6407 = vsub.f32 %v6220, %v6406
  %v6408 = vand.u32 %v6407, 4294901760
  %v6409 = vsub.f32 %v6407, %v6408
  %v6410 = vand.u32 %v6409, 4294901760
  %6411 = vmatpush1.msra.mxu0 %v6410
  %6412 = vmatprep.subr.mxu0 0.0
  %v6413 = vand.u32 %v6221, 4294901760
  %v6414 = vsub.f32 %v6221, %v6413
  %v6415 = vand.u32 %v6414, 4294901760
  %v6416 = vsub.f32 %v6414, %v6415
  %v6417 = vand.u32 %v6416, 4294901760
  %6418 = vmatpush1.msra.mxu0 %v6417
  %6419 = vmatprep.subr.mxu0 0.0
  %v6420 = vand.u32 %v6222, 4294901760
  %v6421 = vsub.f32 %v6222, %v6420
  %v6422 = vand.u32 %v6421, 4294901760
  %v6423 = vsub.f32 %v6421, %v6422
  %v6424 = vand.u32 %v6423, 4294901760
  %6425 = vmatpush1.msra.mxu0 %v6424
  %6426 = vmatprep.subr.mxu0 0.0
  %6427 = vmatpush1.msra.mxu0 0.0
  %6428 = vmatprep.subr.mxu0 0.0
  %6429 = vmatpush1.msra.mxu0 0.0
  %6430 = vmatprep.subr.mxu0 0.0
  %6431 = vmatpush1.msra.mxu0 0.0
  %6432 = vmatprep.subr.mxu0 0.0
  %6433 = vmatpush1.msra.mxu0 0.0
  %6434 = vmatprep.subr.mxu0 0.0
  %6435 = vmatpush1.msra.mxu0 0.0
  %6436 = vmatprep.subr.mxu0 0.0
  %6437 = vmatpush1.msra.mxu0 0.0
  %6438 = vmatprep.subr.mxu0 0.0
  %6439 = vmatpush1.msra.mxu0 0.0
  %6440 = vmatprep.subr.mxu0 0.0
  %6441 = vmatpush1.msra.mxu0 0.0
  %6442 = vmatprep.subr.mxu0 0.0
  %6443 = vmatpush1.msra.mxu0 0.0
  %6444 = vmatprep.subr.mxu0 0.0
  %6445 = vmatpush1.msra.mxu0 0.0
  %6446 = vmatprep.subr.mxu0 0.0
  %6447 = vmatpush1.msra.mxu0 0.0
  %6448 = vmatprep.subr.mxu0 0.0
  %6449 = vmatpush1.msra.mxu0 0.0
  %6450 = vmatprep.subr.mxu0 0.0
  %6451 = vmatpush1.msra.mxu0 0.0
  %6452 = vmatprep.subr.mxu0 0.0
  %6453 = vmatpush1.msra.mxu0 0.0
  %6454 = vmatprep.subr.mxu0 0.0
  %6455 = vmatpush1.msra.mxu0 0.0
  %6456 = vmatprep.subr.mxu0 0.0
  %6457 = vmatpush1.msra.mxu0 0.0
  %6458 = vmatprep.mubr.f32.mxu0 0.0
  %v6459 = vand.u32 %v6205, 4294901760
  %6460 = vmatmul.mubr.f32.gmra.mrb[0].mxu0 %v6459
  %v6461 = vpop.f32.mrb[0].mxu0
  %v6462 = vadd.f32 %v6311, %v6461
  %v6463 = vpop.f32.mrb[0].mxu0
  %6464 = vdwg.mxu0
  %6465 = vmatprep.subr.mxu0 0.0
  %v6466 = vand.u32 %v6207, 4294901760
  %v6467 = vsub.f32 %v6207, %v6466
  %6468 = vmatpush1.msra.mxu0 %v6467
  %6469 = vmatprep.subr.mxu0 0.0
  %v6470 = vand.u32 %v6208, 4294901760
  %v6471 = vsub.f32 %v6208, %v6470
  %6472 = vmatpush1.msra.mxu0 %v6471
  %6473 = vmatprep.subr.mxu0 0.0
  %v6474 = vand.u32 %v6209, 4294901760
  %v6475 = vsub.f32 %v6209, %v6474
  %6476 = vmatpush1.msra.mxu0 %v6475
  %6477 = vmatprep.subr.mxu0 0.0
  %v6478 = vand.u32 %v6210, 4294901760
  %v6479 = vsub.f32 %v6210, %v6478
  %6480 = vmatpush1.msra.mxu0 %v6479
  %6481 = vmatprep.subr.mxu0 0.0
  %v6482 = vand.u32 %v6211, 4294901760
  %v6483 = vsub.f32 %v6211, %v6482
  %6484 = vmatpush1.msra.mxu0 %v6483
  %6485 = vmatprep.subr.mxu0 0.0
  %v6486 = vand.u32 %v6212, 4294901760
  %v6487 = vsub.f32 %v6212, %v6486
  %6488 = vmatpush1.msra.mxu0 %v6487
  %6489 = vmatprep.subr.mxu0 0.0
  %v6490 = vand.u32 %v6213, 4294901760
  %v6491 = vsub.f32 %v6213, %v6490
  %6492 = vmatpush1.msra.mxu0 %v6491
  %6493 = vmatprep.subr.mxu0 0.0
  %v6494 = vand.u32 %v6214, 4294901760
  %v6495 = vsub.f32 %v6214, %v6494
  %6496 = vmatpush1.msra.mxu0 %v6495
  %6497 = vmatprep.subr.mxu0 0.0
  %v6498 = vand.u32 %v6215, 4294901760
  %v6499 = vsub.f32 %v6215, %v6498
  %6500 = vmatpush1.msra.mxu0 %v6499
  %6501 = vmatprep.subr.mxu0 0.0
  %v6502 = vand.u32 %v6216, 4294901760
  %v6503 = vsub.f32 %v6216, %v6502
  %6504 = vmatpush1.msra.mxu0 %v6503
  %6505 = vmatprep.subr.mxu0 0.0
  %v6506 = vand.u32 %v6217, 4294901760
  %v6507 = vsub.f32 %v6217, %v6506
  %6508 = vmatpush1.msra.mxu0 %v6507
  %6509 = vmatprep.subr.mxu0 0.0
  %v6510 = vand.u32 %v6218, 4294901760
  %v6511 = vsub.f32 %v6218, %v6510
  %6512 = vmatpush1.msra.mxu0 %v6511
  %6513 = vmatprep.subr.mxu0 0.0
  %v6514 = vand.u32 %v6219, 4294901760
  %v6515 = vsub.f32 %v6219, %v6514
  %6516 = vmatpush1.msra.mxu0 %v6515
  %6517 = vmatprep.subr.mxu0 0.0
  %v6518 = vand.u32 %v6220, 4294901760
  %v6519 = vsub.f32 %v6220, %v6518
  %6520 = vmatpush1.msra.mxu0 %v6519
  %6521 = vmatprep.subr.mxu0 0.0
  %v6522 = vand.u32 %v6221, 4294901760
  %v6523 = vsub.f32 %v6221, %v6522
  %6524 = vmatpush1.msra.mxu0 %v6523
  %6525 = vmatprep.subr.mxu0 0.0
  %v6526 = vand.u32 %v6222, 4294901760
  %v6527 = vsub.f32 %v6222, %v6526
  %6528 = vmatpush1.msra.mxu0 %v6527
  %6529 = vmatprep.subr.mxu0 0.0
  %6530 = vmatpush1.msra.mxu0 0.0
  %6531 = vmatprep.subr.mxu0 0.0
  %6532 = vmatpush1.msra.mxu0 0.0
  %6533 = vmatprep.subr.mxu0 0.0
  %6534 = vmatpush1.msra.mxu0 0.0
  %6535 = vmatprep.subr.mxu0 0.0
  %6536 = vmatpush1.msra.mxu0 0.0
  %6537 = vmatprep.subr.mxu0 0.0
  %6538 = vmatpush1.msra.mxu0 0.0
  %6539 = vmatprep.subr.mxu0 0.0
  %6540 = vmatpush1.msra.mxu0 0.0
  %6541 = vmatprep.subr.mxu0 0.0
  %6542 = vmatpush1.msra.mxu0 0.0
  %6543 = vmatprep.subr.mxu0 0.0
  %6544 = vmatpush1.msra.mxu0 0.0
  %6545 = vmatprep.subr.mxu0 0.0
  %6546 = vmatpush1.msra.mxu0 0.0
  %6547 = vmatprep.subr.mxu0 0.0
  %6548 = vmatpush1.msra.mxu0 0.0
  %6549 = vmatprep.subr.mxu0 0.0
  %6550 = vmatpush1.msra.mxu0 0.0
  %6551 = vmatprep.subr.mxu0 0.0
  %6552 = vmatpush1.msra.mxu0 0.0
  %6553 = vmatprep.subr.mxu0 0.0
  %6554 = vmatpush1.msra.mxu0 0.0
  %6555 = vmatprep.subr.mxu0 0.0
  %6556 = vmatpush1.msra.mxu0 0.0
  %6557 = vmatprep.subr.mxu0 0.0
  %6558 = vmatpush1.msra.mxu0 0.0
  %6559 = vmatprep.subr.mxu0 0.0
  %6560 = vmatpush1.msra.mxu0 0.0
  %6561 = vmatprep.mubr.f32.mxu0 0.0
  %v6562 = vand.u32 %v6205, 4294901760
  %v6563 = vsub.f32 %v6205, %v6562
  %6564 = vmatmul.mubr.f32.gmra.mrb[0].mxu0 %v6563
  %v6565 = vpop.f32.mrb[0].mxu0
  %v6566 = vadd.f32 %v6462, %v6565
  %v6567 = vpop.f32.mrb[0].mxu0
  %6568 = vdwg.mxu0
  %6569 = vmatprep.subr.mxu0 0.0
  %v6570 = vand.u32 %v6207, 4294901760
  %6571 = vmatpush1.msra.mxu0 %v6570
  %6572 = vmatprep.subr.mxu0 0.0
  %v6573 = vand.u32 %v6208, 4294901760
  %6574 = vmatpush1.msra.mxu0 %v6573
  %6575 = vmatprep.subr.mxu0 0.0
  %v6576 = vand.u32 %v6209, 4294901760
  %6577 = vmatpush1.msra.mxu0 %v6576
  %6578 = vmatprep.subr.mxu0 0.0
  %v6579 = vand.u32 %v6210, 4294901760
  %6580 = vmatpush1.msra.mxu0 %v6579
  %6581 = vmatprep.subr.mxu0 0.0
  %v6582 = vand.u32 %v6211, 4294901760
  %6583 = vmatpush1.msra.mxu0 %v6582
  %6584 = vmatprep.subr.mxu0 0.0
  %v6585 = vand.u32 %v6212, 4294901760
  %6586 = vmatpush1.msra.mxu0 %v6585
  %6587 = vmatprep.subr.mxu0 0.0
  %v6588 = vand.u32 %v6213, 4294901760
  %6589 = vmatpush1.msra.mxu0 %v6588
  %6590 = vmatprep.subr.mxu0 0.0
  %v6591 = vand.u32 %v6214, 4294901760
  %6592 = vmatpush1.msra.mxu0 %v6591
  %6593 = vmatprep.subr.mxu0 0.0
  %v6594 = vand.u32 %v6215, 4294901760
  %6595 = vmatpush1.msra.mxu0 %v6594
  %6596 = vmatprep.subr.mxu0 0.0
  %v6597 = vand.u32 %v6216, 4294901760
  %6598 = vmatpush1.msra.mxu0 %v6597
  %6599 = vmatprep.subr.mxu0 0.0
  %v6600 = vand.u32 %v6217, 4294901760
  %6601 = vmatpush1.msra.mxu0 %v6600
  %6602 = vmatprep.subr.mxu0 0.0
  %v6603 = vand.u32 %v6218, 4294901760
  %6604 = vmatpush1.msra.mxu0 %v6603
  %6605 = vmatprep.subr.mxu0 0.0
  %v6606 = vand.u32 %v6219, 4294901760
  %6607 = vmatpush1.msra.mxu0 %v6606
  %6608 = vmatprep.subr.mxu0 0.0
  %v6609 = vand.u32 %v6220, 4294901760
  %6610 = vmatpush1.msra.mxu0 %v6609
  %6611 = vmatprep.subr.mxu0 0.0
  %v6612 = vand.u32 %v6221, 4294901760
  %6613 = vmatpush1.msra.mxu0 %v6612
  %6614 = vmatprep.subr.mxu0 0.0
  %v6615 = vand.u32 %v6222, 4294901760
  %6616 = vmatpush1.msra.mxu0 %v6615
  %6617 = vmatprep.subr.mxu0 0.0
  %6618 = vmatpush1.msra.mxu0 0.0
  %6619 = vmatprep.subr.mxu0 0.0
  %6620 = vmatpush1.msra.mxu0 0.0
  %6621 = vmatprep.subr.mxu0 0.0
  %6622 = vmatpush1.msra.mxu0 0.0
  %6623 = vmatprep.subr.mxu0 0.0
  %6624 = vmatpush1.msra.mxu0 0.0
  %6625 = vmatprep.subr.mxu0 0.0
  %6626 = vmatpush1.msra.mxu0 0.0
  %6627 = vmatprep.subr.mxu0 0.0
  %6628 = vmatpush1.msra.mxu0 0.0
  %6629 = vmatprep.subr.mxu0 0.0
  %6630 = vmatpush1.msra.mxu0 0.0
  %6631 = vmatprep.subr.mxu0 0.0
  %6632 = vmatpush1.msra.mxu0 0.0
  %6633 = vmatprep.subr.mxu0 0.0
  %6634 = vmatpush1.msra.mxu0 0.0
  %6635 = vmatprep.subr.mxu0 0.0
  %6636 = vmatpush1.msra.mxu0 0.0
  %6637 = vmatprep.subr.mxu0 0.0
  %6638 = vmatpush1.msra.mxu0 0.0
  %6639 = vmatprep.subr.mxu0 0.0
  %6640 = vmatpush1.msra.mxu0 0.0
  %6641 = vmatprep.subr.mxu0 0.0
  %6642 = vmatpush1.msra.mxu0 0.0
  %6643 = vmatprep.subr.mxu0 0.0
  %6644 = vmatpush1.msra.mxu0 0.0
  %6645 = vmatprep.subr.mxu0 0.0
  %6646 = vmatpush1.msra.mxu0 0.0
  %6647 = vmatprep.subr.mxu0 0.0
  %6648 = vmatpush1.msra.mxu0 0.0
  %6649 = vmatprep.mubr.f32.mxu0 0.0
  %v6650 = vand.u32 %v6205, 4294901760
  %v6651 = vsub.f32 %v6205, %v6650
  %v6652 = vand.u32 %v6651, 4294901760
  %6653 = vmatmul.mubr.f32.gmra.mrb[0].mxu0 %v6652
  %v6654 = vpop.f32.mrb[0].mxu0
  %v6655 = vadd.f32 %v6566, %v6654
  %v6656 = vpop.f32.mrb[0].mxu0
  %6657 = vdwg.mxu0
  %6658 = vmatprep.subr.mxu0 0.0
  %v6659 = vand.u32 %v6207, 4294901760
  %v6660 = vsub.f32 %v6207, %v6659
  %v6661 = vand.u32 %v6660, 4294901760
  %6662 = vmatpush1.msra.mxu0 %v6661
  %6663 = vmatprep.subr.mxu0 0.0
  %v6664 = vand.u32 %v6208, 4294901760
  %v6665 = vsub.f32 %v6208, %v6664
  %v6666 = vand.u32 %v6665, 4294901760
  %6667 = vmatpush1.msra.mxu0 %v6666
  %6668 = vmatprep.subr.mxu0 0.0
  %v6669 = vand.u32 %v6209, 4294901760
  %v6670 = vsub.f32 %v6209, %v6669
  %v6671 = vand.u32 %v6670, 4294901760
  %6672 = vmatpush1.msra.mxu0 %v6671
  %6673 = vmatprep.subr.mxu0 0.0
  %v6674 = vand.u32 %v6210, 4294901760
  %v6675 = vsub.f32 %v6210, %v6674
  %v6676 = vand.u32 %v6675, 4294901760
  %6677 = vmatpush1.msra.mxu0 %v6676
  %6678 = vmatprep.subr.mxu0 0.0
  %v6679 = vand.u32 %v6211, 4294901760
  %v6680 = vsub.f32 %v6211, %v6679
  %v6681 = vand.u32 %v6680, 4294901760
  %6682 = vmatpush1.msra.mxu0 %v6681
  %6683 = vmatprep.subr.mxu0 0.0
  %v6684 = vand.u32 %v6212, 4294901760
  %v6685 = vsub.f32 %v6212, %v6684
  %v6686 = vand.u32 %v6685, 4294901760
  %6687 = vmatpush1.msra.mxu0 %v6686
  %6688 = vmatprep.subr.mxu0 0.0
  %v6689 = vand.u32 %v6213, 4294901760
  %v6690 = vsub.f32 %v6213, %v6689
  %v6691 = vand.u32 %v6690, 4294901760
  %6692 = vmatpush1.msra.mxu0 %v6691
  %6693 = vmatprep.subr.mxu0 0.0
  %v6694 = vand.u32 %v6214, 4294901760
  %v6695 = vsub.f32 %v6214, %v6694
  %v6696 = vand.u32 %v6695, 4294901760
  %6697 = vmatpush1.msra.mxu0 %v6696
  %6698 = vmatprep.subr.mxu0 0.0
  %v6699 = vand.u32 %v6215, 4294901760
  %v6700 = vsub.f32 %v6215, %v6699
  %v6701 = vand.u32 %v6700, 4294901760
  %6702 = vmatpush1.msra.mxu0 %v6701
  %6703 = vmatprep.subr.mxu0 0.0
  %v6704 = vand.u32 %v6216, 4294901760
  %v6705 = vsub.f32 %v6216, %v6704
  %v6706 = vand.u32 %v6705, 4294901760
  %6707 = vmatpush1.msra.mxu0 %v6706
  %6708 = vmatprep.subr.mxu0 0.0
  %v6709 = vand.u32 %v6217, 4294901760
  %v6710 = vsub.f32 %v6217, %v6709
  %v6711 = vand.u32 %v6710, 4294901760
  %6712 = vmatpush1.msra.mxu0 %v6711
  %6713 = vmatprep.subr.mxu0 0.0
  %v6714 = vand.u32 %v6218, 4294901760
  %v6715 = vsub.f32 %v6218, %v6714
  %v6716 = vand.u32 %v6715, 4294901760
  %6717 = vmatpush1.msra.mxu0 %v6716
  %6718 = vmatprep.subr.mxu0 0.0
  %v6719 = vand.u32 %v6219, 4294901760
  %v6720 = vsub.f32 %v6219, %v6719
  %v6721 = vand.u32 %v6720, 4294901760
  %6722 = vmatpush1.msra.mxu0 %v6721
  %6723 = vmatprep.subr.mxu0 0.0
  %v6724 = vand.u32 %v6220, 4294901760
  %v6725 = vsub.f32 %v6220, %v6724
  %v6726 = vand.u32 %v6725, 4294901760
  %6727 = vmatpush1.msra.mxu0 %v6726
  %6728 = vmatprep.subr.mxu0 0.0
  %v6729 = vand.u32 %v6221, 4294901760
  %v6730 = vsub.f32 %v6221, %v6729
  %v6731 = vand.u32 %v6730, 4294901760
  %6732 = vmatpush1.msra.mxu0 %v6731
  %6733 = vmatprep.subr.mxu0 0.0
  %v6734 = vand.u32 %v6222, 4294901760
  %v6735 = vsub.f32 %v6222, %v6734
  %v6736 = vand.u32 %v6735, 4294901760
  %6737 = vmatpush1.msra.mxu0 %v6736
  %6738 = vmatprep.subr.mxu0 0.0
  %6739 = vmatpush1.msra.mxu0 0.0
  %6740 = vmatprep.subr.mxu0 0.0
  %6741 = vmatpush1.msra.mxu0 0.0
  %6742 = vmatprep.subr.mxu0 0.0
  %6743 = vmatpush1.msra.mxu0 0.0
  %6744 = vmatprep.subr.mxu0 0.0
  %6745 = vmatpush1.msra.mxu0 0.0
  %6746 = vmatprep.subr.mxu0 0.0
  %6747 = vmatpush1.msra.mxu0 0.0
  %6748 = vmatprep.subr.mxu0 0.0
  %6749 = vmatpush1.msra.mxu0 0.0
  %6750 = vmatprep.subr.mxu0 0.0
  %6751 = vmatpush1.msra.mxu0 0.0
  %6752 = vmatprep.subr.mxu0 0.0
  %6753 = vmatpush1.msra.mxu0 0.0
  %6754 = vmatprep.subr.mxu0 0.0
  %6755 = vmatpush1.msra.mxu0 0.0
  %6756 = vmatprep.subr.mxu0 0.0
  %6757 = vmatpush1.msra.mxu0 0.0
  %6758 = vmatprep.subr.mxu0 0.0
  %6759 = vmatpush1.msra.mxu0 0.0
  %6760 = vmatprep.subr.mxu0 0.0
  %6761 = vmatpush1.msra.mxu0 0.0
  %6762 = vmatprep.subr.mxu0 0.0
  %6763 = vmatpush1.msra.mxu0 0.0
  %6764 = vmatprep.subr.mxu0 0.0
  %6765 = vmatpush1.msra.mxu0 0.0
  %6766 = vmatprep.subr.mxu0 0.0
  %6767 = vmatpush1.msra.mxu0 0.0
  %6768 = vmatprep.subr.mxu0 0.0
  %6769 = vmatpush1.msra.mxu0 0.0
  %6770 = vmatprep.mubr.f32.mxu0 0.0
  %v6771 = vand.u32 %v6205, 4294901760
  %6772 = vmatmul.mubr.f32.gmra.mrb[0].mxu0 %v6771
  %v6773 = vpop.f32.mrb[0].mxu0
  %v6774 = vadd.f32 %v6655, %v6773
  %v6775 = vpop.f32.mrb[0].mxu0
  %6776 = vdwg.mxu0
  %6777 = vmatprep.subr.mxu0 0.0
  %v6778 = vand.u32 %v6207, 4294901760
  %6779 = vmatpush1.msra.mxu0 %v6778
  %6780 = vmatprep.subr.mxu0 0.0
  %v6781 = vand.u32 %v6208, 4294901760
  %6782 = vmatpush1.msra.mxu0 %v6781
  %6783 = vmatprep.subr.mxu0 0.0
  %v6784 = vand.u32 %v6209, 4294901760
  %6785 = vmatpush1.msra.mxu0 %v6784
  %6786 = vmatprep.subr.mxu0 0.0
  %v6787 = vand.u32 %v6210, 4294901760
  %6788 = vmatpush1.msra.mxu0 %v6787
  %6789 = vmatprep.subr.mxu0 0.0
  %v6790 = vand.u32 %v6211, 4294901760
  %6791 = vmatpush1.msra.mxu0 %v6790
  %6792 = vmatprep.subr.mxu0 0.0
  %v6793 = vand.u32 %v6212, 4294901760
  %6794 = vmatpush1.msra.mxu0 %v6793
  %6795 = vmatprep.subr.mxu0 0.0
  %v6796 = vand.u32 %v6213, 4294901760
  %6797 = vmatpush1.msra.mxu0 %v6796
  %6798 = vmatprep.subr.mxu0 0.0
  %v6799 = vand.u32 %v6214, 4294901760
  %6800 = vmatpush1.msra.mxu0 %v6799
  %6801 = vmatprep.subr.mxu0 0.0
  %v6802 = vand.u32 %v6215, 4294901760
  %6803 = vmatpush1.msra.mxu0 %v6802
  %6804 = vmatprep.subr.mxu0 0.0
  %v6805 = vand.u32 %v6216, 4294901760
  %6806 = vmatpush1.msra.mxu0 %v6805
  %6807 = vmatprep.subr.mxu0 0.0
  %v6808 = vand.u32 %v6217, 4294901760
  %6809 = vmatpush1.msra.mxu0 %v6808
  %6810 = vmatprep.subr.mxu0 0.0
  %v6811 = vand.u32 %v6218, 4294901760
  %6812 = vmatpush1.msra.mxu0 %v6811
  %6813 = vmatprep.subr.mxu0 0.0
  %v6814 = vand.u32 %v6219, 4294901760
  %6815 = vmatpush1.msra.mxu0 %v6814
  %6816 = vmatprep.subr.mxu0 0.0
  %v6817 = vand.u32 %v6220, 4294901760
  %6818 = vmatpush1.msra.mxu0 %v6817
  %6819 = vmatprep.subr.mxu0 0.0
  %v6820 = vand.u32 %v6221, 4294901760
  %6821 = vmatpush1.msra.mxu0 %v6820
  %6822 = vmatprep.subr.mxu0 0.0
  %v6823 = vand.u32 %v6222, 4294901760
  %6824 = vmatpush1.msra.mxu0 %v6823
  %6825 = vmatprep.subr.mxu0 0.0
  %6826 = vmatpush1.msra.mxu0 0.0
  %6827 = vmatprep.subr.mxu0 0.0
  %6828 = vmatpush1.msra.mxu0 0.0
  %6829 = vmatprep.subr.mxu0 0.0
  %6830 = vmatpush1.msra.mxu0 0.0
  %6831 = vmatprep.subr.mxu0 0.0
  %6832 = vmatpush1.msra.mxu0 0.0
  %6833 = vmatprep.subr.mxu0 0.0
  %6834 = vmatpush1.msra.mxu0 0.0
  %6835 = vmatprep.subr.mxu0 0.0
  %6836 = vmatpush1.msra.mxu0 0.0
  %6837 = vmatprep.subr.mxu0 0.0
  %6838 = vmatpush1.msra.mxu0 0.0
  %6839 = vmatprep.subr.mxu0 0.0
  %6840 = vmatpush1.msra.mxu0 0.0
  %6841 = vmatprep.subr.mxu0 0.0
  %6842 = vmatpush1.msra.mxu0 0.0
  %6843 = vmatprep.subr.mxu0 0.0
  %6844 = vmatpush1.msra.mxu0 0.0
  %6845 = vmatprep.subr.mxu0 0.0
  %6846 = vmatpush1.msra.mxu0 0.0
  %6847 = vmatprep.subr.mxu0 0.0
  %6848 = vmatpush1.msra.mxu0 0.0
  %6849 = vmatprep.subr.mxu0 0.0
  %6850 = vmatpush1.msra.mxu0 0.0
  %6851 = vmatprep.subr.mxu0 0.0
  %6852 = vmatpush1.msra.mxu0 0.0
  %6853 = vmatprep.subr.mxu0 0.0
  %6854 = vmatpush1.msra.mxu0 0.0
  %6855 = vmatprep.subr.mxu0 0.0
  %6856 = vmatpush1.msra.mxu0 0.0
  %6857 = vmatprep.mubr.f32.mxu0 0.0
  %v6858 = vand.u32 %v6205, 4294901760
  %6859 = vmatmul.mubr.f32.gmra.mrb[0].mxu0 %v6858
  %v6860 = vpop.f32.mrb[0].mxu0
  %v6861 = vadd.f32 %v6774, %v6860
  %v6862 = vpop.f32.mrb[0].mxu0
  %6863 = vdwg.mxu0
  %v6864 = vadd.f32 %v6203, %v6861
  %s6865 = scalar_lea.vmem [#allocation2], 6
  %v6866 = vld [vmem:[%s6865] ss:$8 sm:$0xf]
  %s6867 = scalar_lea.vmem %s4, 768
  %v6868 = vld [vmem:[%s6867] sm:$0xff]
  %v6869 = vld [vmem:[%s6867 + $0x8] sm:$0xff]
  %v6870 = vld [vmem:[%s6867 + $0x10] sm:$0xff]
  %v6871 = vld [vmem:[%s6867 + $0x18] sm:$0xff]
  %v6872 = vld [vmem:[%s6867 + $0x20] sm:$0xff]
  %v6873 = vld [vmem:[%s6867 + $0x28] sm:$0xff]
  %v6874 = vld [vmem:[%s6867 + $0x30] sm:$0xff]
  %v6875 = vld [vmem:[%s6867 + $0x38] sm:$0xff]
  %v6876 = vld [vmem:[%s6867 + $0x40] sm:$0xff]
  %v6877 = vld [vmem:[%s6867 + $0x48] sm:$0xff]
  %v6878 = vld [vmem:[%s6867 + $0x50] sm:$0xff]
  %v6879 = vld [vmem:[%s6867 + $0x58] sm:$0xff]
  %v6880 = vld [vmem:[%s6867 + $0x60] sm:$0xff]
  %v6881 = vld [vmem:[%s6867 + $0x68] sm:$0xff]
  %v6882 = vld [vmem:[%s6867 + $0x70] sm:$0xff]
  %v6883 = vld [vmem:[%s6867 + $0x78] sm:$0xff]
  %6884 = vmatprep.subr.mxu0 0.0
  %v6885 = vand.u32 %v6868, 4294901760
  %6886 = vmatpush1.msra.mxu0 %v6885
  %6887 = vmatprep.subr.mxu0 0.0
  %v6888 = vand.u32 %v6869, 4294901760
  %6889 = vmatpush1.msra.mxu0 %v6888
  %6890 = vmatprep.subr.mxu0 0.0
  %v6891 = vand.u32 %v6870, 4294901760
  %6892 = vmatpush1.msra.mxu0 %v6891
  %6893 = vmatprep.subr.mxu0 0.0
  %v6894 = vand.u32 %v6871, 4294901760
  %6895 = vmatpush1.msra.mxu0 %v6894
  %6896 = vmatprep.subr.mxu0 0.0
  %v6897 = vand.u32 %v6872, 4294901760
  %6898 = vmatpush1.msra.mxu0 %v6897
  %6899 = vmatprep.subr.mxu0 0.0
  %v6900 = vand.u32 %v6873, 4294901760
  %6901 = vmatpush1.msra.mxu0 %v6900
  %6902 = vmatprep.subr.mxu0 0.0
  %v6903 = vand.u32 %v6874, 4294901760
  %6904 = vmatpush1.msra.mxu0 %v6903
  %6905 = vmatprep.subr.mxu0 0.0
  %v6906 = vand.u32 %v6875, 4294901760
  %6907 = vmatpush1.msra.mxu0 %v6906
  %6908 = vmatprep.subr.mxu0 0.0
  %v6909 = vand.u32 %v6876, 4294901760
  %6910 = vmatpush1.msra.mxu0 %v6909
  %6911 = vmatprep.subr.mxu0 0.0
  %v6912 = vand.u32 %v6877, 4294901760
  %6913 = vmatpush1.msra.mxu0 %v6912
  %6914 = vmatprep.subr.mxu0 0.0
  %v6915 = vand.u32 %v6878, 4294901760
  %6916 = vmatpush1.msra.mxu0 %v6915
  %6917 = vmatprep.subr.mxu0 0.0
  %v6918 = vand.u32 %v6879, 4294901760
  %6919 = vmatpush1.msra.mxu0 %v6918
  %6920 = vmatprep.subr.mxu0 0.0
  %v6921 = vand.u32 %v6880, 4294901760
  %6922 = vmatpush1.msra.mxu0 %v6921
  %6923 = vmatprep.subr.mxu0 0.0
  %v6924 = vand.u32 %v6881, 4294901760
  %6925 = vmatpush1.msra.mxu0 %v6924
  %6926 = vmatprep.subr.mxu0 0.0
  %v6927 = vand.u32 %v6882, 4294901760
  %6928 = vmatpush1.msra.mxu0 %v6927
  %6929 = vmatprep.subr.mxu0 0.0
  %v6930 = vand.u32 %v6883, 4294901760
  %6931 = vmatpush1.msra.mxu0 %v6930
  %6932 = vmatprep.subr.mxu0 0.0
  %6933 = vmatpush1.msra.mxu0 0.0
  %6934 = vmatprep.subr.mxu0 0.0
  %6935 = vmatpush1.msra.mxu0 0.0
  %6936 = vmatprep.subr.mxu0 0.0
  %6937 = vmatpush1.msra.mxu0 0.0
  %6938 = vmatprep.subr.mxu0 0.0
  %6939 = vmatpush1.msra.mxu0 0.0
  %6940 = vmatprep.subr.mxu0 0.0
  %6941 = vmatpush1.msra.mxu0 0.0
  %6942 = vmatprep.subr.mxu0 0.0
  %6943 = vmatpush1.msra.mxu0 0.0
  %6944 = vmatprep.subr.mxu0 0.0
  %6945 = vmatpush1.msra.mxu0 0.0
  %6946 = vmatprep.subr.mxu0 0.0
  %6947 = vmatpush1.msra.mxu0 0.0
  %6948 = vmatprep.subr.mxu0 0.0
  %6949 = vmatpush1.msra.mxu0 0.0
  %6950 = vmatprep.subr.mxu0 0.0
  %6951 = vmatpush1.msra.mxu0 0.0
  %6952 = vmatprep.subr.mxu0 0.0
  %6953 = vmatpush1.msra.mxu0 0.0
  %6954 = vmatprep.subr.mxu0 0.0
  %6955 = vmatpush1.msra.mxu0 0.0
  %6956 = vmatprep.subr.mxu0 0.0
  %6957 = vmatpush1.msra.mxu0 0.0
  %6958 = vmatprep.subr.mxu0 0.0
  %6959 = vmatpush1.msra.mxu0 0.0
  %6960 = vmatprep.subr.mxu0 0.0
  %6961 = vmatpush1.msra.mxu0 0.0
  %6962 = vmatprep.subr.mxu0 0.0
  %6963 = vmatpush1.msra.mxu0 0.0
  %6964 = vmatprep.mubr.f32.mxu0 0.0
  %v6965 = vand.u32 %v6866, 4294901760
  %v6966 = vsub.f32 %v6866, %v6965
  %v6967 = vand.u32 %v6966, 4294901760
  %v6968 = vsub.f32 %v6966, %v6967
  %v6969 = vand.u32 %v6968, 4294901760
  %6970 = vmatmul.mubr.f32.gmra.mrb[0].mxu0 %v6969
  %v6971 = vpop.f32.mrb[0].mxu0
  %v6972 = vadd.f32 0.0, %v6971
  %v6973 = vpop.f32.mrb[0].mxu0
  %6974 = vdwg.mxu0
  %6975 = vmatprep.subr.mxu0 0.0
  %v6976 = vand.u32 %v6868, 4294901760
  %v6977 = vsub.f32 %v6868, %v6976
  %v6978 = vand.u32 %v6977, 4294901760
  %v6979 = vsub.f32 %v6977, %v6978
  %v6980 = vand.u32 %v6979, 4294901760
  %6981 = vmatpush1.msra.mxu0 %v6980
  %6982 = vmatprep.subr.mxu0 0.0
  %v6983 = vand.u32 %v6869, 4294901760
  %v6984 = vsub.f32 %v6869, %v6983
  %v6985 = vand.u32 %v6984, 4294901760
  %v6986 = vsub.f32 %v6984, %v6985
  %v6987 = vand.u32 %v6986, 4294901760
  %6988 = vmatpush1.msra.mxu0 %v6987
  %6989 = vmatprep.subr.mxu0 0.0
  %v6990 = vand.u32 %v6870, 4294901760
  %v6991 = vsub.f32 %v6870, %v6990
  %v6992 = vand.u32 %v6991, 4294901760
  %v6993 = vsub.f32 %v6991, %v6992
  %v6994 = vand.u32 %v6993, 4294901760
  %6995 = vmatpush1.msra.mxu0 %v6994
  %6996 = vmatprep.subr.mxu0 0.0
  %v6997 = vand.u32 %v6871, 4294901760
  %v6998 = vsub.f32 %v6871, %v6997
  %v6999 = vand.u32 %v6998, 4294901760
  %v7000 = vsub.f32 %v6998, %v6999
  %v7001 = vand.u32 %v7000, 4294901760
  %7002 = vmatpush1.msra.mxu0 %v7001
  %7003 = vmatprep.subr.mxu0 0.0
  %v7004 = vand.u32 %v6872, 4294901760
  %v7005 = vsub.f32 %v6872, %v7004
  %v7006 = vand.u32 %v7005, 4294901760
  %v7007 = vsub.f32 %v7005, %v7006
  %v7008 = vand.u32 %v7007, 4294901760
  %7009 = vmatpush1.msra.mxu0 %v7008
  %7010 = vmatprep.subr.mxu0 0.0
  %v7011 = vand.u32 %v6873, 4294901760
  %v7012 = vsub.f32 %v6873, %v7011
  %v7013 = vand.u32 %v7012, 4294901760
  %v7014 = vsub.f32 %v7012, %v7013
  %v7015 = vand.u32 %v7014, 4294901760
  %7016 = vmatpush1.msra.mxu0 %v7015
  %7017 = vmatprep.subr.mxu0 0.0
  %v7018 = vand.u32 %v6874, 4294901760
  %v7019 = vsub.f32 %v6874, %v7018
  %v7020 = vand.u32 %v7019, 4294901760
  %v7021 = vsub.f32 %v7019, %v7020
  %v7022 = vand.u32 %v7021, 4294901760
  %7023 = vmatpush1.msra.mxu0 %v7022
  %7024 = vmatprep.subr.mxu0 0.0
  %v7025 = vand.u32 %v6875, 4294901760
  %v7026 = vsub.f32 %v6875, %v7025
  %v7027 = vand.u32 %v7026, 4294901760
  %v7028 = vsub.f32 %v7026, %v7027
  %v7029 = vand.u32 %v7028, 4294901760
  %7030 = vmatpush1.msra.mxu0 %v7029
  %7031 = vmatprep.subr.mxu0 0.0
  %v7032 = vand.u32 %v6876, 4294901760
  %v7033 = vsub.f32 %v6876, %v7032
  %v7034 = vand.u32 %v7033, 4294901760
  %v7035 = vsub.f32 %v7033, %v7034
  %v7036 = vand.u32 %v7035, 4294901760
  %7037 = vmatpush1.msra.mxu0 %v7036
  %7038 = vmatprep.subr.mxu0 0.0
  %v7039 = vand.u32 %v6877, 4294901760
  %v7040 = vsub.f32 %v6877, %v7039
  %v7041 = vand.u32 %v7040, 4294901760
  %v7042 = vsub.f32 %v7040, %v7041
  %v7043 = vand.u32 %v7042, 4294901760
  %7044 = vmatpush1.msra.mxu0 %v7043
  %7045 = vmatprep.subr.mxu0 0.0
  %v7046 = vand.u32 %v6878, 4294901760
  %v7047 = vsub.f32 %v6878, %v7046
  %v7048 = vand.u32 %v7047, 4294901760
  %v7049 = vsub.f32 %v7047, %v7048
  %v7050 = vand.u32 %v7049, 4294901760
  %7051 = vmatpush1.msra.mxu0 %v7050
  %7052 = vmatprep.subr.mxu0 0.0
  %v7053 = vand.u32 %v6879, 4294901760
  %v7054 = vsub.f32 %v6879, %v7053
  %v7055 = vand.u32 %v7054, 4294901760
  %v7056 = vsub.f32 %v7054, %v7055
  %v7057 = vand.u32 %v7056, 4294901760
  %7058 = vmatpush1.msra.mxu0 %v7057
  %7059 = vmatprep.subr.mxu0 0.0
  %v7060 = vand.u32 %v6880, 4294901760
  %v7061 = vsub.f32 %v6880, %v7060
  %v7062 = vand.u32 %v7061, 4294901760
  %v7063 = vsub.f32 %v7061, %v7062
  %v7064 = vand.u32 %v7063, 4294901760
  %7065 = vmatpush1.msra.mxu0 %v7064
  %7066 = vmatprep.subr.mxu0 0.0
  %v7067 = vand.u32 %v6881, 4294901760
  %v7068 = vsub.f32 %v6881, %v7067
  %v7069 = vand.u32 %v7068, 4294901760
  %v7070 = vsub.f32 %v7068, %v7069
  %v7071 = vand.u32 %v7070, 4294901760
  %7072 = vmatpush1.msra.mxu0 %v7071
  %7073 = vmatprep.subr.mxu0 0.0
  %v7074 = vand.u32 %v6882, 4294901760
  %v7075 = vsub.f32 %v6882, %v7074
  %v7076 = vand.u32 %v7075, 4294901760
  %v7077 = vsub.f32 %v7075, %v7076
  %v7078 = vand.u32 %v7077, 4294901760
  %7079 = vmatpush1.msra.mxu0 %v7078
  %7080 = vmatprep.subr.mxu0 0.0
  %v7081 = vand.u32 %v6883, 4294901760
  %v7082 = vsub.f32 %v6883, %v7081
  %v7083 = vand.u32 %v7082, 4294901760
  %v7084 = vsub.f32 %v7082, %v7083
  %v7085 = vand.u32 %v7084, 4294901760
  %7086 = vmatpush1.msra.mxu0 %v7085
  %7087 = vmatprep.subr.mxu0 0.0
  %7088 = vmatpush1.msra.mxu0 0.0
  %7089 = vmatprep.subr.mxu0 0.0
  %7090 = vmatpush1.msra.mxu0 0.0
  %7091 = vmatprep.subr.mxu0 0.0
  %7092 = vmatpush1.msra.mxu0 0.0
  %7093 = vmatprep.subr.mxu0 0.0
  %7094 = vmatpush1.msra.mxu0 0.0
  %7095 = vmatprep.subr.mxu0 0.0
  %7096 = vmatpush1.msra.mxu0 0.0
  %7097 = vmatprep.subr.mxu0 0.0
  %7098 = vmatpush1.msra.mxu0 0.0
  %7099 = vmatprep.subr.mxu0 0.0
  %7100 = vmatpush1.msra.mxu0 0.0
  %7101 = vmatprep.subr.mxu0 0.0
  %7102 = vmatpush1.msra.mxu0 0.0
  %7103 = vmatprep.subr.mxu0 0.0
  %7104 = vmatpush1.msra.mxu0 0.0
  %7105 = vmatprep.subr.mxu0 0.0
  %7106 = vmatpush1.msra.mxu0 0.0
  %7107 = vmatprep.subr.mxu0 0.0
  %7108 = vmatpush1.msra.mxu0 0.0
  %7109 = vmatprep.subr.mxu0 0.0
  %7110 = vmatpush1.msra.mxu0 0.0
  %7111 = vmatprep.subr.mxu0 0.0
  %7112 = vmatpush1.msra.mxu0 0.0
  %7113 = vmatprep.subr.mxu0 0.0
  %7114 = vmatpush1.msra.mxu0 0.0
  %7115 = vmatprep.subr.mxu0 0.0
  %7116 = vmatpush1.msra.mxu0 0.0
  %7117 = vmatprep.subr.mxu0 0.0
  %7118 = vmatpush1.msra.mxu0 0.0
  %7119 = vmatprep.mubr.f32.mxu0 0.0
  %v7120 = vand.u32 %v6866, 4294901760
  %7121 = vmatmul.mubr.f32.gmra.mrb[0].mxu0 %v7120
  %v7122 = vpop.f32.mrb[0].mxu0
  %v7123 = vadd.f32 %v6972, %v7122
  %v7124 = vpop.f32.mrb[0].mxu0
  %7125 = vdwg.mxu0
  %7126 = vmatprep.subr.mxu0 0.0
  %v7127 = vand.u32 %v6868, 4294901760
  %v7128 = vsub.f32 %v6868, %v7127
  %7129 = vmatpush1.msra.mxu0 %v7128
  %7130 = vmatprep.subr.mxu0 0.0
  %v7131 = vand.u32 %v6869, 4294901760
  %v7132 = vsub.f32 %v6869, %v7131
  %7133 = vmatpush1.msra.mxu0 %v7132
  %7134 = vmatprep.subr.mxu0 0.0
  %v7135 = vand.u32 %v6870, 4294901760
  %v7136 = vsub.f32 %v6870, %v7135
  %7137 = vmatpush1.msra.mxu0 %v7136
  %7138 = vmatprep.subr.mxu0 0.0
  %v7139 = vand.u32 %v6871, 4294901760
  %v7140 = vsub.f32 %v6871, %v7139
  %7141 = vmatpush1.msra.mxu0 %v7140
  %7142 = vmatprep.subr.mxu0 0.0
  %v7143 = vand.u32 %v6872, 4294901760
  %v7144 = vsub.f32 %v6872, %v7143
  %7145 = vmatpush1.msra.mxu0 %v7144
  %7146 = vmatprep.subr.mxu0 0.0
  %v7147 = vand.u32 %v6873, 4294901760
  %v7148 = vsub.f32 %v6873, %v7147
  %7149 = vmatpush1.msra.mxu0 %v7148
  %7150 = vmatprep.subr.mxu0 0.0
  %v7151 = vand.u32 %v6874, 4294901760
  %v7152 = vsub.f32 %v6874, %v7151
  %7153 = vmatpush1.msra.mxu0 %v7152
  %7154 = vmatprep.subr.mxu0 0.0
  %v7155 = vand.u32 %v6875, 4294901760
  %v7156 = vsub.f32 %v6875, %v7155
  %7157 = vmatpush1.msra.mxu0 %v7156
  %7158 = vmatprep.subr.mxu0 0.0
  %v7159 = vand.u32 %v6876, 4294901760
  %v7160 = vsub.f32 %v6876, %v7159
  %7161 = vmatpush1.msra.mxu0 %v7160
  %7162 = vmatprep.subr.mxu0 0.0
  %v7163 = vand.u32 %v6877, 4294901760
  %v7164 = vsub.f32 %v6877, %v7163
  %7165 = vmatpush1.msra.mxu0 %v7164
  %7166 = vmatprep.subr.mxu0 0.0
  %v7167 = vand.u32 %v6878, 4294901760
  %v7168 = vsub.f32 %v6878, %v7167
  %7169 = vmatpush1.msra.mxu0 %v7168
  %7170 = vmatprep.subr.mxu0 0.0
  %v7171 = vand.u32 %v6879, 4294901760
  %v7172 = vsub.f32 %v6879, %v7171
  %7173 = vmatpush1.msra.mxu0 %v7172
  %7174 = vmatprep.subr.mxu0 0.0
  %v7175 = vand.u32 %v6880, 4294901760
  %v7176 = vsub.f32 %v6880, %v7175
  %7177 = vmatpush1.msra.mxu0 %v7176
  %7178 = vmatprep.subr.mxu0 0.0
  %v7179 = vand.u32 %v6881, 4294901760
  %v7180 = vsub.f32 %v6881, %v7179
  %7181 = vmatpush1.msra.mxu0 %v7180
  %7182 = vmatprep.subr.mxu0 0.0
  %v7183 = vand.u32 %v6882, 4294901760
  %v7184 = vsub.f32 %v6882, %v7183
  %7185 = vmatpush1.msra.mxu0 %v7184
  %7186 = vmatprep.subr.mxu0 0.0
  %v7187 = vand.u32 %v6883, 4294901760
  %v7188 = vsub.f32 %v6883, %v7187
  %7189 = vmatpush1.msra.mxu0 %v7188
  %7190 = vmatprep.subr.mxu0 0.0
  %7191 = vmatpush1.msra.mxu0 0.0
  %7192 = vmatprep.subr.mxu0 0.0
  %7193 = vmatpush1.msra.mxu0 0.0
  %7194 = vmatprep.subr.mxu0 0.0
  %7195 = vmatpush1.msra.mxu0 0.0
  %7196 = vmatprep.subr.mxu0 0.0
  %7197 = vmatpush1.msra.mxu0 0.0
  %7198 = vmatprep.subr.mxu0 0.0
  %7199 = vmatpush1.msra.mxu0 0.0
  %7200 = vmatprep.subr.mxu0 0.0
  %7201 = vmatpush1.msra.mxu0 0.0
  %7202 = vmatprep.subr.mxu0 0.0
  %7203 = vmatpush1.msra.mxu0 0.0
  %7204 = vmatprep.subr.mxu0 0.0
  %7205 = vmatpush1.msra.mxu0 0.0
  %7206 = vmatprep.subr.mxu0 0.0
  %7207 = vmatpush1.msra.mxu0 0.0
  %7208 = vmatprep.subr.mxu0 0.0
  %7209 = vmatpush1.msra.mxu0 0.0
  %7210 = vmatprep.subr.mxu0 0.0
  %7211 = vmatpush1.msra.mxu0 0.0
  %7212 = vmatprep.subr.mxu0 0.0
  %7213 = vmatpush1.msra.mxu0 0.0
  %7214 = vmatprep.subr.mxu0 0.0
  %7215 = vmatpush1.msra.mxu0 0.0
  %7216 = vmatprep.subr.mxu0 0.0
  %7217 = vmatpush1.msra.mxu0 0.0
  %7218 = vmatprep.subr.mxu0 0.0
  %7219 = vmatpush1.msra.mxu0 0.0
  %7220 = vmatprep.subr.mxu0 0.0
  %7221 = vmatpush1.msra.mxu0 0.0
  %7222 = vmatprep.mubr.f32.mxu0 0.0
  %v7223 = vand.u32 %v6866, 4294901760
  %v7224 = vsub.f32 %v6866, %v7223
  %7225 = vmatmul.mubr.f32.gmra.mrb[0].mxu0 %v7224
  %v7226 = vpop.f32.mrb[0].mxu0
  %v7227 = vadd.f32 %v7123, %v7226
  %v7228 = vpop.f32.mrb[0].mxu0
  %7229 = vdwg.mxu0
  %7230 = vmatprep.subr.mxu0 0.0
  %v7231 = vand.u32 %v6868, 4294901760
  %7232 = vmatpush1.msra.mxu0 %v7231
  %7233 = vmatprep.subr.mxu0 0.0
  %v7234 = vand.u32 %v6869, 4294901760
  %7235 = vmatpush1.msra.mxu0 %v7234
  %7236 = vmatprep.subr.mxu0 0.0
  %v7237 = vand.u32 %v6870, 4294901760
  %7238 = vmatpush1.msra.mxu0 %v7237
  %7239 = vmatprep.subr.mxu0 0.0
  %v7240 = vand.u32 %v6871, 4294901760
  %7241 = vmatpush1.msra.mxu0 %v7240
  %7242 = vmatprep.subr.mxu0 0.0
  %v7243 = vand.u32 %v6872, 4294901760
  %7244 = vmatpush1.msra.mxu0 %v7243
  %7245 = vmatprep.subr.mxu0 0.0
  %v7246 = vand.u32 %v6873, 4294901760
  %7247 = vmatpush1.msra.mxu0 %v7246
  %7248 = vmatprep.subr.mxu0 0.0
  %v7249 = vand.u32 %v6874, 4294901760
  %7250 = vmatpush1.msra.mxu0 %v7249
  %7251 = vmatprep.subr.mxu0 0.0
  %v7252 = vand.u32 %v6875, 4294901760
  %7253 = vmatpush1.msra.mxu0 %v7252
  %7254 = vmatprep.subr.mxu0 0.0
  %v7255 = vand.u32 %v6876, 4294901760
  %7256 = vmatpush1.msra.mxu0 %v7255
  %7257 = vmatprep.subr.mxu0 0.0
  %v7258 = vand.u32 %v6877, 4294901760
  %7259 = vmatpush1.msra.mxu0 %v7258
  %7260 = vmatprep.subr.mxu0 0.0
  %v7261 = vand.u32 %v6878, 4294901760
  %7262 = vmatpush1.msra.mxu0 %v7261
  %7263 = vmatprep.subr.mxu0 0.0
  %v7264 = vand.u32 %v6879, 4294901760
  %7265 = vmatpush1.msra.mxu0 %v7264
  %7266 = vmatprep.subr.mxu0 0.0
  %v7267 = vand.u32 %v6880, 4294901760
  %7268 = vmatpush1.msra.mxu0 %v7267
  %7269 = vmatprep.subr.mxu0 0.0
  %v7270 = vand.u32 %v6881, 4294901760
  %7271 = vmatpush1.msra.mxu0 %v7270
  %7272 = vmatprep.subr.mxu0 0.0
  %v7273 = vand.u32 %v6882, 4294901760
  %7274 = vmatpush1.msra.mxu0 %v7273
  %7275 = vmatprep.subr.mxu0 0.0
  %v7276 = vand.u32 %v6883, 4294901760
  %7277 = vmatpush1.msra.mxu0 %v7276
  %7278 = vmatprep.subr.mxu0 0.0
  %7279 = vmatpush1.msra.mxu0 0.0
  %7280 = vmatprep.subr.mxu0 0.0
  %7281 = vmatpush1.msra.mxu0 0.0
  %7282 = vmatprep.subr.mxu0 0.0
  %7283 = vmatpush1.msra.mxu0 0.0
  %7284 = vmatprep.subr.mxu0 0.0
  %7285 = vmatpush1.msra.mxu0 0.0
  %7286 = vmatprep.subr.mxu0 0.0
  %7287 = vmatpush1.msra.mxu0 0.0
  %7288 = vmatprep.subr.mxu0 0.0
  %7289 = vmatpush1.msra.mxu0 0.0
  %7290 = vmatprep.subr.mxu0 0.0
  %7291 = vmatpush1.msra.mxu0 0.0
  %7292 = vmatprep.subr.mxu0 0.0
  %7293 = vmatpush1.msra.mxu0 0.0
  %7294 = vmatprep.subr.mxu0 0.0
  %7295 = vmatpush1.msra.mxu0 0.0
  %7296 = vmatprep.subr.mxu0 0.0
  %7297 = vmatpush1.msra.mxu0 0.0
  %7298 = vmatprep.subr.mxu0 0.0
  %7299 = vmatpush1.msra.mxu0 0.0
  %7300 = vmatprep.subr.mxu0 0.0
  %7301 = vmatpush1.msra.mxu0 0.0
  %7302 = vmatprep.subr.mxu0 0.0
  %7303 = vmatpush1.msra.mxu0 0.0
  %7304 = vmatprep.subr.mxu0 0.0
  %7305 = vmatpush1.msra.mxu0 0.0
  %7306 = vmatprep.subr.mxu0 0.0
  %7307 = vmatpush1.msra.mxu0 0.0
  %7308 = vmatprep.subr.mxu0 0.0
  %7309 = vmatpush1.msra.mxu0 0.0
  %7310 = vmatprep.mubr.f32.mxu0 0.0
  %v7311 = vand.u32 %v6866, 4294901760
  %v7312 = vsub.f32 %v6866, %v7311
  %v7313 = vand.u32 %v7312, 4294901760
  %7314 = vmatmul.mubr.f32.gmra.mrb[0].mxu0 %v7313
  %v7315 = vpop.f32.mrb[0].mxu0
  %v7316 = vadd.f32 %v7227, %v7315
  %v7317 = vpop.f32.mrb[0].mxu0
  %7318 = vdwg.mxu0
  %7319 = vmatprep.subr.mxu0 0.0
  %v7320 = vand.u32 %v6868, 4294901760
  %v7321 = vsub.f32 %v6868, %v7320
  %v7322 = vand.u32 %v7321, 4294901760
  %7323 = vmatpush1.msra.mxu0 %v7322
  %7324 = vmatprep.subr.mxu0 0.0
  %v7325 = vand.u32 %v6869, 4294901760
  %v7326 = vsub.f32 %v6869, %v7325
  %v7327 = vand.u32 %v7326, 4294901760
  %7328 = vmatpush1.msra.mxu0 %v7327
  %7329 = vmatprep.subr.mxu0 0.0
  %v7330 = vand.u32 %v6870, 4294901760
  %v7331 = vsub.f32 %v6870, %v7330
  %v7332 = vand.u32 %v7331, 4294901760
  %7333 = vmatpush1.msra.mxu0 %v7332
  %7334 = vmatprep.subr.mxu0 0.0
  %v7335 = vand.u32 %v6871, 4294901760
  %v7336 = vsub.f32 %v6871, %v7335
  %v7337 = vand.u32 %v7336, 4294901760
  %7338 = vmatpush1.msra.mxu0 %v7337
  %7339 = vmatprep.subr.mxu0 0.0
  %v7340 = vand.u32 %v6872, 4294901760
  %v7341 = vsub.f32 %v6872, %v7340
  %v7342 = vand.u32 %v7341, 4294901760
  %7343 = vmatpush1.msra.mxu0 %v7342
  %7344 = vmatprep.subr.mxu0 0.0
  %v7345 = vand.u32 %v6873, 4294901760
  %v7346 = vsub.f32 %v6873, %v7345
  %v7347 = vand.u32 %v7346, 4294901760
  %7348 = vmatpush1.msra.mxu0 %v7347
  %7349 = vmatprep.subr.mxu0 0.0
  %v7350 = vand.u32 %v6874, 4294901760
  %v7351 = vsub.f32 %v6874, %v7350
  %v7352 = vand.u32 %v7351, 4294901760
  %7353 = vmatpush1.msra.mxu0 %v7352
  %7354 = vmatprep.subr.mxu0 0.0
  %v7355 = vand.u32 %v6875, 4294901760
  %v7356 = vsub.f32 %v6875, %v7355
  %v7357 = vand.u32 %v7356, 4294901760
  %7358 = vmatpush1.msra.mxu0 %v7357
  %7359 = vmatprep.subr.mxu0 0.0
  %v7360 = vand.u32 %v6876, 4294901760
  %v7361 = vsub.f32 %v6876, %v7360
  %v7362 = vand.u32 %v7361, 4294901760
  %7363 = vmatpush1.msra.mxu0 %v7362
  %7364 = vmatprep.subr.mxu0 0.0
  %v7365 = vand.u32 %v6877, 4294901760
  %v7366 = vsub.f32 %v6877, %v7365
  %v7367 = vand.u32 %v7366, 4294901760
  %7368 = vmatpush1.msra.mxu0 %v7367
  %7369 = vmatprep.subr.mxu0 0.0
  %v7370 = vand.u32 %v6878, 4294901760
  %v7371 = vsub.f32 %v6878, %v7370
  %v7372 = vand.u32 %v7371, 4294901760
  %7373 = vmatpush1.msra.mxu0 %v7372
  %7374 = vmatprep.subr.mxu0 0.0
  %v7375 = vand.u32 %v6879, 4294901760
  %v7376 = vsub.f32 %v6879, %v7375
  %v7377 = vand.u32 %v7376, 4294901760
  %7378 = vmatpush1.msra.mxu0 %v7377
  %7379 = vmatprep.subr.mxu0 0.0
  %v7380 = vand.u32 %v6880, 4294901760
  %v7381 = vsub.f32 %v6880, %v7380
  %v7382 = vand.u32 %v7381, 4294901760
  %7383 = vmatpush1.msra.mxu0 %v7382
  %7384 = vmatprep.subr.mxu0 0.0
  %v7385 = vand.u32 %v6881, 4294901760
  %v7386 = vsub.f32 %v6881, %v7385
  %v7387 = vand.u32 %v7386, 4294901760
  %7388 = vmatpush1.msra.mxu0 %v7387
  %7389 = vmatprep.subr.mxu0 0.0
  %v7390 = vand.u32 %v6882, 4294901760
  %v7391 = vsub.f32 %v6882, %v7390
  %v7392 = vand.u32 %v7391, 4294901760
  %7393 = vmatpush1.msra.mxu0 %v7392
  %7394 = vmatprep.subr.mxu0 0.0
  %v7395 = vand.u32 %v6883, 4294901760
  %v7396 = vsub.f32 %v6883, %v7395
  %v7397 = vand.u32 %v7396, 4294901760
  %7398 = vmatpush1.msra.mxu0 %v7397
  %7399 = vmatprep.subr.mxu0 0.0
  %7400 = vmatpush1.msra.mxu0 0.0
  %7401 = vmatprep.subr.mxu0 0.0
  %7402 = vmatpush1.msra.mxu0 0.0
  %7403 = vmatprep.subr.mxu0 0.0
  %7404 = vmatpush1.msra.mxu0 0.0
  %7405 = vmatprep.subr.mxu0 0.0
  %7406 = vmatpush1.msra.mxu0 0.0
  %7407 = vmatprep.subr.mxu0 0.0
  %7408 = vmatpush1.msra.mxu0 0.0
  %7409 = vmatprep.subr.mxu0 0.0
  %7410 = vmatpush1.msra.mxu0 0.0
  %7411 = vmatprep.subr.mxu0 0.0
  %7412 = vmatpush1.msra.mxu0 0.0
  %7413 = vmatprep.subr.mxu0 0.0
  %7414 = vmatpush1.msra.mxu0 0.0
  %7415 = vmatprep.subr.mxu0 0.0
  %7416 = vmatpush1.msra.mxu0 0.0
  %7417 = vmatprep.subr.mxu0 0.0
  %7418 = vmatpush1.msra.mxu0 0.0
  %7419 = vmatprep.subr.mxu0 0.0
  %7420 = vmatpush1.msra.mxu0 0.0
  %7421 = vmatprep.subr.mxu0 0.0
  %7422 = vmatpush1.msra.mxu0 0.0
  %7423 = vmatprep.subr.mxu0 0.0
  %7424 = vmatpush1.msra.mxu0 0.0
  %7425 = vmatprep.subr.mxu0 0.0
  %7426 = vmatpush1.msra.mxu0 0.0
  %7427 = vmatprep.subr.mxu0 0.0
  %7428 = vmatpush1.msra.mxu0 0.0
  %7429 = vmatprep.subr.mxu0 0.0
  %7430 = vmatpush1.msra.mxu0 0.0
  %7431 = vmatprep.mubr.f32.mxu0 0.0
  %v7432 = vand.u32 %v6866, 4294901760
  %7433 = vmatmul.mubr.f32.gmra.mrb[0].mxu0 %v7432
  %v7434 = vpop.f32.mrb[0].mxu0
  %v7435 = vadd.f32 %v7316, %v7434
  %v7436 = vpop.f32.mrb[0].mxu0
  %7437 = vdwg.mxu0
  %7438 = vmatprep.subr.mxu0 0.0
  %v7439 = vand.u32 %v6868, 4294901760
  %7440 = vmatpush1.msra.mxu0 %v7439
  %7441 = vmatprep.subr.mxu0 0.0
  %v7442 = vand.u32 %v6869, 4294901760
  %7443 = vmatpush1.msra.mxu0 %v7442
  %7444 = vmatprep.subr.mxu0 0.0
  %v7445 = vand.u32 %v6870, 4294901760
  %7446 = vmatpush1.msra.mxu0 %v7445
  %7447 = vmatprep.subr.mxu0 0.0
  %v7448 = vand.u32 %v6871, 4294901760
  %7449 = vmatpush1.msra.mxu0 %v7448
  %7450 = vmatprep.subr.mxu0 0.0
  %v7451 = vand.u32 %v6872, 4294901760
  %7452 = vmatpush1.msra.mxu0 %v7451
  %7453 = vmatprep.subr.mxu0 0.0
  %v7454 = vand.u32 %v6873, 4294901760
  %7455 = vmatpush1.msra.mxu0 %v7454
  %7456 = vmatprep.subr.mxu0 0.0
  %v7457 = vand.u32 %v6874, 4294901760
  %7458 = vmatpush1.msra.mxu0 %v7457
  %7459 = vmatprep.subr.mxu0 0.0
  %v7460 = vand.u32 %v6875, 4294901760
  %7461 = vmatpush1.msra.mxu0 %v7460
  %7462 = vmatprep.subr.mxu0 0.0
  %v7463 = vand.u32 %v6876, 4294901760
  %7464 = vmatpush1.msra.mxu0 %v7463
  %7465 = vmatprep.subr.mxu0 0.0
  %v7466 = vand.u32 %v6877, 4294901760
  %7467 = vmatpush1.msra.mxu0 %v7466
  %7468 = vmatprep.subr.mxu0 0.0
  %v7469 = vand.u32 %v6878, 4294901760
  %7470 = vmatpush1.msra.mxu0 %v7469
  %7471 = vmatprep.subr.mxu0 0.0
  %v7472 = vand.u32 %v6879, 4294901760
  %7473 = vmatpush1.msra.mxu0 %v7472
  %7474 = vmatprep.subr.mxu0 0.0
  %v7475 = vand.u32 %v6880, 4294901760
  %7476 = vmatpush1.msra.mxu0 %v7475
  %7477 = vmatprep.subr.mxu0 0.0
  %v7478 = vand.u32 %v6881, 4294901760
  %7479 = vmatpush1.msra.mxu0 %v7478
  %7480 = vmatprep.subr.mxu0 0.0
  %v7481 = vand.u32 %v6882, 4294901760
  %7482 = vmatpush1.msra.mxu0 %v7481
  %7483 = vmatprep.subr.mxu0 0.0
  %v7484 = vand.u32 %v6883, 4294901760
  %7485 = vmatpush1.msra.mxu0 %v7484
  %7486 = vmatprep.subr.mxu0 0.0
  %7487 = vmatpush1.msra.mxu0 0.0
  %7488 = vmatprep.subr.mxu0 0.0
  %7489 = vmatpush1.msra.mxu0 0.0
  %7490 = vmatprep.subr.mxu0 0.0
  %7491 = vmatpush1.msra.mxu0 0.0
  %7492 = vmatprep.subr.mxu0 0.0
  %7493 = vmatpush1.msra.mxu0 0.0
  %7494 = vmatprep.subr.mxu0 0.0
  %7495 = vmatpush1.msra.mxu0 0.0
  %7496 = vmatprep.subr.mxu0 0.0
  %7497 = vmatpush1.msra.mxu0 0.0
  %7498 = vmatprep.subr.mxu0 0.0
  %7499 = vmatpush1.msra.mxu0 0.0
  %7500 = vmatprep.subr.mxu0 0.0
  %7501 = vmatpush1.msra.mxu0 0.0
  %7502 = vmatprep.subr.mxu0 0.0
  %7503 = vmatpush1.msra.mxu0 0.0
  %7504 = vmatprep.subr.mxu0 0.0
  %7505 = vmatpush1.msra.mxu0 0.0
  %7506 = vmatprep.subr.mxu0 0.0
  %7507 = vmatpush1.msra.mxu0 0.0
  %7508 = vmatprep.subr.mxu0 0.0
  %7509 = vmatpush1.msra.mxu0 0.0
  %7510 = vmatprep.subr.mxu0 0.0
  %7511 = vmatpush1.msra.mxu0 0.0
  %7512 = vmatprep.subr.mxu0 0.0
  %7513 = vmatpush1.msra.mxu0 0.0
  %7514 = vmatprep.subr.mxu0 0.0
  %7515 = vmatpush1.msra.mxu0 0.0
  %7516 = vmatprep.subr.mxu0 0.0
  %7517 = vmatpush1.msra.mxu0 0.0
  %7518 = vmatprep.mubr.f32.mxu0 0.0
  %v7519 = vand.u32 %v6866, 4294901760
  %7520 = vmatmul.mubr.f32.gmra.mrb[0].mxu0 %v7519
  %v7521 = vpop.f32.mrb[0].mxu0
  %v7522 = vadd.f32 %v7435, %v7521
  %v7523 = vpop.f32.mrb[0].mxu0
  %7524 = vdwg.mxu0
  %v7525 = vadd.f32 %v6864, %v7522
  %s7526 = scalar_lea.vmem [#allocation2], 7
  %v7527 = vld [vmem:[%s7526] ss:$8 sm:$0xf]
  %s7528 = scalar_lea.vmem %s4, 896
  %v7529 = vld [vmem:[%s7528] sm:$0xff]
  %v7530 = vld [vmem:[%s7528 + $0x8] sm:$0xff]
  %v7531 = vld [vmem:[%s7528 + $0x10] sm:$0xff]
  %v7532 = vld [vmem:[%s7528 + $0x18] sm:$0xff]
  %v7533 = vld [vmem:[%s7528 + $0x20] sm:$0xff]
  %v7534 = vld [vmem:[%s7528 + $0x28] sm:$0xff]
  %v7535 = vld [vmem:[%s7528 + $0x30] sm:$0xff]
  %v7536 = vld [vmem:[%s7528 + $0x38] sm:$0xff]
  %v7537 = vld [vmem:[%s7528 + $0x40] sm:$0xff]
  %v7538 = vld [vmem:[%s7528 + $0x48] sm:$0xff]
  %v7539 = vld [vmem:[%s7528 + $0x50] sm:$0xff]
  %v7540 = vld [vmem:[%s7528 + $0x58] sm:$0xff]
  %v7541 = vld [vmem:[%s7528 + $0x60] sm:$0xff]
  %v7542 = vld [vmem:[%s7528 + $0x68] sm:$0xff]
  %v7543 = vld [vmem:[%s7528 + $0x70] sm:$0xff]
  %v7544 = vld [vmem:[%s7528 + $0x78] sm:$0xff]
  %7545 = vmatprep.subr.mxu0 0.0
  %v7546 = vand.u32 %v7529, 4294901760
  %7547 = vmatpush1.msra.mxu0 %v7546
  %7548 = vmatprep.subr.mxu0 0.0
  %v7549 = vand.u32 %v7530, 4294901760
  %7550 = vmatpush1.msra.mxu0 %v7549
  %7551 = vmatprep.subr.mxu0 0.0
  %v7552 = vand.u32 %v7531, 4294901760
  %7553 = vmatpush1.msra.mxu0 %v7552
  %7554 = vmatprep.subr.mxu0 0.0
  %v7555 = vand.u32 %v7532, 4294901760
  %7556 = vmatpush1.msra.mxu0 %v7555
  %7557 = vmatprep.subr.mxu0 0.0
  %v7558 = vand.u32 %v7533, 4294901760
  %7559 = vmatpush1.msra.mxu0 %v7558
  %7560 = vmatprep.subr.mxu0 0.0
  %v7561 = vand.u32 %v7534, 4294901760
  %7562 = vmatpush1.msra.mxu0 %v7561
  %7563 = vmatprep.subr.mxu0 0.0
  %v7564 = vand.u32 %v7535, 4294901760
  %7565 = vmatpush1.msra.mxu0 %v7564
  %7566 = vmatprep.subr.mxu0 0.0
  %v7567 = vand.u32 %v7536, 4294901760
  %7568 = vmatpush1.msra.mxu0 %v7567
  %7569 = vmatprep.subr.mxu0 0.0
  %v7570 = vand.u32 %v7537, 4294901760
  %7571 = vmatpush1.msra.mxu0 %v7570
  %7572 = vmatprep.subr.mxu0 0.0
  %v7573 = vand.u32 %v7538, 4294901760
  %7574 = vmatpush1.msra.mxu0 %v7573
  %7575 = vmatprep.subr.mxu0 0.0
  %v7576 = vand.u32 %v7539, 4294901760
  %7577 = vmatpush1.msra.mxu0 %v7576
  %7578 = vmatprep.subr.mxu0 0.0
  %v7579 = vand.u32 %v7540, 4294901760
  %7580 = vmatpush1.msra.mxu0 %v7579
  %7581 = vmatprep.subr.mxu0 0.0
  %v7582 = vand.u32 %v7541, 4294901760
  %7583 = vmatpush1.msra.mxu0 %v7582
  %7584 = vmatprep.subr.mxu0 0.0
  %v7585 = vand.u32 %v7542, 4294901760
  %7586 = vmatpush1.msra.mxu0 %v7585
  %7587 = vmatprep.subr.mxu0 0.0
  %v7588 = vand.u32 %v7543, 4294901760
  %7589 = vmatpush1.msra.mxu0 %v7588
  %7590 = vmatprep.subr.mxu0 0.0
  %v7591 = vand.u32 %v7544, 4294901760
  %7592 = vmatpush1.msra.mxu0 %v7591
  %7593 = vmatprep.subr.mxu0 0.0
  %7594 = vmatpush1.msra.mxu0 0.0
  %7595 = vmatprep.subr.mxu0 0.0
  %7596 = vmatpush1.msra.mxu0 0.0
  %7597 = vmatprep.subr.mxu0 0.0
  %7598 = vmatpush1.msra.mxu0 0.0
  %7599 = vmatprep.subr.mxu0 0.0
  %7600 = vmatpush1.msra.mxu0 0.0
  %7601 = vmatprep.subr.mxu0 0.0
  %7602 = vmatpush1.msra.mxu0 0.0
  %7603 = vmatprep.subr.mxu0 0.0
  %7604 = vmatpush1.msra.mxu0 0.0
  %7605 = vmatprep.subr.mxu0 0.0
  %7606 = vmatpush1.msra.mxu0 0.0
  %7607 = vmatprep.subr.mxu0 0.0
  %7608 = vmatpush1.msra.mxu0 0.0
  %7609 = vmatprep.subr.mxu0 0.0
  %7610 = vmatpush1.msra.mxu0 0.0
  %7611 = vmatprep.subr.mxu0 0.0
  %7612 = vmatpush1.msra.mxu0 0.0
  %7613 = vmatprep.subr.mxu0 0.0
  %7614 = vmatpush1.msra.mxu0 0.0
  %7615 = vmatprep.subr.mxu0 0.0
  %7616 = vmatpush1.msra.mxu0 0.0
  %7617 = vmatprep.subr.mxu0 0.0
  %7618 = vmatpush1.msra.mxu0 0.0
  %7619 = vmatprep.subr.mxu0 0.0
  %7620 = vmatpush1.msra.mxu0 0.0
  %7621 = vmatprep.subr.mxu0 0.0
  %7622 = vmatpush1.msra.mxu0 0.0
  %7623 = vmatprep.subr.mxu0 0.0
  %7624 = vmatpush1.msra.mxu0 0.0
  %7625 = vmatprep.mubr.f32.mxu0 0.0
  %v7626 = vand.u32 %v7527, 4294901760
  %v7627 = vsub.f32 %v7527, %v7626
  %v7628 = vand.u32 %v7627, 4294901760
  %v7629 = vsub.f32 %v7627, %v7628
  %v7630 = vand.u32 %v7629, 4294901760
  %7631 = vmatmul.mubr.f32.gmra.mrb[0].mxu0 %v7630
  %v7632 = vpop.f32.mrb[0].mxu0
  %v7633 = vadd.f32 0.0, %v7632
  %v7634 = vpop.f32.mrb[0].mxu0
  %7635 = vdwg.mxu0
  %7636 = vmatprep.subr.mxu0 0.0
  %v7637 = vand.u32 %v7529, 4294901760
  %v7638 = vsub.f32 %v7529, %v7637
  %v7639 = vand.u32 %v7638, 4294901760
  %v7640 = vsub.f32 %v7638, %v7639
  %v7641 = vand.u32 %v7640, 4294901760
  %7642 = vmatpush1.msra.mxu0 %v7641
  %7643 = vmatprep.subr.mxu0 0.0
  %v7644 = vand.u32 %v7530, 4294901760
  %v7645 = vsub.f32 %v7530, %v7644
  %v7646 = vand.u32 %v7645, 4294901760
  %v7647 = vsub.f32 %v7645, %v7646
  %v7648 = vand.u32 %v7647, 4294901760
  %7649 = vmatpush1.msra.mxu0 %v7648
  %7650 = vmatprep.subr.mxu0 0.0
  %v7651 = vand.u32 %v7531, 4294901760
  %v7652 = vsub.f32 %v7531, %v7651
  %v7653 = vand.u32 %v7652, 4294901760
  %v7654 = vsub.f32 %v7652, %v7653
  %v7655 = vand.u32 %v7654, 4294901760
  %7656 = vmatpush1.msra.mxu0 %v7655
  %7657 = vmatprep.subr.mxu0 0.0
  %v7658 = vand.u32 %v7532, 4294901760
  %v7659 = vsub.f32 %v7532, %v7658
  %v7660 = vand.u32 %v7659, 4294901760
  %v7661 = vsub.f32 %v7659, %v7660
  %v7662 = vand.u32 %v7661, 4294901760
  %7663 = vmatpush1.msra.mxu0 %v7662
  %7664 = vmatprep.subr.mxu0 0.0
  %v7665 = vand.u32 %v7533, 4294901760
  %v7666 = vsub.f32 %v7533, %v7665
  %v7667 = vand.u32 %v7666, 4294901760
  %v7668 = vsub.f32 %v7666, %v7667
  %v7669 = vand.u32 %v7668, 4294901760
  %7670 = vmatpush1.msra.mxu0 %v7669
  %7671 = vmatprep.subr.mxu0 0.0
  %v7672 = vand.u32 %v7534, 4294901760
  %v7673 = vsub.f32 %v7534, %v7672
  %v7674 = vand.u32 %v7673, 4294901760
  %v7675 = vsub.f32 %v7673, %v7674
  %v7676 = vand.u32 %v7675, 4294901760
  %7677 = vmatpush1.msra.mxu0 %v7676
  %7678 = vmatprep.subr.mxu0 0.0
  %v7679 = vand.u32 %v7535, 4294901760
  %v7680 = vsub.f32 %v7535, %v7679
  %v7681 = vand.u32 %v7680, 4294901760
  %v7682 = vsub.f32 %v7680, %v7681
  %v7683 = vand.u32 %v7682, 4294901760
  %7684 = vmatpush1.msra.mxu0 %v7683
  %7685 = vmatprep.subr.mxu0 0.0
  %v7686 = vand.u32 %v7536, 4294901760
  %v7687 = vsub.f32 %v7536, %v7686
  %v7688 = vand.u32 %v7687, 4294901760
  %v7689 = vsub.f32 %v7687, %v7688
  %v7690 = vand.u32 %v7689, 4294901760
  %7691 = vmatpush1.msra.mxu0 %v7690
  %7692 = vmatprep.subr.mxu0 0.0
  %v7693 = vand.u32 %v7537, 4294901760
  %v7694 = vsub.f32 %v7537, %v7693
  %v7695 = vand.u32 %v7694, 4294901760
  %v7696 = vsub.f32 %v7694, %v7695
  %v7697 = vand.u32 %v7696, 4294901760
  %7698 = vmatpush1.msra.mxu0 %v7697
  %7699 = vmatprep.subr.mxu0 0.0
  %v7700 = vand.u32 %v7538, 4294901760
  %v7701 = vsub.f32 %v7538, %v7700
  %v7702 = vand.u32 %v7701, 4294901760
  %v7703 = vsub.f32 %v7701, %v7702
  %v7704 = vand.u32 %v7703, 4294901760
  %7705 = vmatpush1.msra.mxu0 %v7704
  %7706 = vmatprep.subr.mxu0 0.0
  %v7707 = vand.u32 %v7539, 4294901760
  %v7708 = vsub.f32 %v7539, %v7707
  %v7709 = vand.u32 %v7708, 4294901760
  %v7710 = vsub.f32 %v7708, %v7709
  %v7711 = vand.u32 %v7710, 4294901760
  %7712 = vmatpush1.msra.mxu0 %v7711
  %7713 = vmatprep.subr.mxu0 0.0
  %v7714 = vand.u32 %v7540, 4294901760
  %v7715 = vsub.f32 %v7540, %v7714
  %v7716 = vand.u32 %v7715, 4294901760
  %v7717 = vsub.f32 %v7715, %v7716
  %v7718 = vand.u32 %v7717, 4294901760
  %7719 = vmatpush1.msra.mxu0 %v7718
  %7720 = vmatprep.subr.mxu0 0.0
  %v7721 = vand.u32 %v7541, 4294901760
  %v7722 = vsub.f32 %v7541, %v7721
  %v7723 = vand.u32 %v7722, 4294901760
  %v7724 = vsub.f32 %v7722, %v7723
  %v7725 = vand.u32 %v7724, 4294901760
  %7726 = vmatpush1.msra.mxu0 %v7725
  %7727 = vmatprep.subr.mxu0 0.0
  %v7728 = vand.u32 %v7542, 4294901760
  %v7729 = vsub.f32 %v7542, %v7728
  %v7730 = vand.u32 %v7729, 4294901760
  %v7731 = vsub.f32 %v7729, %v7730
  %v7732 = vand.u32 %v7731, 4294901760
  %7733 = vmatpush1.msra.mxu0 %v7732
  %7734 = vmatprep.subr.mxu0 0.0
  %v7735 = vand.u32 %v7543, 4294901760
  %v7736 = vsub.f32 %v7543, %v7735
  %v7737 = vand.u32 %v7736, 4294901760
  %v7738 = vsub.f32 %v7736, %v7737
  %v7739 = vand.u32 %v7738, 4294901760
  %7740 = vmatpush1.msra.mxu0 %v7739
  %7741 = vmatprep.subr.mxu0 0.0
  %v7742 = vand.u32 %v7544, 4294901760
  %v7743 = vsub.f32 %v7544, %v7742
  %v7744 = vand.u32 %v7743, 4294901760
  %v7745 = vsub.f32 %v7743, %v7744
  %v7746 = vand.u32 %v7745, 4294901760
  %7747 = vmatpush1.msra.mxu0 %v7746
  %7748 = vmatprep.subr.mxu0 0.0
  %7749 = vmatpush1.msra.mxu0 0.0
  %7750 = vmatprep.subr.mxu0 0.0
  %7751 = vmatpush1.msra.mxu0 0.0
  %7752 = vmatprep.subr.mxu0 0.0
  %7753 = vmatpush1.msra.mxu0 0.0
  %7754 = vmatprep.subr.mxu0 0.0
  %7755 = vmatpush1.msra.mxu0 0.0
  %7756 = vmatprep.subr.mxu0 0.0
  %7757 = vmatpush1.msra.mxu0 0.0
  %7758 = vmatprep.subr.mxu0 0.0
  %7759 = vmatpush1.msra.mxu0 0.0
  %7760 = vmatprep.subr.mxu0 0.0
  %7761 = vmatpush1.msra.mxu0 0.0
  %7762 = vmatprep.subr.mxu0 0.0
  %7763 = vmatpush1.msra.mxu0 0.0
  %7764 = vmatprep.subr.mxu0 0.0
  %7765 = vmatpush1.msra.mxu0 0.0
  %7766 = vmatprep.subr.mxu0 0.0
  %7767 = vmatpush1.msra.mxu0 0.0
  %7768 = vmatprep.subr.mxu0 0.0
  %7769 = vmatpush1.msra.mxu0 0.0
  %7770 = vmatprep.subr.mxu0 0.0
  %7771 = vmatpush1.msra.mxu0 0.0
  %7772 = vmatprep.subr.mxu0 0.0
  %7773 = vmatpush1.msra.mxu0 0.0
  %7774 = vmatprep.subr.mxu0 0.0
  %7775 = vmatpush1.msra.mxu0 0.0
  %7776 = vmatprep.subr.mxu0 0.0
  %7777 = vmatpush1.msra.mxu0 0.0
  %7778 = vmatprep.subr.mxu0 0.0
  %7779 = vmatpush1.msra.mxu0 0.0
  %7780 = vmatprep.mubr.f32.mxu0 0.0
  %v7781 = vand.u32 %v7527, 4294901760
  %7782 = vmatmul.mubr.f32.gmra.mrb[0].mxu0 %v7781
  %v7783 = vpop.f32.mrb[0].mxu0
  %v7784 = vadd.f32 %v7633, %v7783
  %v7785 = vpop.f32.mrb[0].mxu0
  %7786 = vdwg.mxu0
  %7787 = vmatprep.subr.mxu0 0.0
  %v7788 = vand.u32 %v7529, 4294901760
  %v7789 = vsub.f32 %v7529, %v7788
  %7790 = vmatpush1.msra.mxu0 %v7789
  %7791 = vmatprep.subr.mxu0 0.0
  %v7792 = vand.u32 %v7530, 4294901760
  %v7793 = vsub.f32 %v7530, %v7792
  %7794 = vmatpush1.msra.mxu0 %v7793
  %7795 = vmatprep.subr.mxu0 0.0
  %v7796 = vand.u32 %v7531, 4294901760
  %v7797 = vsub.f32 %v7531, %v7796
  %7798 = vmatpush1.msra.mxu0 %v7797
  %7799 = vmatprep.subr.mxu0 0.0
  %v7800 = vand.u32 %v7532, 4294901760
  %v7801 = vsub.f32 %v7532, %v7800
  %7802 = vmatpush1.msra.mxu0 %v7801
  %7803 = vmatprep.subr.mxu0 0.0
  %v7804 = vand.u32 %v7533, 4294901760
  %v7805 = vsub.f32 %v7533, %v7804
  %7806 = vmatpush1.msra.mxu0 %v7805
  %7807 = vmatprep.subr.mxu0 0.0
  %v7808 = vand.u32 %v7534, 4294901760
  %v7809 = vsub.f32 %v7534, %v7808
  %7810 = vmatpush1.msra.mxu0 %v7809
  %7811 = vmatprep.subr.mxu0 0.0
  %v7812 = vand.u32 %v7535, 4294901760
  %v7813 = vsub.f32 %v7535, %v7812
  %7814 = vmatpush1.msra.mxu0 %v7813
  %7815 = vmatprep.subr.mxu0 0.0
  %v7816 = vand.u32 %v7536, 4294901760
  %v7817 = vsub.f32 %v7536, %v7816
  %7818 = vmatpush1.msra.mxu0 %v7817
  %7819 = vmatprep.subr.mxu0 0.0
  %v7820 = vand.u32 %v7537, 4294901760
  %v7821 = vsub.f32 %v7537, %v7820
  %7822 = vmatpush1.msra.mxu0 %v7821
  %7823 = vmatprep.subr.mxu0 0.0
  %v7824 = vand.u32 %v7538, 4294901760
  %v7825 = vsub.f32 %v7538, %v7824
  %7826 = vmatpush1.msra.mxu0 %v7825
  %7827 = vmatprep.subr.mxu0 0.0
  %v7828 = vand.u32 %v7539, 4294901760
  %v7829 = vsub.f32 %v7539, %v7828
  %7830 = vmatpush1.msra.mxu0 %v7829
  %7831 = vmatprep.subr.mxu0 0.0
  %v7832 = vand.u32 %v7540, 4294901760
  %v7833 = vsub.f32 %v7540, %v7832
  %7834 = vmatpush1.msra.mxu0 %v7833
  %7835 = vmatprep.subr.mxu0 0.0
  %v7836 = vand.u32 %v7541, 4294901760
  %v7837 = vsub.f32 %v7541, %v7836
  %7838 = vmatpush1.msra.mxu0 %v7837
  %7839 = vmatprep.subr.mxu0 0.0
  %v7840 = vand.u32 %v7542, 4294901760
  %v7841 = vsub.f32 %v7542, %v7840
  %7842 = vmatpush1.msra.mxu0 %v7841
  %7843 = vmatprep.subr.mxu0 0.0
  %v7844 = vand.u32 %v7543, 4294901760
  %v7845 = vsub.f32 %v7543, %v7844
  %7846 = vmatpush1.msra.mxu0 %v7845
  %7847 = vmatprep.subr.mxu0 0.0
  %v7848 = vand.u32 %v7544, 4294901760
  %v7849 = vsub.f32 %v7544, %v7848
  %7850 = vmatpush1.msra.mxu0 %v7849
  %7851 = vmatprep.subr.mxu0 0.0
  %7852 = vmatpush1.msra.mxu0 0.0
  %7853 = vmatprep.subr.mxu0 0.0
  %7854 = vmatpush1.msra.mxu0 0.0
  %7855 = vmatprep.subr.mxu0 0.0
  %7856 = vmatpush1.msra.mxu0 0.0
  %7857 = vmatprep.subr.mxu0 0.0
  %7858 = vmatpush1.msra.mxu0 0.0
  %7859 = vmatprep.subr.mxu0 0.0
  %7860 = vmatpush1.msra.mxu0 0.0
  %7861 = vmatprep.subr.mxu0 0.0
  %7862 = vmatpush1.msra.mxu0 0.0
  %7863 = vmatprep.subr.mxu0 0.0
  %7864 = vmatpush1.msra.mxu0 0.0
  %7865 = vmatprep.subr.mxu0 0.0
  %7866 = vmatpush1.msra.mxu0 0.0
  %7867 = vmatprep.subr.mxu0 0.0
  %7868 = vmatpush1.msra.mxu0 0.0
  %7869 = vmatprep.subr.mxu0 0.0
  %7870 = vmatpush1.msra.mxu0 0.0
  %7871 = vmatprep.subr.mxu0 0.0
  %7872 = vmatpush1.msra.mxu0 0.0
  %7873 = vmatprep.subr.mxu0 0.0
  %7874 = vmatpush1.msra.mxu0 0.0
  %7875 = vmatprep.subr.mxu0 0.0
  %7876 = vmatpush1.msra.mxu0 0.0
  %7877 = vmatprep.subr.mxu0 0.0
  %7878 = vmatpush1.msra.mxu0 0.0
  %7879 = vmatprep.subr.mxu0 0.0
  %7880 = vmatpush1.msra.mxu0 0.0
  %7881 = vmatprep.subr.mxu0 0.0
  %7882 = vmatpush1.msra.mxu0 0.0
  %7883 = vmatprep.mubr.f32.mxu0 0.0
  %v7884 = vand.u32 %v7527, 4294901760
  %v7885 = vsub.f32 %v7527, %v7884
  %7886 = vmatmul.mubr.f32.gmra.mrb[0].mxu0 %v7885
  %v7887 = vpop.f32.mrb[0].mxu0
  %v7888 = vadd.f32 %v7784, %v7887
  %v7889 = vpop.f32.mrb[0].mxu0
  %7890 = vdwg.mxu0
  %7891 = vmatprep.subr.mxu0 0.0
  %v7892 = vand.u32 %v7529, 4294901760
  %7893 = vmatpush1.msra.mxu0 %v7892
  %7894 = vmatprep.subr.mxu0 0.0
  %v7895 = vand.u32 %v7530, 4294901760
  %7896 = vmatpush1.msra.mxu0 %v7895
  %7897 = vmatprep.subr.mxu0 0.0
  %v7898 = vand.u32 %v7531, 4294901760
  %7899 = vmatpush1.msra.mxu0 %v7898
  %7900 = vmatprep.subr.mxu0 0.0
  %v7901 = vand.u32 %v7532, 4294901760
  %7902 = vmatpush1.msra.mxu0 %v7901
  %7903 = vmatprep.subr.mxu0 0.0
  %v7904 = vand.u32 %v7533, 4294901760
  %7905 = vmatpush1.msra.mxu0 %v7904
  %7906 = vmatprep.subr.mxu0 0.0
  %v7907 = vand.u32 %v7534, 4294901760
  %7908 = vmatpush1.msra.mxu0 %v7907
  %7909 = vmatprep.subr.mxu0 0.0
  %v7910 = vand.u32 %v7535, 4294901760
  %7911 = vmatpush1.msra.mxu0 %v7910
  %7912 = vmatprep.subr.mxu0 0.0
  %v7913 = vand.u32 %v7536, 4294901760
  %7914 = vmatpush1.msra.mxu0 %v7913
  %7915 = vmatprep.subr.mxu0 0.0
  %v7916 = vand.u32 %v7537, 4294901760
  %7917 = vmatpush1.msra.mxu0 %v7916
  %7918 = vmatprep.subr.mxu0 0.0
  %v7919 = vand.u32 %v7538, 4294901760
  %7920 = vmatpush1.msra.mxu0 %v7919
  %7921 = vmatprep.subr.mxu0 0.0
  %v7922 = vand.u32 %v7539, 4294901760
  %7923 = vmatpush1.msra.mxu0 %v7922
  %7924 = vmatprep.subr.mxu0 0.0
  %v7925 = vand.u32 %v7540, 4294901760
  %7926 = vmatpush1.msra.mxu0 %v7925
  %7927 = vmatprep.subr.mxu0 0.0
  %v7928 = vand.u32 %v7541, 4294901760
  %7929 = vmatpush1.msra.mxu0 %v7928
  %7930 = vmatprep.subr.mxu0 0.0
  %v7931 = vand.u32 %v7542, 4294901760
  %7932 = vmatpush1.msra.mxu0 %v7931
  %7933 = vmatprep.subr.mxu0 0.0
  %v7934 = vand.u32 %v7543, 4294901760
  %7935 = vmatpush1.msra.mxu0 %v7934
  %7936 = vmatprep.subr.mxu0 0.0
  %v7937 = vand.u32 %v7544, 4294901760
  %7938 = vmatpush1.msra.mxu0 %v7937
  %7939 = vmatprep.subr.mxu0 0.0
  %7940 = vmatpush1.msra.mxu0 0.0
  %7941 = vmatprep.subr.mxu0 0.0
  %7942 = vmatpush1.msra.mxu0 0.0
  %7943 = vmatprep.subr.mxu0 0.0
  %7944 = vmatpush1.msra.mxu0 0.0
  %7945 = vmatprep.subr.mxu0 0.0
  %7946 = vmatpush1.msra.mxu0 0.0
  %7947 = vmatprep.subr.mxu0 0.0
  %7948 = vmatpush1.msra.mxu0 0.0
  %7949 = vmatprep.subr.mxu0 0.0
  %7950 = vmatpush1.msra.mxu0 0.0
  %7951 = vmatprep.subr.mxu0 0.0
  %7952 = vmatpush1.msra.mxu0 0.0
  %7953 = vmatprep.subr.mxu0 0.0
  %7954 = vmatpush1.msra.mxu0 0.0
  %7955 = vmatprep.subr.mxu0 0.0
  %7956 = vmatpush1.msra.mxu0 0.0
  %7957 = vmatprep.subr.mxu0 0.0
  %7958 = vmatpush1.msra.mxu0 0.0
  %7959 = vmatprep.subr.mxu0 0.0
  %7960 = vmatpush1.msra.mxu0 0.0
  %7961 = vmatprep.subr.mxu0 0.0
  %7962 = vmatpush1.msra.mxu0 0.0
  %7963 = vmatprep.subr.mxu0 0.0
  %7964 = vmatpush1.msra.mxu0 0.0
  %7965 = vmatprep.subr.mxu0 0.0
  %7966 = vmatpush1.msra.mxu0 0.0
  %7967 = vmatprep.subr.mxu0 0.0
  %7968 = vmatpush1.msra.mxu0 0.0
  %7969 = vmatprep.subr.mxu0 0.0
  %7970 = vmatpush1.msra.mxu0 0.0
  %7971 = vmatprep.mubr.f32.mxu0 0.0
  %v7972 = vand.u32 %v7527, 4294901760
  %v7973 = vsub.f32 %v7527, %v7972
  %v7974 = vand.u32 %v7973, 4294901760
  %7975 = vmatmul.mubr.f32.gmra.mrb[0].mxu0 %v7974
  %v7976 = vpop.f32.mrb[0].mxu0
  %v7977 = vadd.f32 %v7888, %v7976
  %v7978 = vpop.f32.mrb[0].mxu0
  %7979 = vdwg.mxu0
  %7980 = vmatprep.subr.mxu0 0.0
  %v7981 = vand.u32 %v7529, 4294901760
  %v7982 = vsub.f32 %v7529, %v7981
  %v7983 = vand.u32 %v7982, 4294901760
  %7984 = vmatpush1.msra.mxu0 %v7983
  %7985 = vmatprep.subr.mxu0 0.0
  %v7986 = vand.u32 %v7530, 4294901760
  %v7987 = vsub.f32 %v7530, %v7986
  %v7988 = vand.u32 %v7987, 4294901760
  %7989 = vmatpush1.msra.mxu0 %v7988
  %7990 = vmatprep.subr.mxu0 0.0
  %v7991 = vand.u32 %v7531, 4294901760
  %v7992 = vsub.f32 %v7531, %v7991
  %v7993 = vand.u32 %v7992, 4294901760
  %7994 = vmatpush1.msra.mxu0 %v7993
  %7995 = vmatprep.subr.mxu0 0.0
  %v7996 = vand.u32 %v7532, 4294901760
  %v7997 = vsub.f32 %v7532, %v7996
  %v7998 = vand.u32 %v7997, 4294901760
  %7999 = vmatpush1.msra.mxu0 %v7998
  %8000 = vmatprep.subr.mxu0 0.0
  %v8001 = vand.u32 %v7533, 4294901760
  %v8002 = vsub.f32 %v7533, %v8001
  %v8003 = vand.u32 %v8002, 4294901760
  %8004 = vmatpush1.msra.mxu0 %v8003
  %8005 = vmatprep.subr.mxu0 0.0
  %v8006 = vand.u32 %v7534, 4294901760
  %v8007 = vsub.f32 %v7534, %v8006
  %v8008 = vand.u32 %v8007, 4294901760
  %8009 = vmatpush1.msra.mxu0 %v8008
  %8010 = vmatprep.subr.mxu0 0.0
  %v8011 = vand.u32 %v7535, 4294901760
  %v8012 = vsub.f32 %v7535, %v8011
  %v8013 = vand.u32 %v8012, 4294901760
  %8014 = vmatpush1.msra.mxu0 %v8013
  %8015 = vmatprep.subr.mxu0 0.0
  %v8016 = vand.u32 %v7536, 4294901760
  %v8017 = vsub.f32 %v7536, %v8016
  %v8018 = vand.u32 %v8017, 4294901760
  %8019 = vmatpush1.msra.mxu0 %v8018
  %8020 = vmatprep.subr.mxu0 0.0
  %v8021 = vand.u32 %v7537, 4294901760
  %v8022 = vsub.f32 %v7537, %v8021
  %v8023 = vand.u32 %v8022, 4294901760
  %8024 = vmatpush1.msra.mxu0 %v8023
  %8025 = vmatprep.subr.mxu0 0.0
  %v8026 = vand.u32 %v7538, 4294901760
  %v8027 = vsub.f32 %v7538, %v8026
  %v8028 = vand.u32 %v8027, 4294901760
  %8029 = vmatpush1.msra.mxu0 %v8028
  %8030 = vmatprep.subr.mxu0 0.0
  %v8031 = vand.u32 %v7539, 4294901760
  %v8032 = vsub.f32 %v7539, %v8031
  %v8033 = vand.u32 %v8032, 4294901760
  %8034 = vmatpush1.msra.mxu0 %v8033
  %8035 = vmatprep.subr.mxu0 0.0
  %v8036 = vand.u32 %v7540, 4294901760
  %v8037 = vsub.f32 %v7540, %v8036
  %v8038 = vand.u32 %v8037, 4294901760
  %8039 = vmatpush1.msra.mxu0 %v8038
  %8040 = vmatprep.subr.mxu0 0.0
  %v8041 = vand.u32 %v7541, 4294901760
  %v8042 = vsub.f32 %v7541, %v8041
  %v8043 = vand.u32 %v8042, 4294901760
  %8044 = vmatpush1.msra.mxu0 %v8043
  %8045 = vmatprep.subr.mxu0 0.0
  %v8046 = vand.u32 %v7542, 4294901760
  %v8047 = vsub.f32 %v7542, %v8046
  %v8048 = vand.u32 %v8047, 4294901760
  %8049 = vmatpush1.msra.mxu0 %v8048
  %8050 = vmatprep.subr.mxu0 0.0
  %v8051 = vand.u32 %v7543, 4294901760
  %v8052 = vsub.f32 %v7543, %v8051
  %v8053 = vand.u32 %v8052, 4294901760
  %8054 = vmatpush1.msra.mxu0 %v8053
  %8055 = vmatprep.subr.mxu0 0.0
  %v8056 = vand.u32 %v7544, 4294901760
  %v8057 = vsub.f32 %v7544, %v8056
  %v8058 = vand.u32 %v8057, 4294901760
  %8059 = vmatpush1.msra.mxu0 %v8058
  %8060 = vmatprep.subr.mxu0 0.0
  %8061 = vmatpush1.msra.mxu0 0.0
  %8062 = vmatprep.subr.mxu0 0.0
  %8063 = vmatpush1.msra.mxu0 0.0
  %8064 = vmatprep.subr.mxu0 0.0
  %8065 = vmatpush1.msra.mxu0 0.0
  %8066 = vmatprep.subr.mxu0 0.0
  %8067 = vmatpush1.msra.mxu0 0.0
  %8068 = vmatprep.subr.mxu0 0.0
  %8069 = vmatpush1.msra.mxu0 0.0
  %8070 = vmatprep.subr.mxu0 0.0
  %8071 = vmatpush1.msra.mxu0 0.0
  %8072 = vmatprep.subr.mxu0 0.0
  %8073 = vmatpush1.msra.mxu0 0.0
  %8074 = vmatprep.subr.mxu0 0.0
  %8075 = vmatpush1.msra.mxu0 0.0
  %8076 = vmatprep.subr.mxu0 0.0
  %8077 = vmatpush1.msra.mxu0 0.0
  %8078 = vmatprep.subr.mxu0 0.0
  %8079 = vmatpush1.msra.mxu0 0.0
  %8080 = vmatprep.subr.mxu0 0.0
  %8081 = vmatpush1.msra.mxu0 0.0
  %8082 = vmatprep.subr.mxu0 0.0
  %8083 = vmatpush1.msra.mxu0 0.0
  %8084 = vmatprep.subr.mxu0 0.0
  %8085 = vmatpush1.msra.mxu0 0.0
  %8086 = vmatprep.subr.mxu0 0.0
  %8087 = vmatpush1.msra.mxu0 0.0
  %8088 = vmatprep.subr.mxu0 0.0
  %8089 = vmatpush1.msra.mxu0 0.0
  %8090 = vmatprep.subr.mxu0 0.0
  %8091 = vmatpush1.msra.mxu0 0.0
  %8092 = vmatprep.mubr.f32.mxu0 0.0
  %v8093 = vand.u32 %v7527, 4294901760
  %8094 = vmatmul.mubr.f32.gmra.mrb[0].mxu0 %v8093
  %v8095 = vpop.f32.mrb[0].mxu0
  %v8096 = vadd.f32 %v7977, %v8095
  %v8097 = vpop.f32.mrb[0].mxu0
  %8098 = vdwg.mxu0
  %8099 = vmatprep.subr.mxu0 0.0
  %v8100 = vand.u32 %v7529, 4294901760
  %8101 = vmatpush1.msra.mxu0 %v8100
  %8102 = vmatprep.subr.mxu0 0.0
  %v8103 = vand.u32 %v7530, 4294901760
  %8104 = vmatpush1.msra.mxu0 %v8103
  %8105 = vmatprep.subr.mxu0 0.0
  %v8106 = vand.u32 %v7531, 4294901760
  %8107 = vmatpush1.msra.mxu0 %v8106
  %8108 = vmatprep.subr.mxu0 0.0
  %v8109 = vand.u32 %v7532, 4294901760
  %8110 = vmatpush1.msra.mxu0 %v8109
  %8111 = vmatprep.subr.mxu0 0.0
  %v8112 = vand.u32 %v7533, 4294901760
  %8113 = vmatpush1.msra.mxu0 %v8112
  %8114 = vmatprep.subr.mxu0 0.0
  %v8115 = vand.u32 %v7534, 4294901760
  %8116 = vmatpush1.msra.mxu0 %v8115
  %8117 = vmatprep.subr.mxu0 0.0
  %v8118 = vand.u32 %v7535, 4294901760
  %8119 = vmatpush1.msra.mxu0 %v8118
  %8120 = vmatprep.subr.mxu0 0.0
  %v8121 = vand.u32 %v7536, 4294901760
  %8122 = vmatpush1.msra.mxu0 %v8121
  %8123 = vmatprep.subr.mxu0 0.0
  %v8124 = vand.u32 %v7537, 4294901760
  %8125 = vmatpush1.msra.mxu0 %v8124
  %8126 = vmatprep.subr.mxu0 0.0
  %v8127 = vand.u32 %v7538, 4294901760
  %8128 = vmatpush1.msra.mxu0 %v8127
  %8129 = vmatprep.subr.mxu0 0.0
  %v8130 = vand.u32 %v7539, 4294901760
  %8131 = vmatpush1.msra.mxu0 %v8130
  %8132 = vmatprep.subr.mxu0 0.0
  %v8133 = vand.u32 %v7540, 4294901760
  %8134 = vmatpush1.msra.mxu0 %v8133
  %8135 = vmatprep.subr.mxu0 0.0
  %v8136 = vand.u32 %v7541, 4294901760
  %8137 = vmatpush1.msra.mxu0 %v8136
  %8138 = vmatprep.subr.mxu0 0.0
  %v8139 = vand.u32 %v7542, 4294901760
  %8140 = vmatpush1.msra.mxu0 %v8139
  %8141 = vmatprep.subr.mxu0 0.0
  %v8142 = vand.u32 %v7543, 4294901760
  %8143 = vmatpush1.msra.mxu0 %v8142
  %8144 = vmatprep.subr.mxu0 0.0
  %v8145 = vand.u32 %v7544, 4294901760
  %8146 = vmatpush1.msra.mxu0 %v8145
  %8147 = vmatprep.subr.mxu0 0.0
  %8148 = vmatpush1.msra.mxu0 0.0
  %8149 = vmatprep.subr.mxu0 0.0
  %8150 = vmatpush1.msra.mxu0 0.0
  %8151 = vmatprep.subr.mxu0 0.0
  %8152 = vmatpush1.msra.mxu0 0.0
  %8153 = vmatprep.subr.mxu0 0.0
  %8154 = vmatpush1.msra.mxu0 0.0
  %8155 = vmatprep.subr.mxu0 0.0
  %8156 = vmatpush1.msra.mxu0 0.0
  %8157 = vmatprep.subr.mxu0 0.0
  %8158 = vmatpush1.msra.mxu0 0.0
  %8159 = vmatprep.subr.mxu0 0.0
  %8160 = vmatpush1.msra.mxu0 0.0
  %8161 = vmatprep.subr.mxu0 0.0
  %8162 = vmatpush1.msra.mxu0 0.0
  %8163 = vmatprep.subr.mxu0 0.0
  %8164 = vmatpush1.msra.mxu0 0.0
  %8165 = vmatprep.subr.mxu0 0.0
  %8166 = vmatpush1.msra.mxu0 0.0
  %8167 = vmatprep.subr.mxu0 0.0
  %8168 = vmatpush1.msra.mxu0 0.0
  %8169 = vmatprep.subr.mxu0 0.0
  %8170 = vmatpush1.msra.mxu0 0.0
  %8171 = vmatprep.subr.mxu0 0.0
  %8172 = vmatpush1.msra.mxu0 0.0
  %8173 = vmatprep.subr.mxu0 0.0
  %8174 = vmatpush1.msra.mxu0 0.0
  %8175 = vmatprep.subr.mxu0 0.0
  %8176 = vmatpush1.msra.mxu0 0.0
  %8177 = vmatprep.subr.mxu0 0.0
  %8178 = vmatpush1.msra.mxu0 0.0
  %8179 = vmatprep.mubr.f32.mxu0 0.0
  %v8180 = vand.u32 %v7527, 4294901760
  %8181 = vmatmul.mubr.f32.gmra.mrb[0].mxu0 %v8180
  %v8182 = vpop.f32.mrb[0].mxu0
  %v8183 = vadd.f32 %v8096, %v8182
  %v8184 = vpop.f32.mrb[0].mxu0
  %8185 = vdwg.mxu0
  %v8186 = vadd.f32 %v7525, %v8183
  %v8187 = vmax.f32 %v8186, 0.0
  %v8188 = vld [vmem:[%s5] sm:$0xff]
  %v8189 = vld [vmem:[%s5 + $0x8] sm:$0xff]
  %v8190 = vld [vmem:[%s5 + $0x10] sm:$0xff]
  %v8191 = vld [vmem:[%s5 + $0x18] sm:$0xff]
  %v8192 = vld [vmem:[%s5 + $0x20] sm:$0xff]
  %v8193 = vld [vmem:[%s5 + $0x28] sm:$0xff]
  %v8194 = vld [vmem:[%s5 + $0x30] sm:$0xff]
  %v8195 = vld [vmem:[%s5 + $0x38] sm:$0xff]
  %v8196 = vld [vmem:[%s5 + $0x40] sm:$0xff]
  %v8197 = vld [vmem:[%s5 + $0x48] sm:$0xff]
  %v8198 = vld [vmem:[%s5 + $0x50] sm:$0xff]
  %v8199 = vld [vmem:[%s5 + $0x58] sm:$0xff]
  %v8200 = vld [vmem:[%s5 + $0x60] sm:$0xff]
  %v8201 = vld [vmem:[%s5 + $0x68] sm:$0xff]
  %v8202 = vld [vmem:[%s5 + $0x70] sm:$0xff]
  %v8203 = vld [vmem:[%s5 + $0x78] sm:$0xff]
  %v8204 = vld [vmem:[%s5 + $0x80] sm:$0xff]
  %v8205 = vld [vmem:[%s5 + $0x88] sm:$0xff]
  %v8206 = vld [vmem:[%s5 + $0x90] sm:$0xff]
  %v8207 = vld [vmem:[%s5 + $0x98] sm:$0xff]
  %v8208 = vld [vmem:[%s5 + $0xa0] sm:$0xff]
  %v8209 = vld [vmem:[%s5 + $0xa8] sm:$0xff]
  %v8210 = vld [vmem:[%s5 + $0xb0] sm:$0xff]
  %v8211 = vld [vmem:[%s5 + $0xb8] sm:$0xff]
  %v8212 = vld [vmem:[%s5 + $0xc0] sm:$0xff]
  %v8213 = vld [vmem:[%s5 + $0xc8] sm:$0xff]
  %v8214 = vld [vmem:[%s5 + $0xd0] sm:$0xff]
  %v8215 = vld [vmem:[%s5 + $0xd8] sm:$0xff]
  %v8216 = vld [vmem:[%s5 + $0xe0] sm:$0xff]
  %v8217 = vld [vmem:[%s5 + $0xe8] sm:$0xff]
  %v8218 = vld [vmem:[%s5 + $0xf0] sm:$0xff]
  %v8219 = vld [vmem:[%s5 + $0xf8] sm:$0xff]
  %v8220 = vld [vmem:[%s5 + $0x100] sm:$0xff]
  %v8221 = vld [vmem:[%s5 + $0x108] sm:$0xff]
  %v8222 = vld [vmem:[%s5 + $0x110] sm:$0xff]
  %v8223 = vld [vmem:[%s5 + $0x118] sm:$0xff]
  %v8224 = vld [vmem:[%s5 + $0x120] sm:$0xff]
  %v8225 = vld [vmem:[%s5 + $0x128] sm:$0xff]
  %v8226 = vld [vmem:[%s6] sm:$0xff]
  %v8227 = vld [vmem:[%s6 + $0x8] sm:$0xff]
  %v8228 = vld [vmem:[%s6 + $0x10] sm:$0xff]
  %v8229 = vld [vmem:[%s6 + $0x18] sm:$0xff]
  %v8230 = vld [vmem:[%s6 + $0x20] sm:$0xff]
  %v8231 = vld [vmem:[%s6 + $0x28] sm:$0xff]
  %v8232 = vld [vmem:[%s6 + $0x30] sm:$0xff]
  %v8233 = vld [vmem:[%s6 + $0x38] sm:$0xff]
  %v8234 = vld [vmem:[%s6 + $0x40] sm:$0xff]
  %v8235 = vld [vmem:[%s6 + $0x48] sm:$0xff]
  %v8236 = vld [vmem:[%s6 + $0x50] sm:$0xff]
  %v8237 = vld [vmem:[%s6 + $0x58] sm:$0xff]
  %v8238 = vld [vmem:[%s6 + $0x60] sm:$0xff]
  %v8239 = vld [vmem:[%s6 + $0x68] sm:$0xff]
  %v8240 = vld [vmem:[%s6 + $0x70] sm:$0xff]
  %v8241 = vld [vmem:[%s6 + $0x78] sm:$0xff]
  %v8242 = vld [vmem:[%s6 + $0x80] sm:$0xff]
  %v8243 = vld [vmem:[%s6 + $0x88] sm:$0xff]
  %v8244 = vld [vmem:[%s6 + $0x90] sm:$0xff]
  %v8245 = vld [vmem:[%s6 + $0x98] sm:$0xff]
  %v8246 = vld [vmem:[%s6 + $0xa0] sm:$0xff]
  %v8247 = vld [vmem:[%s6 + $0xa8] sm:$0xff]
  %v8248 = vld [vmem:[%s6 + $0xb0] sm:$0xff]
  %v8249 = vld [vmem:[%s6 + $0xb8] sm:$0xff]
  %v8250 = vld [vmem:[%s6 + $0xc0] sm:$0xff]
  %v8251 = vld [vmem:[%s6 + $0xc8] sm:$0xff]
  %v8252 = vld [vmem:[%s6 + $0xd0] sm:$0xff]
  %v8253 = vld [vmem:[%s6 + $0xd8] sm:$0xff]
  %v8254 = vld [vmem:[%s6 + $0xe0] sm:$0xff]
  %v8255 = vld [vmem:[%s6 + $0xe8] sm:$0xff]
  %v8256 = vld [vmem:[%s6 + $0xf0] sm:$0xff]
  %v8257 = vld [vmem:[%s6 + $0xf8] sm:$0xff]
  %v8258 = vld [vmem:[%s6 + $0x100] sm:$0xff]
  %v8259 = vld [vmem:[%s6 + $0x108] sm:$0xff]
  %v8260 = vld [vmem:[%s6 + $0x110] sm:$0xff]
  %v8261 = vld [vmem:[%s6 + $0x118] sm:$0xff]
  %v8262 = vld [vmem:[%s6 + $0x120] sm:$0xff]
  %v8263 = vld [vmem:[%s6 + $0x128] sm:$0xff]
  %8265 = vset.pattern.permute.xlu0 0
  %8266 = vperm.xlu0 %8265, %v8226
  %v8267 = vpop.permute.xlu0 %8266
  %8270 = vset.pattern.permute.xlu0 0
  %8271 = vperm.xlu0 %8270, %v8227
  %v8272 = vpop.permute.xlu0 %8271
  %8275 = vset.pattern.permute.xlu0 0
  %8276 = vperm.xlu0 %8275, %v8228
  %v8277 = vpop.permute.xlu0 %8276
  %8280 = vset.pattern.permute.xlu0 0
  %8281 = vperm.xlu0 %8280, %v8229
  %v8282 = vpop.permute.xlu0 %8281
  %8285 = vset.pattern.permute.xlu0 0
  %8286 = vperm.xlu0 %8285, %v8230
  %v8287 = vpop.permute.xlu0 %8286
  %8290 = vset.pattern.permute.xlu0 0
  %8291 = vperm.xlu0 %8290, %v8231
  %v8292 = vpop.permute.xlu0 %8291
  %8295 = vset.pattern.permute.xlu0 0
  %8296 = vperm.xlu0 %8295, %v8232
  %v8297 = vpop.permute.xlu0 %8296
  %8300 = vset.pattern.permute.xlu0 0
  %8301 = vperm.xlu0 %8300, %v8233
  %v8302 = vpop.permute.xlu0 %8301
  %8305 = vset.pattern.permute.xlu0 0
  %8306 = vperm.xlu0 %8305, %v8234
  %v8307 = vpop.permute.xlu0 %8306
  %8310 = vset.pattern.permute.xlu0 0
  %8311 = vperm.xlu0 %8310, %v8235
  %v8312 = vpop.permute.xlu0 %8311
  %8315 = vset.pattern.permute.xlu0 0
  %8316 = vperm.xlu0 %8315, %v8236
  %v8317 = vpop.permute.xlu0 %8316
  %8320 = vset.pattern.permute.xlu0 0
  %8321 = vperm.xlu0 %8320, %v8237
  %v8322 = vpop.permute.xlu0 %8321
  %8325 = vset.pattern.permute.xlu0 0
  %8326 = vperm.xlu0 %8325, %v8238
  %v8327 = vpop.permute.xlu0 %8326
  %8330 = vset.pattern.permute.xlu0 0
  %8331 = vperm.xlu0 %8330, %v8239
  %v8332 = vpop.permute.xlu0 %8331
  %8335 = vset.pattern.permute.xlu0 0
  %8336 = vperm.xlu0 %8335, %v8240
  %v8337 = vpop.permute.xlu0 %8336
  %8340 = vset.pattern.permute.xlu0 0
  %8341 = vperm.xlu0 %8340, %v8241
  %v8342 = vpop.permute.xlu0 %8341
  %8345 = vset.pattern.permute.xlu0 0
  %8346 = vperm.xlu0 %8345, %v8242
  %v8347 = vpop.permute.xlu0 %8346
  %8350 = vset.pattern.permute.xlu0 0
  %8351 = vperm.xlu0 %8350, %v8243
  %v8352 = vpop.permute.xlu0 %8351
  %8355 = vset.pattern.permute.xlu0 0
  %8356 = vperm.xlu0 %8355, %v8244
  %v8357 = vpop.permute.xlu0 %8356
  %8360 = vset.pattern.permute.xlu0 0
  %8361 = vperm.xlu0 %8360, %v8245
  %v8362 = vpop.permute.xlu0 %8361
  %8365 = vset.pattern.permute.xlu0 0
  %8366 = vperm.xlu0 %8365, %v8246
  %v8367 = vpop.permute.xlu0 %8366
  %8370 = vset.pattern.permute.xlu0 0
  %8371 = vperm.xlu0 %8370, %v8247
  %v8372 = vpop.permute.xlu0 %8371
  %8375 = vset.pattern.permute.xlu0 0
  %8376 = vperm.xlu0 %8375, %v8248
  %v8377 = vpop.permute.xlu0 %8376
  %8380 = vset.pattern.permute.xlu0 0
  %8381 = vperm.xlu0 %8380, %v8249
  %v8382 = vpop.permute.xlu0 %8381
  %8385 = vset.pattern.permute.xlu0 0
  %8386 = vperm.xlu0 %8385, %v8250
  %v8387 = vpop.permute.xlu0 %8386
  %8390 = vset.pattern.permute.xlu0 0
  %8391 = vperm.xlu0 %8390, %v8251
  %v8392 = vpop.permute.xlu0 %8391
  %8395 = vset.pattern.permute.xlu0 0
  %8396 = vperm.xlu0 %8395, %v8252
  %v8397 = vpop.permute.xlu0 %8396
  %8400 = vset.pattern.permute.xlu0 0
  %8401 = vperm.xlu0 %8400, %v8253
  %v8402 = vpop.permute.xlu0 %8401
  %8405 = vset.pattern.permute.xlu0 0
  %8406 = vperm.xlu0 %8405, %v8254
  %v8407 = vpop.permute.xlu0 %8406
  %8410 = vset.pattern.permute.xlu0 0
  %8411 = vperm.xlu0 %8410, %v8255
  %v8412 = vpop.permute.xlu0 %8411
  %8415 = vset.pattern.permute.xlu0 0
  %8416 = vperm.xlu0 %8415, %v8256
  %v8417 = vpop.permute.xlu0 %8416
  %8420 = vset.pattern.permute.xlu0 0
  %8421 = vperm.xlu0 %8420, %v8257
  %v8422 = vpop.permute.xlu0 %8421
  %8425 = vset.pattern.permute.xlu0 0
  %8426 = vperm.xlu0 %8425, %v8258
  %v8427 = vpop.permute.xlu0 %8426
  %8430 = vset.pattern.permute.xlu0 0
  %8431 = vperm.xlu0 %8430, %v8259
  %v8432 = vpop.permute.xlu0 %8431
  %8435 = vset.pattern.permute.xlu0 0
  %8436 = vperm.xlu0 %8435, %v8260
  %v8437 = vpop.permute.xlu0 %8436
  %8440 = vset.pattern.permute.xlu0 0
  %8441 = vperm.xlu0 %8440, %v8261
  %v8442 = vpop.permute.xlu0 %8441
  %8445 = vset.pattern.permute.xlu0 0
  %8446 = vperm.xlu0 %8445, %v8262
  %v8447 = vpop.permute.xlu0 %8446
  %8450 = vset.pattern.permute.xlu0 0
  %8451 = vperm.xlu0 %8450, %v8263
  %v8452 = vpop.permute.xlu0 %8451
  %vm8454 = vcmask 261120
  %v8456 = vsel %vm8454, %v8188, 0
  %v8459 = vsel %vm8454, %v8189, 0
  %v8462 = vsel %vm8454, %v8190, 0
  %v8465 = vsel %vm8454, %v8191, 0
  %v8468 = vsel %vm8454, %v8192, 0
  %v8471 = vsel %vm8454, %v8193, 0
  %v8474 = vsel %vm8454, %v8194, 0
  %v8477 = vsel %vm8454, %v8195, 0
  %v8480 = vsel %vm8454, %v8196, 0
  %v8483 = vsel %vm8454, %v8197, 0
  %v8486 = vsel %vm8454, %v8198, 0
  %v8489 = vsel %vm8454, %v8199, 0
  %v8492 = vsel %vm8454, %v8200, 0
  %v8495 = vsel %vm8454, %v8201, 0
  %v8498 = vsel %vm8454, %v8202, 0
  %v8501 = vsel %vm8454, %v8203, 0
  %v8504 = vsel %vm8454, %v8204, 0
  %v8507 = vsel %vm8454, %v8205, 0
  %v8510 = vsel %vm8454, %v8206, 0
  %v8513 = vsel %vm8454, %v8207, 0
  %v8516 = vsel %vm8454, %v8208, 0
  %v8519 = vsel %vm8454, %v8209, 0
  %v8522 = vsel %vm8454, %v8210, 0
  %v8525 = vsel %vm8454, %v8211, 0
  %v8528 = vsel %vm8454, %v8212, 0
  %v8531 = vsel %vm8454, %v8213, 0
  %v8534 = vsel %vm8454, %v8214, 0
  %v8537 = vsel %vm8454, %v8215, 0
  %v8540 = vsel %vm8454, %v8216, 0
  %v8543 = vsel %vm8454, %v8217, 0
  %v8546 = vsel %vm8454, %v8218, 0
  %v8549 = vsel %vm8454, %v8219, 0
  %v8552 = vsel %vm8454, %v8220, 0
  %v8555 = vsel %vm8454, %v8221, 0
  %v8558 = vsel %vm8454, %v8222, 0
  %v8561 = vsel %vm8454, %v8223, 0
  %v8564 = vsel %vm8454, %v8224, 0
  %v8567 = vsel %vm8454, %v8225, 0
  %v8570 = vsel %vm8454, %v8187, 0
  %8572 = vmatprep.subr.mxu0 0.0
  %v8573 = vand.u32 %v8570, 4294901760
  %8574 = vmatpush1.xpose.msra.mxu0 %v8573
  %8575 = vmatprep.subr.mxu0 0.0
  %8576 = vmatpush1.xpose.msra.mxu0 0.0
  %8577 = vmatprep.subr.mxu0 0.0
  %8578 = vmatpush1.xpose.msra.mxu0 0.0
  %8579 = vmatprep.subr.mxu0 0.0
  %8580 = vmatpush1.xpose.msra.mxu0 0.0
  %8581 = vmatprep.subr.mxu0 0.0
  %8582 = vmatpush1.xpose.msra.mxu0 0.0
  %8583 = vmatprep.subr.mxu0 0.0
  %8584 = vmatpush1.xpose.msra.mxu0 0.0
  %8585 = vmatprep.subr.mxu0 0.0
  %8586 = vmatpush1.xpose.msra.mxu0 0.0
  %8587 = vmatprep.subr.mxu0 0.0
  %8588 = vmatpush1.xpose.msra.mxu0 0.0
  %8589 = vmatprep.subr.mxu0 0.0
  %8590 = vmatpush1.xpose.msra.mxu0 0.0
  %8591 = vmatprep.subr.mxu0 0.0
  %8592 = vmatpush1.xpose.msra.mxu0 0.0
  %8593 = vmatprep.subr.mxu0 0.0
  %8594 = vmatpush1.xpose.msra.mxu0 0.0
  %8595 = vmatprep.subr.mxu0 0.0
  %8596 = vmatpush1.xpose.msra.mxu0 0.0
  %8597 = vmatprep.subr.mxu0 0.0
  %8598 = vmatpush1.xpose.msra.mxu0 0.0
  %8599 = vmatprep.subr.mxu0 0.0
  %8600 = vmatpush1.xpose.msra.mxu0 0.0
  %8601 = vmatprep.subr.mxu0 0.0
  %8602 = vmatpush1.xpose.msra.mxu0 0.0
  %8603 = vmatprep.subr.mxu0 0.0
  %8604 = vmatpush1.xpose.msra.mxu0 0.0
  %8605 = vmatprep.subr.mxu0 0.0
  %8606 = vmatpush1.xpose.msra.mxu0 0.0
  %8607 = vmatprep.subr.mxu0 0.0
  %8608 = vmatpush1.xpose.msra.mxu0 0.0
  %8609 = vmatprep.subr.mxu0 0.0
  %8610 = vmatpush1.xpose.msra.mxu0 0.0
  %8611 = vmatprep.subr.mxu0 0.0
  %8612 = vmatpush1.xpose.msra.mxu0 0.0
  %8613 = vmatprep.subr.mxu0 0.0
  %8614 = vmatpush1.xpose.msra.mxu0 0.0
  %8615 = vmatprep.subr.mxu0 0.0
  %8616 = vmatpush1.xpose.msra.mxu0 0.0
  %8617 = vmatprep.subr.mxu0 0.0
  %8618 = vmatpush1.xpose.msra.mxu0 0.0
  %8619 = vmatprep.subr.mxu0 0.0
  %8620 = vmatpush1.xpose.msra.mxu0 0.0
  %8621 = vmatprep.subr.mxu0 0.0
  %8622 = vmatpush1.xpose.msra.mxu0 0.0
  %8623 = vmatprep.subr.mxu0 0.0
  %8624 = vmatpush1.xpose.msra.mxu0 0.0
  %8625 = vmatprep.subr.mxu0 0.0
  %8626 = vmatpush1.xpose.msra.mxu0 0.0
  %8627 = vmatprep.subr.mxu0 0.0
  %8628 = vmatpush1.xpose.msra.mxu0 0.0
  %8629 = vmatprep.subr.mxu0 0.0
  %8630 = vmatpush1.xpose.msra.mxu0 0.0
  %8631 = vmatprep.subr.mxu0 0.0
  %8632 = vmatpush1.xpose.msra.mxu0 0.0
  %8633 = vmatprep.subr.mxu0 0.0
  %8634 = vmatpush1.xpose.msra.mxu0 0.0
  %8635 = vmatprep.subr.mxu0 0.0
  %8636 = vmatpush1.xpose.msra.mxu0 0.0
  %8637 = vmatprep.mubr.f32.mxu0 0.0
  %v8638 = vand.u32 %v8456, 4294901760
  %v8639 = vsub.f32 %v8456, %v8638
  %v8640 = vand.u32 %v8639, 4294901760
  %v8641 = vsub.f32 %v8639, %v8640
  %v8642 = vand.u32 %v8641, 4294901760
  %8643 = vmatmul.mubr.f32.gmra.mrb[0].mxu0 %v8642
  %v8644 = vpop.f32.mrb[0].mxu0
  %v8645 = vadd.f32 %v8267, %v8644
  %v8646 = vpop.f32.mrb[0].mxu0
  %8647 = vmatprep.mubr.f32.mxu0 0.0
  %v8648 = vand.u32 %v8459, 4294901760
  %v8649 = vsub.f32 %v8459, %v8648
  %v8650 = vand.u32 %v8649, 4294901760
  %v8651 = vsub.f32 %v8649, %v8650
  %v8652 = vand.u32 %v8651, 4294901760
  %8653 = vmatmul.mubr.f32.gmra.mrb[0].mxu0 %v8652
  %v8654 = vpop.f32.mrb[0].mxu0
  %v8655 = vadd.f32 %v8272, %v8654
  %v8656 = vpop.f32.mrb[0].mxu0
  %8657 = vmatprep.mubr.f32.mxu0 0.0
  %v8658 = vand.u32 %v8462, 4294901760
  %v8659 = vsub.f32 %v8462, %v8658
  %v8660 = vand.u32 %v8659, 4294901760
  %v8661 = vsub.f32 %v8659, %v8660
  %v8662 = vand.u32 %v8661, 4294901760
  %8663 = vmatmul.mubr.f32.gmra.mrb[0].mxu0 %v8662
  %v8664 = vpop.f32.mrb[0].mxu0
  %v8665 = vadd.f32 %v8277, %v8664
  %v8666 = vpop.f32.mrb[0].mxu0
  %8667 = vmatprep.mubr.f32.mxu0 0.0
  %v8668 = vand.u32 %v8465, 4294901760
  %v8669 = vsub.f32 %v8465, %v8668
  %v8670 = vand.u32 %v8669, 4294901760
  %v8671 = vsub.f32 %v8669, %v8670
  %v8672 = vand.u32 %v8671, 4294901760
  %8673 = vmatmul.mubr.f32.gmra.mrb[0].mxu0 %v8672
  %v8674 = vpop.f32.mrb[0].mxu0
  %v8675 = vadd.f32 %v8282, %v8674
  %v8676 = vpop.f32.mrb[0].mxu0
  %8677 = vmatprep.mubr.f32.mxu0 0.0
  %v8678 = vand.u32 %v8468, 4294901760
  %v8679 = vsub.f32 %v8468, %v8678
  %v8680 = vand.u32 %v8679, 4294901760
  %v8681 = vsub.f32 %v8679, %v8680
  %v8682 = vand.u32 %v8681, 4294901760
  %8683 = vmatmul.mubr.f32.gmra.mrb[0].mxu0 %v8682
  %v8684 = vpop.f32.mrb[0].mxu0
  %v8685 = vadd.f32 %v8287, %v8684
  %v8686 = vpop.f32.mrb[0].mxu0
  %8687 = vmatprep.mubr.f32.mxu0 0.0
  %v8688 = vand.u32 %v8471, 4294901760
  %v8689 = vsub.f32 %v8471, %v8688
  %v8690 = vand.u32 %v8689, 4294901760
  %v8691 = vsub.f32 %v8689, %v8690
  %v8692 = vand.u32 %v8691, 4294901760
  %8693 = vmatmul.mubr.f32.gmra.mrb[0].mxu0 %v8692
  %v8694 = vpop.f32.mrb[0].mxu0
  %v8695 = vadd.f32 %v8292, %v8694
  %v8696 = vpop.f32.mrb[0].mxu0
  %8697 = vmatprep.mubr.f32.mxu0 0.0
  %v8698 = vand.u32 %v8474, 4294901760
  %v8699 = vsub.f32 %v8474, %v8698
  %v8700 = vand.u32 %v8699, 4294901760
  %v8701 = vsub.f32 %v8699, %v8700
  %v8702 = vand.u32 %v8701, 4294901760
  %8703 = vmatmul.mubr.f32.gmra.mrb[0].mxu0 %v8702
  %v8704 = vpop.f32.mrb[0].mxu0
  %v8705 = vadd.f32 %v8297, %v8704
  %v8706 = vpop.f32.mrb[0].mxu0
  %8707 = vmatprep.mubr.f32.mxu0 0.0
  %v8708 = vand.u32 %v8477, 4294901760
  %v8709 = vsub.f32 %v8477, %v8708
  %v8710 = vand.u32 %v8709, 4294901760
  %v8711 = vsub.f32 %v8709, %v8710
  %v8712 = vand.u32 %v8711, 4294901760
  %8713 = vmatmul.mubr.f32.gmra.mrb[0].mxu0 %v8712
  %v8714 = vpop.f32.mrb[0].mxu0
  %v8715 = vadd.f32 %v8302, %v8714
  %v8716 = vpop.f32.mrb[0].mxu0
  %8717 = vmatprep.mubr.f32.mxu0 0.0
  %v8718 = vand.u32 %v8480, 4294901760
  %v8719 = vsub.f32 %v8480, %v8718
  %v8720 = vand.u32 %v8719, 4294901760
  %v8721 = vsub.f32 %v8719, %v8720
  %v8722 = vand.u32 %v8721, 4294901760
  %8723 = vmatmul.mubr.f32.gmra.mrb[0].mxu0 %v8722
  %v8724 = vpop.f32.mrb[0].mxu0
  %v8725 = vadd.f32 %v8307, %v8724
  %v8726 = vpop.f32.mrb[0].mxu0
  %8727 = vmatprep.mubr.f32.mxu0 0.0
  %v8728 = vand.u32 %v8483, 4294901760
  %v8729 = vsub.f32 %v8483, %v8728
  %v8730 = vand.u32 %v8729, 4294901760
  %v8731 = vsub.f32 %v8729, %v8730
  %v8732 = vand.u32 %v8731, 4294901760
  %8733 = vmatmul.mubr.f32.gmra.mrb[0].mxu0 %v8732
  %v8734 = vpop.f32.mrb[0].mxu0
  %v8735 = vadd.f32 %v8312, %v8734
  %v8736 = vpop.f32.mrb[0].mxu0
  %8737 = vmatprep.mubr.f32.mxu0 0.0
  %v8738 = vand.u32 %v8486, 4294901760
  %v8739 = vsub.f32 %v8486, %v8738
  %v8740 = vand.u32 %v8739, 4294901760
  %v8741 = vsub.f32 %v8739, %v8740
  %v8742 = vand.u32 %v8741, 4294901760
  %8743 = vmatmul.mubr.f32.gmra.mrb[0].mxu0 %v8742
  %v8744 = vpop.f32.mrb[0].mxu0
  %v8745 = vadd.f32 %v8317, %v8744
  %v8746 = vpop.f32.mrb[0].mxu0
  %8747 = vmatprep.mubr.f32.mxu0 0.0
  %v8748 = vand.u32 %v8489, 4294901760
  %v8749 = vsub.f32 %v8489, %v8748
  %v8750 = vand.u32 %v8749, 4294901760
  %v8751 = vsub.f32 %v8749, %v8750
  %v8752 = vand.u32 %v8751, 4294901760
  %8753 = vmatmul.mubr.f32.gmra.mrb[0].mxu0 %v8752
  %v8754 = vpop.f32.mrb[0].mxu0
  %v8755 = vadd.f32 %v8322, %v8754
  %v8756 = vpop.f32.mrb[0].mxu0
  %8757 = vmatprep.mubr.f32.mxu0 0.0
  %v8758 = vand.u32 %v8492, 4294901760
  %v8759 = vsub.f32 %v8492, %v8758
  %v8760 = vand.u32 %v8759, 4294901760
  %v8761 = vsub.f32 %v8759, %v8760
  %v8762 = vand.u32 %v8761, 4294901760
  %8763 = vmatmul.mubr.f32.gmra.mrb[0].mxu0 %v8762
  %v8764 = vpop.f32.mrb[0].mxu0
  %v8765 = vadd.f32 %v8327, %v8764
  %v8766 = vpop.f32.mrb[0].mxu0
  %8767 = vmatprep.mubr.f32.mxu0 0.0
  %v8768 = vand.u32 %v8495, 4294901760
  %v8769 = vsub.f32 %v8495, %v8768
  %v8770 = vand.u32 %v8769, 4294901760
  %v8771 = vsub.f32 %v8769, %v8770
  %v8772 = vand.u32 %v8771, 4294901760
  %8773 = vmatmul.mubr.f32.gmra.mrb[0].mxu0 %v8772
  %v8774 = vpop.f32.mrb[0].mxu0
  %v8775 = vadd.f32 %v8332, %v8774
  %v8776 = vpop.f32.mrb[0].mxu0
  %8777 = vmatprep.mubr.f32.mxu0 0.0
  %v8778 = vand.u32 %v8498, 4294901760
  %v8779 = vsub.f32 %v8498, %v8778
  %v8780 = vand.u32 %v8779, 4294901760
  %v8781 = vsub.f32 %v8779, %v8780
  %v8782 = vand.u32 %v8781, 4294901760
  %8783 = vmatmul.mubr.f32.gmra.mrb[0].mxu0 %v8782
  %v8784 = vpop.f32.mrb[0].mxu0
  %v8785 = vadd.f32 %v8337, %v8784
  %v8786 = vpop.f32.mrb[0].mxu0
  %8787 = vmatprep.mubr.f32.mxu0 0.0
  %v8788 = vand.u32 %v8501, 4294901760
  %v8789 = vsub.f32 %v8501, %v8788
  %v8790 = vand.u32 %v8789, 4294901760
  %v8791 = vsub.f32 %v8789, %v8790
  %v8792 = vand.u32 %v8791, 4294901760
  %8793 = vmatmul.mubr.f32.gmra.mrb[0].mxu0 %v8792
  %v8794 = vpop.f32.mrb[0].mxu0
  %v8795 = vadd.f32 %v8342, %v8794
  %v8796 = vpop.f32.mrb[0].mxu0
  %8797 = vmatprep.mubr.f32.mxu0 0.0
  %v8798 = vand.u32 %v8504, 4294901760
  %v8799 = vsub.f32 %v8504, %v8798
  %v8800 = vand.u32 %v8799, 4294901760
  %v8801 = vsub.f32 %v8799, %v8800
  %v8802 = vand.u32 %v8801, 4294901760
  %8803 = vmatmul.mubr.f32.gmra.mrb[0].mxu0 %v8802
  %v8804 = vpop.f32.mrb[0].mxu0
  %v8805 = vadd.f32 %v8347, %v8804
  %v8806 = vpop.f32.mrb[0].mxu0
  %8807 = vmatprep.mubr.f32.mxu0 0.0
  %v8808 = vand.u32 %v8507, 4294901760
  %v8809 = vsub.f32 %v8507, %v8808
  %v8810 = vand.u32 %v8809, 4294901760
  %v8811 = vsub.f32 %v8809, %v8810
  %v8812 = vand.u32 %v8811, 4294901760
  %8813 = vmatmul.mubr.f32.gmra.mrb[0].mxu0 %v8812
  %v8814 = vpop.f32.mrb[0].mxu0
  %v8815 = vadd.f32 %v8352, %v8814
  %v8816 = vpop.f32.mrb[0].mxu0
  %8817 = vmatprep.mubr.f32.mxu0 0.0
  %v8818 = vand.u32 %v8510, 4294901760
  %v8819 = vsub.f32 %v8510, %v8818
  %v8820 = vand.u32 %v8819, 4294901760
  %v8821 = vsub.f32 %v8819, %v8820
  %v8822 = vand.u32 %v8821, 4294901760
  %8823 = vmatmul.mubr.f32.gmra.mrb[0].mxu0 %v8822
  %v8824 = vpop.f32.mrb[0].mxu0
  %v8825 = vadd.f32 %v8357, %v8824
  %v8826 = vpop.f32.mrb[0].mxu0
  %8827 = vmatprep.mubr.f32.mxu0 0.0
  %v8828 = vand.u32 %v8513, 4294901760
  %v8829 = vsub.f32 %v8513, %v8828
  %v8830 = vand.u32 %v8829, 4294901760
  %v8831 = vsub.f32 %v8829, %v8830
  %v8832 = vand.u32 %v8831, 4294901760
  %8833 = vmatmul.mubr.f32.gmra.mrb[0].mxu0 %v8832
  %v8834 = vpop.f32.mrb[0].mxu0
  %v8835 = vadd.f32 %v8362, %v8834
  %v8836 = vpop.f32.mrb[0].mxu0
  %8837 = vmatprep.mubr.f32.mxu0 0.0
  %v8838 = vand.u32 %v8516, 4294901760
  %v8839 = vsub.f32 %v8516, %v8838
  %v8840 = vand.u32 %v8839, 4294901760
  %v8841 = vsub.f32 %v8839, %v8840
  %v8842 = vand.u32 %v8841, 4294901760
  %8843 = vmatmul.mubr.f32.gmra.mrb[0].mxu0 %v8842
  %v8844 = vpop.f32.mrb[0].mxu0
  %v8845 = vadd.f32 %v8367, %v8844
  %v8846 = vpop.f32.mrb[0].mxu0
  %8847 = vmatprep.mubr.f32.mxu0 0.0
  %v8848 = vand.u32 %v8519, 4294901760
  %v8849 = vsub.f32 %v8519, %v8848
  %v8850 = vand.u32 %v8849, 4294901760
  %v8851 = vsub.f32 %v8849, %v8850
  %v8852 = vand.u32 %v8851, 4294901760
  %8853 = vmatmul.mubr.f32.gmra.mrb[0].mxu0 %v8852
  %v8854 = vpop.f32.mrb[0].mxu0
  %v8855 = vadd.f32 %v8372, %v8854
  %v8856 = vpop.f32.mrb[0].mxu0
  %8857 = vmatprep.mubr.f32.mxu0 0.0
  %v8858 = vand.u32 %v8522, 4294901760
  %v8859 = vsub.f32 %v8522, %v8858
  %v8860 = vand.u32 %v8859, 4294901760
  %v8861 = vsub.f32 %v8859, %v8860
  %v8862 = vand.u32 %v8861, 4294901760
  %8863 = vmatmul.mubr.f32.gmra.mrb[0].mxu0 %v8862
  %v8864 = vpop.f32.mrb[0].mxu0
  %v8865 = vadd.f32 %v8377, %v8864
  %v8866 = vpop.f32.mrb[0].mxu0
  %8867 = vmatprep.mubr.f32.mxu0 0.0
  %v8868 = vand.u32 %v8525, 4294901760
  %v8869 = vsub.f32 %v8525, %v8868
  %v8870 = vand.u32 %v8869, 4294901760
  %v8871 = vsub.f32 %v8869, %v8870
  %v8872 = vand.u32 %v8871, 4294901760
  %8873 = vmatmul.mubr.f32.gmra.mrb[0].mxu0 %v8872
  %v8874 = vpop.f32.mrb[0].mxu0
  %v8875 = vadd.f32 %v8382, %v8874
  %v8876 = vpop.f32.mrb[0].mxu0
  %8877 = vmatprep.mubr.f32.mxu0 0.0
  %v8878 = vand.u32 %v8528, 4294901760
  %v8879 = vsub.f32 %v8528, %v8878
  %v8880 = vand.u32 %v8879, 4294901760
  %v8881 = vsub.f32 %v8879, %v8880
  %v8882 = vand.u32 %v8881, 4294901760
  %8883 = vmatmul.mubr.f32.gmra.mrb[0].mxu0 %v8882
  %v8884 = vpop.f32.mrb[0].mxu0
  %v8885 = vadd.f32 %v8387, %v8884
  %v8886 = vpop.f32.mrb[0].mxu0
  %8887 = vmatprep.mubr.f32.mxu0 0.0
  %v8888 = vand.u32 %v8531, 4294901760
  %v8889 = vsub.f32 %v8531, %v8888
  %v8890 = vand.u32 %v8889, 4294901760
  %v8891 = vsub.f32 %v8889, %v8890
  %v8892 = vand.u32 %v8891, 4294901760
  %8893 = vmatmul.mubr.f32.gmra.mrb[0].mxu0 %v8892
  %v8894 = vpop.f32.mrb[0].mxu0
  %v8895 = vadd.f32 %v8392, %v8894
  %v8896 = vpop.f32.mrb[0].mxu0
  %8897 = vmatprep.mubr.f32.mxu0 0.0
  %v8898 = vand.u32 %v8534, 4294901760
  %v8899 = vsub.f32 %v8534, %v8898
  %v8900 = vand.u32 %v8899, 4294901760
  %v8901 = vsub.f32 %v8899, %v8900
  %v8902 = vand.u32 %v8901, 4294901760
  %8903 = vmatmul.mubr.f32.gmra.mrb[0].mxu0 %v8902
  %v8904 = vpop.f32.mrb[0].mxu0
  %v8905 = vadd.f32 %v8397, %v8904
  %v8906 = vpop.f32.mrb[0].mxu0
  %8907 = vmatprep.mubr.f32.mxu0 0.0
  %v8908 = vand.u32 %v8537, 4294901760
  %v8909 = vsub.f32 %v8537, %v8908
  %v8910 = vand.u32 %v8909, 4294901760
  %v8911 = vsub.f32 %v8909, %v8910
  %v8912 = vand.u32 %v8911, 4294901760
  %8913 = vmatmul.mubr.f32.gmra.mrb[0].mxu0 %v8912
  %v8914 = vpop.f32.mrb[0].mxu0
  %v8915 = vadd.f32 %v8402, %v8914
  %v8916 = vpop.f32.mrb[0].mxu0
  %8917 = vmatprep.mubr.f32.mxu0 0.0
  %v8918 = vand.u32 %v8540, 4294901760
  %v8919 = vsub.f32 %v8540, %v8918
  %v8920 = vand.u32 %v8919, 4294901760
  %v8921 = vsub.f32 %v8919, %v8920
  %v8922 = vand.u32 %v8921, 4294901760
  %8923 = vmatmul.mubr.f32.gmra.mrb[0].mxu0 %v8922
  %v8924 = vpop.f32.mrb[0].mxu0
  %v8925 = vadd.f32 %v8407, %v8924
  %v8926 = vpop.f32.mrb[0].mxu0
  %8927 = vmatprep.mubr.f32.mxu0 0.0
  %v8928 = vand.u32 %v8543, 4294901760
  %v8929 = vsub.f32 %v8543, %v8928
  %v8930 = vand.u32 %v8929, 4294901760
  %v8931 = vsub.f32 %v8929, %v8930
  %v8932 = vand.u32 %v8931, 4294901760
  %8933 = vmatmul.mubr.f32.gmra.mrb[0].mxu0 %v8932
  %v8934 = vpop.f32.mrb[0].mxu0
  %v8935 = vadd.f32 %v8412, %v8934
  %v8936 = vpop.f32.mrb[0].mxu0
  %8937 = vmatprep.mubr.f32.mxu0 0.0
  %v8938 = vand.u32 %v8546, 4294901760
  %v8939 = vsub.f32 %v8546, %v8938
  %v8940 = vand.u32 %v8939, 4294901760
  %v8941 = vsub.f32 %v8939, %v8940
  %v8942 = vand.u32 %v8941, 4294901760
  %8943 = vmatmul.mubr.f32.gmra.mrb[0].mxu0 %v8942
  %v8944 = vpop.f32.mrb[0].mxu0
  %v8945 = vadd.f32 %v8417, %v8944
  %v8946 = vpop.f32.mrb[0].mxu0
  %8947 = vmatprep.mubr.f32.mxu0 0.0
  %v8948 = vand.u32 %v8549, 4294901760
  %v8949 = vsub.f32 %v8549, %v8948
  %v8950 = vand.u32 %v8949, 4294901760
  %v8951 = vsub.f32 %v8949, %v8950
  %v8952 = vand.u32 %v8951, 4294901760
  %8953 = vmatmul.mubr.f32.gmra.mrb[0].mxu0 %v8952
  %v8954 = vpop.f32.mrb[0].mxu0
  %v8955 = vadd.f32 %v8422, %v8954
  %v8956 = vpop.f32.mrb[0].mxu0
  %8957 = vmatprep.mubr.f32.mxu0 0.0
  %v8958 = vand.u32 %v8552, 4294901760
  %v8959 = vsub.f32 %v8552, %v8958
  %v8960 = vand.u32 %v8959, 4294901760
  %v8961 = vsub.f32 %v8959, %v8960
  %v8962 = vand.u32 %v8961, 4294901760
  %8963 = vmatmul.mubr.f32.gmra.mrb[0].mxu0 %v8962
  %v8964 = vpop.f32.mrb[0].mxu0
  %v8965 = vadd.f32 %v8427, %v8964
  %v8966 = vpop.f32.mrb[0].mxu0
  %8967 = vmatprep.mubr.f32.mxu0 0.0
  %v8968 = vand.u32 %v8555, 4294901760
  %v8969 = vsub.f32 %v8555, %v8968
  %v8970 = vand.u32 %v8969, 4294901760
  %v8971 = vsub.f32 %v8969, %v8970
  %v8972 = vand.u32 %v8971, 4294901760
  %8973 = vmatmul.mubr.f32.gmra.mrb[0].mxu0 %v8972
  %v8974 = vpop.f32.mrb[0].mxu0
  %v8975 = vadd.f32 %v8432, %v8974
  %v8976 = vpop.f32.mrb[0].mxu0
  %8977 = vmatprep.mubr.f32.mxu0 0.0
  %v8978 = vand.u32 %v8558, 4294901760
  %v8979 = vsub.f32 %v8558, %v8978
  %v8980 = vand.u32 %v8979, 4294901760
  %v8981 = vsub.f32 %v8979, %v8980
  %v8982 = vand.u32 %v8981, 4294901760
  %8983 = vmatmul.mubr.f32.gmra.mrb[0].mxu0 %v8982
  %v8984 = vpop.f32.mrb[0].mxu0
  %v8985 = vadd.f32 %v8437, %v8984
  %v8986 = vpop.f32.mrb[0].mxu0
  %8987 = vmatprep.mubr.f32.mxu0 0.0
  %v8988 = vand.u32 %v8561, 4294901760
  %v8989 = vsub.f32 %v8561, %v8988
  %v8990 = vand.u32 %v8989, 4294901760
  %v8991 = vsub.f32 %v8989, %v8990
  %v8992 = vand.u32 %v8991, 4294901760
  %8993 = vmatmul.mubr.f32.gmra.mrb[0].mxu0 %v8992
  %v8994 = vpop.f32.mrb[0].mxu0
  %v8995 = vadd.f32 %v8442, %v8994
  %v8996 = vpop.f32.mrb[0].mxu0
  %8997 = vmatprep.mubr.f32.mxu0 0.0
  %v8998 = vand.u32 %v8564, 4294901760
  %v8999 = vsub.f32 %v8564, %v8998
  %v9000 = vand.u32 %v8999, 4294901760
  %v9001 = vsub.f32 %v8999, %v9000
  %v9002 = vand.u32 %v9001, 4294901760
  %9003 = vmatmul.mubr.f32.gmra.mrb[0].mxu0 %v9002
  %v9004 = vpop.f32.mrb[0].mxu0
  %v9005 = vadd.f32 %v8447, %v9004
  %v9006 = vpop.f32.mrb[0].mxu0
  %9007 = vmatprep.mubr.f32.mxu0 0.0
  %v9008 = vand.u32 %v8567, 4294901760
  %v9009 = vsub.f32 %v8567, %v9008
  %v9010 = vand.u32 %v9009, 4294901760
  %v9011 = vsub.f32 %v9009, %v9010
  %v9012 = vand.u32 %v9011, 4294901760
  %9013 = vmatmul.mubr.f32.gmra.mrb[0].mxu0 %v9012
  %v9014 = vpop.f32.mrb[0].mxu0
  %v9015 = vadd.f32 %v8452, %v9014
  %v9016 = vpop.f32.mrb[0].mxu0
  %9017 = vdwg.mxu0
  %9018 = vmatprep.subr.mxu0 0.0
  %v9019 = vand.u32 %v8570, 4294901760
  %v9020 = vsub.f32 %v8570, %v9019
  %v9021 = vand.u32 %v9020, 4294901760
  %v9022 = vsub.f32 %v9020, %v9021
  %v9023 = vand.u32 %v9022, 4294901760
  %9024 = vmatpush1.xpose.msra.mxu0 %v9023
  %9025 = vmatprep.subr.mxu0 0.0
  %9026 = vmatpush1.xpose.msra.mxu0 0.0
  %9027 = vmatprep.subr.mxu0 0.0
  %9028 = vmatpush1.xpose.msra.mxu0 0.0
  %9029 = vmatprep.subr.mxu0 0.0
  %9030 = vmatpush1.xpose.msra.mxu0 0.0
  %9031 = vmatprep.subr.mxu0 0.0
  %9032 = vmatpush1.xpose.msra.mxu0 0.0
  %9033 = vmatprep.subr.mxu0 0.0
  %9034 = vmatpush1.xpose.msra.mxu0 0.0
  %9035 = vmatprep.subr.mxu0 0.0
  %9036 = vmatpush1.xpose.msra.mxu0 0.0
  %9037 = vmatprep.subr.mxu0 0.0
  %9038 = vmatpush1.xpose.msra.mxu0 0.0
  %9039 = vmatprep.subr.mxu0 0.0
  %9040 = vmatpush1.xpose.msra.mxu0 0.0
  %9041 = vmatprep.subr.mxu0 0.0
  %9042 = vmatpush1.xpose.msra.mxu0 0.0
  %9043 = vmatprep.subr.mxu0 0.0
  %9044 = vmatpush1.xpose.msra.mxu0 0.0
  %9045 = vmatprep.subr.mxu0 0.0
  %9046 = vmatpush1.xpose.msra.mxu0 0.0
  %9047 = vmatprep.subr.mxu0 0.0
  %9048 = vmatpush1.xpose.msra.mxu0 0.0
  %9049 = vmatprep.subr.mxu0 0.0
  %9050 = vmatpush1.xpose.msra.mxu0 0.0
  %9051 = vmatprep.subr.mxu0 0.0
  %9052 = vmatpush1.xpose.msra.mxu0 0.0
  %9053 = vmatprep.subr.mxu0 0.0
  %9054 = vmatpush1.xpose.msra.mxu0 0.0
  %9055 = vmatprep.subr.mxu0 0.0
  %9056 = vmatpush1.xpose.msra.mxu0 0.0
  %9057 = vmatprep.subr.mxu0 0.0
  %9058 = vmatpush1.xpose.msra.mxu0 0.0
  %9059 = vmatprep.subr.mxu0 0.0
  %9060 = vmatpush1.xpose.msra.mxu0 0.0
  %9061 = vmatprep.subr.mxu0 0.0
  %9062 = vmatpush1.xpose.msra.mxu0 0.0
  %9063 = vmatprep.subr.mxu0 0.0
  %9064 = vmatpush1.xpose.msra.mxu0 0.0
  %9065 = vmatprep.subr.mxu0 0.0
  %9066 = vmatpush1.xpose.msra.mxu0 0.0
  %9067 = vmatprep.subr.mxu0 0.0
  %9068 = vmatpush1.xpose.msra.mxu0 0.0
  %9069 = vmatprep.subr.mxu0 0.0
  %9070 = vmatpush1.xpose.msra.mxu0 0.0
  %9071 = vmatprep.subr.mxu0 0.0
  %9072 = vmatpush1.xpose.msra.mxu0 0.0
  %9073 = vmatprep.subr.mxu0 0.0
  %9074 = vmatpush1.xpose.msra.mxu0 0.0
  %9075 = vmatprep.subr.mxu0 0.0
  %9076 = vmatpush1.xpose.msra.mxu0 0.0
  %9077 = vmatprep.subr.mxu0 0.0
  %9078 = vmatpush1.xpose.msra.mxu0 0.0
  %9079 = vmatprep.subr.mxu0 0.0
  %9080 = vmatpush1.xpose.msra.mxu0 0.0
  %9081 = vmatprep.subr.mxu0 0.0
  %9082 = vmatpush1.xpose.msra.mxu0 0.0
  %9083 = vmatprep.subr.mxu0 0.0
  %9084 = vmatpush1.xpose.msra.mxu0 0.0
  %9085 = vmatprep.subr.mxu0 0.0
  %9086 = vmatpush1.xpose.msra.mxu0 0.0
  %9087 = vmatprep.mubr.f32.mxu0 0.0
  %v9088 = vand.u32 %v8456, 4294901760
  %9089 = vmatmul.mubr.f32.gmra.mrb[0].mxu0 %v9088
  %v9090 = vpop.f32.mrb[0].mxu0
  %v9091 = vadd.f32 %v8645, %v9090
  %v9092 = vpop.f32.mrb[0].mxu0
  %9093 = vmatprep.mubr.f32.mxu0 0.0
  %v9094 = vand.u32 %v8459, 4294901760
  %9095 = vmatmul.mubr.f32.gmra.mrb[0].mxu0 %v9094
  %v9096 = vpop.f32.mrb[0].mxu0
  %v9097 = vadd.f32 %v8655, %v9096
  %v9098 = vpop.f32.mrb[0].mxu0
  %9099 = vmatprep.mubr.f32.mxu0 0.0
  %v9100 = vand.u32 %v8462, 4294901760
  %9101 = vmatmul.mubr.f32.gmra.mrb[0].mxu0 %v9100
  %v9102 = vpop.f32.mrb[0].mxu0
  %v9103 = vadd.f32 %v8665, %v9102
  %v9104 = vpop.f32.mrb[0].mxu0
  %9105 = vmatprep.mubr.f32.mxu0 0.0
  %v9106 = vand.u32 %v8465, 4294901760
  %9107 = vmatmul.mubr.f32.gmra.mrb[0].mxu0 %v9106
  %v9108 = vpop.f32.mrb[0].mxu0
  %v9109 = vadd.f32 %v8675, %v9108
  %v9110 = vpop.f32.mrb[0].mxu0
  %9111 = vmatprep.mubr.f32.mxu0 0.0
  %v9112 = vand.u32 %v8468, 4294901760
  %9113 = vmatmul.mubr.f32.gmra.mrb[0].mxu0 %v9112
  %v9114 = vpop.f32.mrb[0].mxu0
  %v9115 = vadd.f32 %v8685, %v9114
  %v9116 = vpop.f32.mrb[0].mxu0
  %9117 = vmatprep.mubr.f32.mxu0 0.0
  %v9118 = vand.u32 %v8471, 4294901760
  %9119 = vmatmul.mubr.f32.gmra.mrb[0].mxu0 %v9118
  %v9120 = vpop.f32.mrb[0].mxu0
  %v9121 = vadd.f32 %v8695, %v9120
  %v9122 = vpop.f32.mrb[0].mxu0
  %9123 = vmatprep.mubr.f32.mxu0 0.0
  %v9124 = vand.u32 %v8474, 4294901760
  %9125 = vmatmul.mubr.f32.gmra.mrb[0].mxu0 %v9124
  %v9126 = vpop.f32.mrb[0].mxu0
  %v9127 = vadd.f32 %v8705, %v9126
  %v9128 = vpop.f32.mrb[0].mxu0
  %9129 = vmatprep.mubr.f32.mxu0 0.0
  %v9130 = vand.u32 %v8477, 4294901760
  %9131 = vmatmul.mubr.f32.gmra.mrb[0].mxu0 %v9130
  %v9132 = vpop.f32.mrb[0].mxu0
  %v9133 = vadd.f32 %v8715, %v9132
  %v9134 = vpop.f32.mrb[0].mxu0
  %9135 = vmatprep.mubr.f32.mxu0 0.0
  %v9136 = vand.u32 %v8480, 4294901760
  %9137 = vmatmul.mubr.f32.gmra.mrb[0].mxu0 %v9136
  %v9138 = vpop.f32.mrb[0].mxu0
  %v9139 = vadd.f32 %v8725, %v9138
  %v9140 = vpop.f32.mrb[0].mxu0
  %9141 = vmatprep.mubr.f32.mxu0 0.0
  %v9142 = vand.u32 %v8483, 4294901760
  %9143 = vmatmul.mubr.f32.gmra.mrb[0].mxu0 %v9142
  %v9144 = vpop.f32.mrb[0].mxu0
  %v9145 = vadd.f32 %v8735, %v9144
  %v9146 = vpop.f32.mrb[0].mxu0
  %9147 = vmatprep.mubr.f32.mxu0 0.0
  %v9148 = vand.u32 %v8486, 4294901760
  %9149 = vmatmul.mubr.f32.gmra.mrb[0].mxu0 %v9148
  %v9150 = vpop.f32.mrb[0].mxu0
  %v9151 = vadd.f32 %v8745, %v9150
  %v9152 = vpop.f32.mrb[0].mxu0
  %9153 = vmatprep.mubr.f32.mxu0 0.0
  %v9154 = vand.u32 %v8489, 4294901760
  %9155 = vmatmul.mubr.f32.gmra.mrb[0].mxu0 %v9154
  %v9156 = vpop.f32.mrb[0].mxu0
  %v9157 = vadd.f32 %v8755, %v9156
  %v9158 = vpop.f32.mrb[0].mxu0
  %9159 = vmatprep.mubr.f32.mxu0 0.0
  %v9160 = vand.u32 %v8492, 4294901760
  %9161 = vmatmul.mubr.f32.gmra.mrb[0].mxu0 %v9160
  %v9162 = vpop.f32.mrb[0].mxu0
  %v9163 = vadd.f32 %v8765, %v9162
  %v9164 = vpop.f32.mrb[0].mxu0
  %9165 = vmatprep.mubr.f32.mxu0 0.0
  %v9166 = vand.u32 %v8495, 4294901760
  %9167 = vmatmul.mubr.f32.gmra.mrb[0].mxu0 %v9166
  %v9168 = vpop.f32.mrb[0].mxu0
  %v9169 = vadd.f32 %v8775, %v9168
  %v9170 = vpop.f32.mrb[0].mxu0
  %9171 = vmatprep.mubr.f32.mxu0 0.0
  %v9172 = vand.u32 %v8498, 4294901760
  %9173 = vmatmul.mubr.f32.gmra.mrb[0].mxu0 %v9172
  %v9174 = vpop.f32.mrb[0].mxu0
  %v9175 = vadd.f32 %v8785, %v9174
  %v9176 = vpop.f32.mrb[0].mxu0
  %9177 = vmatprep.mubr.f32.mxu0 0.0
  %v9178 = vand.u32 %v8501, 4294901760
  %9179 = vmatmul.mubr.f32.gmra.mrb[0].mxu0 %v9178
  %v9180 = vpop.f32.mrb[0].mxu0
  %v9181 = vadd.f32 %v8795, %v9180
  %v9182 = vpop.f32.mrb[0].mxu0
  %9183 = vmatprep.mubr.f32.mxu0 0.0
  %v9184 = vand.u32 %v8504, 4294901760
  %9185 = vmatmul.mubr.f32.gmra.mrb[0].mxu0 %v9184
  %v9186 = vpop.f32.mrb[0].mxu0
  %v9187 = vadd.f32 %v8805, %v9186
  %v9188 = vpop.f32.mrb[0].mxu0
  %9189 = vmatprep.mubr.f32.mxu0 0.0
  %v9190 = vand.u32 %v8507, 4294901760
  %9191 = vmatmul.mubr.f32.gmra.mrb[0].mxu0 %v9190
  %v9192 = vpop.f32.mrb[0].mxu0
  %v9193 = vadd.f32 %v8815, %v9192
  %v9194 = vpop.f32.mrb[0].mxu0
  %9195 = vmatprep.mubr.f32.mxu0 0.0
  %v9196 = vand.u32 %v8510, 4294901760
  %9197 = vmatmul.mubr.f32.gmra.mrb[0].mxu0 %v9196
  %v9198 = vpop.f32.mrb[0].mxu0
  %v9199 = vadd.f32 %v8825, %v9198
  %v9200 = vpop.f32.mrb[0].mxu0
  %9201 = vmatprep.mubr.f32.mxu0 0.0
  %v9202 = vand.u32 %v8513, 4294901760
  %9203 = vmatmul.mubr.f32.gmra.mrb[0].mxu0 %v9202
  %v9204 = vpop.f32.mrb[0].mxu0
  %v9205 = vadd.f32 %v8835, %v9204
  %v9206 = vpop.f32.mrb[0].mxu0
  %9207 = vmatprep.mubr.f32.mxu0 0.0
  %v9208 = vand.u32 %v8516, 4294901760
  %9209 = vmatmul.mubr.f32.gmra.mrb[0].mxu0 %v9208
  %v9210 = vpop.f32.mrb[0].mxu0
  %v9211 = vadd.f32 %v8845, %v9210
  %v9212 = vpop.f32.mrb[0].mxu0
  %9213 = vmatprep.mubr.f32.mxu0 0.0
  %v9214 = vand.u32 %v8519, 4294901760
  %9215 = vmatmul.mubr.f32.gmra.mrb[0].mxu0 %v9214
  %v9216 = vpop.f32.mrb[0].mxu0
  %v9217 = vadd.f32 %v8855, %v9216
  %v9218 = vpop.f32.mrb[0].mxu0
  %9219 = vmatprep.mubr.f32.mxu0 0.0
  %v9220 = vand.u32 %v8522, 4294901760
  %9221 = vmatmul.mubr.f32.gmra.mrb[0].mxu0 %v9220
  %v9222 = vpop.f32.mrb[0].mxu0
  %v9223 = vadd.f32 %v8865, %v9222
  %v9224 = vpop.f32.mrb[0].mxu0
  %9225 = vmatprep.mubr.f32.mxu0 0.0
  %v9226 = vand.u32 %v8525, 4294901760
  %9227 = vmatmul.mubr.f32.gmra.mrb[0].mxu0 %v9226
  %v9228 = vpop.f32.mrb[0].mxu0
  %v9229 = vadd.f32 %v8875, %v9228
  %v9230 = vpop.f32.mrb[0].mxu0
  %9231 = vmatprep.mubr.f32.mxu0 0.0
  %v9232 = vand.u32 %v8528, 4294901760
  %9233 = vmatmul.mubr.f32.gmra.mrb[0].mxu0 %v9232
  %v9234 = vpop.f32.mrb[0].mxu0
  %v9235 = vadd.f32 %v8885, %v9234
  %v9236 = vpop.f32.mrb[0].mxu0
  %9237 = vmatprep.mubr.f32.mxu0 0.0
  %v9238 = vand.u32 %v8531, 4294901760
  %9239 = vmatmul.mubr.f32.gmra.mrb[0].mxu0 %v9238
  %v9240 = vpop.f32.mrb[0].mxu0
  %v9241 = vadd.f32 %v8895, %v9240
  %v9242 = vpop.f32.mrb[0].mxu0
  %9243 = vmatprep.mubr.f32.mxu0 0.0
  %v9244 = vand.u32 %v8534, 4294901760
  %9245 = vmatmul.mubr.f32.gmra.mrb[0].mxu0 %v9244
  %v9246 = vpop.f32.mrb[0].mxu0
  %v9247 = vadd.f32 %v8905, %v9246
  %v9248 = vpop.f32.mrb[0].mxu0
  %9249 = vmatprep.mubr.f32.mxu0 0.0
  %v9250 = vand.u32 %v8537, 4294901760
  %9251 = vmatmul.mubr.f32.gmra.mrb[0].mxu0 %v9250
  %v9252 = vpop.f32.mrb[0].mxu0
  %v9253 = vadd.f32 %v8915, %v9252
  %v9254 = vpop.f32.mrb[0].mxu0
  %9255 = vmatprep.mubr.f32.mxu0 0.0
  %v9256 = vand.u32 %v8540, 4294901760
  %9257 = vmatmul.mubr.f32.gmra.mrb[0].mxu0 %v9256
  %v9258 = vpop.f32.mrb[0].mxu0
  %v9259 = vadd.f32 %v8925, %v9258
  %v9260 = vpop.f32.mrb[0].mxu0
  %9261 = vmatprep.mubr.f32.mxu0 0.0
  %v9262 = vand.u32 %v8543, 4294901760
  %9263 = vmatmul.mubr.f32.gmra.mrb[0].mxu0 %v9262
  %v9264 = vpop.f32.mrb[0].mxu0
  %v9265 = vadd.f32 %v8935, %v9264
  %v9266 = vpop.f32.mrb[0].mxu0
  %9267 = vmatprep.mubr.f32.mxu0 0.0
  %v9268 = vand.u32 %v8546, 4294901760
  %9269 = vmatmul.mubr.f32.gmra.mrb[0].mxu0 %v9268
  %v9270 = vpop.f32.mrb[0].mxu0
  %v9271 = vadd.f32 %v8945, %v9270
  %v9272 = vpop.f32.mrb[0].mxu0
  %9273 = vmatprep.mubr.f32.mxu0 0.0
  %v9274 = vand.u32 %v8549, 4294901760
  %9275 = vmatmul.mubr.f32.gmra.mrb[0].mxu0 %v9274
  %v9276 = vpop.f32.mrb[0].mxu0
  %v9277 = vadd.f32 %v8955, %v9276
  %v9278 = vpop.f32.mrb[0].mxu0
  %9279 = vmatprep.mubr.f32.mxu0 0.0
  %v9280 = vand.u32 %v8552, 4294901760
  %9281 = vmatmul.mubr.f32.gmra.mrb[0].mxu0 %v9280
  %v9282 = vpop.f32.mrb[0].mxu0
  %v9283 = vadd.f32 %v8965, %v9282
  %v9284 = vpop.f32.mrb[0].mxu0
  %9285 = vmatprep.mubr.f32.mxu0 0.0
  %v9286 = vand.u32 %v8555, 4294901760
  %9287 = vmatmul.mubr.f32.gmra.mrb[0].mxu0 %v9286
  %v9288 = vpop.f32.mrb[0].mxu0
  %v9289 = vadd.f32 %v8975, %v9288
  %v9290 = vpop.f32.mrb[0].mxu0
  %9291 = vmatprep.mubr.f32.mxu0 0.0
  %v9292 = vand.u32 %v8558, 4294901760
  %9293 = vmatmul.mubr.f32.gmra.mrb[0].mxu0 %v9292
  %v9294 = vpop.f32.mrb[0].mxu0
  %v9295 = vadd.f32 %v8985, %v9294
  %v9296 = vpop.f32.mrb[0].mxu0
  %9297 = vmatprep.mubr.f32.mxu0 0.0
  %v9298 = vand.u32 %v8561, 4294901760
  %9299 = vmatmul.mubr.f32.gmra.mrb[0].mxu0 %v9298
  %v9300 = vpop.f32.mrb[0].mxu0
  %v9301 = vadd.f32 %v8995, %v9300
  %v9302 = vpop.f32.mrb[0].mxu0
  %9303 = vmatprep.mubr.f32.mxu0 0.0
  %v9304 = vand.u32 %v8564, 4294901760
  %9305 = vmatmul.mubr.f32.gmra.mrb[0].mxu0 %v9304
  %v9306 = vpop.f32.mrb[0].mxu0
  %v9307 = vadd.f32 %v9005, %v9306
  %v9308 = vpop.f32.mrb[0].mxu0
  %9309 = vmatprep.mubr.f32.mxu0 0.0
  %v9310 = vand.u32 %v8567, 4294901760
  %9311 = vmatmul.mubr.f32.gmra.mrb[0].mxu0 %v9310
  %v9312 = vpop.f32.mrb[0].mxu0
  %v9313 = vadd.f32 %v9015, %v9312
  %v9314 = vpop.f32.mrb[0].mxu0
  %9315 = vdwg.mxu0
  %9316 = vmatprep.subr.mxu0 0.0
  %v9317 = vand.u32 %v8570, 4294901760
  %v9318 = vsub.f32 %v8570, %v9317
  %9319 = vmatpush1.xpose.msra.mxu0 %v9318
  %9320 = vmatprep.subr.mxu0 0.0
  %9321 = vmatpush1.xpose.msra.mxu0 0.0
  %9322 = vmatprep.subr.mxu0 0.0
  %9323 = vmatpush1.xpose.msra.mxu0 0.0
  %9324 = vmatprep.subr.mxu0 0.0
  %9325 = vmatpush1.xpose.msra.mxu0 0.0
  %9326 = vmatprep.subr.mxu0 0.0
  %9327 = vmatpush1.xpose.msra.mxu0 0.0
  %9328 = vmatprep.subr.mxu0 0.0
  %9329 = vmatpush1.xpose.msra.mxu0 0.0
  %9330 = vmatprep.subr.mxu0 0.0
  %9331 = vmatpush1.xpose.msra.mxu0 0.0
  %9332 = vmatprep.subr.mxu0 0.0
  %9333 = vmatpush1.xpose.msra.mxu0 0.0
  %9334 = vmatprep.subr.mxu0 0.0
  %9335 = vmatpush1.xpose.msra.mxu0 0.0
  %9336 = vmatprep.subr.mxu0 0.0
  %9337 = vmatpush1.xpose.msra.mxu0 0.0
  %9338 = vmatprep.subr.mxu0 0.0
  %9339 = vmatpush1.xpose.msra.mxu0 0.0
  %9340 = vmatprep.subr.mxu0 0.0
  %9341 = vmatpush1.xpose.msra.mxu0 0.0
  %9342 = vmatprep.subr.mxu0 0.0
  %9343 = vmatpush1.xpose.msra.mxu0 0.0
  %9344 = vmatprep.subr.mxu0 0.0
  %9345 = vmatpush1.xpose.msra.mxu0 0.0
  %9346 = vmatprep.subr.mxu0 0.0
  %9347 = vmatpush1.xpose.msra.mxu0 0.0
  %9348 = vmatprep.subr.mxu0 0.0
  %9349 = vmatpush1.xpose.msra.mxu0 0.0
  %9350 = vmatprep.subr.mxu0 0.0
  %9351 = vmatpush1.xpose.msra.mxu0 0.0
  %9352 = vmatprep.subr.mxu0 0.0
  %9353 = vmatpush1.xpose.msra.mxu0 0.0
  %9354 = vmatprep.subr.mxu0 0.0
  %9355 = vmatpush1.xpose.msra.mxu0 0.0
  %9356 = vmatprep.subr.mxu0 0.0
  %9357 = vmatpush1.xpose.msra.mxu0 0.0
  %9358 = vmatprep.subr.mxu0 0.0
  %9359 = vmatpush1.xpose.msra.mxu0 0.0
  %9360 = vmatprep.subr.mxu0 0.0
  %9361 = vmatpush1.xpose.msra.mxu0 0.0
  %9362 = vmatprep.subr.mxu0 0.0
  %9363 = vmatpush1.xpose.msra.mxu0 0.0
  %9364 = vmatprep.subr.mxu0 0.0
  %9365 = vmatpush1.xpose.msra.mxu0 0.0
  %9366 = vmatprep.subr.mxu0 0.0
  %9367 = vmatpush1.xpose.msra.mxu0 0.0
  %9368 = vmatprep.subr.mxu0 0.0
  %9369 = vmatpush1.xpose.msra.mxu0 0.0
  %9370 = vmatprep.subr.mxu0 0.0
  %9371 = vmatpush1.xpose.msra.mxu0 0.0
  %9372 = vmatprep.subr.mxu0 0.0
  %9373 = vmatpush1.xpose.msra.mxu0 0.0
  %9374 = vmatprep.subr.mxu0 0.0
  %9375 = vmatpush1.xpose.msra.mxu0 0.0
  %9376 = vmatprep.subr.mxu0 0.0
  %9377 = vmatpush1.xpose.msra.mxu0 0.0
  %9378 = vmatprep.subr.mxu0 0.0
  %9379 = vmatpush1.xpose.msra.mxu0 0.0
  %9380 = vmatprep.subr.mxu0 0.0
  %9381 = vmatpush1.xpose.msra.mxu0 0.0
  %9382 = vmatprep.mubr.f32.mxu0 0.0
  %v9383 = vand.u32 %v8456, 4294901760
  %v9384 = vsub.f32 %v8456, %v9383
  %9385 = vmatmul.mubr.f32.gmra.mrb[0].mxu0 %v9384
  %v9386 = vpop.f32.mrb[0].mxu0
  %v9387 = vadd.f32 %v9091, %v9386
  %v9388 = vpop.f32.mrb[0].mxu0
  %9389 = vmatprep.mubr.f32.mxu0 0.0
  %v9390 = vand.u32 %v8459, 4294901760
  %v9391 = vsub.f32 %v8459, %v9390
  %9392 = vmatmul.mubr.f32.gmra.mrb[0].mxu0 %v9391
  %v9393 = vpop.f32.mrb[0].mxu0
  %v9394 = vadd.f32 %v9097, %v9393
  %v9395 = vpop.f32.mrb[0].mxu0
  %9396 = vmatprep.mubr.f32.mxu0 0.0
  %v9397 = vand.u32 %v8462, 4294901760
  %v9398 = vsub.f32 %v8462, %v9397
  %9399 = vmatmul.mubr.f32.gmra.mrb[0].mxu0 %v9398
  %v9400 = vpop.f32.mrb[0].mxu0
  %v9401 = vadd.f32 %v9103, %v9400
  %v9402 = vpop.f32.mrb[0].mxu0
  %9403 = vmatprep.mubr.f32.mxu0 0.0
  %v9404 = vand.u32 %v8465, 4294901760
  %v9405 = vsub.f32 %v8465, %v9404
  %9406 = vmatmul.mubr.f32.gmra.mrb[0].mxu0 %v9405
  %v9407 = vpop.f32.mrb[0].mxu0
  %v9408 = vadd.f32 %v9109, %v9407
  %v9409 = vpop.f32.mrb[0].mxu0
  %9410 = vmatprep.mubr.f32.mxu0 0.0
  %v9411 = vand.u32 %v8468, 4294901760
  %v9412 = vsub.f32 %v8468, %v9411
  %9413 = vmatmul.mubr.f32.gmra.mrb[0].mxu0 %v9412
  %v9414 = vpop.f32.mrb[0].mxu0
  %v9415 = vadd.f32 %v9115, %v9414
  %v9416 = vpop.f32.mrb[0].mxu0
  %9417 = vmatprep.mubr.f32.mxu0 0.0
  %v9418 = vand.u32 %v8471, 4294901760
  %v9419 = vsub.f32 %v8471, %v9418
  %9420 = vmatmul.mubr.f32.gmra.mrb[0].mxu0 %v9419
  %v9421 = vpop.f32.mrb[0].mxu0
  %v9422 = vadd.f32 %v9121, %v9421
  %v9423 = vpop.f32.mrb[0].mxu0
  %9424 = vmatprep.mubr.f32.mxu0 0.0
  %v9425 = vand.u32 %v8474, 4294901760
  %v9426 = vsub.f32 %v8474, %v9425
  %9427 = vmatmul.mubr.f32.gmra.mrb[0].mxu0 %v9426
  %v9428 = vpop.f32.mrb[0].mxu0
  %v9429 = vadd.f32 %v9127, %v9428
  %v9430 = vpop.f32.mrb[0].mxu0
  %9431 = vmatprep.mubr.f32.mxu0 0.0
  %v9432 = vand.u32 %v8477, 4294901760
  %v9433 = vsub.f32 %v8477, %v9432
  %9434 = vmatmul.mubr.f32.gmra.mrb[0].mxu0 %v9433
  %v9435 = vpop.f32.mrb[0].mxu0
  %v9436 = vadd.f32 %v9133, %v9435
  %v9437 = vpop.f32.mrb[0].mxu0
  %9438 = vmatprep.mubr.f32.mxu0 0.0
  %v9439 = vand.u32 %v8480, 4294901760
  %v9440 = vsub.f32 %v8480, %v9439
  %9441 = vmatmul.mubr.f32.gmra.mrb[0].mxu0 %v9440
  %v9442 = vpop.f32.mrb[0].mxu0
  %v9443 = vadd.f32 %v9139, %v9442
  %v9444 = vpop.f32.mrb[0].mxu0
  %9445 = vmatprep.mubr.f32.mxu0 0.0
  %v9446 = vand.u32 %v8483, 4294901760
  %v9447 = vsub.f32 %v8483, %v9446
  %9448 = vmatmul.mubr.f32.gmra.mrb[0].mxu0 %v9447
  %v9449 = vpop.f32.mrb[0].mxu0
  %v9450 = vadd.f32 %v9145, %v9449
  %v9451 = vpop.f32.mrb[0].mxu0
  %9452 = vmatprep.mubr.f32.mxu0 0.0
  %v9453 = vand.u32 %v8486, 4294901760
  %v9454 = vsub.f32 %v8486, %v9453
  %9455 = vmatmul.mubr.f32.gmra.mrb[0].mxu0 %v9454
  %v9456 = vpop.f32.mrb[0].mxu0
  %v9457 = vadd.f32 %v9151, %v9456
  %v9458 = vpop.f32.mrb[0].mxu0
  %9459 = vmatprep.mubr.f32.mxu0 0.0
  %v9460 = vand.u32 %v8489, 4294901760
  %v9461 = vsub.f32 %v8489, %v9460
  %9462 = vmatmul.mubr.f32.gmra.mrb[0].mxu0 %v9461
  %v9463 = vpop.f32.mrb[0].mxu0
  %v9464 = vadd.f32 %v9157, %v9463
  %v9465 = vpop.f32.mrb[0].mxu0
  %9466 = vmatprep.mubr.f32.mxu0 0.0
  %v9467 = vand.u32 %v8492, 4294901760
  %v9468 = vsub.f32 %v8492, %v9467
  %9469 = vmatmul.mubr.f32.gmra.mrb[0].mxu0 %v9468
  %v9470 = vpop.f32.mrb[0].mxu0
  %v9471 = vadd.f32 %v9163, %v9470
  %v9472 = vpop.f32.mrb[0].mxu0
  %9473 = vmatprep.mubr.f32.mxu0 0.0
  %v9474 = vand.u32 %v8495, 4294901760
  %v9475 = vsub.f32 %v8495, %v9474
  %9476 = vmatmul.mubr.f32.gmra.mrb[0].mxu0 %v9475
  %v9477 = vpop.f32.mrb[0].mxu0
  %v9478 = vadd.f32 %v9169, %v9477
  %v9479 = vpop.f32.mrb[0].mxu0
  %9480 = vmatprep.mubr.f32.mxu0 0.0
  %v9481 = vand.u32 %v8498, 4294901760
  %v9482 = vsub.f32 %v8498, %v9481
  %9483 = vmatmul.mubr.f32.gmra.mrb[0].mxu0 %v9482
  %v9484 = vpop.f32.mrb[0].mxu0
  %v9485 = vadd.f32 %v9175, %v9484
  %v9486 = vpop.f32.mrb[0].mxu0
  %9487 = vmatprep.mubr.f32.mxu0 0.0
  %v9488 = vand.u32 %v8501, 4294901760
  %v9489 = vsub.f32 %v8501, %v9488
  %9490 = vmatmul.mubr.f32.gmra.mrb[0].mxu0 %v9489
  %v9491 = vpop.f32.mrb[0].mxu0
  %v9492 = vadd.f32 %v9181, %v9491
  %v9493 = vpop.f32.mrb[0].mxu0
  %9494 = vmatprep.mubr.f32.mxu0 0.0
  %v9495 = vand.u32 %v8504, 4294901760
  %v9496 = vsub.f32 %v8504, %v9495
  %9497 = vmatmul.mubr.f32.gmra.mrb[0].mxu0 %v9496
  %v9498 = vpop.f32.mrb[0].mxu0
  %v9499 = vadd.f32 %v9187, %v9498
  %v9500 = vpop.f32.mrb[0].mxu0
  %9501 = vmatprep.mubr.f32.mxu0 0.0
  %v9502 = vand.u32 %v8507, 4294901760
  %v9503 = vsub.f32 %v8507, %v9502
  %9504 = vmatmul.mubr.f32.gmra.mrb[0].mxu0 %v9503
  %v9505 = vpop.f32.mrb[0].mxu0
  %v9506 = vadd.f32 %v9193, %v9505
  %v9507 = vpop.f32.mrb[0].mxu0
  %9508 = vmatprep.mubr.f32.mxu0 0.0
  %v9509 = vand.u32 %v8510, 4294901760
  %v9510 = vsub.f32 %v8510, %v9509
  %9511 = vmatmul.mubr.f32.gmra.mrb[0].mxu0 %v9510
  %v9512 = vpop.f32.mrb[0].mxu0
  %v9513 = vadd.f32 %v9199, %v9512
  %v9514 = vpop.f32.mrb[0].mxu0
  %9515 = vmatprep.mubr.f32.mxu0 0.0
  %v9516 = vand.u32 %v8513, 4294901760
  %v9517 = vsub.f32 %v8513, %v9516
  %9518 = vmatmul.mubr.f32.gmra.mrb[0].mxu0 %v9517
  %v9519 = vpop.f32.mrb[0].mxu0
  %v9520 = vadd.f32 %v9205, %v9519
  %v9521 = vpop.f32.mrb[0].mxu0
  %9522 = vmatprep.mubr.f32.mxu0 0.0
  %v9523 = vand.u32 %v8516, 4294901760
  %v9524 = vsub.f32 %v8516, %v9523
  %9525 = vmatmul.mubr.f32.gmra.mrb[0].mxu0 %v9524
  %v9526 = vpop.f32.mrb[0].mxu0
  %v9527 = vadd.f32 %v9211, %v9526
  %v9528 = vpop.f32.mrb[0].mxu0
  %9529 = vmatprep.mubr.f32.mxu0 0.0
  %v9530 = vand.u32 %v8519, 4294901760
  %v9531 = vsub.f32 %v8519, %v9530
  %9532 = vmatmul.mubr.f32.gmra.mrb[0].mxu0 %v9531
  %v9533 = vpop.f32.mrb[0].mxu0
  %v9534 = vadd.f32 %v9217, %v9533
  %v9535 = vpop.f32.mrb[0].mxu0
  %9536 = vmatprep.mubr.f32.mxu0 0.0
  %v9537 = vand.u32 %v8522, 4294901760
  %v9538 = vsub.f32 %v8522, %v9537
  %9539 = vmatmul.mubr.f32.gmra.mrb[0].mxu0 %v9538
  %v9540 = vpop.f32.mrb[0].mxu0
  %v9541 = vadd.f32 %v9223, %v9540
  %v9542 = vpop.f32.mrb[0].mxu0
  %9543 = vmatprep.mubr.f32.mxu0 0.0
  %v9544 = vand.u32 %v8525, 4294901760
  %v9545 = vsub.f32 %v8525, %v9544
  %9546 = vmatmul.mubr.f32.gmra.mrb[0].mxu0 %v9545
  %v9547 = vpop.f32.mrb[0].mxu0
  %v9548 = vadd.f32 %v9229, %v9547
  %v9549 = vpop.f32.mrb[0].mxu0
  %9550 = vmatprep.mubr.f32.mxu0 0.0
  %v9551 = vand.u32 %v8528, 4294901760
  %v9552 = vsub.f32 %v8528, %v9551
  %9553 = vmatmul.mubr.f32.gmra.mrb[0].mxu0 %v9552
  %v9554 = vpop.f32.mrb[0].mxu0
  %v9555 = vadd.f32 %v9235, %v9554
  %v9556 = vpop.f32.mrb[0].mxu0
  %9557 = vmatprep.mubr.f32.mxu0 0.0
  %v9558 = vand.u32 %v8531, 4294901760
  %v9559 = vsub.f32 %v8531, %v9558
  %9560 = vmatmul.mubr.f32.gmra.mrb[0].mxu0 %v9559
  %v9561 = vpop.f32.mrb[0].mxu0
  %v9562 = vadd.f32 %v9241, %v9561
  %v9563 = vpop.f32.mrb[0].mxu0
  %9564 = vmatprep.mubr.f32.mxu0 0.0
  %v9565 = vand.u32 %v8534, 4294901760
  %v9566 = vsub.f32 %v8534, %v9565
  %9567 = vmatmul.mubr.f32.gmra.mrb[0].mxu0 %v9566
  %v9568 = vpop.f32.mrb[0].mxu0
  %v9569 = vadd.f32 %v9247, %v9568
  %v9570 = vpop.f32.mrb[0].mxu0
  %9571 = vmatprep.mubr.f32.mxu0 0.0
  %v9572 = vand.u32 %v8537, 4294901760
  %v9573 = vsub.f32 %v8537, %v9572
  %9574 = vmatmul.mubr.f32.gmra.mrb[0].mxu0 %v9573
  %v9575 = vpop.f32.mrb[0].mxu0
  %v9576 = vadd.f32 %v9253, %v9575
  %v9577 = vpop.f32.mrb[0].mxu0
  %9578 = vmatprep.mubr.f32.mxu0 0.0
  %v9579 = vand.u32 %v8540, 4294901760
  %v9580 = vsub.f32 %v8540, %v9579
  %9581 = vmatmul.mubr.f32.gmra.mrb[0].mxu0 %v9580
  %v9582 = vpop.f32.mrb[0].mxu0
  %v9583 = vadd.f32 %v9259, %v9582
  %v9584 = vpop.f32.mrb[0].mxu0
  %9585 = vmatprep.mubr.f32.mxu0 0.0
  %v9586 = vand.u32 %v8543, 4294901760
  %v9587 = vsub.f32 %v8543, %v9586
  %9588 = vmatmul.mubr.f32.gmra.mrb[0].mxu0 %v9587
  %v9589 = vpop.f32.mrb[0].mxu0
  %v9590 = vadd.f32 %v9265, %v9589
  %v9591 = vpop.f32.mrb[0].mxu0
  %9592 = vmatprep.mubr.f32.mxu0 0.0
  %v9593 = vand.u32 %v8546, 4294901760
  %v9594 = vsub.f32 %v8546, %v9593
  %9595 = vmatmul.mubr.f32.gmra.mrb[0].mxu0 %v9594
  %v9596 = vpop.f32.mrb[0].mxu0
  %v9597 = vadd.f32 %v9271, %v9596
  %v9598 = vpop.f32.mrb[0].mxu0
  %9599 = vmatprep.mubr.f32.mxu0 0.0
  %v9600 = vand.u32 %v8549, 4294901760
  %v9601 = vsub.f32 %v8549, %v9600
  %9602 = vmatmul.mubr.f32.gmra.mrb[0].mxu0 %v9601
  %v9603 = vpop.f32.mrb[0].mxu0
  %v9604 = vadd.f32 %v9277, %v9603
  %v9605 = vpop.f32.mrb[0].mxu0
  %9606 = vmatprep.mubr.f32.mxu0 0.0
  %v9607 = vand.u32 %v8552, 4294901760
  %v9608 = vsub.f32 %v8552, %v9607
  %9609 = vmatmul.mubr.f32.gmra.mrb[0].mxu0 %v9608
  %v9610 = vpop.f32.mrb[0].mxu0
  %v9611 = vadd.f32 %v9283, %v9610
  %v9612 = vpop.f32.mrb[0].mxu0
  %9613 = vmatprep.mubr.f32.mxu0 0.0
  %v9614 = vand.u32 %v8555, 4294901760
  %v9615 = vsub.f32 %v8555, %v9614
  %9616 = vmatmul.mubr.f32.gmra.mrb[0].mxu0 %v9615
  %v9617 = vpop.f32.mrb[0].mxu0
  %v9618 = vadd.f32 %v9289, %v9617
  %v9619 = vpop.f32.mrb[0].mxu0
  %9620 = vmatprep.mubr.f32.mxu0 0.0
  %v9621 = vand.u32 %v8558, 4294901760
  %v9622 = vsub.f32 %v8558, %v9621
  %9623 = vmatmul.mubr.f32.gmra.mrb[0].mxu0 %v9622
  %v9624 = vpop.f32.mrb[0].mxu0
  %v9625 = vadd.f32 %v9295, %v9624
  %v9626 = vpop.f32.mrb[0].mxu0
  %9627 = vmatprep.mubr.f32.mxu0 0.0
  %v9628 = vand.u32 %v8561, 4294901760
  %v9629 = vsub.f32 %v8561, %v9628
  %9630 = vmatmul.mubr.f32.gmra.mrb[0].mxu0 %v9629
  %v9631 = vpop.f32.mrb[0].mxu0
  %v9632 = vadd.f32 %v9301, %v9631
  %v9633 = vpop.f32.mrb[0].mxu0
  %9634 = vmatprep.mubr.f32.mxu0 0.0
  %v9635 = vand.u32 %v8564, 4294901760
  %v9636 = vsub.f32 %v8564, %v9635
  %9637 = vmatmul.mubr.f32.gmra.mrb[0].mxu0 %v9636
  %v9638 = vpop.f32.mrb[0].mxu0
  %v9639 = vadd.f32 %v9307, %v9638
  %v9640 = vpop.f32.mrb[0].mxu0
  %9641 = vmatprep.mubr.f32.mxu0 0.0
  %v9642 = vand.u32 %v8567, 4294901760
  %v9643 = vsub.f32 %v8567, %v9642
  %9644 = vmatmul.mubr.f32.gmra.mrb[0].mxu0 %v9643
  %v9645 = vpop.f32.mrb[0].mxu0
  %v9646 = vadd.f32 %v9313, %v9645
  %v9647 = vpop.f32.mrb[0].mxu0
  %9648 = vdwg.mxu0
  %9649 = vmatprep.subr.mxu0 0.0
  %v9650 = vand.u32 %v8570, 4294901760
  %9651 = vmatpush1.xpose.msra.mxu0 %v9650
  %9652 = vmatprep.subr.mxu0 0.0
  %9653 = vmatpush1.xpose.msra.mxu0 0.0
  %9654 = vmatprep.subr.mxu0 0.0
  %9655 = vmatpush1.xpose.msra.mxu0 0.0
  %9656 = vmatprep.subr.mxu0 0.0
  %9657 = vmatpush1.xpose.msra.mxu0 0.0
  %9658 = vmatprep.subr.mxu0 0.0
  %9659 = vmatpush1.xpose.msra.mxu0 0.0
  %9660 = vmatprep.subr.mxu0 0.0
  %9661 = vmatpush1.xpose.msra.mxu0 0.0
  %9662 = vmatprep.subr.mxu0 0.0
  %9663 = vmatpush1.xpose.msra.mxu0 0.0
  %9664 = vmatprep.subr.mxu0 0.0
  %9665 = vmatpush1.xpose.msra.mxu0 0.0
  %9666 = vmatprep.subr.mxu0 0.0
  %9667 = vmatpush1.xpose.msra.mxu0 0.0
  %9668 = vmatprep.subr.mxu0 0.0
  %9669 = vmatpush1.xpose.msra.mxu0 0.0
  %9670 = vmatprep.subr.mxu0 0.0
  %9671 = vmatpush1.xpose.msra.mxu0 0.0
  %9672 = vmatprep.subr.mxu0 0.0
  %9673 = vmatpush1.xpose.msra.mxu0 0.0
  %9674 = vmatprep.subr.mxu0 0.0
  %9675 = vmatpush1.xpose.msra.mxu0 0.0
  %9676 = vmatprep.subr.mxu0 0.0
  %9677 = vmatpush1.xpose.msra.mxu0 0.0
  %9678 = vmatprep.subr.mxu0 0.0
  %9679 = vmatpush1.xpose.msra.mxu0 0.0
  %9680 = vmatprep.subr.mxu0 0.0
  %9681 = vmatpush1.xpose.msra.mxu0 0.0
  %9682 = vmatprep.subr.mxu0 0.0
  %9683 = vmatpush1.xpose.msra.mxu0 0.0
  %9684 = vmatprep.subr.mxu0 0.0
  %9685 = vmatpush1.xpose.msra.mxu0 0.0
  %9686 = vmatprep.subr.mxu0 0.0
  %9687 = vmatpush1.xpose.msra.mxu0 0.0
  %9688 = vmatprep.subr.mxu0 0.0
  %9689 = vmatpush1.xpose.msra.mxu0 0.0
  %9690 = vmatprep.subr.mxu0 0.0
  %9691 = vmatpush1.xpose.msra.mxu0 0.0
  %9692 = vmatprep.subr.mxu0 0.0
  %9693 = vmatpush1.xpose.msra.mxu0 0.0
  %9694 = vmatprep.subr.mxu0 0.0
  %9695 = vmatpush1.xpose.msra.mxu0 0.0
  %9696 = vmatprep.subr.mxu0 0.0
  %9697 = vmatpush1.xpose.msra.mxu0 0.0
  %9698 = vmatprep.subr.mxu0 0.0
  %9699 = vmatpush1.xpose.msra.mxu0 0.0
  %9700 = vmatprep.subr.mxu0 0.0
  %9701 = vmatpush1.xpose.msra.mxu0 0.0
  %9702 = vmatprep.subr.mxu0 0.0
  %9703 = vmatpush1.xpose.msra.mxu0 0.0
  %9704 = vmatprep.subr.mxu0 0.0
  %9705 = vmatpush1.xpose.msra.mxu0 0.0
  %9706 = vmatprep.subr.mxu0 0.0
  %9707 = vmatpush1.xpose.msra.mxu0 0.0
  %9708 = vmatprep.subr.mxu0 0.0
  %9709 = vmatpush1.xpose.msra.mxu0 0.0
  %9710 = vmatprep.subr.mxu0 0.0
  %9711 = vmatpush1.xpose.msra.mxu0 0.0
  %9712 = vmatprep.subr.mxu0 0.0
  %9713 = vmatpush1.xpose.msra.mxu0 0.0
  %9714 = vmatprep.mubr.f32.mxu0 0.0
  %v9715 = vand.u32 %v8456, 4294901760
  %v9716 = vsub.f32 %v8456, %v9715
  %v9717 = vand.u32 %v9716, 4294901760
  %9718 = vmatmul.mubr.f32.gmra.mrb[0].mxu0 %v9717
  %v9719 = vpop.f32.mrb[0].mxu0
  %v9720 = vadd.f32 %v9387, %v9719
  %v9721 = vpop.f32.mrb[0].mxu0
  %9722 = vmatprep.mubr.f32.mxu0 0.0
  %v9723 = vand.u32 %v8459, 4294901760
  %v9724 = vsub.f32 %v8459, %v9723
  %v9725 = vand.u32 %v9724, 4294901760
  %9726 = vmatmul.mubr.f32.gmra.mrb[0].mxu0 %v9725
  %v9727 = vpop.f32.mrb[0].mxu0
  %v9728 = vadd.f32 %v9394, %v9727
  %v9729 = vpop.f32.mrb[0].mxu0
  %9730 = vmatprep.mubr.f32.mxu0 0.0
  %v9731 = vand.u32 %v8462, 4294901760
  %v9732 = vsub.f32 %v8462, %v9731
  %v9733 = vand.u32 %v9732, 4294901760
  %9734 = vmatmul.mubr.f32.gmra.mrb[0].mxu0 %v9733
  %v9735 = vpop.f32.mrb[0].mxu0
  %v9736 = vadd.f32 %v9401, %v9735
  %v9737 = vpop.f32.mrb[0].mxu0
  %9738 = vmatprep.mubr.f32.mxu0 0.0
  %v9739 = vand.u32 %v8465, 4294901760
  %v9740 = vsub.f32 %v8465, %v9739
  %v9741 = vand.u32 %v9740, 4294901760
  %9742 = vmatmul.mubr.f32.gmra.mrb[0].mxu0 %v9741
  %v9743 = vpop.f32.mrb[0].mxu0
  %v9744 = vadd.f32 %v9408, %v9743
  %v9745 = vpop.f32.mrb[0].mxu0
  %9746 = vmatprep.mubr.f32.mxu0 0.0
  %v9747 = vand.u32 %v8468, 4294901760
  %v9748 = vsub.f32 %v8468, %v9747
  %v9749 = vand.u32 %v9748, 4294901760
  %9750 = vmatmul.mubr.f32.gmra.mrb[0].mxu0 %v9749
  %v9751 = vpop.f32.mrb[0].mxu0
  %v9752 = vadd.f32 %v9415, %v9751
  %v9753 = vpop.f32.mrb[0].mxu0
  %9754 = vmatprep.mubr.f32.mxu0 0.0
  %v9755 = vand.u32 %v8471, 4294901760
  %v9756 = vsub.f32 %v8471, %v9755
  %v9757 = vand.u32 %v9756, 4294901760
  %9758 = vmatmul.mubr.f32.gmra.mrb[0].mxu0 %v9757
  %v9759 = vpop.f32.mrb[0].mxu0
  %v9760 = vadd.f32 %v9422, %v9759
  %v9761 = vpop.f32.mrb[0].mxu0
  %9762 = vmatprep.mubr.f32.mxu0 0.0
  %v9763 = vand.u32 %v8474, 4294901760
  %v9764 = vsub.f32 %v8474, %v9763
  %v9765 = vand.u32 %v9764, 4294901760
  %9766 = vmatmul.mubr.f32.gmra.mrb[0].mxu0 %v9765
  %v9767 = vpop.f32.mrb[0].mxu0
  %v9768 = vadd.f32 %v9429, %v9767
  %v9769 = vpop.f32.mrb[0].mxu0
  %9770 = vmatprep.mubr.f32.mxu0 0.0
  %v9771 = vand.u32 %v8477, 4294901760
  %v9772 = vsub.f32 %v8477, %v9771
  %v9773 = vand.u32 %v9772, 4294901760
  %9774 = vmatmul.mubr.f32.gmra.mrb[0].mxu0 %v9773
  %v9775 = vpop.f32.mrb[0].mxu0
  %v9776 = vadd.f32 %v9436, %v9775
  %v9777 = vpop.f32.mrb[0].mxu0
  %9778 = vmatprep.mubr.f32.mxu0 0.0
  %v9779 = vand.u32 %v8480, 4294901760
  %v9780 = vsub.f32 %v8480, %v9779
  %v9781 = vand.u32 %v9780, 4294901760
  %9782 = vmatmul.mubr.f32.gmra.mrb[0].mxu0 %v9781
  %v9783 = vpop.f32.mrb[0].mxu0
  %v9784 = vadd.f32 %v9443, %v9783
  %v9785 = vpop.f32.mrb[0].mxu0
  %9786 = vmatprep.mubr.f32.mxu0 0.0
  %v9787 = vand.u32 %v8483, 4294901760
  %v9788 = vsub.f32 %v8483, %v9787
  %v9789 = vand.u32 %v9788, 4294901760
  %9790 = vmatmul.mubr.f32.gmra.mrb[0].mxu0 %v9789
  %v9791 = vpop.f32.mrb[0].mxu0
  %v9792 = vadd.f32 %v9450, %v9791
  %v9793 = vpop.f32.mrb[0].mxu0
  %9794 = vmatprep.mubr.f32.mxu0 0.0
  %v9795 = vand.u32 %v8486, 4294901760
  %v9796 = vsub.f32 %v8486, %v9795
  %v9797 = vand.u32 %v9796, 4294901760
  %9798 = vmatmul.mubr.f32.gmra.mrb[0].mxu0 %v9797
  %v9799 = vpop.f32.mrb[0].mxu0
  %v9800 = vadd.f32 %v9457, %v9799
  %v9801 = vpop.f32.mrb[0].mxu0
  %9802 = vmatprep.mubr.f32.mxu0 0.0
  %v9803 = vand.u32 %v8489, 4294901760
  %v9804 = vsub.f32 %v8489, %v9803
  %v9805 = vand.u32 %v9804, 4294901760
  %9806 = vmatmul.mubr.f32.gmra.mrb[0].mxu0 %v9805
  %v9807 = vpop.f32.mrb[0].mxu0
  %v9808 = vadd.f32 %v9464, %v9807
  %v9809 = vpop.f32.mrb[0].mxu0
  %9810 = vmatprep.mubr.f32.mxu0 0.0
  %v9811 = vand.u32 %v8492, 4294901760
  %v9812 = vsub.f32 %v8492, %v9811
  %v9813 = vand.u32 %v9812, 4294901760
  %9814 = vmatmul.mubr.f32.gmra.mrb[0].mxu0 %v9813
  %v9815 = vpop.f32.mrb[0].mxu0
  %v9816 = vadd.f32 %v9471, %v9815
  %v9817 = vpop.f32.mrb[0].mxu0
  %9818 = vmatprep.mubr.f32.mxu0 0.0
  %v9819 = vand.u32 %v8495, 4294901760
  %v9820 = vsub.f32 %v8495, %v9819
  %v9821 = vand.u32 %v9820, 4294901760
  %9822 = vmatmul.mubr.f32.gmra.mrb[0].mxu0 %v9821
  %v9823 = vpop.f32.mrb[0].mxu0
  %v9824 = vadd.f32 %v9478, %v9823
  %v9825 = vpop.f32.mrb[0].mxu0
  %9826 = vmatprep.mubr.f32.mxu0 0.0
  %v9827 = vand.u32 %v8498, 4294901760
  %v9828 = vsub.f32 %v8498, %v9827
  %v9829 = vand.u32 %v9828, 4294901760
  %9830 = vmatmul.mubr.f32.gmra.mrb[0].mxu0 %v9829
  %v9831 = vpop.f32.mrb[0].mxu0
  %v9832 = vadd.f32 %v9485, %v9831
  %v9833 = vpop.f32.mrb[0].mxu0
  %9834 = vmatprep.mubr.f32.mxu0 0.0
  %v9835 = vand.u32 %v8501, 4294901760
  %v9836 = vsub.f32 %v8501, %v9835
  %v9837 = vand.u32 %v9836, 4294901760
  %9838 = vmatmul.mubr.f32.gmra.mrb[0].mxu0 %v9837
  %v9839 = vpop.f32.mrb[0].mxu0
  %v9840 = vadd.f32 %v9492, %v9839
  %v9841 = vpop.f32.mrb[0].mxu0
  %9842 = vmatprep.mubr.f32.mxu0 0.0
  %v9843 = vand.u32 %v8504, 4294901760
  %v9844 = vsub.f32 %v8504, %v9843
  %v9845 = vand.u32 %v9844, 4294901760
  %9846 = vmatmul.mubr.f32.gmra.mrb[0].mxu0 %v9845
  %v9847 = vpop.f32.mrb[0].mxu0
  %v9848 = vadd.f32 %v9499, %v9847
  %v9849 = vpop.f32.mrb[0].mxu0
  %9850 = vmatprep.mubr.f32.mxu0 0.0
  %v9851 = vand.u32 %v8507, 4294901760
  %v9852 = vsub.f32 %v8507, %v9851
  %v9853 = vand.u32 %v9852, 4294901760
  %9854 = vmatmul.mubr.f32.gmra.mrb[0].mxu0 %v9853
  %v9855 = vpop.f32.mrb[0].mxu0
  %v9856 = vadd.f32 %v9506, %v9855
  %v9857 = vpop.f32.mrb[0].mxu0
  %9858 = vmatprep.mubr.f32.mxu0 0.0
  %v9859 = vand.u32 %v8510, 4294901760
  %v9860 = vsub.f32 %v8510, %v9859
  %v9861 = vand.u32 %v9860, 4294901760
  %9862 = vmatmul.mubr.f32.gmra.mrb[0].mxu0 %v9861
  %v9863 = vpop.f32.mrb[0].mxu0
  %v9864 = vadd.f32 %v9513, %v9863
  %v9865 = vpop.f32.mrb[0].mxu0
  %9866 = vmatprep.mubr.f32.mxu0 0.0
  %v9867 = vand.u32 %v8513, 4294901760
  %v9868 = vsub.f32 %v8513, %v9867
  %v9869 = vand.u32 %v9868, 4294901760
  %9870 = vmatmul.mubr.f32.gmra.mrb[0].mxu0 %v9869
  %v9871 = vpop.f32.mrb[0].mxu0
  %v9872 = vadd.f32 %v9520, %v9871
  %v9873 = vpop.f32.mrb[0].mxu0
  %9874 = vmatprep.mubr.f32.mxu0 0.0
  %v9875 = vand.u32 %v8516, 4294901760
  %v9876 = vsub.f32 %v8516, %v9875
  %v9877 = vand.u32 %v9876, 4294901760
  %9878 = vmatmul.mubr.f32.gmra.mrb[0].mxu0 %v9877
  %v9879 = vpop.f32.mrb[0].mxu0
  %v9880 = vadd.f32 %v9527, %v9879
  %v9881 = vpop.f32.mrb[0].mxu0
  %9882 = vmatprep.mubr.f32.mxu0 0.0
  %v9883 = vand.u32 %v8519, 4294901760
  %v9884 = vsub.f32 %v8519, %v9883
  %v9885 = vand.u32 %v9884, 4294901760
  %9886 = vmatmul.mubr.f32.gmra.mrb[0].mxu0 %v9885
  %v9887 = vpop.f32.mrb[0].mxu0
  %v9888 = vadd.f32 %v9534, %v9887
  %v9889 = vpop.f32.mrb[0].mxu0
  %9890 = vmatprep.mubr.f32.mxu0 0.0
  %v9891 = vand.u32 %v8522, 4294901760
  %v9892 = vsub.f32 %v8522, %v9891
  %v9893 = vand.u32 %v9892, 4294901760
  %9894 = vmatmul.mubr.f32.gmra.mrb[0].mxu0 %v9893
  %v9895 = vpop.f32.mrb[0].mxu0
  %v9896 = vadd.f32 %v9541, %v9895
  %v9897 = vpop.f32.mrb[0].mxu0
  %9898 = vmatprep.mubr.f32.mxu0 0.0
  %v9899 = vand.u32 %v8525, 4294901760
  %v9900 = vsub.f32 %v8525, %v9899
  %v9901 = vand.u32 %v9900, 4294901760
  %9902 = vmatmul.mubr.f32.gmra.mrb[0].mxu0 %v9901
  %v9903 = vpop.f32.mrb[0].mxu0
  %v9904 = vadd.f32 %v9548, %v9903
  %v9905 = vpop.f32.mrb[0].mxu0
  %9906 = vmatprep.mubr.f32.mxu0 0.0
  %v9907 = vand.u32 %v8528, 4294901760
  %v9908 = vsub.f32 %v8528, %v9907
  %v9909 = vand.u32 %v9908, 4294901760
  %9910 = vmatmul.mubr.f32.gmra.mrb[0].mxu0 %v9909
  %v9911 = vpop.f32.mrb[0].mxu0
  %v9912 = vadd.f32 %v9555, %v9911
  %v9913 = vpop.f32.mrb[0].mxu0
  %9914 = vmatprep.mubr.f32.mxu0 0.0
  %v9915 = vand.u32 %v8531, 4294901760
  %v9916 = vsub.f32 %v8531, %v9915
  %v9917 = vand.u32 %v9916, 4294901760
  %9918 = vmatmul.mubr.f32.gmra.mrb[0].mxu0 %v9917
  %v9919 = vpop.f32.mrb[0].mxu0
  %v9920 = vadd.f32 %v9562, %v9919
  %v9921 = vpop.f32.mrb[0].mxu0
  %9922 = vmatprep.mubr.f32.mxu0 0.0
  %v9923 = vand.u32 %v8534, 4294901760
  %v9924 = vsub.f32 %v8534, %v9923
  %v9925 = vand.u32 %v9924, 4294901760
  %9926 = vmatmul.mubr.f32.gmra.mrb[0].mxu0 %v9925
  %v9927 = vpop.f32.mrb[0].mxu0
  %v9928 = vadd.f32 %v9569, %v9927
  %v9929 = vpop.f32.mrb[0].mxu0
  %9930 = vmatprep.mubr.f32.mxu0 0.0
  %v9931 = vand.u32 %v8537, 4294901760
  %v9932 = vsub.f32 %v8537, %v9931
  %v9933 = vand.u32 %v9932, 4294901760
  %9934 = vmatmul.mubr.f32.gmra.mrb[0].mxu0 %v9933
  %v9935 = vpop.f32.mrb[0].mxu0
  %v9936 = vadd.f32 %v9576, %v9935
  %v9937 = vpop.f32.mrb[0].mxu0
  %9938 = vmatprep.mubr.f32.mxu0 0.0
  %v9939 = vand.u32 %v8540, 4294901760
  %v9940 = vsub.f32 %v8540, %v9939
  %v9941 = vand.u32 %v9940, 4294901760
  %9942 = vmatmul.mubr.f32.gmra.mrb[0].mxu0 %v9941
  %v9943 = vpop.f32.mrb[0].mxu0
  %v9944 = vadd.f32 %v9583, %v9943
  %v9945 = vpop.f32.mrb[0].mxu0
  %9946 = vmatprep.mubr.f32.mxu0 0.0
  %v9947 = vand.u32 %v8543, 4294901760
  %v9948 = vsub.f32 %v8543, %v9947
  %v9949 = vand.u32 %v9948, 4294901760
  %9950 = vmatmul.mubr.f32.gmra.mrb[0].mxu0 %v9949
  %v9951 = vpop.f32.mrb[0].mxu0
  %v9952 = vadd.f32 %v9590, %v9951
  %v9953 = vpop.f32.mrb[0].mxu0
  %9954 = vmatprep.mubr.f32.mxu0 0.0
  %v9955 = vand.u32 %v8546, 4294901760
  %v9956 = vsub.f32 %v8546, %v9955
  %v9957 = vand.u32 %v9956, 4294901760
  %9958 = vmatmul.mubr.f32.gmra.mrb[0].mxu0 %v9957
  %v9959 = vpop.f32.mrb[0].mxu0
  %v9960 = vadd.f32 %v9597, %v9959
  %v9961 = vpop.f32.mrb[0].mxu0
  %9962 = vmatprep.mubr.f32.mxu0 0.0
  %v9963 = vand.u32 %v8549, 4294901760
  %v9964 = vsub.f32 %v8549, %v9963
  %v9965 = vand.u32 %v9964, 4294901760
  %9966 = vmatmul.mubr.f32.gmra.mrb[0].mxu0 %v9965
  %v9967 = vpop.f32.mrb[0].mxu0
  %v9968 = vadd.f32 %v9604, %v9967
  %v9969 = vpop.f32.mrb[0].mxu0
  %9970 = vmatprep.mubr.f32.mxu0 0.0
  %v9971 = vand.u32 %v8552, 4294901760
  %v9972 = vsub.f32 %v8552, %v9971
  %v9973 = vand.u32 %v9972, 4294901760
  %9974 = vmatmul.mubr.f32.gmra.mrb[0].mxu0 %v9973
  %v9975 = vpop.f32.mrb[0].mxu0
  %v9976 = vadd.f32 %v9611, %v9975
  %v9977 = vpop.f32.mrb[0].mxu0
  %9978 = vmatprep.mubr.f32.mxu0 0.0
  %v9979 = vand.u32 %v8555, 4294901760
  %v9980 = vsub.f32 %v8555, %v9979
  %v9981 = vand.u32 %v9980, 4294901760
  %9982 = vmatmul.mubr.f32.gmra.mrb[0].mxu0 %v9981
  %v9983 = vpop.f32.mrb[0].mxu0
  %v9984 = vadd.f32 %v9618, %v9983
  %v9985 = vpop.f32.mrb[0].mxu0
  %9986 = vmatprep.mubr.f32.mxu0 0.0
  %v9987 = vand.u32 %v8558, 4294901760
  %v9988 = vsub.f32 %v8558, %v9987
  %v9989 = vand.u32 %v9988, 4294901760
  %9990 = vmatmul.mubr.f32.gmra.mrb[0].mxu0 %v9989
  %v9991 = vpop.f32.mrb[0].mxu0
  %v9992 = vadd.f32 %v9625, %v9991
  %v9993 = vpop.f32.mrb[0].mxu0
  %9994 = vmatprep.mubr.f32.mxu0 0.0
  %v9995 = vand.u32 %v8561, 4294901760
  %v9996 = vsub.f32 %v8561, %v9995
  %v9997 = vand.u32 %v9996, 4294901760
  %9998 = vmatmul.mubr.f32.gmra.mrb[0].mxu0 %v9997
  %v9999 = vpop.f32.mrb[0].mxu0
  %v10000 = vadd.f32 %v9632, %v9999
  %v10001 = vpop.f32.mrb[0].mxu0
  %10002 = vmatprep.mubr.f32.mxu0 0.0
  %v10003 = vand.u32 %v8564, 4294901760
  %v10004 = vsub.f32 %v8564, %v10003
  %v10005 = vand.u32 %v10004, 4294901760
  %10006 = vmatmul.mubr.f32.gmra.mrb[0].mxu0 %v10005
  %v10007 = vpop.f32.mrb[0].mxu0
  %v10008 = vadd.f32 %v9639, %v10007
  %v10009 = vpop.f32.mrb[0].mxu0
  %10010 = vmatprep.mubr.f32.mxu0 0.0
  %v10011 = vand.u32 %v8567, 4294901760
  %v10012 = vsub.f32 %v8567, %v10011
  %v10013 = vand.u32 %v10012, 4294901760
  %10014 = vmatmul.mubr.f32.gmra.mrb[0].mxu0 %v10013
  %v10015 = vpop.f32.mrb[0].mxu0
  %v10016 = vadd.f32 %v9646, %v10015
  %v10017 = vpop.f32.mrb[0].mxu0
  %10018 = vdwg.mxu0
  %10019 = vmatprep.subr.mxu0 0.0
  %v10020 = vand.u32 %v8570, 4294901760
  %v10021 = vsub.f32 %v8570, %v10020
  %v10022 = vand.u32 %v10021, 4294901760
  %10023 = vmatpush1.xpose.msra.mxu0 %v10022
  %10024 = vmatprep.subr.mxu0 0.0
  %10025 = vmatpush1.xpose.msra.mxu0 0.0
  %10026 = vmatprep.subr.mxu0 0.0
  %10027 = vmatpush1.xpose.msra.mxu0 0.0
  %10028 = vmatprep.subr.mxu0 0.0
  %10029 = vmatpush1.xpose.msra.mxu0 0.0
  %10030 = vmatprep.subr.mxu0 0.0
  %10031 = vmatpush1.xpose.msra.mxu0 0.0
  %10032 = vmatprep.subr.mxu0 0.0
  %10033 = vmatpush1.xpose.msra.mxu0 0.0
  %10034 = vmatprep.subr.mxu0 0.0
  %10035 = vmatpush1.xpose.msra.mxu0 0.0
  %10036 = vmatprep.subr.mxu0 0.0
  %10037 = vmatpush1.xpose.msra.mxu0 0.0
  %10038 = vmatprep.subr.mxu0 0.0
  %10039 = vmatpush1.xpose.msra.mxu0 0.0
  %10040 = vmatprep.subr.mxu0 0.0
  %10041 = vmatpush1.xpose.msra.mxu0 0.0
  %10042 = vmatprep.subr.mxu0 0.0
  %10043 = vmatpush1.xpose.msra.mxu0 0.0
  %10044 = vmatprep.subr.mxu0 0.0
  %10045 = vmatpush1.xpose.msra.mxu0 0.0
  %10046 = vmatprep.subr.mxu0 0.0
  %10047 = vmatpush1.xpose.msra.mxu0 0.0
  %10048 = vmatprep.subr.mxu0 0.0
  %10049 = vmatpush1.xpose.msra.mxu0 0.0
  %10050 = vmatprep.subr.mxu0 0.0
  %10051 = vmatpush1.xpose.msra.mxu0 0.0
  %10052 = vmatprep.subr.mxu0 0.0
  %10053 = vmatpush1.xpose.msra.mxu0 0.0
  %10054 = vmatprep.subr.mxu0 0.0
  %10055 = vmatpush1.xpose.msra.mxu0 0.0
  %10056 = vmatprep.subr.mxu0 0.0
  %10057 = vmatpush1.xpose.msra.mxu0 0.0
  %10058 = vmatprep.subr.mxu0 0.0
  %10059 = vmatpush1.xpose.msra.mxu0 0.0
  %10060 = vmatprep.subr.mxu0 0.0
  %10061 = vmatpush1.xpose.msra.mxu0 0.0
  %10062 = vmatprep.subr.mxu0 0.0
  %10063 = vmatpush1.xpose.msra.mxu0 0.0
  %10064 = vmatprep.subr.mxu0 0.0
  %10065 = vmatpush1.xpose.msra.mxu0 0.0
  %10066 = vmatprep.subr.mxu0 0.0
  %10067 = vmatpush1.xpose.msra.mxu0 0.0
  %10068 = vmatprep.subr.mxu0 0.0
  %10069 = vmatpush1.xpose.msra.mxu0 0.0
  %10070 = vmatprep.subr.mxu0 0.0
  %10071 = vmatpush1.xpose.msra.mxu0 0.0
  %10072 = vmatprep.subr.mxu0 0.0
  %10073 = vmatpush1.xpose.msra.mxu0 0.0
  %10074 = vmatprep.subr.mxu0 0.0
  %10075 = vmatpush1.xpose.msra.mxu0 0.0
  %10076 = vmatprep.subr.mxu0 0.0
  %10077 = vmatpush1.xpose.msra.mxu0 0.0
  %10078 = vmatprep.subr.mxu0 0.0
  %10079 = vmatpush1.xpose.msra.mxu0 0.0
  %10080 = vmatprep.subr.mxu0 0.0
  %10081 = vmatpush1.xpose.msra.mxu0 0.0
  %10082 = vmatprep.subr.mxu0 0.0
  %10083 = vmatpush1.xpose.msra.mxu0 0.0
  %10084 = vmatprep.subr.mxu0 0.0
  %10085 = vmatpush1.xpose.msra.mxu0 0.0
  %10086 = vmatprep.mubr.f32.mxu0 0.0
  %v10087 = vand.u32 %v8456, 4294901760
  %10088 = vmatmul.mubr.f32.gmra.mrb[0].mxu0 %v10087
  %v10089 = vpop.f32.mrb[0].mxu0
  %v10090 = vadd.f32 %v9720, %v10089
  %v10091 = vpop.f32.mrb[0].mxu0
  %10092 = vmatprep.mubr.f32.mxu0 0.0
  %v10093 = vand.u32 %v8459, 4294901760
  %10094 = vmatmul.mubr.f32.gmra.mrb[0].mxu0 %v10093
  %v10095 = vpop.f32.mrb[0].mxu0
  %v10096 = vadd.f32 %v9728, %v10095
  %v10097 = vpop.f32.mrb[0].mxu0
  %10098 = vmatprep.mubr.f32.mxu0 0.0
  %v10099 = vand.u32 %v8462, 4294901760
  %10100 = vmatmul.mubr.f32.gmra.mrb[0].mxu0 %v10099
  %v10101 = vpop.f32.mrb[0].mxu0
  %v10102 = vadd.f32 %v9736, %v10101
  %v10103 = vpop.f32.mrb[0].mxu0
  %10104 = vmatprep.mubr.f32.mxu0 0.0
  %v10105 = vand.u32 %v8465, 4294901760
  %10106 = vmatmul.mubr.f32.gmra.mrb[0].mxu0 %v10105
  %v10107 = vpop.f32.mrb[0].mxu0
  %v10108 = vadd.f32 %v9744, %v10107
  %v10109 = vpop.f32.mrb[0].mxu0
  %10110 = vmatprep.mubr.f32.mxu0 0.0
  %v10111 = vand.u32 %v8468, 4294901760
  %10112 = vmatmul.mubr.f32.gmra.mrb[0].mxu0 %v10111
  %v10113 = vpop.f32.mrb[0].mxu0
  %v10114 = vadd.f32 %v9752, %v10113
  %v10115 = vpop.f32.mrb[0].mxu0
  %10116 = vmatprep.mubr.f32.mxu0 0.0
  %v10117 = vand.u32 %v8471, 4294901760
  %10118 = vmatmul.mubr.f32.gmra.mrb[0].mxu0 %v10117
  %v10119 = vpop.f32.mrb[0].mxu0
  %v10120 = vadd.f32 %v9760, %v10119
  %v10121 = vpop.f32.mrb[0].mxu0
  %10122 = vmatprep.mubr.f32.mxu0 0.0
  %v10123 = vand.u32 %v8474, 4294901760
  %10124 = vmatmul.mubr.f32.gmra.mrb[0].mxu0 %v10123
  %v10125 = vpop.f32.mrb[0].mxu0
  %v10126 = vadd.f32 %v9768, %v10125
  %v10127 = vpop.f32.mrb[0].mxu0
  %10128 = vmatprep.mubr.f32.mxu0 0.0
  %v10129 = vand.u32 %v8477, 4294901760
  %10130 = vmatmul.mubr.f32.gmra.mrb[0].mxu0 %v10129
  %v10131 = vpop.f32.mrb[0].mxu0
  %v10132 = vadd.f32 %v9776, %v10131
  %v10133 = vpop.f32.mrb[0].mxu0
  %10134 = vmatprep.mubr.f32.mxu0 0.0
  %v10135 = vand.u32 %v8480, 4294901760
  %10136 = vmatmul.mubr.f32.gmra.mrb[0].mxu0 %v10135
  %v10137 = vpop.f32.mrb[0].mxu0
  %v10138 = vadd.f32 %v9784, %v10137
  %v10139 = vpop.f32.mrb[0].mxu0
  %10140 = vmatprep.mubr.f32.mxu0 0.0
  %v10141 = vand.u32 %v8483, 4294901760
  %10142 = vmatmul.mubr.f32.gmra.mrb[0].mxu0 %v10141
  %v10143 = vpop.f32.mrb[0].mxu0
  %v10144 = vadd.f32 %v9792, %v10143
  %v10145 = vpop.f32.mrb[0].mxu0
  %10146 = vmatprep.mubr.f32.mxu0 0.0
  %v10147 = vand.u32 %v8486, 4294901760
  %10148 = vmatmul.mubr.f32.gmra.mrb[0].mxu0 %v10147
  %v10149 = vpop.f32.mrb[0].mxu0
  %v10150 = vadd.f32 %v9800, %v10149
  %v10151 = vpop.f32.mrb[0].mxu0
  %10152 = vmatprep.mubr.f32.mxu0 0.0
  %v10153 = vand.u32 %v8489, 4294901760
  %10154 = vmatmul.mubr.f32.gmra.mrb[0].mxu0 %v10153
  %v10155 = vpop.f32.mrb[0].mxu0
  %v10156 = vadd.f32 %v9808, %v10155
  %v10157 = vpop.f32.mrb[0].mxu0
  %10158 = vmatprep.mubr.f32.mxu0 0.0
  %v10159 = vand.u32 %v8492, 4294901760
  %10160 = vmatmul.mubr.f32.gmra.mrb[0].mxu0 %v10159
  %v10161 = vpop.f32.mrb[0].mxu0
  %v10162 = vadd.f32 %v9816, %v10161
  %v10163 = vpop.f32.mrb[0].mxu0
  %10164 = vmatprep.mubr.f32.mxu0 0.0
  %v10165 = vand.u32 %v8495, 4294901760
  %10166 = vmatmul.mubr.f32.gmra.mrb[0].mxu0 %v10165
  %v10167 = vpop.f32.mrb[0].mxu0
  %v10168 = vadd.f32 %v9824, %v10167
  %v10169 = vpop.f32.mrb[0].mxu0
  %10170 = vmatprep.mubr.f32.mxu0 0.0
  %v10171 = vand.u32 %v8498, 4294901760
  %10172 = vmatmul.mubr.f32.gmra.mrb[0].mxu0 %v10171
  %v10173 = vpop.f32.mrb[0].mxu0
  %v10174 = vadd.f32 %v9832, %v10173
  %v10175 = vpop.f32.mrb[0].mxu0
  %10176 = vmatprep.mubr.f32.mxu0 0.0
  %v10177 = vand.u32 %v8501, 4294901760
  %10178 = vmatmul.mubr.f32.gmra.mrb[0].mxu0 %v10177
  %v10179 = vpop.f32.mrb[0].mxu0
  %v10180 = vadd.f32 %v9840, %v10179
  %v10181 = vpop.f32.mrb[0].mxu0
  %10182 = vmatprep.mubr.f32.mxu0 0.0
  %v10183 = vand.u32 %v8504, 4294901760
  %10184 = vmatmul.mubr.f32.gmra.mrb[0].mxu0 %v10183
  %v10185 = vpop.f32.mrb[0].mxu0
  %v10186 = vadd.f32 %v9848, %v10185
  %v10187 = vpop.f32.mrb[0].mxu0
  %10188 = vmatprep.mubr.f32.mxu0 0.0
  %v10189 = vand.u32 %v8507, 4294901760
  %10190 = vmatmul.mubr.f32.gmra.mrb[0].mxu0 %v10189
  %v10191 = vpop.f32.mrb[0].mxu0
  %v10192 = vadd.f32 %v9856, %v10191
  %v10193 = vpop.f32.mrb[0].mxu0
  %10194 = vmatprep.mubr.f32.mxu0 0.0
  %v10195 = vand.u32 %v8510, 4294901760
  %10196 = vmatmul.mubr.f32.gmra.mrb[0].mxu0 %v10195
  %v10197 = vpop.f32.mrb[0].mxu0
  %v10198 = vadd.f32 %v9864, %v10197
  %v10199 = vpop.f32.mrb[0].mxu0
  %10200 = vmatprep.mubr.f32.mxu0 0.0
  %v10201 = vand.u32 %v8513, 4294901760
  %10202 = vmatmul.mubr.f32.gmra.mrb[0].mxu0 %v10201
  %v10203 = vpop.f32.mrb[0].mxu0
  %v10204 = vadd.f32 %v9872, %v10203
  %v10205 = vpop.f32.mrb[0].mxu0
  %10206 = vmatprep.mubr.f32.mxu0 0.0
  %v10207 = vand.u32 %v8516, 4294901760
  %10208 = vmatmul.mubr.f32.gmra.mrb[0].mxu0 %v10207
  %v10209 = vpop.f32.mrb[0].mxu0
  %v10210 = vadd.f32 %v9880, %v10209
  %v10211 = vpop.f32.mrb[0].mxu0
  %10212 = vmatprep.mubr.f32.mxu0 0.0
  %v10213 = vand.u32 %v8519, 4294901760
  %10214 = vmatmul.mubr.f32.gmra.mrb[0].mxu0 %v10213
  %v10215 = vpop.f32.mrb[0].mxu0
  %v10216 = vadd.f32 %v9888, %v10215
  %v10217 = vpop.f32.mrb[0].mxu0
  %10218 = vmatprep.mubr.f32.mxu0 0.0
  %v10219 = vand.u32 %v8522, 4294901760
  %10220 = vmatmul.mubr.f32.gmra.mrb[0].mxu0 %v10219
  %v10221 = vpop.f32.mrb[0].mxu0
  %v10222 = vadd.f32 %v9896, %v10221
  %v10223 = vpop.f32.mrb[0].mxu0
  %10224 = vmatprep.mubr.f32.mxu0 0.0
  %v10225 = vand.u32 %v8525, 4294901760
  %10226 = vmatmul.mubr.f32.gmra.mrb[0].mxu0 %v10225
  %v10227 = vpop.f32.mrb[0].mxu0
  %v10228 = vadd.f32 %v9904, %v10227
  %v10229 = vpop.f32.mrb[0].mxu0
  %10230 = vmatprep.mubr.f32.mxu0 0.0
  %v10231 = vand.u32 %v8528, 4294901760
  %10232 = vmatmul.mubr.f32.gmra.mrb[0].mxu0 %v10231
  %v10233 = vpop.f32.mrb[0].mxu0
  %v10234 = vadd.f32 %v9912, %v10233
  %v10235 = vpop.f32.mrb[0].mxu0
  %10236 = vmatprep.mubr.f32.mxu0 0.0
  %v10237 = vand.u32 %v8531, 4294901760
  %10238 = vmatmul.mubr.f32.gmra.mrb[0].mxu0 %v10237
  %v10239 = vpop.f32.mrb[0].mxu0
  %v10240 = vadd.f32 %v9920, %v10239
  %v10241 = vpop.f32.mrb[0].mxu0
  %10242 = vmatprep.mubr.f32.mxu0 0.0
  %v10243 = vand.u32 %v8534, 4294901760
  %10244 = vmatmul.mubr.f32.gmra.mrb[0].mxu0 %v10243
  %v10245 = vpop.f32.mrb[0].mxu0
  %v10246 = vadd.f32 %v9928, %v10245
  %v10247 = vpop.f32.mrb[0].mxu0
  %10248 = vmatprep.mubr.f32.mxu0 0.0
  %v10249 = vand.u32 %v8537, 4294901760
  %10250 = vmatmul.mubr.f32.gmra.mrb[0].mxu0 %v10249
  %v10251 = vpop.f32.mrb[0].mxu0
  %v10252 = vadd.f32 %v9936, %v10251
  %v10253 = vpop.f32.mrb[0].mxu0
  %10254 = vmatprep.mubr.f32.mxu0 0.0
  %v10255 = vand.u32 %v8540, 4294901760
  %10256 = vmatmul.mubr.f32.gmra.mrb[0].mxu0 %v10255
  %v10257 = vpop.f32.mrb[0].mxu0
  %v10258 = vadd.f32 %v9944, %v10257
  %v10259 = vpop.f32.mrb[0].mxu0
  %10260 = vmatprep.mubr.f32.mxu0 0.0
  %v10261 = vand.u32 %v8543, 4294901760
  %10262 = vmatmul.mubr.f32.gmra.mrb[0].mxu0 %v10261
  %v10263 = vpop.f32.mrb[0].mxu0
  %v10264 = vadd.f32 %v9952, %v10263
  %v10265 = vpop.f32.mrb[0].mxu0
  %10266 = vmatprep.mubr.f32.mxu0 0.0
  %v10267 = vand.u32 %v8546, 4294901760
  %10268 = vmatmul.mubr.f32.gmra.mrb[0].mxu0 %v10267
  %v10269 = vpop.f32.mrb[0].mxu0
  %v10270 = vadd.f32 %v9960, %v10269
  %v10271 = vpop.f32.mrb[0].mxu0
  %10272 = vmatprep.mubr.f32.mxu0 0.0
  %v10273 = vand.u32 %v8549, 4294901760
  %10274 = vmatmul.mubr.f32.gmra.mrb[0].mxu0 %v10273
  %v10275 = vpop.f32.mrb[0].mxu0
  %v10276 = vadd.f32 %v9968, %v10275
  %v10277 = vpop.f32.mrb[0].mxu0
  %10278 = vmatprep.mubr.f32.mxu0 0.0
  %v10279 = vand.u32 %v8552, 4294901760
  %10280 = vmatmul.mubr.f32.gmra.mrb[0].mxu0 %v10279
  %v10281 = vpop.f32.mrb[0].mxu0
  %v10282 = vadd.f32 %v9976, %v10281
  %v10283 = vpop.f32.mrb[0].mxu0
  %10284 = vmatprep.mubr.f32.mxu0 0.0
  %v10285 = vand.u32 %v8555, 4294901760
  %10286 = vmatmul.mubr.f32.gmra.mrb[0].mxu0 %v10285
  %v10287 = vpop.f32.mrb[0].mxu0
  %v10288 = vadd.f32 %v9984, %v10287
  %v10289 = vpop.f32.mrb[0].mxu0
  %10290 = vmatprep.mubr.f32.mxu0 0.0
  %v10291 = vand.u32 %v8558, 4294901760
  %10292 = vmatmul.mubr.f32.gmra.mrb[0].mxu0 %v10291
  %v10293 = vpop.f32.mrb[0].mxu0
  %v10294 = vadd.f32 %v9992, %v10293
  %v10295 = vpop.f32.mrb[0].mxu0
  %10296 = vmatprep.mubr.f32.mxu0 0.0
  %v10297 = vand.u32 %v8561, 4294901760
  %10298 = vmatmul.mubr.f32.gmra.mrb[0].mxu0 %v10297
  %v10299 = vpop.f32.mrb[0].mxu0
  %v10300 = vadd.f32 %v10000, %v10299
  %v10301 = vpop.f32.mrb[0].mxu0
  %10302 = vmatprep.mubr.f32.mxu0 0.0
  %v10303 = vand.u32 %v8564, 4294901760
  %10304 = vmatmul.mubr.f32.gmra.mrb[0].mxu0 %v10303
  %v10305 = vpop.f32.mrb[0].mxu0
  %v10306 = vadd.f32 %v10008, %v10305
  %v10307 = vpop.f32.mrb[0].mxu0
  %10308 = vmatprep.mubr.f32.mxu0 0.0
  %v10309 = vand.u32 %v8567, 4294901760
  %10310 = vmatmul.mubr.f32.gmra.mrb[0].mxu0 %v10309
  %v10311 = vpop.f32.mrb[0].mxu0
  %v10312 = vadd.f32 %v10016, %v10311
  %v10313 = vpop.f32.mrb[0].mxu0
  %10314 = vdwg.mxu0
  %10315 = vmatprep.subr.mxu0 0.0
  %v10316 = vand.u32 %v8570, 4294901760
  %10317 = vmatpush1.xpose.msra.mxu0 %v10316
  %10318 = vmatprep.subr.mxu0 0.0
  %10319 = vmatpush1.xpose.msra.mxu0 0.0
  %10320 = vmatprep.subr.mxu0 0.0
  %10321 = vmatpush1.xpose.msra.mxu0 0.0
  %10322 = vmatprep.subr.mxu0 0.0
  %10323 = vmatpush1.xpose.msra.mxu0 0.0
  %10324 = vmatprep.subr.mxu0 0.0
  %10325 = vmatpush1.xpose.msra.mxu0 0.0
  %10326 = vmatprep.subr.mxu0 0.0
  %10327 = vmatpush1.xpose.msra.mxu0 0.0
  %10328 = vmatprep.subr.mxu0 0.0
  %10329 = vmatpush1.xpose.msra.mxu0 0.0
  %10330 = vmatprep.subr.mxu0 0.0
  %10331 = vmatpush1.xpose.msra.mxu0 0.0
  %10332 = vmatprep.subr.mxu0 0.0
  %10333 = vmatpush1.xpose.msra.mxu0 0.0
  %10334 = vmatprep.subr.mxu0 0.0
  %10335 = vmatpush1.xpose.msra.mxu0 0.0
  %10336 = vmatprep.subr.mxu0 0.0
  %10337 = vmatpush1.xpose.msra.mxu0 0.0
  %10338 = vmatprep.subr.mxu0 0.0
  %10339 = vmatpush1.xpose.msra.mxu0 0.0
  %10340 = vmatprep.subr.mxu0 0.0
  %10341 = vmatpush1.xpose.msra.mxu0 0.0
  %10342 = vmatprep.subr.mxu0 0.0
  %10343 = vmatpush1.xpose.msra.mxu0 0.0
  %10344 = vmatprep.subr.mxu0 0.0
  %10345 = vmatpush1.xpose.msra.mxu0 0.0
  %10346 = vmatprep.subr.mxu0 0.0
  %10347 = vmatpush1.xpose.msra.mxu0 0.0
  %10348 = vmatprep.subr.mxu0 0.0
  %10349 = vmatpush1.xpose.msra.mxu0 0.0
  %10350 = vmatprep.subr.mxu0 0.0
  %10351 = vmatpush1.xpose.msra.mxu0 0.0
  %10352 = vmatprep.subr.mxu0 0.0
  %10353 = vmatpush1.xpose.msra.mxu0 0.0
  %10354 = vmatprep.subr.mxu0 0.0
  %10355 = vmatpush1.xpose.msra.mxu0 0.0
  %10356 = vmatprep.subr.mxu0 0.0
  %10357 = vmatpush1.xpose.msra.mxu0 0.0
  %10358 = vmatprep.subr.mxu0 0.0
  %10359 = vmatpush1.xpose.msra.mxu0 0.0
  %10360 = vmatprep.subr.mxu0 0.0
  %10361 = vmatpush1.xpose.msra.mxu0 0.0
  %10362 = vmatprep.subr.mxu0 0.0
  %10363 = vmatpush1.xpose.msra.mxu0 0.0
  %10364 = vmatprep.subr.mxu0 0.0
  %10365 = vmatpush1.xpose.msra.mxu0 0.0
  %10366 = vmatprep.subr.mxu0 0.0
  %10367 = vmatpush1.xpose.msra.mxu0 0.0
  %10368 = vmatprep.subr.mxu0 0.0
  %10369 = vmatpush1.xpose.msra.mxu0 0.0
  %10370 = vmatprep.subr.mxu0 0.0
  %10371 = vmatpush1.xpose.msra.mxu0 0.0
  %10372 = vmatprep.subr.mxu0 0.0
  %10373 = vmatpush1.xpose.msra.mxu0 0.0
  %10374 = vmatprep.subr.mxu0 0.0
  %10375 = vmatpush1.xpose.msra.mxu0 0.0
  %10376 = vmatprep.subr.mxu0 0.0
  %10377 = vmatpush1.xpose.msra.mxu0 0.0
  %10378 = vmatprep.subr.mxu0 0.0
  %10379 = vmatpush1.xpose.msra.mxu0 0.0
  %10380 = vmatprep.mubr.f32.mxu0 0.0
  %v10381 = vand.u32 %v8456, 4294901760
  %10382 = vmatmul.mubr.f32.gmra.mrb[0].mxu0 %v10381
  %v10383 = vpop.f32.mrb[0].mxu0
  %v10384 = vadd.f32 %v10090, %v10383
  %v10385 = vpop.f32.mrb[0].mxu0
  %10386 = vmatprep.mubr.f32.mxu0 0.0
  %v10387 = vand.u32 %v8459, 4294901760
  %10388 = vmatmul.mubr.f32.gmra.mrb[0].mxu0 %v10387
  %v10389 = vpop.f32.mrb[0].mxu0
  %v10390 = vadd.f32 %v10096, %v10389
  %v10391 = vpop.f32.mrb[0].mxu0
  %10392 = vmatprep.mubr.f32.mxu0 0.0
  %v10393 = vand.u32 %v8462, 4294901760
  %10394 = vmatmul.mubr.f32.gmra.mrb[0].mxu0 %v10393
  %v10395 = vpop.f32.mrb[0].mxu0
  %v10396 = vadd.f32 %v10102, %v10395
  %v10397 = vpop.f32.mrb[0].mxu0
  %10398 = vmatprep.mubr.f32.mxu0 0.0
  %v10399 = vand.u32 %v8465, 4294901760
  %10400 = vmatmul.mubr.f32.gmra.mrb[0].mxu0 %v10399
  %v10401 = vpop.f32.mrb[0].mxu0
  %v10402 = vadd.f32 %v10108, %v10401
  %v10403 = vpop.f32.mrb[0].mxu0
  %10404 = vmatprep.mubr.f32.mxu0 0.0
  %v10405 = vand.u32 %v8468, 4294901760
  %10406 = vmatmul.mubr.f32.gmra.mrb[0].mxu0 %v10405
  %v10407 = vpop.f32.mrb[0].mxu0
  %v10408 = vadd.f32 %v10114, %v10407
  %v10409 = vpop.f32.mrb[0].mxu0
  %10410 = vmatprep.mubr.f32.mxu0 0.0
  %v10411 = vand.u32 %v8471, 4294901760
  %10412 = vmatmul.mubr.f32.gmra.mrb[0].mxu0 %v10411
  %v10413 = vpop.f32.mrb[0].mxu0
  %v10414 = vadd.f32 %v10120, %v10413
  %v10415 = vpop.f32.mrb[0].mxu0
  %10416 = vmatprep.mubr.f32.mxu0 0.0
  %v10417 = vand.u32 %v8474, 4294901760
  %10418 = vmatmul.mubr.f32.gmra.mrb[0].mxu0 %v10417
  %v10419 = vpop.f32.mrb[0].mxu0
  %v10420 = vadd.f32 %v10126, %v10419
  %v10421 = vpop.f32.mrb[0].mxu0
  %10422 = vmatprep.mubr.f32.mxu0 0.0
  %v10423 = vand.u32 %v8477, 4294901760
  %10424 = vmatmul.mubr.f32.gmra.mrb[0].mxu0 %v10423
  %v10425 = vpop.f32.mrb[0].mxu0
  %v10426 = vadd.f32 %v10132, %v10425
  %v10427 = vpop.f32.mrb[0].mxu0
  %10428 = vmatprep.mubr.f32.mxu0 0.0
  %v10429 = vand.u32 %v8480, 4294901760
  %10430 = vmatmul.mubr.f32.gmra.mrb[0].mxu0 %v10429
  %v10431 = vpop.f32.mrb[0].mxu0
  %v10432 = vadd.f32 %v10138, %v10431
  %v10433 = vpop.f32.mrb[0].mxu0
  %10434 = vmatprep.mubr.f32.mxu0 0.0
  %v10435 = vand.u32 %v8483, 4294901760
  %10436 = vmatmul.mubr.f32.gmra.mrb[0].mxu0 %v10435
  %v10437 = vpop.f32.mrb[0].mxu0
  %v10438 = vadd.f32 %v10144, %v10437
  %v10439 = vpop.f32.mrb[0].mxu0
  %10440 = vmatprep.mubr.f32.mxu0 0.0
  %v10441 = vand.u32 %v8486, 4294901760
  %10442 = vmatmul.mubr.f32.gmra.mrb[0].mxu0 %v10441
  %v10443 = vpop.f32.mrb[0].mxu0
  %v10444 = vadd.f32 %v10150, %v10443
  %v10445 = vpop.f32.mrb[0].mxu0
  %10446 = vmatprep.mubr.f32.mxu0 0.0
  %v10447 = vand.u32 %v8489, 4294901760
  %10448 = vmatmul.mubr.f32.gmra.mrb[0].mxu0 %v10447
  %v10449 = vpop.f32.mrb[0].mxu0
  %v10450 = vadd.f32 %v10156, %v10449
  %v10451 = vpop.f32.mrb[0].mxu0
  %10452 = vmatprep.mubr.f32.mxu0 0.0
  %v10453 = vand.u32 %v8492, 4294901760
  %10454 = vmatmul.mubr.f32.gmra.mrb[0].mxu0 %v10453
  %v10455 = vpop.f32.mrb[0].mxu0
  %v10456 = vadd.f32 %v10162, %v10455
  %v10457 = vpop.f32.mrb[0].mxu0
  %10458 = vmatprep.mubr.f32.mxu0 0.0
  %v10459 = vand.u32 %v8495, 4294901760
  %10460 = vmatmul.mubr.f32.gmra.mrb[0].mxu0 %v10459
  %v10461 = vpop.f32.mrb[0].mxu0
  %v10462 = vadd.f32 %v10168, %v10461
  %v10463 = vpop.f32.mrb[0].mxu0
  %10464 = vmatprep.mubr.f32.mxu0 0.0
  %v10465 = vand.u32 %v8498, 4294901760
  %10466 = vmatmul.mubr.f32.gmra.mrb[0].mxu0 %v10465
  %v10467 = vpop.f32.mrb[0].mxu0
  %v10468 = vadd.f32 %v10174, %v10467
  %v10469 = vpop.f32.mrb[0].mxu0
  %10470 = vmatprep.mubr.f32.mxu0 0.0
  %v10471 = vand.u32 %v8501, 4294901760
  %10472 = vmatmul.mubr.f32.gmra.mrb[0].mxu0 %v10471
  %v10473 = vpop.f32.mrb[0].mxu0
  %v10474 = vadd.f32 %v10180, %v10473
  %v10475 = vpop.f32.mrb[0].mxu0
  %10476 = vmatprep.mubr.f32.mxu0 0.0
  %v10477 = vand.u32 %v8504, 4294901760
  %10478 = vmatmul.mubr.f32.gmra.mrb[0].mxu0 %v10477
  %v10479 = vpop.f32.mrb[0].mxu0
  %v10480 = vadd.f32 %v10186, %v10479
  %v10481 = vpop.f32.mrb[0].mxu0
  %10482 = vmatprep.mubr.f32.mxu0 0.0
  %v10483 = vand.u32 %v8507, 4294901760
  %10484 = vmatmul.mubr.f32.gmra.mrb[0].mxu0 %v10483
  %v10485 = vpop.f32.mrb[0].mxu0
  %v10486 = vadd.f32 %v10192, %v10485
  %v10487 = vpop.f32.mrb[0].mxu0
  %10488 = vmatprep.mubr.f32.mxu0 0.0
  %v10489 = vand.u32 %v8510, 4294901760
  %10490 = vmatmul.mubr.f32.gmra.mrb[0].mxu0 %v10489
  %v10491 = vpop.f32.mrb[0].mxu0
  %v10492 = vadd.f32 %v10198, %v10491
  %v10493 = vpop.f32.mrb[0].mxu0
  %10494 = vmatprep.mubr.f32.mxu0 0.0
  %v10495 = vand.u32 %v8513, 4294901760
  %10496 = vmatmul.mubr.f32.gmra.mrb[0].mxu0 %v10495
  %v10497 = vpop.f32.mrb[0].mxu0
  %v10498 = vadd.f32 %v10204, %v10497
  %v10499 = vpop.f32.mrb[0].mxu0
  %10500 = vmatprep.mubr.f32.mxu0 0.0
  %v10501 = vand.u32 %v8516, 4294901760
  %10502 = vmatmul.mubr.f32.gmra.mrb[0].mxu0 %v10501
  %v10503 = vpop.f32.mrb[0].mxu0
  %v10504 = vadd.f32 %v10210, %v10503
  %v10505 = vpop.f32.mrb[0].mxu0
  %10506 = vmatprep.mubr.f32.mxu0 0.0
  %v10507 = vand.u32 %v8519, 4294901760
  %10508 = vmatmul.mubr.f32.gmra.mrb[0].mxu0 %v10507
  %v10509 = vpop.f32.mrb[0].mxu0
  %v10510 = vadd.f32 %v10216, %v10509
  %v10511 = vpop.f32.mrb[0].mxu0
  %10512 = vmatprep.mubr.f32.mxu0 0.0
  %v10513 = vand.u32 %v8522, 4294901760
  %10514 = vmatmul.mubr.f32.gmra.mrb[0].mxu0 %v10513
  %v10515 = vpop.f32.mrb[0].mxu0
  %v10516 = vadd.f32 %v10222, %v10515
  %v10517 = vpop.f32.mrb[0].mxu0
  %10518 = vmatprep.mubr.f32.mxu0 0.0
  %v10519 = vand.u32 %v8525, 4294901760
  %10520 = vmatmul.mubr.f32.gmra.mrb[0].mxu0 %v10519
  %v10521 = vpop.f32.mrb[0].mxu0
  %v10522 = vadd.f32 %v10228, %v10521
  %v10523 = vpop.f32.mrb[0].mxu0
  %10524 = vmatprep.mubr.f32.mxu0 0.0
  %v10525 = vand.u32 %v8528, 4294901760
  %10526 = vmatmul.mubr.f32.gmra.mrb[0].mxu0 %v10525
  %v10527 = vpop.f32.mrb[0].mxu0
  %v10528 = vadd.f32 %v10234, %v10527
  %v10529 = vpop.f32.mrb[0].mxu0
  %10530 = vmatprep.mubr.f32.mxu0 0.0
  %v10531 = vand.u32 %v8531, 4294901760
  %10532 = vmatmul.mubr.f32.gmra.mrb[0].mxu0 %v10531
  %v10533 = vpop.f32.mrb[0].mxu0
  %v10534 = vadd.f32 %v10240, %v10533
  %v10535 = vpop.f32.mrb[0].mxu0
  %10536 = vmatprep.mubr.f32.mxu0 0.0
  %v10537 = vand.u32 %v8534, 4294901760
  %10538 = vmatmul.mubr.f32.gmra.mrb[0].mxu0 %v10537
  %v10539 = vpop.f32.mrb[0].mxu0
  %v10540 = vadd.f32 %v10246, %v10539
  %v10541 = vpop.f32.mrb[0].mxu0
  %10542 = vmatprep.mubr.f32.mxu0 0.0
  %v10543 = vand.u32 %v8537, 4294901760
  %10544 = vmatmul.mubr.f32.gmra.mrb[0].mxu0 %v10543
  %v10545 = vpop.f32.mrb[0].mxu0
  %v10546 = vadd.f32 %v10252, %v10545
  %v10547 = vpop.f32.mrb[0].mxu0
  %10548 = vmatprep.mubr.f32.mxu0 0.0
  %v10549 = vand.u32 %v8540, 4294901760
  %10550 = vmatmul.mubr.f32.gmra.mrb[0].mxu0 %v10549
  %v10551 = vpop.f32.mrb[0].mxu0
  %v10552 = vadd.f32 %v10258, %v10551
  %v10553 = vpop.f32.mrb[0].mxu0
  %10554 = vmatprep.mubr.f32.mxu0 0.0
  %v10555 = vand.u32 %v8543, 4294901760
  %10556 = vmatmul.mubr.f32.gmra.mrb[0].mxu0 %v10555
  %v10557 = vpop.f32.mrb[0].mxu0
  %v10558 = vadd.f32 %v10264, %v10557
  %v10559 = vpop.f32.mrb[0].mxu0
  %10560 = vmatprep.mubr.f32.mxu0 0.0
  %v10561 = vand.u32 %v8546, 4294901760
  %10562 = vmatmul.mubr.f32.gmra.mrb[0].mxu0 %v10561
  %v10563 = vpop.f32.mrb[0].mxu0
  %v10564 = vadd.f32 %v10270, %v10563
  %v10565 = vpop.f32.mrb[0].mxu0
  %10566 = vmatprep.mubr.f32.mxu0 0.0
  %v10567 = vand.u32 %v8549, 4294901760
  %10568 = vmatmul.mubr.f32.gmra.mrb[0].mxu0 %v10567
  %v10569 = vpop.f32.mrb[0].mxu0
  %v10570 = vadd.f32 %v10276, %v10569
  %v10571 = vpop.f32.mrb[0].mxu0
  %10572 = vmatprep.mubr.f32.mxu0 0.0
  %v10573 = vand.u32 %v8552, 4294901760
  %10574 = vmatmul.mubr.f32.gmra.mrb[0].mxu0 %v10573
  %v10575 = vpop.f32.mrb[0].mxu0
  %v10576 = vadd.f32 %v10282, %v10575
  %v10577 = vpop.f32.mrb[0].mxu0
  %10578 = vmatprep.mubr.f32.mxu0 0.0
  %v10579 = vand.u32 %v8555, 4294901760
  %10580 = vmatmul.mubr.f32.gmra.mrb[0].mxu0 %v10579
  %v10581 = vpop.f32.mrb[0].mxu0
  %v10582 = vadd.f32 %v10288, %v10581
  %v10583 = vpop.f32.mrb[0].mxu0
  %10584 = vmatprep.mubr.f32.mxu0 0.0
  %v10585 = vand.u32 %v8558, 4294901760
  %10586 = vmatmul.mubr.f32.gmra.mrb[0].mxu0 %v10585
  %v10587 = vpop.f32.mrb[0].mxu0
  %v10588 = vadd.f32 %v10294, %v10587
  %v10589 = vpop.f32.mrb[0].mxu0
  %10590 = vmatprep.mubr.f32.mxu0 0.0
  %v10591 = vand.u32 %v8561, 4294901760
  %10592 = vmatmul.mubr.f32.gmra.mrb[0].mxu0 %v10591
  %v10593 = vpop.f32.mrb[0].mxu0
  %v10594 = vadd.f32 %v10300, %v10593
  %v10595 = vpop.f32.mrb[0].mxu0
  %10596 = vmatprep.mubr.f32.mxu0 0.0
  %v10597 = vand.u32 %v8564, 4294901760
  %10598 = vmatmul.mubr.f32.gmra.mrb[0].mxu0 %v10597
  %v10599 = vpop.f32.mrb[0].mxu0
  %v10600 = vadd.f32 %v10306, %v10599
  %v10601 = vpop.f32.mrb[0].mxu0
  %10602 = vmatprep.mubr.f32.mxu0 0.0
  %v10603 = vand.u32 %v8567, 4294901760
  %10604 = vmatmul.mubr.f32.gmra.mrb[0].mxu0 %v10603
  %v10605 = vpop.f32.mrb[0].mxu0
  %v10606 = vadd.f32 %v10312, %v10605
  %v10607 = vpop.f32.mrb[0].mxu0
  %10608 = vdwg.mxu0
  %v10609 = vsub.f32 0.0, %v10384
  %v10610 = vsub.f32 0.0, %v10390
  %v10611 = vsub.f32 0.0, %v10396
  %v10612 = vsub.f32 0.0, %v10402
  %v10613 = vsub.f32 0.0, %v10408
  %v10614 = vsub.f32 0.0, %v10414
  %v10615 = vsub.f32 0.0, %v10420
  %v10616 = vsub.f32 0.0, %v10426
  %v10617 = vsub.f32 0.0, %v10432
  %v10618 = vsub.f32 0.0, %v10438
  %v10619 = vsub.f32 0.0, %v10444
  %v10620 = vsub.f32 0.0, %v10450
  %v10621 = vsub.f32 0.0, %v10456
  %v10622 = vsub.f32 0.0, %v10462
  %v10623 = vsub.f32 0.0, %v10468
  %v10624 = vsub.f32 0.0, %v10474
  %v10625 = vsub.f32 0.0, %v10480
  %v10626 = vsub.f32 0.0, %v10486
  %v10627 = vsub.f32 0.0, %v10492
  %v10628 = vmul.f32 %v10609, 1.442695
  %v10629 = vpow.pop %v10628
  %v10630 = vmul.f32 %v10610, 1.442695
  %v10631 = vpow.pop %v10630
  %v10632 = vmul.f32 %v10611, 1.442695
  %v10633 = vpow.pop %v10632
  %v10634 = vmul.f32 %v10612, 1.442695
  %v10635 = vpow.pop %v10634
  %v10636 = vmul.f32 %v10613, 1.442695
  %v10637 = vpow.pop %v10636
  %v10638 = vmul.f32 %v10614, 1.442695
  %v10639 = vpow.pop %v10638
  %v10640 = vmul.f32 %v10615, 1.442695
  %v10641 = vpow.pop %v10640
  %v10642 = vmul.f32 %v10616, 1.442695
  %v10643 = vpow.pop %v10642
  %v10644 = vmul.f32 %v10617, 1.442695
  %v10645 = vpow.pop %v10644
  %v10646 = vmul.f32 %v10618, 1.442695
  %v10647 = vpow.pop %v10646
  %v10648 = vmul.f32 %v10619, 1.442695
  %v10649 = vpow.pop %v10648
  %v10650 = vmul.f32 %v10620, 1.442695
  %v10651 = vpow.pop %v10650
  %v10652 = vmul.f32 %v10621, 1.442695
  %v10653 = vpow.pop %v10652
  %v10654 = vmul.f32 %v10622, 1.442695
  %v10655 = vpow.pop %v10654
  %v10656 = vmul.f32 %v10623, 1.442695
  %v10657 = vpow.pop %v10656
  %v10658 = vmul.f32 %v10624, 1.442695
  %v10659 = vpow.pop %v10658
  %v10660 = vmul.f32 %v10625, 1.442695
  %v10661 = vpow.pop %v10660
  %v10662 = vmul.f32 %v10626, 1.442695
  %v10663 = vpow.pop %v10662
  %v10664 = vmul.f32 %v10627, 1.442695
  %v10665 = vpow.pop %v10664
  %v10666 = vadd.f32 %v10629, 1.0
  %v10667 = vadd.f32 %v10631, 1.0
  %v10668 = vadd.f32 %v10633, 1.0
  %v10669 = vadd.f32 %v10635, 1.0
  %v10670 = vadd.f32 %v10637, 1.0
  %v10671 = vadd.f32 %v10639, 1.0
  %v10672 = vadd.f32 %v10641, 1.0
  %v10673 = vadd.f32 %v10643, 1.0
  %v10674 = vadd.f32 %v10645, 1.0
  %v10675 = vadd.f32 %v10647, 1.0
  %v10676 = vadd.f32 %v10649, 1.0
  %v10677 = vadd.f32 %v10651, 1.0
  %v10678 = vadd.f32 %v10653, 1.0
  %v10679 = vadd.f32 %v10655, 1.0
  %v10680 = vadd.f32 %v10657, 1.0
  %v10681 = vadd.f32 %v10659, 1.0
  %v10682 = vadd.f32 %v10661, 1.0
  %v10683 = vadd.f32 %v10663, 1.0
  %v10684 = vadd.f32 %v10665, 1.0
  %v10685 = vrcp.pop %v10666
  %v10686 = vmul.f32 1.0, %v10685
  %v10687 = vrcp.pop %v10667
  %v10688 = vmul.f32 1.0, %v10687
  %v10689 = vrcp.pop %v10668
  %v10690 = vmul.f32 1.0, %v10689
  %v10691 = vrcp.pop %v10669
  %v10692 = vmul.f32 1.0, %v10691
  %v10693 = vrcp.pop %v10670
  %v10694 = vmul.f32 1.0, %v10693
  %v10695 = vrcp.pop %v10671
  %v10696 = vmul.f32 1.0, %v10695
  %v10697 = vrcp.pop %v10672
  %v10698 = vmul.f32 1.0, %v10697
  %v10699 = vrcp.pop %v10673
  %v10700 = vmul.f32 1.0, %v10699
  %v10701 = vrcp.pop %v10674
  %v10702 = vmul.f32 1.0, %v10701
  %v10703 = vrcp.pop %v10675
  %v10704 = vmul.f32 1.0, %v10703
  %v10705 = vrcp.pop %v10676
  %v10706 = vmul.f32 1.0, %v10705
  %v10707 = vrcp.pop %v10677
  %v10708 = vmul.f32 1.0, %v10707
  %v10709 = vrcp.pop %v10678
  %v10710 = vmul.f32 1.0, %v10709
  %v10711 = vrcp.pop %v10679
  %v10712 = vmul.f32 1.0, %v10711
  %v10713 = vrcp.pop %v10680
  %v10714 = vmul.f32 1.0, %v10713
  %v10715 = vrcp.pop %v10681
  %v10716 = vmul.f32 1.0, %v10715
  %v10717 = vrcp.pop %v10682
  %v10718 = vmul.f32 1.0, %v10717
  %v10719 = vrcp.pop %v10683
  %v10720 = vmul.f32 1.0, %v10719
  %v10721 = vrcp.pop %v10684
  %v10722 = vmul.f32 1.0, %v10721
  %v10723 = vld [vmem:[%s1] sm:$0xf]
  %v10724 = vld [vmem:[%s0] sm:$0xff]
  %v10725 = vld [vmem:[%s0 + $0x8] sm:$0xff]
  %v10726 = vld [vmem:[%s0 + $0x10] sm:$0xff]
  %v10727 = vld [vmem:[%s0 + $0x18] sm:$0xff]
  %v10728 = vld [vmem:[%s0 + $0x20] sm:$0xff]
  %v10729 = vld [vmem:[%s0 + $0x28] sm:$0xff]
  %v10730 = vld [vmem:[%s0 + $0x30] sm:$0xff]
  %v10731 = vld [vmem:[%s0 + $0x38] sm:$0xff]
  %v10732 = vld [vmem:[%s0 + $0x40] sm:$0xff]
  %v10733 = vld [vmem:[%s0 + $0x48] sm:$0xff]
  %v10734 = vld [vmem:[%s0 + $0x50] sm:$0xff]
  %v10735 = vld [vmem:[%s0 + $0x58] sm:$0xff]
  %v10736 = vld [vmem:[%s0 + $0x60] sm:$0xff]
  %v10737 = vld [vmem:[%s0 + $0x68] sm:$0xff]
  %v10738 = vld [vmem:[%s0 + $0x70] sm:$0xff]
  %v10739 = vld [vmem:[%s0 + $0x78] sm:$0xff]
  %v10740 = vld [vmem:[%s0 + $0x80] sm:$0xff]
  %v10741 = vld [vmem:[%s0 + $0x88] sm:$0xff]
  %v10742 = vld [vmem:[%s0 + $0x90] sm:$0x3f]
  %v10743 = vlaneseq
  %v10744 = vshrl.u32 %v10743, 7
  %v10745 = vsub.s32 0, %v10744
  %v10746 = vrot.slane %v10723, %v10745
  %v10747 = vsub.f32 %v10724, %v10746
  %v10748 = vsub.f32 %v10725, %v10746
  %v10749 = vsub.f32 %v10726, %v10746
  %v10750 = vsub.f32 %v10727, %v10746
  %v10751 = vsub.f32 %v10728, %v10746
  %v10752 = vsub.f32 %v10729, %v10746
  %v10753 = vsub.f32 %v10730, %v10746
  %v10754 = vsub.f32 %v10731, %v10746
  %v10755 = vsub.f32 %v10732, %v10746
  %v10756 = vsub.f32 %v10733, %v10746
  %v10757 = vsub.f32 %v10734, %v10746
  %v10758 = vsub.f32 %v10735, %v10746
  %v10759 = vsub.f32 %v10736, %v10746
  %v10760 = vsub.f32 %v10737, %v10746
  %v10761 = vsub.f32 %v10738, %v10746
  %v10762 = vsub.f32 %v10739, %v10746
  %v10763 = vsub.f32 %v10740, %v10746
  %v10764 = vsub.f32 %v10741, %v10746
  %v10765 = vsub.f32 %v10742, %v10746
  %10767 = vset.pattern.permute.xlu0 0
  %10768 = vperm.xlu0 %10767, %v10686
  %v10769 = vpop.permute.xlu0 %10768
  %10772 = vset.pattern.permute.xlu0 0
  %10773 = vperm.xlu0 %10772, %v10688
  %v10774 = vpop.permute.xlu0 %10773
  %10777 = vset.pattern.permute.xlu0 0
  %10778 = vperm.xlu0 %10777, %v10690
  %v10779 = vpop.permute.xlu0 %10778
  %10782 = vset.pattern.permute.xlu0 0
  %10783 = vperm.xlu0 %10782, %v10692
  %v10784 = vpop.permute.xlu0 %10783
  %10787 = vset.pattern.permute.xlu0 0
  %10788 = vperm.xlu0 %10787, %v10694
  %v10789 = vpop.permute.xlu0 %10788
  %10792 = vset.pattern.permute.xlu0 0
  %10793 = vperm.xlu0 %10792, %v10696
  %v10794 = vpop.permute.xlu0 %10793
  %10797 = vset.pattern.permute.xlu0 0
  %10798 = vperm.xlu0 %10797, %v10698
  %v10799 = vpop.permute.xlu0 %10798
  %10802 = vset.pattern.permute.xlu0 0
  %10803 = vperm.xlu0 %10802, %v10700
  %v10804 = vpop.permute.xlu0 %10803
  %10807 = vset.pattern.permute.xlu0 0
  %10808 = vperm.xlu0 %10807, %v10702
  %v10809 = vpop.permute.xlu0 %10808
  %10812 = vset.pattern.permute.xlu0 0
  %10813 = vperm.xlu0 %10812, %v10704
  %v10814 = vpop.permute.xlu0 %10813
  %10817 = vset.pattern.permute.xlu0 0
  %10818 = vperm.xlu0 %10817, %v10706
  %v10819 = vpop.permute.xlu0 %10818
  %10822 = vset.pattern.permute.xlu0 0
  %10823 = vperm.xlu0 %10822, %v10708
  %v10824 = vpop.permute.xlu0 %10823
  %10827 = vset.pattern.permute.xlu0 0
  %10828 = vperm.xlu0 %10827, %v10710
  %v10829 = vpop.permute.xlu0 %10828
  %10832 = vset.pattern.permute.xlu0 0
  %10833 = vperm.xlu0 %10832, %v10712
  %v10834 = vpop.permute.xlu0 %10833
  %10837 = vset.pattern.permute.xlu0 0
  %10838 = vperm.xlu0 %10837, %v10714
  %v10839 = vpop.permute.xlu0 %10838
  %10842 = vset.pattern.permute.xlu0 0
  %10843 = vperm.xlu0 %10842, %v10716
  %v10844 = vpop.permute.xlu0 %10843
  %10847 = vset.pattern.permute.xlu0 0
  %10848 = vperm.xlu0 %10847, %v10718
  %v10849 = vpop.permute.xlu0 %10848
  %10852 = vset.pattern.permute.xlu0 0
  %10853 = vperm.xlu0 %10852, %v10720
  %v10854 = vpop.permute.xlu0 %10853
  %10857 = vset.pattern.permute.xlu0 0
  %10858 = vperm.xlu0 %10857, %v10722
  %v10859 = vpop.permute.xlu0 %10858
  %v10861 = vmul.f32 %v10769, %v10747
  %v10862 = vmul.f32 %v10774, %v10748
  %v10863 = vmul.f32 %v10779, %v10749
  %v10864 = vmul.f32 %v10784, %v10750
  %v10865 = vmul.f32 %v10789, %v10751
  %v10866 = vmul.f32 %v10794, %v10752
  %v10867 = vmul.f32 %v10799, %v10753
  %v10868 = vmul.f32 %v10804, %v10754
  %v10869 = vmul.f32 %v10809, %v10755
  %v10870 = vmul.f32 %v10814, %v10756
  %v10871 = vmul.f32 %v10819, %v10757
  %v10872 = vmul.f32 %v10824, %v10758
  %v10873 = vmul.f32 %v10829, %v10759
  %v10874 = vmul.f32 %v10834, %v10760
  %v10875 = vmul.f32 %v10839, %v10761
  %v10876 = vmul.f32 %v10844, %v10762
  %v10877 = vmul.f32 %v10849, %v10763
  %v10878 = vmul.f32 %v10854, %v10764
  %v10879 = vmul.f32 %v10859, %v10765
  %10881 = vset.pattern.permute.xlu0 0
  %10882 = vperm.xlu0 %10881, %v10498
  %v10883 = vpop.permute.xlu0 %10882
  %10886 = vset.pattern.permute.xlu0 0
  %10887 = vperm.xlu0 %10886, %v10504
  %v10888 = vpop.permute.xlu0 %10887
  %10891 = vset.pattern.permute.xlu0 0
  %10892 = vperm.xlu0 %10891, %v10510
  %v10893 = vpop.permute.xlu0 %10892
  %10896 = vset.pattern.permute.xlu0 0
  %10897 = vperm.xlu0 %10896, %v10516
  %v10898 = vpop.permute.xlu0 %10897
  %10901 = vset.pattern.permute.xlu0 0
  %10902 = vperm.xlu0 %10901, %v10522
  %v10903 = vpop.permute.xlu0 %10902
  %10906 = vset.pattern.permute.xlu0 0
  %10907 = vperm.xlu0 %10906, %v10528
  %v10908 = vpop.permute.xlu0 %10907
  %10911 = vset.pattern.permute.xlu0 0
  %10912 = vperm.xlu0 %10911, %v10534
  %v10913 = vpop.permute.xlu0 %10912
  %10916 = vset.pattern.permute.xlu0 0
  %10917 = vperm.xlu0 %10916, %v10540
  %v10918 = vpop.permute.xlu0 %10917
  %10921 = vset.pattern.permute.xlu0 0
  %10922 = vperm.xlu0 %10921, %v10546
  %v10923 = vpop.permute.xlu0 %10922
  %10926 = vset.pattern.permute.xlu0 0
  %10927 = vperm.xlu0 %10926, %v10552
  %v10928 = vpop.permute.xlu0 %10927
  %10931 = vset.pattern.permute.xlu0 0
  %10932 = vperm.xlu0 %10931, %v10558
  %v10933 = vpop.permute.xlu0 %10932
  %10936 = vset.pattern.permute.xlu0 0
  %10937 = vperm.xlu0 %10936, %v10564
  %v10938 = vpop.permute.xlu0 %10937
  %10941 = vset.pattern.permute.xlu0 0
  %10942 = vperm.xlu0 %10941, %v10570
  %v10943 = vpop.permute.xlu0 %10942
  %10946 = vset.pattern.permute.xlu0 0
  %10947 = vperm.xlu0 %10946, %v10576
  %v10948 = vpop.permute.xlu0 %10947
  %10951 = vset.pattern.permute.xlu0 0
  %10952 = vperm.xlu0 %10951, %v10582
  %v10953 = vpop.permute.xlu0 %10952
  %10956 = vset.pattern.permute.xlu0 0
  %10957 = vperm.xlu0 %10956, %v10588
  %v10958 = vpop.permute.xlu0 %10957
  %10961 = vset.pattern.permute.xlu0 0
  %10962 = vperm.xlu0 %10961, %v10594
  %v10963 = vpop.permute.xlu0 %10962
  %10966 = vset.pattern.permute.xlu0 0
  %10967 = vperm.xlu0 %10966, %v10600
  %v10968 = vpop.permute.xlu0 %10967
  %10971 = vset.pattern.permute.xlu0 0
  %10972 = vperm.xlu0 %10971, %v10606
  %v10973 = vpop.permute.xlu0 %10972
  %v10975 = vadd.f32 %v10746, %v10883
  %v10976 = vadd.f32 %v10746, %v10888
  %v10977 = vadd.f32 %v10746, %v10893
  %v10978 = vadd.f32 %v10746, %v10898
  %v10979 = vadd.f32 %v10746, %v10903
  %v10980 = vadd.f32 %v10746, %v10908
  %v10981 = vadd.f32 %v10746, %v10913
  %v10982 = vadd.f32 %v10746, %v10918
  %v10983 = vadd.f32 %v10746, %v10923
  %v10984 = vadd.f32 %v10746, %v10928
  %v10985 = vadd.f32 %v10746, %v10933
  %v10986 = vadd.f32 %v10746, %v10938
  %v10987 = vadd.f32 %v10746, %v10943
  %v10988 = vadd.f32 %v10746, %v10948
  %v10989 = vadd.f32 %v10746, %v10953
  %v10990 = vadd.f32 %v10746, %v10958
  %v10991 = vadd.f32 %v10746, %v10963
  %v10992 = vadd.f32 %v10746, %v10968
  %v10993 = vadd.f32 %v10746, %v10973
  %v10994 = vadd.f32 %v10861, %v10975
  %v10995 = vadd.f32 %v10862, %v10976
  %v10996 = vadd.f32 %v10863, %v10977
  %v10997 = vadd.f32 %v10864, %v10978
  %v10998 = vadd.f32 %v10865, %v10979
  %v10999 = vadd.f32 %v10866, %v10980
  %v11000 = vadd.f32 %v10867, %v10981
  %v11001 = vadd.f32 %v10868, %v10982
  %v11002 = vadd.f32 %v10869, %v10983
  %v11003 = vadd.f32 %v10870, %v10984
  %v11004 = vadd.f32 %v10871, %v10985
  %v11005 = vadd.f32 %v10872, %v10986
  %v11006 = vadd.f32 %v10873, %v10987
  %v11007 = vadd.f32 %v10874, %v10988
  %v11008 = vadd.f32 %v10875, %v10989
  %v11009 = vadd.f32 %v10876, %v10990
  %v11010 = vadd.f32 %v10877, %v10991
  %v11011 = vadd.f32 %v10878, %v10992
  %v11012 = vadd.f32 %v10879, %v10993
  %11013 = vst [vmem:[%s7] sm:$0xff] %v10994
  %11014 = vst [vmem:[%s7 + $0x8] sm:$0xff] %v10995
  %11015 = vst [vmem:[%s7 + $0x10] sm:$0xff] %v10996
  %11016 = vst [vmem:[%s7 + $0x18] sm:$0xff] %v10997
  %11017 = vst [vmem:[%s7 + $0x20] sm:$0xff] %v10998
  %11018 = vst [vmem:[%s7 + $0x28] sm:$0xff] %v10999
  %11019 = vst [vmem:[%s7 + $0x30] sm:$0xff] %v11000
  %11020 = vst [vmem:[%s7 + $0x38] sm:$0xff] %v11001
  %11021 = vst [vmem:[%s7 + $0x40] sm:$0xff] %v11002
  %11022 = vst [vmem:[%s7 + $0x48] sm:$0xff] %v11003
  %11023 = vst [vmem:[%s7 + $0x50] sm:$0xff] %v11004
  %11024 = vst [vmem:[%s7 + $0x58] sm:$0xff] %v11005
  %11025 = vst [vmem:[%s7 + $0x60] sm:$0xff] %v11006
  %11026 = vst [vmem:[%s7 + $0x68] sm:$0xff] %v11007
  %11027 = vst [vmem:[%s7 + $0x70] sm:$0xff] %v11008
  %11028 = vst [vmem:[%s7 + $0x78] sm:$0xff] %v11009
  %11029 = vst [vmem:[%s7 + $0x80] sm:$0xff] %v11010
  %11030 = vst [vmem:[%s7 + $0x88] sm:$0xff] %v11011
  %11031 = vst [vmem:[%s7 + $0x90] sm:$0x3f] %v11012
  %v11032 = vld [vmem:[%s749] sm:$0xff]
  %v11033 = vld [vmem:[%s749 + $0x8] sm:$0xff]
  %v11034 = vld [vmem:[%s749 + $0x10] sm:$0xff]
  %v11035 = vld [vmem:[%s749 + $0x18] sm:$0xff]
  %v11036 = vld [vmem:[%s749 + $0x20] sm:$0xff]
  %v11037 = vld [vmem:[%s749 + $0x28] sm:$0xff]
  %v11038 = vld [vmem:[%s749 + $0x30] sm:$0xff]
  %v11039 = vld [vmem:[%s749 + $0x38] sm:$0xff]
  %v11040 = vld [vmem:[%s749 + $0x40] sm:$0xff]
  %v11041 = vld [vmem:[%s749 + $0x48] sm:$0xff]
  %v11042 = vld [vmem:[%s749 + $0x50] sm:$0xff]
  %v11043 = vld [vmem:[%s749 + $0x58] sm:$0xff]
  %v11044 = vld [vmem:[%s749 + $0x60] sm:$0xff]
  %v11045 = vld [vmem:[%s749 + $0x68] sm:$0xff]
  %v11046 = vld [vmem:[%s749 + $0x70] sm:$0xff]
  %v11047 = vld [vmem:[%s749 + $0x78] sm:$0xff]
  %v11048 = vld [vmem:[%s749 + $0x80] sm:$0xff]
  %v11049 = vld [vmem:[%s749 + $0x88] sm:$0xff]
  %v11050 = vld [vmem:[%s749 + $0x90] sm:$0x3f]
  %v11051 = vlaneseq
  %v11052 = vshrl.u32 %v11051, 7
  %v11053 = vsub.s32 1, %v11052
  %v11054 = vrot.slane %v10723, %v11053
  %v11055 = vsub.f32 %v11032, %v11054
  %v11056 = vsub.f32 %v11033, %v11054
  %v11057 = vsub.f32 %v11034, %v11054
  %v11058 = vsub.f32 %v11035, %v11054
  %v11059 = vsub.f32 %v11036, %v11054
  %v11060 = vsub.f32 %v11037, %v11054
  %v11061 = vsub.f32 %v11038, %v11054
  %v11062 = vsub.f32 %v11039, %v11054
  %v11063 = vsub.f32 %v11040, %v11054
  %v11064 = vsub.f32 %v11041, %v11054
  %v11065 = vsub.f32 %v11042, %v11054
  %v11066 = vsub.f32 %v11043, %v11054
  %v11067 = vsub.f32 %v11044, %v11054
  %v11068 = vsub.f32 %v11045, %v11054
  %v11069 = vsub.f32 %v11046, %v11054
  %v11070 = vsub.f32 %v11047, %v11054
  %v11071 = vsub.f32 %v11048, %v11054
  %v11072 = vsub.f32 %v11049, %v11054
  %v11073 = vsub.f32 %v11050, %v11054
  %11074 = vset.pattern.permute.xlu0 1
  %11075 = vperm.xlu0 %11074, %v10686
  %v11076 = vpop.permute.xlu0 %11075
  %11078 = vset.pattern.permute.xlu0 1
  %11079 = vperm.xlu0 %11078, %v10688
  %v11080 = vpop.permute.xlu0 %11079
  %11082 = vset.pattern.permute.xlu0 1
  %11083 = vperm.xlu0 %11082, %v10690
  %v11084 = vpop.permute.xlu0 %11083
  %11086 = vset.pattern.permute.xlu0 1
  %11087 = vperm.xlu0 %11086, %v10692
  %v11088 = vpop.permute.xlu0 %11087
  %11090 = vset.pattern.permute.xlu0 1
  %11091 = vperm.xlu0 %11090, %v10694
  %v11092 = vpop.permute.xlu0 %11091
  %11094 = vset.pattern.permute.xlu0 1
  %11095 = vperm.xlu0 %11094, %v10696
  %v11096 = vpop.permute.xlu0 %11095
  %11098 = vset.pattern.permute.xlu0 1
  %11099 = vperm.xlu0 %11098, %v10698
  %v11100 = vpop.permute.xlu0 %11099
  %11102 = vset.pattern.permute.xlu0 1
  %11103 = vperm.xlu0 %11102, %v10700
  %v11104 = vpop.permute.xlu0 %11103
  %11106 = vset.pattern.permute.xlu0 1
  %11107 = vperm.xlu0 %11106, %v10702
  %v11108 = vpop.permute.xlu0 %11107
  %11110 = vset.pattern.permute.xlu0 1
  %11111 = vperm.xlu0 %11110, %v10704
  %v11112 = vpop.permute.xlu0 %11111
  %11114 = vset.pattern.permute.xlu0 1
  %11115 = vperm.xlu0 %11114, %v10706
  %v11116 = vpop.permute.xlu0 %11115
  %11118 = vset.pattern.permute.xlu0 1
  %11119 = vperm.xlu0 %11118, %v10708
  %v11120 = vpop.permute.xlu0 %11119
  %11122 = vset.pattern.permute.xlu0 1
  %11123 = vperm.xlu0 %11122, %v10710
  %v11124 = vpop.permute.xlu0 %11123
  %11126 = vset.pattern.permute.xlu0 1
  %11127 = vperm.xlu0 %11126, %v10712
  %v11128 = vpop.permute.xlu0 %11127
  %11130 = vset.pattern.permute.xlu0 1
  %11131 = vperm.xlu0 %11130, %v10714
  %v11132 = vpop.permute.xlu0 %11131
  %11134 = vset.pattern.permute.xlu0 1
  %11135 = vperm.xlu0 %11134, %v10716
  %v11136 = vpop.permute.xlu0 %11135
  %11138 = vset.pattern.permute.xlu0 1
  %11139 = vperm.xlu0 %11138, %v10718
  %v11140 = vpop.permute.xlu0 %11139
  %11142 = vset.pattern.permute.xlu0 1
  %11143 = vperm.xlu0 %11142, %v10720
  %v11144 = vpop.permute.xlu0 %11143
  %11146 = vset.pattern.permute.xlu0 1
  %11147 = vperm.xlu0 %11146, %v10722
  %v11148 = vpop.permute.xlu0 %11147
  %v11150 = vmul.f32 %v11076, %v11055
  %v11151 = vmul.f32 %v11080, %v11056
  %v11152 = vmul.f32 %v11084, %v11057
  %v11153 = vmul.f32 %v11088, %v11058
  %v11154 = vmul.f32 %v11092, %v11059
  %v11155 = vmul.f32 %v11096, %v11060
  %v11156 = vmul.f32 %v11100, %v11061
  %v11157 = vmul.f32 %v11104, %v11062
  %v11158 = vmul.f32 %v11108, %v11063
  %v11159 = vmul.f32 %v11112, %v11064
  %v11160 = vmul.f32 %v11116, %v11065
  %v11161 = vmul.f32 %v11120, %v11066
  %v11162 = vmul.f32 %v11124, %v11067
  %v11163 = vmul.f32 %v11128, %v11068
  %v11164 = vmul.f32 %v11132, %v11069
  %v11165 = vmul.f32 %v11136, %v11070
  %v11166 = vmul.f32 %v11140, %v11071
  %v11167 = vmul.f32 %v11144, %v11072
  %v11168 = vmul.f32 %v11148, %v11073
  %11169 = vset.pattern.permute.xlu0 1
  %11170 = vperm.xlu0 %11169, %v10498
  %v11171 = vpop.permute.xlu0 %11170
  %11173 = vset.pattern.permute.xlu0 1
  %11174 = vperm.xlu0 %11173, %v10504
  %v11175 = vpop.permute.xlu0 %11174
  %11177 = vset.pattern.permute.xlu0 1
  %11178 = vperm.xlu0 %11177, %v10510
  %v11179 = vpop.permute.xlu0 %11178
  %11181 = vset.pattern.permute.xlu0 1
  %11182 = vperm.xlu0 %11181, %v10516
  %v11183 = vpop.permute.xlu0 %11182
  %11185 = vset.pattern.permute.xlu0 1
  %11186 = vperm.xlu0 %11185, %v10522
  %v11187 = vpop.permute.xlu0 %11186
  %11189 = vset.pattern.permute.xlu0 1
  %11190 = vperm.xlu0 %11189, %v10528
  %v11191 = vpop.permute.xlu0 %11190
  %11193 = vset.pattern.permute.xlu0 1
  %11194 = vperm.xlu0 %11193, %v10534
  %v11195 = vpop.permute.xlu0 %11194
  %11197 = vset.pattern.permute.xlu0 1
  %11198 = vperm.xlu0 %11197, %v10540
  %v11199 = vpop.permute.xlu0 %11198
  %11201 = vset.pattern.permute.xlu0 1
  %11202 = vperm.xlu0 %11201, %v10546
  %v11203 = vpop.permute.xlu0 %11202
  %11205 = vset.pattern.permute.xlu0 1
  %11206 = vperm.xlu0 %11205, %v10552
  %v11207 = vpop.permute.xlu0 %11206
  %11209 = vset.pattern.permute.xlu0 1
  %11210 = vperm.xlu0 %11209, %v10558
  %v11211 = vpop.permute.xlu0 %11210
  %11213 = vset.pattern.permute.xlu0 1
  %11214 = vperm.xlu0 %11213, %v10564
  %v11215 = vpop.permute.xlu0 %11214
  %11217 = vset.pattern.permute.xlu0 1
  %11218 = vperm.xlu0 %11217, %v10570
  %v11219 = vpop.permute.xlu0 %11218
  %11221 = vset.pattern.permute.xlu0 1
  %11222 = vperm.xlu0 %11221, %v10576
  %v11223 = vpop.permute.xlu0 %11222
  %11225 = vset.pattern.permute.xlu0 1
  %11226 = vperm.xlu0 %11225, %v10582
  %v11227 = vpop.permute.xlu0 %11226
  %11229 = vset.pattern.permute.xlu0 1
  %11230 = vperm.xlu0 %11229, %v10588
  %v11231 = vpop.permute.xlu0 %11230
  %11233 = vset.pattern.permute.xlu0 1
  %11234 = vperm.xlu0 %11233, %v10594
  %v11235 = vpop.permute.xlu0 %11234
  %11237 = vset.pattern.permute.xlu0 1
  %11238 = vperm.xlu0 %11237, %v10600
  %v11239 = vpop.permute.xlu0 %11238
  %11241 = vset.pattern.permute.xlu0 1
  %11242 = vperm.xlu0 %11241, %v10606
  %v11243 = vpop.permute.xlu0 %11242
  %v11245 = vadd.f32 %v11054, %v11171
  %v11246 = vadd.f32 %v11054, %v11175
  %v11247 = vadd.f32 %v11054, %v11179
  %v11248 = vadd.f32 %v11054, %v11183
  %v11249 = vadd.f32 %v11054, %v11187
  %v11250 = vadd.f32 %v11054, %v11191
  %v11251 = vadd.f32 %v11054, %v11195
  %v11252 = vadd.f32 %v11054, %v11199
  %v11253 = vadd.f32 %v11054, %v11203
  %v11254 = vadd.f32 %v11054, %v11207
  %v11255 = vadd.f32 %v11054, %v11211
  %v11256 = vadd.f32 %v11054, %v11215
  %v11257 = vadd.f32 %v11054, %v11219
  %v11258 = vadd.f32 %v11054, %v11223
  %v11259 = vadd.f32 %v11054, %v11227
  %v11260 = vadd.f32 %v11054, %v11231
  %v11261 = vadd.f32 %v11054, %v11235
  %v11262 = vadd.f32 %v11054, %v11239
  %v11263 = vadd.f32 %v11054, %v11243
  %v11264 = vadd.f32 %v11150, %v11245
  %v11265 = vadd.f32 %v11151, %v11246
  %v11266 = vadd.f32 %v11152, %v11247
  %v11267 = vadd.f32 %v11153, %v11248
  %v11268 = vadd.f32 %v11154, %v11249
  %v11269 = vadd.f32 %v11155, %v11250
  %v11270 = vadd.f32 %v11156, %v11251
  %v11271 = vadd.f32 %v11157, %v11252
  %v11272 = vadd.f32 %v11158, %v11253
  %v11273 = vadd.f32 %v11159, %v11254
  %v11274 = vadd.f32 %v11160, %v11255
  %v11275 = vadd.f32 %v11161, %v11256
  %v11276 = vadd.f32 %v11162, %v11257
  %v11277 = vadd.f32 %v11163, %v11258
  %v11278 = vadd.f32 %v11164, %v11259
  %v11279 = vadd.f32 %v11165, %v11260
  %v11280 = vadd.f32 %v11166, %v11261
  %v11281 = vadd.f32 %v11167, %v11262
  %v11282 = vadd.f32 %v11168, %v11263
  %s11283 = scalar_lea.vmem %s7, 152
  %11284 = vst [vmem:[%s11283] sm:$0xff] %v11264
  %11285 = vst [vmem:[%s11283 + $0x8] sm:$0xff] %v11265
  %11286 = vst [vmem:[%s11283 + $0x10] sm:$0xff] %v11266
  %11287 = vst [vmem:[%s11283 + $0x18] sm:$0xff] %v11267
  %11288 = vst [vmem:[%s11283 + $0x20] sm:$0xff] %v11268
  %11289 = vst [vmem:[%s11283 + $0x28] sm:$0xff] %v11269
  %11290 = vst [vmem:[%s11283 + $0x30] sm:$0xff] %v11270
  %11291 = vst [vmem:[%s11283 + $0x38] sm:$0xff] %v11271
  %11292 = vst [vmem:[%s11283 + $0x40] sm:$0xff] %v11272
  %11293 = vst [vmem:[%s11283 + $0x48] sm:$0xff] %v11273
  %11294 = vst [vmem:[%s11283 + $0x50] sm:$0xff] %v11274
  %11295 = vst [vmem:[%s11283 + $0x58] sm:$0xff] %v11275
  %11296 = vst [vmem:[%s11283 + $0x60] sm:$0xff] %v11276
  %11297 = vst [vmem:[%s11283 + $0x68] sm:$0xff] %v11277
  %11298 = vst [vmem:[%s11283 + $0x70] sm:$0xff] %v11278
  %11299 = vst [vmem:[%s11283 + $0x78] sm:$0xff] %v11279
  %11300 = vst [vmem:[%s11283 + $0x80] sm:$0xff] %v11280
  %11301 = vst [vmem:[%s11283 + $0x88] sm:$0xff] %v11281
  %11302 = vst [vmem:[%s11283 + $0x90] sm:$0x3f] %v11282
  %v11303 = vld [vmem:[%s1466] sm:$0xff]
  %v11304 = vld [vmem:[%s1466 + $0x8] sm:$0xff]
  %v11305 = vld [vmem:[%s1466 + $0x10] sm:$0xff]
  %v11306 = vld [vmem:[%s1466 + $0x18] sm:$0xff]
  %v11307 = vld [vmem:[%s1466 + $0x20] sm:$0xff]
  %v11308 = vld [vmem:[%s1466 + $0x28] sm:$0xff]
  %v11309 = vld [vmem:[%s1466 + $0x30] sm:$0xff]
  %v11310 = vld [vmem:[%s1466 + $0x38] sm:$0xff]
  %v11311 = vld [vmem:[%s1466 + $0x40] sm:$0xff]
  %v11312 = vld [vmem:[%s1466 + $0x48] sm:$0xff]
  %v11313 = vld [vmem:[%s1466 + $0x50] sm:$0xff]
  %v11314 = vld [vmem:[%s1466 + $0x58] sm:$0xff]
  %v11315 = vld [vmem:[%s1466 + $0x60] sm:$0xff]
  %v11316 = vld [vmem:[%s1466 + $0x68] sm:$0xff]
  %v11317 = vld [vmem:[%s1466 + $0x70] sm:$0xff]
  %v11318 = vld [vmem:[%s1466 + $0x78] sm:$0xff]
  %v11319 = vld [vmem:[%s1466 + $0x80] sm:$0xff]
  %v11320 = vld [vmem:[%s1466 + $0x88] sm:$0xff]
  %v11321 = vld [vmem:[%s1466 + $0x90] sm:$0x3f]
  %v11322 = vlaneseq
  %v11323 = vshrl.u32 %v11322, 7
  %v11324 = vsub.s32 2, %v11323
  %v11325 = vrot.slane %v10723, %v11324
  %v11326 = vsub.f32 %v11303, %v11325
  %v11327 = vsub.f32 %v11304, %v11325
  %v11328 = vsub.f32 %v11305, %v11325
  %v11329 = vsub.f32 %v11306, %v11325
  %v11330 = vsub.f32 %v11307, %v11325
  %v11331 = vsub.f32 %v11308, %v11325
  %v11332 = vsub.f32 %v11309, %v11325
  %v11333 = vsub.f32 %v11310, %v11325
  %v11334 = vsub.f32 %v11311, %v11325
  %v11335 = vsub.f32 %v11312, %v11325
  %v11336 = vsub.f32 %v11313, %v11325
  %v11337 = vsub.f32 %v11314, %v11325
  %v11338 = vsub.f32 %v11315, %v11325
  %v11339 = vsub.f32 %v11316, %v11325
  %v11340 = vsub.f32 %v11317, %v11325
  %v11341 = vsub.f32 %v11318, %v11325
  %v11342 = vsub.f32 %v11319, %v11325
  %v11343 = vsub.f32 %v11320, %v11325
  %v11344 = vsub.f32 %v11321, %v11325
  %11345 = vset.pattern.permute.xlu0 2
  %11346 = vperm.xlu0 %11345, %v10686
  %v11347 = vpop.permute.xlu0 %11346
  %11349 = vset.pattern.permute.xlu0 2
  %11350 = vperm.xlu0 %11349, %v10688
  %v11351 = vpop.permute.xlu0 %11350
  %11353 = vset.pattern.permute.xlu0 2
  %11354 = vperm.xlu0 %11353, %v10690
  %v11355 = vpop.permute.xlu0 %11354
  %11357 = vset.pattern.permute.xlu0 2
  %11358 = vperm.xlu0 %11357, %v10692
  %v11359 = vpop.permute.xlu0 %11358
  %11361 = vset.pattern.permute.xlu0 2
  %11362 = vperm.xlu0 %11361, %v10694
  %v11363 = vpop.permute.xlu0 %11362
  %11365 = vset.pattern.permute.xlu0 2
  %11366 = vperm.xlu0 %11365, %v10696
  %v11367 = vpop.permute.xlu0 %11366
  %11369 = vset.pattern.permute.xlu0 2
  %11370 = vperm.xlu0 %11369, %v10698
  %v11371 = vpop.permute.xlu0 %11370
  %11373 = vset.pattern.permute.xlu0 2
  %11374 = vperm.xlu0 %11373, %v10700
  %v11375 = vpop.permute.xlu0 %11374
  %11377 = vset.pattern.permute.xlu0 2
  %11378 = vperm.xlu0 %11377, %v10702
  %v11379 = vpop.permute.xlu0 %11378
  %11381 = vset.pattern.permute.xlu0 2
  %11382 = vperm.xlu0 %11381, %v10704
  %v11383 = vpop.permute.xlu0 %11382
  %11385 = vset.pattern.permute.xlu0 2
  %11386 = vperm.xlu0 %11385, %v10706
  %v11387 = vpop.permute.xlu0 %11386
  %11389 = vset.pattern.permute.xlu0 2
  %11390 = vperm.xlu0 %11389, %v10708
  %v11391 = vpop.permute.xlu0 %11390
  %11393 = vset.pattern.permute.xlu0 2
  %11394 = vperm.xlu0 %11393, %v10710
  %v11395 = vpop.permute.xlu0 %11394
  %11397 = vset.pattern.permute.xlu0 2
  %11398 = vperm.xlu0 %11397, %v10712
  %v11399 = vpop.permute.xlu0 %11398
  %11401 = vset.pattern.permute.xlu0 2
  %11402 = vperm.xlu0 %11401, %v10714
  %v11403 = vpop.permute.xlu0 %11402
  %11405 = vset.pattern.permute.xlu0 2
  %11406 = vperm.xlu0 %11405, %v10716
  %v11407 = vpop.permute.xlu0 %11406
  %11409 = vset.pattern.permute.xlu0 2
  %11410 = vperm.xlu0 %11409, %v10718
  %v11411 = vpop.permute.xlu0 %11410
  %11413 = vset.pattern.permute.xlu0 2
  %11414 = vperm.xlu0 %11413, %v10720
  %v11415 = vpop.permute.xlu0 %11414
  %11417 = vset.pattern.permute.xlu0 2
  %11418 = vperm.xlu0 %11417, %v10722
  %v11419 = vpop.permute.xlu0 %11418
  %v11421 = vmul.f32 %v11347, %v11326
  %v11422 = vmul.f32 %v11351, %v11327
  %v11423 = vmul.f32 %v11355, %v11328
  %v11424 = vmul.f32 %v11359, %v11329
  %v11425 = vmul.f32 %v11363, %v11330
  %v11426 = vmul.f32 %v11367, %v11331
  %v11427 = vmul.f32 %v11371, %v11332
  %v11428 = vmul.f32 %v11375, %v11333
  %v11429 = vmul.f32 %v11379, %v11334
  %v11430 = vmul.f32 %v11383, %v11335
  %v11431 = vmul.f32 %v11387, %v11336
  %v11432 = vmul.f32 %v11391, %v11337
  %v11433 = vmul.f32 %v11395, %v11338
  %v11434 = vmul.f32 %v11399, %v11339
  %v11435 = vmul.f32 %v11403, %v11340
  %v11436 = vmul.f32 %v11407, %v11341
  %v11437 = vmul.f32 %v11411, %v11342
  %v11438 = vmul.f32 %v11415, %v11343
  %v11439 = vmul.f32 %v11419, %v11344
  %11440 = vset.pattern.permute.xlu0 2
  %11441 = vperm.xlu0 %11440, %v10498
  %v11442 = vpop.permute.xlu0 %11441
  %11444 = vset.pattern.permute.xlu0 2
  %11445 = vperm.xlu0 %11444, %v10504
  %v11446 = vpop.permute.xlu0 %11445
  %11448 = vset.pattern.permute.xlu0 2
  %11449 = vperm.xlu0 %11448, %v10510
  %v11450 = vpop.permute.xlu0 %11449
  %11452 = vset.pattern.permute.xlu0 2
  %11453 = vperm.xlu0 %11452, %v10516
  %v11454 = vpop.permute.xlu0 %11453
  %11456 = vset.pattern.permute.xlu0 2
  %11457 = vperm.xlu0 %11456, %v10522
  %v11458 = vpop.permute.xlu0 %11457
  %11460 = vset.pattern.permute.xlu0 2
  %11461 = vperm.xlu0 %11460, %v10528
  %v11462 = vpop.permute.xlu0 %11461
  %11464 = vset.pattern.permute.xlu0 2
  %11465 = vperm.xlu0 %11464, %v10534
  %v11466 = vpop.permute.xlu0 %11465
  %11468 = vset.pattern.permute.xlu0 2
  %11469 = vperm.xlu0 %11468, %v10540
  %v11470 = vpop.permute.xlu0 %11469
  %11472 = vset.pattern.permute.xlu0 2
  %11473 = vperm.xlu0 %11472, %v10546
  %v11474 = vpop.permute.xlu0 %11473
  %11476 = vset.pattern.permute.xlu0 2
  %11477 = vperm.xlu0 %11476, %v10552
  %v11478 = vpop.permute.xlu0 %11477
  %11480 = vset.pattern.permute.xlu0 2
  %11481 = vperm.xlu0 %11480, %v10558
  %v11482 = vpop.permute.xlu0 %11481
  %11484 = vset.pattern.permute.xlu0 2
  %11485 = vperm.xlu0 %11484, %v10564
  %v11486 = vpop.permute.xlu0 %11485
  %11488 = vset.pattern.permute.xlu0 2
  %11489 = vperm.xlu0 %11488, %v10570
  %v11490 = vpop.permute.xlu0 %11489
  %11492 = vset.pattern.permute.xlu0 2
  %11493 = vperm.xlu0 %11492, %v10576
  %v11494 = vpop.permute.xlu0 %11493
  %11496 = vset.pattern.permute.xlu0 2
  %11497 = vperm.xlu0 %11496, %v10582
  %v11498 = vpop.permute.xlu0 %11497
  %11500 = vset.pattern.permute.xlu0 2
  %11501 = vperm.xlu0 %11500, %v10588
  %v11502 = vpop.permute.xlu0 %11501
  %11504 = vset.pattern.permute.xlu0 2
  %11505 = vperm.xlu0 %11504, %v10594
  %v11506 = vpop.permute.xlu0 %11505
  %11508 = vset.pattern.permute.xlu0 2
  %11509 = vperm.xlu0 %11508, %v10600
  %v11510 = vpop.permute.xlu0 %11509
  %11512 = vset.pattern.permute.xlu0 2
  %11513 = vperm.xlu0 %11512, %v10606
  %v11514 = vpop.permute.xlu0 %11513
  %v11516 = vadd.f32 %v11325, %v11442
  %v11517 = vadd.f32 %v11325, %v11446
  %v11518 = vadd.f32 %v11325, %v11450
  %v11519 = vadd.f32 %v11325, %v11454
  %v11520 = vadd.f32 %v11325, %v11458
  %v11521 = vadd.f32 %v11325, %v11462
  %v11522 = vadd.f32 %v11325, %v11466
  %v11523 = vadd.f32 %v11325, %v11470
  %v11524 = vadd.f32 %v11325, %v11474
  %v11525 = vadd.f32 %v11325, %v11478
  %v11526 = vadd.f32 %v11325, %v11482
  %v11527 = vadd.f32 %v11325, %v11486
  %v11528 = vadd.f32 %v11325, %v11490
  %v11529 = vadd.f32 %v11325, %v11494
  %v11530 = vadd.f32 %v11325, %v11498
  %v11531 = vadd.f32 %v11325, %v11502
  %v11532 = vadd.f32 %v11325, %v11506
  %v11533 = vadd.f32 %v11325, %v11510
  %v11534 = vadd.f32 %v11325, %v11514
  %v11535 = vadd.f32 %v11421, %v11516
  %v11536 = vadd.f32 %v11422, %v11517
  %v11537 = vadd.f32 %v11423, %v11518
  %v11538 = vadd.f32 %v11424, %v11519
  %v11539 = vadd.f32 %v11425, %v11520
  %v11540 = vadd.f32 %v11426, %v11521
  %v11541 = vadd.f32 %v11427, %v11522
  %v11542 = vadd.f32 %v11428, %v11523
  %v11543 = vadd.f32 %v11429, %v11524
  %v11544 = vadd.f32 %v11430, %v11525
  %v11545 = vadd.f32 %v11431, %v11526
  %v11546 = vadd.f32 %v11432, %v11527
  %v11547 = vadd.f32 %v11433, %v11528
  %v11548 = vadd.f32 %v11434, %v11529
  %v11549 = vadd.f32 %v11435, %v11530
  %v11550 = vadd.f32 %v11436, %v11531
  %v11551 = vadd.f32 %v11437, %v11532
  %v11552 = vadd.f32 %v11438, %v11533
  %v11553 = vadd.f32 %v11439, %v11534
  %s11554 = scalar_lea.vmem %s7, 304
  %11555 = vst [vmem:[%s11554] sm:$0xff] %v11535
  %11556 = vst [vmem:[%s11554 + $0x8] sm:$0xff] %v11536
  %11557 = vst [vmem:[%s11554 + $0x10] sm:$0xff] %v11537
  %11558 = vst [vmem:[%s11554 + $0x18] sm:$0xff] %v11538
  %11559 = vst [vmem:[%s11554 + $0x20] sm:$0xff] %v11539
  %11560 = vst [vmem:[%s11554 + $0x28] sm:$0xff] %v11540
  %11561 = vst [vmem:[%s11554 + $0x30] sm:$0xff] %v11541
  %11562 = vst [vmem:[%s11554 + $0x38] sm:$0xff] %v11542
  %11563 = vst [vmem:[%s11554 + $0x40] sm:$0xff] %v11543
  %11564 = vst [vmem:[%s11554 + $0x48] sm:$0xff] %v11544
  %11565 = vst [vmem:[%s11554 + $0x50] sm:$0xff] %v11545
  %11566 = vst [vmem:[%s11554 + $0x58] sm:$0xff] %v11546
  %11567 = vst [vmem:[%s11554 + $0x60] sm:$0xff] %v11547
  %11568 = vst [vmem:[%s11554 + $0x68] sm:$0xff] %v11548
  %11569 = vst [vmem:[%s11554 + $0x70] sm:$0xff] %v11549
  %11570 = vst [vmem:[%s11554 + $0x78] sm:$0xff] %v11550
  %11571 = vst [vmem:[%s11554 + $0x80] sm:$0xff] %v11551
  %11572 = vst [vmem:[%s11554 + $0x88] sm:$0xff] %v11552
  %11573 = vst [vmem:[%s11554 + $0x90] sm:$0x3f] %v11553
  %v11574 = vld [vmem:[%s2183] sm:$0xff]
  %v11575 = vld [vmem:[%s2183 + $0x8] sm:$0xff]
  %v11576 = vld [vmem:[%s2183 + $0x10] sm:$0xff]
  %v11577 = vld [vmem:[%s2183 + $0x18] sm:$0xff]
  %v11578 = vld [vmem:[%s2183 + $0x20] sm:$0xff]
  %v11579 = vld [vmem:[%s2183 + $0x28] sm:$0xff]
  %v11580 = vld [vmem:[%s2183 + $0x30] sm:$0xff]
  %v11581 = vld [vmem:[%s2183 + $0x38] sm:$0xff]
  %v11582 = vld [vmem:[%s2183 + $0x40] sm:$0xff]
  %v11583 = vld [vmem:[%s2183 + $0x48] sm:$0xff]
  %v11584 = vld [vmem:[%s2183 + $0x50] sm:$0xff]
  %v11585 = vld [vmem:[%s2183 + $0x58] sm:$0xff]
  %v11586 = vld [vmem:[%s2183 + $0x60] sm:$0xff]
  %v11587 = vld [vmem:[%s2183 + $0x68] sm:$0xff]
  %v11588 = vld [vmem:[%s2183 + $0x70] sm:$0xff]
  %v11589 = vld [vmem:[%s2183 + $0x78] sm:$0xff]
  %v11590 = vld [vmem:[%s2183 + $0x80] sm:$0xff]
  %v11591 = vld [vmem:[%s2183 + $0x88] sm:$0xff]
  %v11592 = vld [vmem:[%s2183 + $0x90] sm:$0x3f]
  %v11593 = vlaneseq
  %v11594 = vshrl.u32 %v11593, 7
  %v11595 = vsub.s32 3, %v11594
  %v11596 = vrot.slane %v10723, %v11595
  %v11597 = vsub.f32 %v11574, %v11596
  %v11598 = vsub.f32 %v11575, %v11596
  %v11599 = vsub.f32 %v11576, %v11596
  %v11600 = vsub.f32 %v11577, %v11596
  %v11601 = vsub.f32 %v11578, %v11596
  %v11602 = vsub.f32 %v11579, %v11596
  %v11603 = vsub.f32 %v11580, %v11596
  %v11604 = vsub.f32 %v11581, %v11596
  %v11605 = vsub.f32 %v11582, %v11596
  %v11606 = vsub.f32 %v11583, %v11596
  %v11607 = vsub.f32 %v11584, %v11596
  %v11608 = vsub.f32 %v11585, %v11596
  %v11609 = vsub.f32 %v11586, %v11596
  %v11610 = vsub.f32 %v11587, %v11596
  %v11611 = vsub.f32 %v11588, %v11596
  %v11612 = vsub.f32 %v11589, %v11596
  %v11613 = vsub.f32 %v11590, %v11596
  %v11614 = vsub.f32 %v11591, %v11596
  %v11615 = vsub.f32 %v11592, %v11596
  %11616 = vset.pattern.permute.xlu0 3
  %11617 = vperm.xlu0 %11616, %v10686
  %v11618 = vpop.permute.xlu0 %11617
  %11620 = vset.pattern.permute.xlu0 3
  %11621 = vperm.xlu0 %11620, %v10688
  %v11622 = vpop.permute.xlu0 %11621
  %11624 = vset.pattern.permute.xlu0 3
  %11625 = vperm.xlu0 %11624, %v10690
  %v11626 = vpop.permute.xlu0 %11625
  %11628 = vset.pattern.permute.xlu0 3
  %11629 = vperm.xlu0 %11628, %v10692
  %v11630 = vpop.permute.xlu0 %11629
  %11632 = vset.pattern.permute.xlu0 3
  %11633 = vperm.xlu0 %11632, %v10694
  %v11634 = vpop.permute.xlu0 %11633
  %11636 = vset.pattern.permute.xlu0 3
  %11637 = vperm.xlu0 %11636, %v10696
  %v11638 = vpop.permute.xlu0 %11637
  %11640 = vset.pattern.permute.xlu0 3
  %11641 = vperm.xlu0 %11640, %v10698
  %v11642 = vpop.permute.xlu0 %11641
  %11644 = vset.pattern.permute.xlu0 3
  %11645 = vperm.xlu0 %11644, %v10700
  %v11646 = vpop.permute.xlu0 %11645
  %11648 = vset.pattern.permute.xlu0 3
  %11649 = vperm.xlu0 %11648, %v10702
  %v11650 = vpop.permute.xlu0 %11649
  %11652 = vset.pattern.permute.xlu0 3
  %11653 = vperm.xlu0 %11652, %v10704
  %v11654 = vpop.permute.xlu0 %11653
  %11656 = vset.pattern.permute.xlu0 3
  %11657 = vperm.xlu0 %11656, %v10706
  %v11658 = vpop.permute.xlu0 %11657
  %11660 = vset.pattern.permute.xlu0 3
  %11661 = vperm.xlu0 %11660, %v10708
  %v11662 = vpop.permute.xlu0 %11661
  %11664 = vset.pattern.permute.xlu0 3
  %11665 = vperm.xlu0 %11664, %v10710
  %v11666 = vpop.permute.xlu0 %11665
  %11668 = vset.pattern.permute.xlu0 3
  %11669 = vperm.xlu0 %11668, %v10712
  %v11670 = vpop.permute.xlu0 %11669
  %11672 = vset.pattern.permute.xlu0 3
  %11673 = vperm.xlu0 %11672, %v10714
  %v11674 = vpop.permute.xlu0 %11673
  %11676 = vset.pattern.permute.xlu0 3
  %11677 = vperm.xlu0 %11676, %v10716
  %v11678 = vpop.permute.xlu0 %11677
  %11680 = vset.pattern.permute.xlu0 3
  %11681 = vperm.xlu0 %11680, %v10718
  %v11682 = vpop.permute.xlu0 %11681
  %11684 = vset.pattern.permute.xlu0 3
  %11685 = vperm.xlu0 %11684, %v10720
  %v11686 = vpop.permute.xlu0 %11685
  %11688 = vset.pattern.permute.xlu0 3
  %11689 = vperm.xlu0 %11688, %v10722
  %v11690 = vpop.permute.xlu0 %11689
  %v11692 = vmul.f32 %v11618, %v11597
  %v11693 = vmul.f32 %v11622, %v11598
  %v11694 = vmul.f32 %v11626, %v11599
  %v11695 = vmul.f32 %v11630, %v11600
  %v11696 = vmul.f32 %v11634, %v11601
  %v11697 = vmul.f32 %v11638, %v11602
  %v11698 = vmul.f32 %v11642, %v11603
  %v11699 = vmul.f32 %v11646, %v11604
  %v11700 = vmul.f32 %v11650, %v11605
  %v11701 = vmul.f32 %v11654, %v11606
  %v11702 = vmul.f32 %v11658, %v11607
  %v11703 = vmul.f32 %v11662, %v11608
  %v11704 = vmul.f32 %v11666, %v11609
  %v11705 = vmul.f32 %v11670, %v11610
  %v11706 = vmul.f32 %v11674, %v11611
  %v11707 = vmul.f32 %v11678, %v11612
  %v11708 = vmul.f32 %v11682, %v11613
  %v11709 = vmul.f32 %v11686, %v11614
  %v11710 = vmul.f32 %v11690, %v11615
  %11711 = vset.pattern.permute.xlu0 3
  %11712 = vperm.xlu0 %11711, %v10498
  %v11713 = vpop.permute.xlu0 %11712
  %11715 = vset.pattern.permute.xlu0 3
  %11716 = vperm.xlu0 %11715, %v10504
  %v11717 = vpop.permute.xlu0 %11716
  %11719 = vset.pattern.permute.xlu0 3
  %11720 = vperm.xlu0 %11719, %v10510
  %v11721 = vpop.permute.xlu0 %11720
  %11723 = vset.pattern.permute.xlu0 3
  %11724 = vperm.xlu0 %11723, %v10516
  %v11725 = vpop.permute.xlu0 %11724
  %11727 = vset.pattern.permute.xlu0 3
  %11728 = vperm.xlu0 %11727, %v10522
  %v11729 = vpop.permute.xlu0 %11728
  %11731 = vset.pattern.permute.xlu0 3
  %11732 = vperm.xlu0 %11731, %v10528
  %v11733 = vpop.permute.xlu0 %11732
  %11735 = vset.pattern.permute.xlu0 3
  %11736 = vperm.xlu0 %11735, %v10534
  %v11737 = vpop.permute.xlu0 %11736
  %11739 = vset.pattern.permute.xlu0 3
  %11740 = vperm.xlu0 %11739, %v10540
  %v11741 = vpop.permute.xlu0 %11740
  %11743 = vset.pattern.permute.xlu0 3
  %11744 = vperm.xlu0 %11743, %v10546
  %v11745 = vpop.permute.xlu0 %11744
  %11747 = vset.pattern.permute.xlu0 3
  %11748 = vperm.xlu0 %11747, %v10552
  %v11749 = vpop.permute.xlu0 %11748
  %11751 = vset.pattern.permute.xlu0 3
  %11752 = vperm.xlu0 %11751, %v10558
  %v11753 = vpop.permute.xlu0 %11752
  %11755 = vset.pattern.permute.xlu0 3
  %11756 = vperm.xlu0 %11755, %v10564
  %v11757 = vpop.permute.xlu0 %11756
  %11759 = vset.pattern.permute.xlu0 3
  %11760 = vperm.xlu0 %11759, %v10570
  %v11761 = vpop.permute.xlu0 %11760
  %11763 = vset.pattern.permute.xlu0 3
  %11764 = vperm.xlu0 %11763, %v10576
  %v11765 = vpop.permute.xlu0 %11764
  %11767 = vset.pattern.permute.xlu0 3
  %11768 = vperm.xlu0 %11767, %v10582
  %v11769 = vpop.permute.xlu0 %11768
  %11771 = vset.pattern.permute.xlu0 3
  %11772 = vperm.xlu0 %11771, %v10588
  %v11773 = vpop.permute.xlu0 %11772
  %11775 = vset.pattern.permute.xlu0 3
  %11776 = vperm.xlu0 %11775, %v10594
  %v11777 = vpop.permute.xlu0 %11776
  %11779 = vset.pattern.permute.xlu0 3
  %11780 = vperm.xlu0 %11779, %v10600
  %v11781 = vpop.permute.xlu0 %11780
  %11783 = vset.pattern.permute.xlu0 3
  %11784 = vperm.xlu0 %11783, %v10606
  %v11785 = vpop.permute.xlu0 %11784
  %v11787 = vadd.f32 %v11596, %v11713
  %v11788 = vadd.f32 %v11596, %v11717
  %v11789 = vadd.f32 %v11596, %v11721
  %v11790 = vadd.f32 %v11596, %v11725
  %v11791 = vadd.f32 %v11596, %v11729
  %v11792 = vadd.f32 %v11596, %v11733
  %v11793 = vadd.f32 %v11596, %v11737
  %v11794 = vadd.f32 %v11596, %v11741
  %v11795 = vadd.f32 %v11596, %v11745
  %v11796 = vadd.f32 %v11596, %v11749
  %v11797 = vadd.f32 %v11596, %v11753
  %v11798 = vadd.f32 %v11596, %v11757
  %v11799 = vadd.f32 %v11596, %v11761
  %v11800 = vadd.f32 %v11596, %v11765
  %v11801 = vadd.f32 %v11596, %v11769
  %v11802 = vadd.f32 %v11596, %v11773
  %v11803 = vadd.f32 %v11596, %v11777
  %v11804 = vadd.f32 %v11596, %v11781
  %v11805 = vadd.f32 %v11596, %v11785
  %v11806 = vadd.f32 %v11692, %v11787
  %v11807 = vadd.f32 %v11693, %v11788
  %v11808 = vadd.f32 %v11694, %v11789
  %v11809 = vadd.f32 %v11695, %v11790
  %v11810 = vadd.f32 %v11696, %v11791
  %v11811 = vadd.f32 %v11697, %v11792
  %v11812 = vadd.f32 %v11698, %v11793
  %v11813 = vadd.f32 %v11699, %v11794
  %v11814 = vadd.f32 %v11700, %v11795
  %v11815 = vadd.f32 %v11701, %v11796
  %v11816 = vadd.f32 %v11702, %v11797
  %v11817 = vadd.f32 %v11703, %v11798
  %v11818 = vadd.f32 %v11704, %v11799
  %v11819 = vadd.f32 %v11705, %v11800
  %v11820 = vadd.f32 %v11706, %v11801
  %v11821 = vadd.f32 %v11707, %v11802
  %v11822 = vadd.f32 %v11708, %v11803
  %v11823 = vadd.f32 %v11709, %v11804
  %v11824 = vadd.f32 %v11710, %v11805
  %s11825 = scalar_lea.vmem %s7, 456
  %11826 = vst [vmem:[%s11825] sm:$0xff] %v11806
  %11827 = vst [vmem:[%s11825 + $0x8] sm:$0xff] %v11807
  %11828 = vst [vmem:[%s11825 + $0x10] sm:$0xff] %v11808
  %11829 = vst [vmem:[%s11825 + $0x18] sm:$0xff] %v11809
  %11830 = vst [vmem:[%s11825 + $0x20] sm:$0xff] %v11810
  %11831 = vst [vmem:[%s11825 + $0x28] sm:$0xff] %v11811
  %11832 = vst [vmem:[%s11825 + $0x30] sm:$0xff] %v11812
  %11833 = vst [vmem:[%s11825 + $0x38] sm:$0xff] %v11813
  %11834 = vst [vmem:[%s11825 + $0x40] sm:$0xff] %v11814
  %11835 = vst [vmem:[%s11825 + $0x48] sm:$0xff] %v11815
  %11836 = vst [vmem:[%s11825 + $0x50] sm:$0xff] %v11816
  %11837 = vst [vmem:[%s11825 + $0x58] sm:$0xff] %v11817
  %11838 = vst [vmem:[%s11825 + $0x60] sm:$0xff] %v11818
  %11839 = vst [vmem:[%s11825 + $0x68] sm:$0xff] %v11819
  %11840 = vst [vmem:[%s11825 + $0x70] sm:$0xff] %v11820
  %11841 = vst [vmem:[%s11825 + $0x78] sm:$0xff] %v11821
  %11842 = vst [vmem:[%s11825 + $0x80] sm:$0xff] %v11822
  %11843 = vst [vmem:[%s11825 + $0x88] sm:$0xff] %v11823
  %11844 = vst [vmem:[%s11825 + $0x90] sm:$0x3f] %v11824
  // Predicated region
  $region30: #{it_feedforward_updated.1} parent=0 // pred_check
    _
  $region31: #{it_feedforward_updated.1} parent=0 // pred_check_branch
    %11846 = sbr.rel (0) target = $region33
  $region32: #{it_feedforward_updated.1} parent=0 // pred_region
    _
  $region33: #{it_feedforward_updated.1} parent=0 // pred_fallthru
    _
  // Predicated region
  $region34: #{it_feedforward_updated.1} parent=0 // pred_check
    _
  $region35: #{it_feedforward_updated.1} parent=0 // pred_check_branch
    %11848 = sbr.rel (0) target = $region37
  $region36: #{it_feedforward_updated.1} parent=0 // pred_region
    _
  $region37: #{it_feedforward_updated.1} parent=0 // pred_fallthru
    _

</llo_original>
